<compile_context>
chip_gen: v7x
topology: tpu7x:2x2x1
jax: 0.10.0
libtpu: 0.0.40
codegen_flags: <defaults>
</compile_context>

<pallas_src>
import numpy as np

import jax
import jax.numpy as jnp
from jax import lax
from jax.experimental import pallas as pl
from jax.experimental.pallas import tpu as pltpu

LANES = 128


def _round_up(x, m):
    return (x + m - 1) // m * m


# ----------------------------------------------------------------------------
# Fused kernel: conv1 + BN + ReLU -> conv2 + BN + ReLU -> 2x2 maxpool
# ----------------------------------------------------------------------------
def _make_kernel(W, Cin, C1, C2P, L1, L2):
    """W: flat row stride (input width). L1/L2: conv1/conv2 flat row counts."""

    def kernel(x_ref, w1_ref, b1_ref, w2_ref, b2_ref, sel_ref, o_ref, act1_ref):
        # ---- conv1 (3x3 valid) + folded-BN bias + ReLU.
        # Flat layout: row i of x_ref is spatial position (i // W, i % W).
        acc1 = jnp.zeros((L1, C1), jnp.float32)
        for dy in range(3):
            for dx in range(3):
                t = dy * 3 + dx
                xs = x_ref[pl.ds(dy * W + dx, L1), :]          # (L1, Cin)
                wt = w1_ref[pl.ds(t * Cin, Cin), :]            # (Cin, C1)
                acc1 = acc1 + jnp.dot(xs, wt,
                                      preferred_element_type=jnp.float32)
        act1_ref[...] = jnp.maximum(acc1 + b1_ref[...], 0.0)   # stays in VMEM

        # ---- conv2 (3x3 valid) + folded-BN bias + ReLU (channels padded to 128).
        acc2 = jnp.zeros((L2, C2P), jnp.float32)
        for dy in range(3):
            for dx in range(3):
                t = dy * 3 + dx
                a1 = act1_ref[pl.ds(dy * W + dx, L2), :]       # (L2, C1)
                wt = w2_ref[pl.ds(t * C1, C1), :]              # (C1, C2P)
                acc2 = acc2 + jnp.dot(a1, wt,
                                      preferred_element_type=jnp.float32)
        act2 = jnp.maximum(acc2 + b2_ref[...], 0.0)            # (L2, C2P)

        # ---- 2x2 / stride-2 max pool over the valid region, expressed as four
        # one-hot row-selection matmuls (exact), then elementwise max.
        pooled = jnp.dot(sel_ref[0], act2, preferred_element_type=jnp.float32)
        for s in range(1, 4):
            pooled = jnp.maximum(
                pooled,
                jnp.dot(sel_ref[s], act2, preferred_element_type=jnp.float32))
        o_ref[...] = pooled.astype(o_ref.dtype)                # lane-dense store

    return kernel


# ----------------------------------------------------------------------------
# Host-side helpers
# ----------------------------------------------------------------------------
def _fold_bn(gamma, beta, mean, var, eps=1e-5):
    scale = gamma / jnp.sqrt(var + eps)
    return scale, beta - mean * scale


def _w_to_mat(w_oihw):
    """[Cout, Cin, 3, 3] -> [9*Cin, Cout], rows ordered (dy, dx, cin)."""
    Cout, Cin, Kh, Kw = w_oihw.shape
    return jnp.transpose(w_oihw, (2, 3, 1, 0)).reshape(Kh * Kw * Cin, Cout)


def _pool_select(Hp, Wp, W, L2):
    """One-hot selection matrices for the 4 pool taps: (4, Hp*Wp, L2)."""
    p = np.arange(Hp * Wp)
    py, px = p // Wp, p % Wp
    mats = []
    for sy in (0, 1):
        for sx in (0, 1):
            cols = (2 * py + sy) * W + (2 * px + sx)
            m = np.zeros((Hp * Wp, L2), np.float32)
            m[p, cols] = 1.0
            mats.append(m)
    return jnp.asarray(np.stack(mats))


@jax.jit
def encapsule_forward(x_nchw, w1_oihw, s1, b1, w2_oihw, s2, b2):
    N, Cin, H, W = x_nchw.shape
    C1 = w1_oihw.shape[0]
    C2 = w2_oihw.shape[0]
    C2P = _round_up(C2, LANES)

    Hp, Wp = (H - 4) // 2, (W - 4) // 2           # pooled spatial size
    P = Hp * Wp
    MAXOFF = 2 * W + 2                            # largest 3x3 tap flat offset
    L2 = (H - 4) * W                              # conv2 flat rows computed
    L1 = _round_up(L2 + MAXOFF, 8)                # conv1 flat rows computed
    XR = _round_up(L1 + MAXOFF, 8)                # padded flat input rows

    # Fold BN scale into the conv weights; keep only a bias for the epilogue.
    w1m = (_w_to_mat(w1_oihw) * s1[None, :]).astype(jnp.float32)        # (9*Cin, C1)
    w2m = (_w_to_mat(w2_oihw) * s2[None, :]).astype(jnp.float32)        # (9*C1, C2)
    w2m = jnp.pad(w2m, ((0, 0), (0, C2P - C2)))                         # lane-dense out
    b1m = b1.reshape(1, C1).astype(jnp.float32)
    b2m = jnp.pad(b2.reshape(1, C2).astype(jnp.float32),
                  ((0, 0), (0, C2P - C2)))

    sel = _pool_select(Hp, Wp, W, L2)                                   # (4, P, L2)

    # NCHW -> flat NHWC rows (row = y*W + x, lane = channel), zero-pad rows so
    # every shifted in-kernel slice stays in bounds.
    xf = jnp.transpose(x_nchw, (0, 2, 3, 1)).reshape(N, H * W, Cin)
    xf = jnp.pad(xf, ((0, 0), (0, XR - H * W), (0, 0)))

    kernel = _make_kernel(W, Cin, C1, C2P, L1, L2)

    out = pl.pallas_call(
        kernel,
        out_shape=jax.ShapeDtypeStruct((N, P, C2P), x_nchw.dtype),
        grid_spec=pltpu.PrefetchScalarGridSpec(
            num_scalar_prefetch=0,
            grid=(N,),
            in_specs=[
                pl.BlockSpec((pl.Squeezed(), XR, Cin), lambda n: (n, 0, 0)),
                pl.BlockSpec((9 * Cin, C1), lambda n: (0, 0)),
                pl.BlockSpec((1, C1), lambda n: (0, 0)),
                pl.BlockSpec((9 * C1, C2P), lambda n: (0, 0)),
                pl.BlockSpec((1, C2P), lambda n: (0, 0)),
                pl.BlockSpec((4, P, L2), lambda n: (0, 0, 0)),
            ],
            out_specs=pl.BlockSpec((pl.Squeezed(), P, C2P),
                                   lambda n: (n, 0, 0)),
            scratch_shapes=[pltpu.VMEM((L1, C1), jnp.float32)],
        ),
        compiler_params=pltpu.CompilerParams(
            dimension_semantics=("parallel",)),
    )(xf, w1m, b1m, w2m, b2m, sel)

    out = out[:, :, :C2].reshape(N, Hp, Wp, C2)   # drop channel pad
    return jnp.transpose(out, (0, 3, 1, 2))       # back to NCHW


# ----------------------------------------------------------------------------
# Pure-JAX reference (for validation)
# ----------------------------------------------------------------------------
def _reference(x_nchw, w1_oihw, s1, b1, w2_oihw, s2, b2):
    x = jnp.transpose(x_nchw, (0, 2, 3, 1))

    def conv(x, w_oihw):
        w = jnp.transpose(w_oihw, (2, 3, 1, 0))  # HWIO
        return lax.conv_general_dilated(
            x, w, window_strides=(1, 1), padding="VALID",
            dimension_numbers=("NHWC", "HWIO", "NHWC"))

    x = jnp.maximum(conv(x, w1_oihw) * s1 + b1, 0.0)
    x = jnp.maximum(conv(x, w2_oihw) * s2 + b2, 0.0)
    x = lax.reduce_window(x, -jnp.inf, lax.max,
                          (1, 2, 2, 1), (1, 2, 2, 1), "VALID")
    return jnp.transpose(x, (0, 3, 1, 2))


# ----------------------------------------------------------------------------
# Main
# ----------------------------------------------------------------------------
if __name__ == "__main__":
    N, INP, H, W = 2, 4, 16, 16
    OUT = 8                        # `out` in the module; conv2 -> 2*out = 16
    C2 = 2 * OUT

    key = jax.random.PRNGKey(0)
    kx, kw1, kw2 = jax.random.split(key, 3)

    x = jax.random.normal(kx, (N, INP, H, W), dtype=jnp.float32)

    # Conv weights (PyTorch layout [Cout, Cin, 3, 3]), deterministic init.
    w1_oihw = jax.random.normal(kw1, (OUT, INP, 3, 3), jnp.float32) * 0.1
    w2_oihw = jax.random.normal(kw2, (C2, OUT, 3, 3), jnp.float32) * 0.1

    # BatchNorm (inference-mode) parameters, deterministic, folded to scale/bias.
    def bn_params(c):
        gamma = 1.0 + 0.1 * jnp.arange(c, dtype=jnp.float32)
        beta = 0.01 * jnp.arange(c, dtype=jnp.float32)
        mean = 0.05 * jnp.arange(c, dtype=jnp.float32)
        var = 1.0 + 0.02 * jnp.arange(c, dtype=jnp.float32)
        return _fold_bn(gamma, beta, mean, var)

    s1, b1 = bn_params(OUT)
    s2, b2 = bn_params(C2)

    y = encapsule_forward(x, w1_oihw, s1, b1, w2_oihw, s2, b2)
    y = jax.block_until_ready(y)

    y_ref = _reference(x, w1_oihw, s1, b1, w2_oihw, s2, b2)
    assert y.shape == (N, C2, (H - 4) // 2, (W - 4) // 2), y.shape
    assert jnp.allclose(y, y_ref, atol=1e-4, rtol=1e-4), "mismatch vs reference"

    print("KERNEL_OK")
</pallas_src>

<mosaic_0001>
module attributes {stable_mosaic.version = 11 : i64} {
  func.func @kernel(%arg0: i32, %arg1: memref<1x272x4xf32, #tpu.memory_space<vmem>>, %arg2: memref<36x8xf32, #tpu.memory_space<vmem>>, %arg3: memref<1x8xf32, #tpu.memory_space<vmem>>, %arg4: memref<72x128xf32, #tpu.memory_space<vmem>>, %arg5: memref<1x128xf32, #tpu.memory_space<vmem>>, %arg6: memref<4x36x192xf32, #tpu.memory_space<vmem>>, %arg7: memref<1x36x128xf32, #tpu.memory_space<vmem>>, %arg8: memref<232x8xf32, #tpu.memory_space<vmem>>) attributes {dimension_semantics = [#tpu.dimension_semantics<parallel>], iteration_bounds = array<i64: 2>, scalar_prefetch = 0 : i64, scratch_operands = 1 : i64, tpu.core_type = #tpu.core_type<tc>, window_params = [{transform_indices = @transform_0, window_bounds = array<i64: 1, 272, 4>}, {pipeline_mode = #tpu.pipeline_mode<synchronous>, transform_indices = @transform_1, window_bounds = array<i64: 36, 8>}, {pipeline_mode = #tpu.pipeline_mode<synchronous>, transform_indices = @transform_2, window_bounds = array<i64: 1, 8>}, {pipeline_mode = #tpu.pipeline_mode<synchronous>, transform_indices = @transform_3, window_bounds = array<i64: 72, 128>}, {pipeline_mode = #tpu.pipeline_mode<synchronous>, transform_indices = @transform_4, window_bounds = array<i64: 1, 128>}, {pipeline_mode = #tpu.pipeline_mode<synchronous>, transform_indices = @transform_5, window_bounds = array<i64: 4, 36, 192>}, {transform_indices = @transform_6, window_bounds = array<i64: 1, 36, 128>}]} {
    %cst = arith.constant 0.000000e+00 : f32
    %0 = vector.broadcast %cst : f32 to vector<232x8xf32>
    %c0 = arith.constant 0 : index
    %c0_0 = arith.constant 0 : index
    %c0_1 = arith.constant 0 : index
    %1 = vector.load %arg1[%c0, %c0_0, %c0_1] : memref<1x272x4xf32, #tpu.memory_space<vmem>>, vector<1x232x4xf32>
    %2 = vector.shape_cast %1 : vector<1x232x4xf32> to vector<232x4xf32>
    %c0_2 = arith.constant 0 : index
    %c0_3 = arith.constant 0 : index
    %3 = vector.load %arg2[%c0_2, %c0_3] : memref<36x8xf32, #tpu.memory_space<vmem>>, vector<4x8xf32>
    %cst_4 = arith.constant dense<0.000000e+00> : vector<232x8xf32>
    %4 = tpu.matmul %2, %3, %cst_4 {dimension_numbers = #tpu.dot_dimension_numbers<[1], [0], [0], [1], [0, 0, 1, 1], [], []>} : vector<232x4xf32>, vector<4x8xf32>, vector<232x8xf32> -> vector<232x8xf32>
    %5 = arith.addf %0, %4 : vector<232x8xf32>
    %c0_5 = arith.constant 0 : index
    %c1 = arith.constant 1 : index
    %c0_6 = arith.constant 0 : index
    %6 = vector.load %arg1[%c0_5, %c1, %c0_6] : memref<1x272x4xf32, #tpu.memory_space<vmem>>, vector<1x232x4xf32>
    %7 = vector.shape_cast %6 : vector<1x232x4xf32> to vector<232x4xf32>
    %c4 = arith.constant 4 : index
    %c0_7 = arith.constant 0 : index
    %8 = vector.load %arg2[%c4, %c0_7] : memref<36x8xf32, #tpu.memory_space<vmem>>, vector<4x8xf32>
    %cst_8 = arith.constant dense<0.000000e+00> : vector<232x8xf32>
    %9 = tpu.matmul %7, %8, %cst_8 {dimension_numbers = #tpu.dot_dimension_numbers<[1], [0], [0], [1], [0, 0, 1, 1], [], []>} : vector<232x4xf32>, vector<4x8xf32>, vector<232x8xf32> -> vector<232x8xf32>
    %10 = arith.addf %5, %9 : vector<232x8xf32>
    %c0_9 = arith.constant 0 : index
    %c2 = arith.constant 2 : index
    %c0_10 = arith.constant 0 : index
    %11 = vector.load %arg1[%c0_9, %c2, %c0_10] : memref<1x272x4xf32, #tpu.memory_space<vmem>>, vector<1x232x4xf32>
    %12 = vector.shape_cast %11 : vector<1x232x4xf32> to vector<232x4xf32>
    %c8 = arith.constant 8 : index
    %c0_11 = arith.constant 0 : index
    %13 = vector.load %arg2[%c8, %c0_11] : memref<36x8xf32, #tpu.memory_space<vmem>>, vector<4x8xf32>
    %cst_12 = arith.constant dense<0.000000e+00> : vector<232x8xf32>
    %14 = tpu.matmul %12, %13, %cst_12 {dimension_numbers = #tpu.dot_dimension_numbers<[1], [0], [0], [1], [0, 0, 1, 1], [], []>} : vector<232x4xf32>, vector<4x8xf32>, vector<232x8xf32> -> vector<232x8xf32>
    %15 = arith.addf %10, %14 : vector<232x8xf32>
    %c0_13 = arith.constant 0 : index
    %c16 = arith.constant 16 : index
    %c0_14 = arith.constant 0 : index
    %16 = vector.load %arg1[%c0_13, %c16, %c0_14] : memref<1x272x4xf32, #tpu.memory_space<vmem>>, vector<1x232x4xf32>
    %17 = vector.shape_cast %16 : vector<1x232x4xf32> to vector<232x4xf32>
    %c12 = arith.constant 12 : index
    %c0_15 = arith.constant 0 : index
    %18 = vector.load %arg2[%c12, %c0_15] : memref<36x8xf32, #tpu.memory_space<vmem>>, vector<4x8xf32>
    %cst_16 = arith.constant dense<0.000000e+00> : vector<232x8xf32>
    %19 = tpu.matmul %17, %18, %cst_16 {dimension_numbers = #tpu.dot_dimension_numbers<[1], [0], [0], [1], [0, 0, 1, 1], [], []>} : vector<232x4xf32>, vector<4x8xf32>, vector<232x8xf32> -> vector<232x8xf32>
    %20 = arith.addf %15, %19 : vector<232x8xf32>
    %c0_17 = arith.constant 0 : index
    %c17 = arith.constant 17 : index
    %c0_18 = arith.constant 0 : index
    %21 = vector.load %arg1[%c0_17, %c17, %c0_18] : memref<1x272x4xf32, #tpu.memory_space<vmem>>, vector<1x232x4xf32>
    %22 = vector.shape_cast %21 : vector<1x232x4xf32> to vector<232x4xf32>
    %c16_19 = arith.constant 16 : index
    %c0_20 = arith.constant 0 : index
    %23 = vector.load %arg2[%c16_19, %c0_20] : memref<36x8xf32, #tpu.memory_space<vmem>>, vector<4x8xf32>
    %cst_21 = arith.constant dense<0.000000e+00> : vector<232x8xf32>
    %24 = tpu.matmul %22, %23, %cst_21 {dimension_numbers = #tpu.dot_dimension_numbers<[1], [0], [0], [1], [0, 0, 1, 1], [], []>} : vector<232x4xf32>, vector<4x8xf32>, vector<232x8xf32> -> vector<232x8xf32>
    %25 = arith.addf %20, %24 : vector<232x8xf32>
    %c0_22 = arith.constant 0 : index
    %c18 = arith.constant 18 : index
    %c0_23 = arith.constant 0 : index
    %26 = vector.load %arg1[%c0_22, %c18, %c0_23] : memref<1x272x4xf32, #tpu.memory_space<vmem>>, vector<1x232x4xf32>
    %27 = vector.shape_cast %26 : vector<1x232x4xf32> to vector<232x4xf32>
    %c20 = arith.constant 20 : index
    %c0_24 = arith.constant 0 : index
    %28 = vector.load %arg2[%c20, %c0_24] : memref<36x8xf32, #tpu.memory_space<vmem>>, vector<4x8xf32>
    %cst_25 = arith.constant dense<0.000000e+00> : vector<232x8xf32>
    %29 = tpu.matmul %27, %28, %cst_25 {dimension_numbers = #tpu.dot_dimension_numbers<[1], [0], [0], [1], [0, 0, 1, 1], [], []>} : vector<232x4xf32>, vector<4x8xf32>, vector<232x8xf32> -> vector<232x8xf32>
    %30 = arith.addf %25, %29 : vector<232x8xf32>
    %c0_26 = arith.constant 0 : index
    %c32 = arith.constant 32 : index
    %c0_27 = arith.constant 0 : index
    %31 = vector.load %arg1[%c0_26, %c32, %c0_27] : memref<1x272x4xf32, #tpu.memory_space<vmem>>, vector<1x232x4xf32>
    %32 = vector.shape_cast %31 : vector<1x232x4xf32> to vector<232x4xf32>
    %c24 = arith.constant 24 : index
    %c0_28 = arith.constant 0 : index
    %33 = vector.load %arg2[%c24, %c0_28] : memref<36x8xf32, #tpu.memory_space<vmem>>, vector<4x8xf32>
    %cst_29 = arith.constant dense<0.000000e+00> : vector<232x8xf32>
    %34 = tpu.matmul %32, %33, %cst_29 {dimension_numbers = #tpu.dot_dimension_numbers<[1], [0], [0], [1], [0, 0, 1, 1], [], []>} : vector<232x4xf32>, vector<4x8xf32>, vector<232x8xf32> -> vector<232x8xf32>
    %35 = arith.addf %30, %34 : vector<232x8xf32>
    %c0_30 = arith.constant 0 : index
    %c33 = arith.constant 33 : index
    %c0_31 = arith.constant 0 : index
    %36 = vector.load %arg1[%c0_30, %c33, %c0_31] : memref<1x272x4xf32, #tpu.memory_space<vmem>>, vector<1x232x4xf32>
    %37 = vector.shape_cast %36 : vector<1x232x4xf32> to vector<232x4xf32>
    %c28 = arith.constant 28 : index
    %c0_32 = arith.constant 0 : index
    %38 = vector.load %arg2[%c28, %c0_32] : memref<36x8xf32, #tpu.memory_space<vmem>>, vector<4x8xf32>
    %cst_33 = arith.constant dense<0.000000e+00> : vector<232x8xf32>
    %39 = tpu.matmul %37, %38, %cst_33 {dimension_numbers = #tpu.dot_dimension_numbers<[1], [0], [0], [1], [0, 0, 1, 1], [], []>} : vector<232x4xf32>, vector<4x8xf32>, vector<232x8xf32> -> vector<232x8xf32>
    %40 = arith.addf %35, %39 : vector<232x8xf32>
    %c0_34 = arith.constant 0 : index
    %c34 = arith.constant 34 : index
    %c0_35 = arith.constant 0 : index
    %41 = vector.load %arg1[%c0_34, %c34, %c0_35] : memref<1x272x4xf32, #tpu.memory_space<vmem>>, vector<1x232x4xf32>
    %42 = vector.shape_cast %41 : vector<1x232x4xf32> to vector<232x4xf32>
    %c32_36 = arith.constant 32 : index
    %c0_37 = arith.constant 0 : index
    %43 = vector.load %arg2[%c32_36, %c0_37] : memref<36x8xf32, #tpu.memory_space<vmem>>, vector<4x8xf32>
    %cst_38 = arith.constant dense<0.000000e+00> : vector<232x8xf32>
    %44 = tpu.matmul %42, %43, %cst_38 {dimension_numbers = #tpu.dot_dimension_numbers<[1], [0], [0], [1], [0, 0, 1, 1], [], []>} : vector<232x4xf32>, vector<4x8xf32>, vector<232x8xf32> -> vector<232x8xf32>
    %45 = arith.addf %40, %44 : vector<232x8xf32>
    %c0_39 = arith.constant 0 : index
    %c0_40 = arith.constant 0 : index
    %46 = vector.load %arg3[%c0_39, %c0_40] : memref<1x8xf32, #tpu.memory_space<vmem>>, vector<1x8xf32>
    %47 = vector.broadcast %46 : vector<1x8xf32> to vector<232x8xf32>
    %48 = arith.addf %45, %47 : vector<232x8xf32>
    %cst_41 = arith.constant 0.000000e+00 : f32
    %49 = vector.broadcast %cst_41 : f32 to vector<232x8xf32>
    %50 = arith.maximumf %48, %49 : vector<232x8xf32>
    %c0_42 = arith.constant 0 : index
    %c0_43 = arith.constant 0 : index
    %51 = vector.load %arg8[%c0_42, %c0_43] : memref<232x8xf32, #tpu.memory_space<vmem>>, vector<232x8xf32>
    tpu.vector_store %arg8[%c0_42, %c0_43], %50 {strides = array<i32>} : memref<232x8xf32, #tpu.memory_space<vmem>>, vector<232x8xf32>,
    %cst_44 = arith.constant 0.000000e+00 : f32
    %52 = vector.broadcast %cst_44 : f32 to vector<192x128xf32>
    %c0_45 = arith.constant 0 : index
    %c0_46 = arith.constant 0 : index
    %53 = vector.load %arg8[%c0_45, %c0_46] : memref<232x8xf32, #tpu.memory_space<vmem>>, vector<192x8xf32>
    %c0_47 = arith.constant 0 : index
    %c0_48 = arith.constant 0 : index
    %54 = vector.load %arg4[%c0_47, %c0_48] : memref<72x128xf32, #tpu.memory_space<vmem>>, vector<8x128xf32>
    %cst_49 = arith.constant dense<0.000000e+00> : vector<192x128xf32>
    %55 = tpu.matmul %53, %54, %cst_49 {dimension_numbers = #tpu.dot_dimension_numbers<[1], [0], [0], [1], [0, 0, 1, 1], [], []>} : vector<192x8xf32>, vector<8x128xf32>, vector<192x128xf32> -> vector<192x128xf32>
    %56 = arith.addf %52, %55 : vector<192x128xf32>
    %c1_50 = arith.constant 1 : index
    %c0_51 = arith.constant 0 : index
    %57 = vector.load %arg8[%c1_50, %c0_51] : memref<232x8xf32, #tpu.memory_space<vmem>>, vector<192x8xf32>
    %c8_52 = arith.constant 8 : index
    %c0_53 = arith.constant 0 : index
    %58 = vector.load %arg4[%c8_52, %c0_53] : memref<72x128xf32, #tpu.memory_space<vmem>>, vector<8x128xf32>
    %cst_54 = arith.constant dense<0.000000e+00> : vector<192x128xf32>
    %59 = tpu.matmul %57, %58, %cst_54 {dimension_numbers = #tpu.dot_dimension_numbers<[1], [0], [0], [1], [0, 0, 1, 1], [], []>} : vector<192x8xf32>, vector<8x128xf32>, vector<192x128xf32> -> vector<192x128xf32>
    %60 = arith.addf %56, %59 : vector<192x128xf32>
    %c2_55 = arith.constant 2 : index
    %c0_56 = arith.constant 0 : index
    %61 = vector.load %arg8[%c2_55, %c0_56] : memref<232x8xf32, #tpu.memory_space<vmem>>, vector<192x8xf32>
    %c16_57 = arith.constant 16 : index
    %c0_58 = arith.constant 0 : index
    %62 = vector.load %arg4[%c16_57, %c0_58] : memref<72x128xf32, #tpu.memory_space<vmem>>, vector<8x128xf32>
    %cst_59 = arith.constant dense<0.000000e+00> : vector<192x128xf32>
    %63 = tpu.matmul %61, %62, %cst_59 {dimension_numbers = #tpu.dot_dimension_numbers<[1], [0], [0], [1], [0, 0, 1, 1], [], []>} : vector<192x8xf32>, vector<8x128xf32>, vector<192x128xf32> -> vector<192x128xf32>
    %64 = arith.addf %60, %63 : vector<192x128xf32>
    %c16_60 = arith.constant 16 : index
    %c0_61 = arith.constant 0 : index
    %65 = vector.load %arg8[%c16_60, %c0_61] : memref<232x8xf32, #tpu.memory_space<vmem>>, vector<192x8xf32>
    %c24_62 = arith.constant 24 : index
    %c0_63 = arith.constant 0 : index
    %66 = vector.load %arg4[%c24_62, %c0_63] : memref<72x128xf32, #tpu.memory_space<vmem>>, vector<8x128xf32>
    %cst_64 = arith.constant dense<0.000000e+00> : vector<192x128xf32>
    %67 = tpu.matmul %65, %66, %cst_64 {dimension_numbers = #tpu.dot_dimension_numbers<[1], [0], [0], [1], [0, 0, 1, 1], [], []>} : vector<192x8xf32>, vector<8x128xf32>, vector<192x128xf32> -> vector<192x128xf32>
    %68 = arith.addf %64, %67 : vector<192x128xf32>
    %c17_65 = arith.constant 17 : index
    %c0_66 = arith.constant 0 : index
    %69 = vector.load %arg8[%c17_65, %c0_66] : memref<232x8xf32, #tpu.memory_space<vmem>>, vector<192x8xf32>
    %c32_67 = arith.constant 32 : index
    %c0_68 = arith.constant 0 : index
    %70 = vector.load %arg4[%c32_67, %c0_68] : memref<72x128xf32, #tpu.memory_space<vmem>>, vector<8x128xf32>
    %cst_69 = arith.constant dense<0.000000e+00> : vector<192x128xf32>
    %71 = tpu.matmul %69, %70, %cst_69 {dimension_numbers = #tpu.dot_dimension_numbers<[1], [0], [0], [1], [0, 0, 1, 1], [], []>} : vector<192x8xf32>, vector<8x128xf32>, vector<192x128xf32> -> vector<192x128xf32>
    %72 = arith.addf %68, %71 : vector<192x128xf32>
    %c18_70 = arith.constant 18 : index
    %c0_71 = arith.constant 0 : index
    %73 = vector.load %arg8[%c18_70, %c0_71] : memref<232x8xf32, #tpu.memory_space<vmem>>, vector<192x8xf32>
    %c40 = arith.constant 40 : index
    %c0_72 = arith.constant 0 : index
    %74 = vector.load %arg4[%c40, %c0_72] : memref<72x128xf32, #tpu.memory_space<vmem>>, vector<8x128xf32>
    %cst_73 = arith.constant dense<0.000000e+00> : vector<192x128xf32>
    %75 = tpu.matmul %73, %74, %cst_73 {dimension_numbers = #tpu.dot_dimension_numbers<[1], [0], [0], [1], [0, 0, 1, 1], [], []>} : vector<192x8xf32>, vector<8x128xf32>, vector<192x128xf32> -> vector<192x128xf32>
    %76 = arith.addf %72, %75 : vector<192x128xf32>
    %c32_74 = arith.constant 32 : index
    %c0_75 = arith.constant 0 : index
    %77 = vector.load %arg8[%c32_74, %c0_75] : memref<232x8xf32, #tpu.memory_space<vmem>>, vector<192x8xf32>
    %c48 = arith.constant 48 : index
    %c0_76 = arith.constant 0 : index
    %78 = vector.load %arg4[%c48, %c0_76] : memref<72x128xf32, #tpu.memory_space<vmem>>, vector<8x128xf32>
    %cst_77 = arith.constant dense<0.000000e+00> : vector<192x128xf32>
    %79 = tpu.matmul %77, %78, %cst_77 {dimension_numbers = #tpu.dot_dimension_numbers<[1], [0], [0], [1], [0, 0, 1, 1], [], []>} : vector<192x8xf32>, vector<8x128xf32>, vector<192x128xf32> -> vector<192x128xf32>
    %80 = arith.addf %76, %79 : vector<192x128xf32>
    %c33_78 = arith.constant 33 : index
    %c0_79 = arith.constant 0 : index
    %81 = vector.load %arg8[%c33_78, %c0_79] : memref<232x8xf32, #tpu.memory_space<vmem>>, vector<192x8xf32>
    %c56 = arith.constant 56 : index
    %c0_80 = arith.constant 0 : index
    %82 = vector.load %arg4[%c56, %c0_80] : memref<72x128xf32, #tpu.memory_space<vmem>>, vector<8x128xf32>
    %cst_81 = arith.constant dense<0.000000e+00> : vector<192x128xf32>
    %83 = tpu.matmul %81, %82, %cst_81 {dimension_numbers = #tpu.dot_dimension_numbers<[1], [0], [0], [1], [0, 0, 1, 1], [], []>} : vector<192x8xf32>, vector<8x128xf32>, vector<192x128xf32> -> vector<192x128xf32>
    %84 = arith.addf %80, %83 : vector<192x128xf32>
    %c34_82 = arith.constant 34 : index
    %c0_83 = arith.constant 0 : index
    %85 = vector.load %arg8[%c34_82, %c0_83] : memref<232x8xf32, #tpu.memory_space<vmem>>, vector<192x8xf32>
    %c64 = arith.constant 64 : index
    %c0_84 = arith.constant 0 : index
    %86 = vector.load %arg4[%c64, %c0_84] : memref<72x128xf32, #tpu.memory_space<vmem>>, vector<8x128xf32>
    %cst_85 = arith.constant dense<0.000000e+00> : vector<192x128xf32>
    %87 = tpu.matmul %85, %86, %cst_85 {dimension_numbers = #tpu.dot_dimension_numbers<[1], [0], [0], [1], [0, 0, 1, 1], [], []>} : vector<192x8xf32>, vector<8x128xf32>, vector<192x128xf32> -> vector<192x128xf32>
    %88 = arith.addf %84, %87 : vector<192x128xf32>
    %c0_86 = arith.constant 0 : index
    %c0_87 = arith.constant 0 : index
    %89 = vector.load %arg5[%c0_86, %c0_87] : memref<1x128xf32, #tpu.memory_space<vmem>>, vector<1x128xf32>
    %90 = vector.broadcast %89 : vector<1x128xf32> to vector<192x128xf32>
    %91 = arith.addf %88, %90 : vector<192x128xf32>
    %cst_88 = arith.constant 0.000000e+00 : f32
    %92 = vector.broadcast %cst_88 : f32 to vector<192x128xf32>
    %93 = arith.maximumf %91, %92 : vector<192x128xf32>
    %c0_89 = arith.constant 0 : index
    %c0_90 = arith.constant 0 : index
    %c0_91 = arith.constant 0 : index
    %94 = vector.load %arg6[%c0_89, %c0_90, %c0_91] : memref<4x36x192xf32, #tpu.memory_space<vmem>>, vector<1x36x192xf32>
    %95 = vector.shape_cast %94 : vector<1x36x192xf32> to vector<36x192xf32>
    %cst_92 = arith.constant dense<0.000000e+00> : vector<36x128xf32>
    %96 = tpu.matmul %95, %93, %cst_92 {dimension_numbers = #tpu.dot_dimension_numbers<[1], [0], [0], [1], [0, 0, 1, 1], [], []>} : vector<36x192xf32>, vector<192x128xf32>, vector<36x128xf32> -> vector<36x128xf32>
    %c1_93 = arith.constant 1 : index
    %c0_94 = arith.constant 0 : index
    %c0_95 = arith.constant 0 : index
    %97 = vector.load %arg6[%c1_93, %c0_94, %c0_95] : memref<4x36x192xf32, #tpu.memory_space<vmem>>, vector<1x36x192xf32>
    %98 = vector.shape_cast %97 : vector<1x36x192xf32> to vector<36x192xf32>
    %cst_96 = arith.constant dense<0.000000e+00> : vector<36x128xf32>
    %99 = tpu.matmul %98, %93, %cst_96 {dimension_numbers = #tpu.dot_dimension_numbers<[1], [0], [0], [1], [0, 0, 1, 1], [], []>} : vector<36x192xf32>, vector<192x128xf32>, vector<36x128xf32> -> vector<36x128xf32>
    %100 = arith.maximumf %96, %99 : vector<36x128xf32>
    %c2_97 = arith.constant 2 : index
    %c0_98 = arith.constant 0 : index
    %c0_99 = arith.constant 0 : index
    %101 = vector.load %arg6[%c2_97, %c0_98, %c0_99] : memref<4x36x192xf32, #tpu.memory_space<vmem>>, vector<1x36x192xf32>
    %102 = vector.shape_cast %101 : vector<1x36x192xf32> to vector<36x192xf32>
    %cst_100 = arith.constant dense<0.000000e+00> : vector<36x128xf32>
    %103 = tpu.matmul %102, %93, %cst_100 {dimension_numbers = #tpu.dot_dimension_numbers<[1], [0], [0], [1], [0, 0, 1, 1], [], []>} : vector<36x192xf32>, vector<192x128xf32>, vector<36x128xf32> -> vector<36x128xf32>
    %104 = arith.maximumf %100, %103 : vector<36x128xf32>
    %c3 = arith.constant 3 : index
    %c0_101 = arith.constant 0 : index
    %c0_102 = arith.constant 0 : index
    %105 = vector.load %arg6[%c3, %c0_101, %c0_102] : memref<4x36x192xf32, #tpu.memory_space<vmem>>, vector<1x36x192xf32>
    %106 = vector.shape_cast %105 : vector<1x36x192xf32> to vector<36x192xf32>
    %cst_103 = arith.constant dense<0.000000e+00> : vector<36x128xf32>
    %107 = tpu.matmul %106, %93, %cst_103 {dimension_numbers = #tpu.dot_dimension_numbers<[1], [0], [0], [1], [0, 0, 1, 1], [], []>} : vector<36x192xf32>, vector<192x128xf32>, vector<36x128xf32> -> vector<36x128xf32>
    %108 = arith.maximumf %104, %107 : vector<36x128xf32>
    %c0_104 = arith.constant 0 : index
    %c0_105 = arith.constant 0 : index
    %c0_106 = arith.constant 0 : index
    %109 = vector.load %arg7[%c0_104, %c0_105, %c0_106] : memref<1x36x128xf32, #tpu.memory_space<vmem>>, vector<1x36x128xf32>
    %110 = vector.shape_cast %109 : vector<1x36x128xf32> to vector<36x128xf32>
    %111 = vector.shape_cast %108 : vector<36x128xf32> to vector<1x36x128xf32>
    tpu.vector_store %arg7[%c0_104, %c0_105, %c0_106], %111 {strides = array<i32>} : memref<1x36x128xf32, #tpu.memory_space<vmem>>, vector<1x36x128xf32>,
    return
  }
  func.func @transform_0(%arg0: i32) -> (i32, i32, i32) {
    %c0_i32 = arith.constant 0 : i32
    %c0_i32_0 = arith.constant 0 : i32
    %c0_i32_1 = arith.constant 0 : i32
    return %arg0, %c0_i32, %c0_i32_0 : i32, i32, i32
  }
  func.func @transform_1(%arg0: i32) -> (i32, i32) {
    %c0_i32 = arith.constant 0 : i32
    %c0_i32_0 = arith.constant 0 : i32
    %c0_i32_1 = arith.constant 0 : i32
    return %c0_i32, %c0_i32_0 : i32, i32
  }
  func.func @transform_2(%arg0: i32) -> (i32, i32) {
    %c0_i32 = arith.constant 0 : i32
    %c0_i32_0 = arith.constant 0 : i32
    %c0_i32_1 = arith.constant 0 : i32
    return %c0_i32, %c0_i32_0 : i32, i32
  }
  func.func @transform_3(%arg0: i32) -> (i32, i32) {
    %c0_i32 = arith.constant 0 : i32
    %c0_i32_0 = arith.constant 0 : i32
    %c0_i32_1 = arith.constant 0 : i32
    return %c0_i32, %c0_i32_0 : i32, i32
  }
  func.func @transform_4(%arg0: i32) -> (i32, i32) {
    %c0_i32 = arith.constant 0 : i32
    %c0_i32_0 = arith.constant 0 : i32
    %c0_i32_1 = arith.constant 0 : i32
    return %c0_i32, %c0_i32_0 : i32, i32
  }
  func.func @transform_5(%arg0: i32) -> (i32, i32, i32) {
    %c0_i32 = arith.constant 0 : i32
    %c0_i32_0 = arith.constant 0 : i32
    %c0_i32_1 = arith.constant 0 : i32
    %c0_i32_2 = arith.constant 0 : i32
    return %c0_i32, %c0_i32_0, %c0_i32_1 : i32, i32, i32
  }
  func.func @transform_6(%arg0: i32) -> (i32, i32, i32) {
    %c0_i32 = arith.constant 0 : i32
    %c0_i32_0 = arith.constant 0 : i32
    %c0_i32_1 = arith.constant 0 : i32
    return %arg0, %c0_i32, %c0_i32_0 : i32, i32, i32
  }
}

</mosaic_0001>

<llo_original>
// kernel: encapsule_forward.1
$region0: #{encapsule_forward.1}
  #allocation0 [shape = 'u32[]', space=smem, size = 0x4, offset = 0x4, fixed_abs, tag = 'smem constant byte address 0x4 - core index']
  #allocation1 [shape = 'u32[144,128]{1,0:T(1,128)}', space=vmem, size = 0x12000, scoped, tag = 'internal scratch']
  #allocation2 [shape = 'f32[232,8]{1,0:T(8,128)}', space=vmem, size = 0x1d000, scoped, tag = 'scratch operand']
  %s0 = inlined_call_operand.vmem [shape: f32[2,272,4], index: 0, kind: input, shape index: {}]
  %s1 = inlined_call_operand.vmem [shape: f32[36,8], index: 1, kind: input, shape index: {}]
  %s2 = inlined_call_operand.vmem [shape: f32[1,8], index: 2, kind: input, shape index: {}]
  %s3 = inlined_call_operand.vmem [shape: f32[72,128], index: 3, kind: input, shape index: {}]
  %s4 = inlined_call_operand.vmem [shape: f32[1,128], index: 4, kind: input, shape index: {}]
  %s5 = inlined_call_operand.vmem [shape: f32[4,36,192], index: 5, kind: input, shape index: {}]
  %s6 = inlined_call_operand.vmem [shape: f32[2,36,128], index: 6, kind: output, shape index: {}]
  %s7 = sld [smem:[#allocation0]]
  $region57: #{encapsule_forward.1} parent=0
    _
  %s9 = ssub.s32 1, %s7
  %s10 = scalar_select 0, %s9, %s7
  loop: start=0, step=1, limit=4
  $region2: #{encapsule_forward.1} parent=0 // loop_pre_header
    _
  $region3: #{encapsule_forward.1} parent=0 // loop_header
    %s12 = sphi 0, %s16
    %p13 = scmp.ge.s32.totalorder %s12, 4
    %s22 = sphi 0, %s24
    %s25 = sphi 0, %s22
    %s26 = sphi 0, %s25
    %s42 = sphi 0, %s26
    %s46 = sphi 0, %s46
    %s48 = sphi 0, %s46
    %s49 = sphi 0, %s48
    %s63 = sphi 0, %s49
    %s67 = sphi 0, %s67
    %s69 = sphi 0, %s67
    %s70 = sphi 0, %s69
    %s84 = sphi 0, %s70
    %s88 = sphi 0, %s88
    %s90 = sphi 0, %s88
    %s91 = sphi 0, %s90
    %s105 = sphi 0, %s91
    %s109 = sphi 0, %s109
    %s111 = sphi 0, %s109
    %s112 = sphi 0, %s111
    %s126 = sphi 0, %s112
    %s130 = sphi 0, %s130
    %s132 = sphi 0, %s130
    %s133 = sphi 0, %s132
    %s147 = sphi 0, %s133
    %s153 = sphi 0, %s155
    %s156 = sphi 0, %s153
    %s157 = sphi 0, %s156
    %s173 = sphi 0, %s157
  $region4: #{encapsule_forward.1} parent=0 // loop_header_branch
    %15 = sbr.rel (%p13) target = $region8
  $region5: #{encapsule_forward.1} parent=0 // loop_body
    %s17 = ssub.s32 %s12, 1
    %s18 = ssub.s32 %s12, 2
    %s19 = sadd.s32 %s12, 1
    %s20 = ssub.s32 %s12, %s19
    %p21 = scmp.eq.s32.totalorder %s20, 0
    %s23 = sadd.s32 %s22, 1
    %s24 = scalar_select %p21, %s22, %s23
    %p27 = pneg %p21
    %p28 = scmp.eq.s32.totalorder %s12, 1
    %p29 = por %p27, %p28
    %p30 = scmp.ne.s32.totalorder %s22, %s25
    %p31 = scmp.eq.s32.totalorder %s12, 0
    %p32 = por %p30, %p31
    %p33 = scmp.ne.s32.totalorder %s22, %s25
    %p34 = scmp.eq.s32.totalorder %s17, 1
    %p35 = por %p33, %p34
    %p36 = scmp.ne.s32.totalorder %s25, %s26
    %p37 = scmp.eq.s32.totalorder %s17, 0
    %p38 = por %p36, %p37
    %p39 = scmp.ne.s32.totalorder %s25, %s26
    %p40 = scmp.eq.s32.totalorder %s18, 1
    %p41 = por %p39, %p40
    %p43 = scmp.ne.s32.totalorder %s26, %s42
    %p44 = scmp.eq.s32.totalorder %s18, 0
    %p45 = por %p43, %p44
    %s47 = sadd.s32 %s46, 1
    %p50 = scmp.eq.s32.totalorder %s12, 1
    %p51 = scmp.ne.s32.totalorder %s46, %s48
    %p52 = scmp.eq.s32.totalorder %s12, 0
    %p53 = por %p51, %p52
    %p54 = scmp.ne.s32.totalorder %s46, %s48
    %p55 = scmp.eq.s32.totalorder %s17, 1
    %p56 = por %p54, %p55
    %p57 = scmp.ne.s32.totalorder %s48, %s49
    %p58 = scmp.eq.s32.totalorder %s17, 0
    %p59 = por %p57, %p58
    %p60 = scmp.ne.s32.totalorder %s48, %s49
    %p61 = scmp.eq.s32.totalorder %s18, 1
    %p62 = por %p60, %p61
    %p64 = scmp.ne.s32.totalorder %s49, %s63
    %p65 = scmp.eq.s32.totalorder %s18, 0
    %p66 = por %p64, %p65
    %s68 = sadd.s32 %s67, 1
    %p71 = scmp.eq.s32.totalorder %s12, 1
    %p72 = scmp.ne.s32.totalorder %s67, %s69
    %p73 = scmp.eq.s32.totalorder %s12, 0
    %p74 = por %p72, %p73
    %p75 = scmp.ne.s32.totalorder %s67, %s69
    %p76 = scmp.eq.s32.totalorder %s17, 1
    %p77 = por %p75, %p76
    %p78 = scmp.ne.s32.totalorder %s69, %s70
    %p79 = scmp.eq.s32.totalorder %s17, 0
    %p80 = por %p78, %p79
    %p81 = scmp.ne.s32.totalorder %s69, %s70
    %p82 = scmp.eq.s32.totalorder %s18, 1
    %p83 = por %p81, %p82
    %p85 = scmp.ne.s32.totalorder %s70, %s84
    %p86 = scmp.eq.s32.totalorder %s18, 0
    %p87 = por %p85, %p86
    %s89 = sadd.s32 %s88, 1
    %p92 = scmp.eq.s32.totalorder %s12, 1
    %p93 = scmp.ne.s32.totalorder %s88, %s90
    %p94 = scmp.eq.s32.totalorder %s12, 0
    %p95 = por %p93, %p94
    %p96 = scmp.ne.s32.totalorder %s88, %s90
    %p97 = scmp.eq.s32.totalorder %s17, 1
    %p98 = por %p96, %p97
    %p99 = scmp.ne.s32.totalorder %s90, %s91
    %p100 = scmp.eq.s32.totalorder %s17, 0
    %p101 = por %p99, %p100
    %p102 = scmp.ne.s32.totalorder %s90, %s91
    %p103 = scmp.eq.s32.totalorder %s18, 1
    %p104 = por %p102, %p103
    %p106 = scmp.ne.s32.totalorder %s91, %s105
    %p107 = scmp.eq.s32.totalorder %s18, 0
    %p108 = por %p106, %p107
    %s110 = sadd.s32 %s109, 1
    %p113 = scmp.eq.s32.totalorder %s12, 1
    %p114 = scmp.ne.s32.totalorder %s109, %s111
    %p115 = scmp.eq.s32.totalorder %s12, 0
    %p116 = por %p114, %p115
    %p117 = scmp.ne.s32.totalorder %s109, %s111
    %p118 = scmp.eq.s32.totalorder %s17, 1
    %p119 = por %p117, %p118
    %p120 = scmp.ne.s32.totalorder %s111, %s112
    %p121 = scmp.eq.s32.totalorder %s17, 0
    %p122 = por %p120, %p121
    %p123 = scmp.ne.s32.totalorder %s111, %s112
    %p124 = scmp.eq.s32.totalorder %s18, 1
    %p125 = por %p123, %p124
    %p127 = scmp.ne.s32.totalorder %s112, %s126
    %p128 = scmp.eq.s32.totalorder %s18, 0
    %p129 = por %p127, %p128
    %s131 = sadd.s32 %s130, 1
    %p134 = scmp.eq.s32.totalorder %s12, 1
    %p135 = scmp.ne.s32.totalorder %s130, %s132
    %p136 = scmp.eq.s32.totalorder %s12, 0
    %p137 = por %p135, %p136
    %p138 = scmp.ne.s32.totalorder %s130, %s132
    %p139 = scmp.eq.s32.totalorder %s17, 1
    %p140 = por %p138, %p139
    %p141 = scmp.ne.s32.totalorder %s132, %s133
    %p142 = scmp.eq.s32.totalorder %s17, 0
    %p143 = por %p141, %p142
    %p144 = scmp.ne.s32.totalorder %s132, %s133
    %p145 = scmp.eq.s32.totalorder %s18, 1
    %p146 = por %p144, %p145
    %p148 = scmp.ne.s32.totalorder %s133, %s147
    %p149 = scmp.eq.s32.totalorder %s18, 0
    %p150 = por %p148, %p149
    %s151 = ssub.s32 %s12, %s19
    %p152 = scmp.eq.s32.totalorder %s151, 0
    %s154 = sadd.s32 %s153, 1
    %s155 = scalar_select %p152, %s153, %s154
    %p158 = pneg %p152
    %p159 = scmp.eq.s32.totalorder %s12, 1
    %p160 = por %p158, %p159
    %p161 = scmp.ne.s32.totalorder %s153, %s156
    %p162 = scmp.eq.s32.totalorder %s12, 0
    %p163 = por %p161, %p162
    %p164 = scmp.ne.s32.totalorder %s153, %s156
    %p165 = scmp.eq.s32.totalorder %s17, 1
    %p166 = por %p164, %p165
    %p167 = scmp.ne.s32.totalorder %s156, %s157
    %p168 = scmp.eq.s32.totalorder %s17, 0
    %p169 = por %p167, %p168
    %p170 = scmp.ne.s32.totalorder %s156, %s157
    %p171 = scmp.eq.s32.totalorder %s18, 1
    %p172 = por %p170, %p171
    %p174 = scmp.ne.s32.totalorder %s157, %s173
    %p175 = scmp.eq.s32.totalorder %s18, 0
    %p176 = por %p174, %p175
    %p177 = scmp.le.s32.totalorder 1, %s12
    %p178 = scmp.lt.s32.totalorder %s12, 3
    %p179 = pnand %p177, %p178
    %p180 = pneg %p179
    // Predicated region
    $region9: #{encapsule_forward.1} parent=5 // pred_check
      _
    $region10: #{encapsule_forward.1} parent=5 // pred_check_branch
      %182 = sbr.rel (%p179) target = $region12
    $region11: #{encapsule_forward.1} parent=5 // pred_region
      %s183 = ssub.s32 %s12, 1
      // Predicated region
      $region13: #{encapsule_forward.1} parent=11 // pred_check
        %p184 = pneg %p59
      $region14: #{encapsule_forward.1} parent=11 // pred_check_branch
        %186 = sbr.rel (%p184) target = $region16
      $region15: #{encapsule_forward.1} parent=11 // pred_region
        _
      $region16: #{encapsule_forward.1} parent=11 // pred_fallthru
        _
      // Predicated region
      $region17: #{encapsule_forward.1} parent=11 // pred_check
        %p187 = pneg %p80
      $region18: #{encapsule_forward.1} parent=11 // pred_check_branch
        %189 = sbr.rel (%p187) target = $region20
      $region19: #{encapsule_forward.1} parent=11 // pred_region
        _
      $region20: #{encapsule_forward.1} parent=11 // pred_fallthru
        _
      // Predicated region
      $region21: #{encapsule_forward.1} parent=11 // pred_check
        %p190 = pneg %p101
      $region22: #{encapsule_forward.1} parent=11 // pred_check_branch
        %192 = sbr.rel (%p190) target = $region24
      $region23: #{encapsule_forward.1} parent=11 // pred_region
        _
      $region24: #{encapsule_forward.1} parent=11 // pred_fallthru
        _
      // Predicated region
      $region25: #{encapsule_forward.1} parent=11 // pred_check
        %p193 = pneg %p122
      $region26: #{encapsule_forward.1} parent=11 // pred_check_branch
        %195 = sbr.rel (%p193) target = $region28
      $region27: #{encapsule_forward.1} parent=11 // pred_region
        _
      $region28: #{encapsule_forward.1} parent=11 // pred_fallthru
        _
      // Predicated region
      $region29: #{encapsule_forward.1} parent=11 // pred_check
        %p196 = pneg %p143
      $region30: #{encapsule_forward.1} parent=11 // pred_check_branch
        %198 = sbr.rel (%p196) target = $region32
      $region31: #{encapsule_forward.1} parent=11 // pred_region
        _
      $region32: #{encapsule_forward.1} parent=11 // pred_fallthru
        _
    $region12: #{encapsule_forward.1} parent=5 // pred_fallthru
      _
    %p199 = scmp.lt.s32.totalorder %s12, 2
    // Predicated region
    $region33: #{encapsule_forward.1} parent=5 // pred_check
      %p200 = pneg %p199
    $region34: #{encapsule_forward.1} parent=5 // pred_check_branch
      %202 = sbr.rel (%p200) target = $region36
    $region35: #{encapsule_forward.1} parent=5 // pred_region
      // Predicated region
      $region37: #{encapsule_forward.1} parent=35 // pred_check
        %p203 = pneg %p32
      $region38: #{encapsule_forward.1} parent=35 // pred_check_branch
        %205 = sbr.rel (%p203) target = $region40
      $region39: #{encapsule_forward.1} parent=35 // pred_region
        %p206 = scmp.lt.s32.totalorder %s12, 1
        %s207 = scalar_select %p206, %s12, 1
        %s208 = smul.addr %s207, 34
        %s209 = smul.addr %s208, 8
        %s210 = scalar_lea.vmem %s0, %s209
      $region40: #{encapsule_forward.1} parent=35 // pred_fallthru
        _
    $region36: #{encapsule_forward.1} parent=5 // pred_fallthru
      _
    %p211 = scmp.le.s32.totalorder 1, %s12
    %p212 = scmp.lt.s32.totalorder %s12, 3
    %p213 = pnand %p211, %p212
    %p214 = pneg %p213
    // Predicated region
    $region41: #{encapsule_forward.1} parent=5 // pred_check
      _
    $region42: #{encapsule_forward.1} parent=5 // pred_check_branch
      %216 = sbr.rel (%p213) target = $region44
    $region43: #{encapsule_forward.1} parent=5 // pred_region
      %s217 = ssub.s32 %s12, 1
      %p218 = scmp.lt.s32.totalorder %s17, 1
      %s219 = scalar_select %p218, %s17, 1
      %s220 = smul.addr %s219, 34
      %s221 = smul.addr %s220, 8
      %s222 = scalar_lea.vmem %s0, %s221
      %p223 = pneg %p38
      %p224 = pneg %p35
      %p225 = pneg %p59
      %p226 = pneg %p56
      %p227 = pneg %p80
      %p228 = pneg %p77
      %p229 = pneg %p101
      %p230 = pneg %p98
      %p231 = pneg %p122
      %p232 = pneg %p119
      %p233 = pneg %p143
      %p234 = pneg %p140
      %p235 = pneg %p169
      %p236 = pneg %p166
      %p237 = scmp.lt.s32.totalorder %s17, 1
      %s238 = scalar_select %p237, %s17, 1
      %s239 = smul.addr %s238, 5
      %s240 = smul.addr %s239, 8
      %s241 = scalar_lea.vmem %s6, %s240
      %p242 = scmp.lt.s32.totalorder %s17, 1
      %s243 = scalar_select %p242, %s17, 1
      %s244 = smul.addr %s243, 34
      %s245 = smul.addr %s244, 8
      %s246 = scalar_lea.vmem %s0, %s245
      %p247 = scmp.lt.s32.totalorder %s17, 1
      %s248 = scalar_select %p247, %s17, 1
      %s249 = smul.addr %s248, 5
      %s250 = smul.addr %s249, 8
      %s251 = scalar_lea.vmem %s6, %s250
      %v252 = vld [vmem:[%s246] sm:$0xff]
      %v253 = vld [vmem:[%s246 + $0x8] sm:$0xff]
      %v254 = vld [vmem:[%s246 + $0x10] sm:$0xff]
      %v255 = vld [vmem:[%s246 + $0x18] sm:$0xff]
      %v256 = vld [vmem:[%s246 + $0x20] sm:$0xff]
      %v257 = vld [vmem:[%s246 + $0x28] sm:$0xff]
      %v258 = vld [vmem:[%s246 + $0x30] sm:$0xff]
      %v259 = vld [vmem:[%s246 + $0x38] sm:$0xff]
      %v260 = vld [vmem:[%s246 + $0x40] sm:$0xff]
      %v261 = vld [vmem:[%s246 + $0x48] sm:$0xff]
      %v262 = vld [vmem:[%s246 + $0x50] sm:$0xff]
      %v263 = vld [vmem:[%s246 + $0x58] sm:$0xff]
      %v264 = vld [vmem:[%s246 + $0x60] sm:$0xff]
      %v265 = vld [vmem:[%s246 + $0x68] sm:$0xff]
      %v266 = vld [vmem:[%s246 + $0x70] sm:$0xff]
      %v267 = vld [vmem:[%s246 + $0x78] sm:$0xff]
      %v268 = vld [vmem:[%s246 + $0x80] sm:$0xff]
      %v269 = vld [vmem:[%s246 + $0x88] sm:$0xff]
      %v270 = vld [vmem:[%s246 + $0x90] sm:$0xff]
      %v271 = vld [vmem:[%s246 + $0x98] sm:$0xff]
      %v272 = vld [vmem:[%s246 + $0xa0] sm:$0xff]
      %v273 = vld [vmem:[%s246 + $0xa8] sm:$0xff]
      %v274 = vld [vmem:[%s246 + $0xb0] sm:$0xff]
      %v275 = vld [vmem:[%s246 + $0xb8] sm:$0xff]
      %v276 = vld [vmem:[%s246 + $0xc0] sm:$0xff]
      %v277 = vld [vmem:[%s246 + $0xc8] sm:$0xff]
      %v278 = vld [vmem:[%s246 + $0xd0] sm:$0xff]
      %v279 = vld [vmem:[%s246 + $0xd8] sm:$0xff]
      %v280 = vld [vmem:[%s246 + $0xe0] sm:$0xff]
      %v281 = vld [vmem:[%s1] sm:$0xf]
      %v282 = vld [vmem:[%s246 + $0x1] sm:$0xff]
      %v283 = vld [vmem:[%s246 + $0x9] sm:$0xff]
      %v284 = vld [vmem:[%s246 + $0x11] sm:$0xff]
      %v285 = vld [vmem:[%s246 + $0x19] sm:$0xff]
      %v286 = vld [vmem:[%s246 + $0x21] sm:$0xff]
      %v287 = vld [vmem:[%s246 + $0x29] sm:$0xff]
      %v288 = vld [vmem:[%s246 + $0x31] sm:$0xff]
      %v289 = vld [vmem:[%s246 + $0x39] sm:$0xff]
      %v290 = vld [vmem:[%s246 + $0x41] sm:$0xff]
      %v291 = vld [vmem:[%s246 + $0x49] sm:$0xff]
      %v292 = vld [vmem:[%s246 + $0x51] sm:$0xff]
      %v293 = vld [vmem:[%s246 + $0x59] sm:$0xff]
      %v294 = vld [vmem:[%s246 + $0x61] sm:$0xff]
      %v295 = vld [vmem:[%s246 + $0x69] sm:$0xff]
      %v296 = vld [vmem:[%s246 + $0x71] sm:$0xff]
      %v297 = vld [vmem:[%s246 + $0x79] sm:$0xff]
      %v298 = vld [vmem:[%s246 + $0x81] sm:$0xff]
      %v299 = vld [vmem:[%s246 + $0x89] sm:$0xff]
      %v300 = vld [vmem:[%s246 + $0x91] sm:$0xff]
      %v301 = vld [vmem:[%s246 + $0x99] sm:$0xff]
      %v302 = vld [vmem:[%s246 + $0xa1] sm:$0xff]
      %v303 = vld [vmem:[%s246 + $0xa9] sm:$0xff]
      %v304 = vld [vmem:[%s246 + $0xb1] sm:$0xff]
      %v305 = vld [vmem:[%s246 + $0xb9] sm:$0xff]
      %v306 = vld [vmem:[%s246 + $0xc1] sm:$0xff]
      %v307 = vld [vmem:[%s246 + $0xc9] sm:$0xff]
      %v308 = vld [vmem:[%s246 + $0xd1] sm:$0xff]
      %v309 = vld [vmem:[%s246 + $0xd9] sm:$0xff]
      %v310 = vld [vmem:[%s246 + $0xe1] sm:$0xff]
      %v311 = vld [vmem:[%s1 + $0x4] sm:$0xf]
      %vm312 = vcmask 31744
      %v314 = vsel %vm312, %v282, 0
      %v317 = vsel %vm312, %v283, 0
      %v320 = vsel %vm312, %v284, 0
      %v323 = vsel %vm312, %v285, 0
      %v326 = vsel %vm312, %v286, 0
      %v329 = vsel %vm312, %v287, 0
      %v332 = vsel %vm312, %v288, 0
      %v335 = vsel %vm312, %v289, 0
      %v338 = vsel %vm312, %v290, 0
      %v341 = vsel %vm312, %v291, 0
      %v344 = vsel %vm312, %v292, 0
      %v347 = vsel %vm312, %v293, 0
      %v350 = vsel %vm312, %v294, 0
      %v353 = vsel %vm312, %v295, 0
      %v356 = vsel %vm312, %v296, 0
      %v359 = vsel %vm312, %v297, 0
      %v362 = vsel %vm312, %v298, 0
      %v365 = vsel %vm312, %v299, 0
      %v368 = vsel %vm312, %v300, 0
      %v371 = vsel %vm312, %v301, 0
      %v374 = vsel %vm312, %v302, 0
      %v377 = vsel %vm312, %v303, 0
      %v380 = vsel %vm312, %v304, 0
      %v383 = vsel %vm312, %v305, 0
      %v386 = vsel %vm312, %v306, 0
      %v389 = vsel %vm312, %v307, 0
      %v392 = vsel %vm312, %v308, 0
      %v395 = vsel %vm312, %v309, 0
      %v398 = vsel %vm312, %v310, 0
      %vm400 = vcmask 1043456
      %v402 = vsel %vm400, %v311, 0
      %404 = vmatprep.subr.mxu0 0.0
      %405 = vmatpush1.msra.mxu0 %v402
      %406 = vmatprep.subr.mxu0 0.0
      %407 = vmatpush1.msra.mxu0 0.0
      %408 = vmatprep.subr.mxu0 0.0
      %409 = vmatpush1.msra.mxu0 0.0
      %410 = vmatprep.subr.mxu0 0.0
      %411 = vmatpush1.msra.mxu0 0.0
      %412 = vmatprep.subr.mxu0 0.0
      %413 = vmatpush1.msra.mxu0 0.0
      %414 = vmatprep.subr.mxu0 0.0
      %415 = vmatpush1.msra.mxu0 0.0
      %416 = vmatprep.subr.mxu0 0.0
      %417 = vmatpush1.msra.mxu0 0.0
      %418 = vmatprep.subr.mxu0 0.0
      %419 = vmatpush1.msra.mxu0 0.0
      %420 = vmatprep.subr.mxu0 0.0
      %421 = vmatpush1.msra.mxu0 0.0
      %422 = vmatprep.subr.mxu0 0.0
      %423 = vmatpush1.msra.mxu0 0.0
      %424 = vmatprep.subr.mxu0 0.0
      %425 = vmatpush1.msra.mxu0 0.0
      %426 = vmatprep.subr.mxu0 0.0
      %427 = vmatpush1.msra.mxu0 0.0
      %428 = vmatprep.subr.mxu0 0.0
      %429 = vmatpush1.msra.mxu0 0.0
      %430 = vmatprep.subr.mxu0 0.0
      %431 = vmatpush1.msra.mxu0 0.0
      %432 = vmatprep.subr.mxu0 0.0
      %433 = vmatpush1.msra.mxu0 0.0
      %434 = vmatprep.subr.mxu0 0.0
      %435 = vmatpush1.msra.mxu0 0.0
      %436 = vmatprep.subr.mxu0 0.0
      %437 = vmatpush1.msra.mxu0 0.0
      %438 = vmatprep.subr.mxu0 0.0
      %439 = vmatpush1.msra.mxu0 0.0
      %440 = vmatprep.subr.mxu0 0.0
      %441 = vmatpush1.msra.mxu0 0.0
      %442 = vmatprep.subr.mxu0 0.0
      %443 = vmatpush1.msra.mxu0 0.0
      %444 = vmatprep.subr.mxu0 0.0
      %445 = vmatpush1.msra.mxu0 0.0
      %446 = vmatprep.subr.mxu0 0.0
      %447 = vmatpush1.msra.mxu0 0.0
      %448 = vmatprep.subr.mxu0 0.0
      %449 = vmatpush1.msra.mxu0 0.0
      %450 = vmatprep.subr.mxu0 0.0
      %451 = vmatpush1.msra.mxu0 0.0
      %452 = vmatprep.subr.mxu0 0.0
      %453 = vmatpush1.msra.mxu0 0.0
      %454 = vmatprep.subr.mxu0 0.0
      %455 = vmatpush1.msra.mxu0 0.0
      %456 = vmatprep.subr.mxu0 0.0
      %457 = vmatpush1.msra.mxu0 0.0
      %458 = vmatprep.subr.mxu0 0.0
      %459 = vmatpush1.msra.mxu0 0.0
      %460 = vmatprep.subr.mxu0 0.0
      %461 = vmatpush1.msra.mxu0 0.0
      %462 = vmatprep.subr.mxu0 0.0
      %463 = vmatpush1.msra.mxu0 0.0
      %464 = vmatprep.subr.mxu0 0.0
      %465 = vmatpush1.msra.mxu0 0.0
      %466 = vmatprep.subr.mxu0 0.0
      %467 = vmatpush1.msra.mxu0 0.0
      %468 = vmatprep.mubr.f32.mxu0 0.0
      %469 = vmatmul.mubr.f32.gmra.mrb[0].mxu0 %v314
      %v470 = vpop.f32.mrb[0].mxu0
      %v471 = vadd.f32 0.0, %v470
      %v472 = vpop.f32.mrb[0].mxu0
      %473 = vmatprep.mubr.f32.mxu0 0.0
      %474 = vmatmul.mubr.f32.gmra.mrb[0].mxu0 %v317
      %v475 = vpop.f32.mrb[0].mxu0
      %v476 = vadd.f32 0.0, %v475
      %v477 = vpop.f32.mrb[0].mxu0
      %478 = vmatprep.mubr.f32.mxu0 0.0
      %479 = vmatmul.mubr.f32.gmra.mrb[0].mxu0 %v320
      %v480 = vpop.f32.mrb[0].mxu0
      %v481 = vadd.f32 0.0, %v480
      %v482 = vpop.f32.mrb[0].mxu0
      %483 = vmatprep.mubr.f32.mxu0 0.0
      %484 = vmatmul.mubr.f32.gmra.mrb[0].mxu0 %v323
      %v485 = vpop.f32.mrb[0].mxu0
      %v486 = vadd.f32 0.0, %v485
      %v487 = vpop.f32.mrb[0].mxu0
      %488 = vmatprep.mubr.f32.mxu0 0.0
      %489 = vmatmul.mubr.f32.gmra.mrb[0].mxu0 %v326
      %v490 = vpop.f32.mrb[0].mxu0
      %v491 = vadd.f32 0.0, %v490
      %v492 = vpop.f32.mrb[0].mxu0
      %493 = vmatprep.mubr.f32.mxu0 0.0
      %494 = vmatmul.mubr.f32.gmra.mrb[0].mxu0 %v329
      %v495 = vpop.f32.mrb[0].mxu0
      %v496 = vadd.f32 0.0, %v495
      %v497 = vpop.f32.mrb[0].mxu0
      %498 = vmatprep.mubr.f32.mxu0 0.0
      %499 = vmatmul.mubr.f32.gmra.mrb[0].mxu0 %v332
      %v500 = vpop.f32.mrb[0].mxu0
      %v501 = vadd.f32 0.0, %v500
      %v502 = vpop.f32.mrb[0].mxu0
      %503 = vmatprep.mubr.f32.mxu0 0.0
      %504 = vmatmul.mubr.f32.gmra.mrb[0].mxu0 %v335
      %v505 = vpop.f32.mrb[0].mxu0
      %v506 = vadd.f32 0.0, %v505
      %v507 = vpop.f32.mrb[0].mxu0
      %508 = vmatprep.mubr.f32.mxu0 0.0
      %509 = vmatmul.mubr.f32.gmra.mrb[0].mxu0 %v338
      %v510 = vpop.f32.mrb[0].mxu0
      %v511 = vadd.f32 0.0, %v510
      %v512 = vpop.f32.mrb[0].mxu0
      %513 = vmatprep.mubr.f32.mxu0 0.0
      %514 = vmatmul.mubr.f32.gmra.mrb[0].mxu0 %v341
      %v515 = vpop.f32.mrb[0].mxu0
      %v516 = vadd.f32 0.0, %v515
      %v517 = vpop.f32.mrb[0].mxu0
      %518 = vmatprep.mubr.f32.mxu0 0.0
      %519 = vmatmul.mubr.f32.gmra.mrb[0].mxu0 %v344
      %v520 = vpop.f32.mrb[0].mxu0
      %v521 = vadd.f32 0.0, %v520
      %v522 = vpop.f32.mrb[0].mxu0
      %523 = vmatprep.mubr.f32.mxu0 0.0
      %524 = vmatmul.mubr.f32.gmra.mrb[0].mxu0 %v347
      %v525 = vpop.f32.mrb[0].mxu0
      %v526 = vadd.f32 0.0, %v525
      %v527 = vpop.f32.mrb[0].mxu0
      %528 = vmatprep.mubr.f32.mxu0 0.0
      %529 = vmatmul.mubr.f32.gmra.mrb[0].mxu0 %v350
      %v530 = vpop.f32.mrb[0].mxu0
      %v531 = vadd.f32 0.0, %v530
      %v532 = vpop.f32.mrb[0].mxu0
      %533 = vmatprep.mubr.f32.mxu0 0.0
      %534 = vmatmul.mubr.f32.gmra.mrb[0].mxu0 %v353
      %v535 = vpop.f32.mrb[0].mxu0
      %v536 = vadd.f32 0.0, %v535
      %v537 = vpop.f32.mrb[0].mxu0
      %538 = vmatprep.mubr.f32.mxu0 0.0
      %539 = vmatmul.mubr.f32.gmra.mrb[0].mxu0 %v356
      %v540 = vpop.f32.mrb[0].mxu0
      %v541 = vadd.f32 0.0, %v540
      %v542 = vpop.f32.mrb[0].mxu0
      %543 = vmatprep.mubr.f32.mxu0 0.0
      %544 = vmatmul.mubr.f32.gmra.mrb[0].mxu0 %v359
      %v545 = vpop.f32.mrb[0].mxu0
      %v546 = vadd.f32 0.0, %v545
      %v547 = vpop.f32.mrb[0].mxu0
      %548 = vmatprep.mubr.f32.mxu0 0.0
      %549 = vmatmul.mubr.f32.gmra.mrb[0].mxu0 %v362
      %v550 = vpop.f32.mrb[0].mxu0
      %v551 = vadd.f32 0.0, %v550
      %v552 = vpop.f32.mrb[0].mxu0
      %553 = vmatprep.mubr.f32.mxu0 0.0
      %554 = vmatmul.mubr.f32.gmra.mrb[0].mxu0 %v365
      %v555 = vpop.f32.mrb[0].mxu0
      %v556 = vadd.f32 0.0, %v555
      %v557 = vpop.f32.mrb[0].mxu0
      %558 = vmatprep.mubr.f32.mxu0 0.0
      %559 = vmatmul.mubr.f32.gmra.mrb[0].mxu0 %v368
      %v560 = vpop.f32.mrb[0].mxu0
      %v561 = vadd.f32 0.0, %v560
      %v562 = vpop.f32.mrb[0].mxu0
      %563 = vmatprep.mubr.f32.mxu0 0.0
      %564 = vmatmul.mubr.f32.gmra.mrb[0].mxu0 %v371
      %v565 = vpop.f32.mrb[0].mxu0
      %v566 = vadd.f32 0.0, %v565
      %v567 = vpop.f32.mrb[0].mxu0
      %568 = vmatprep.mubr.f32.mxu0 0.0
      %569 = vmatmul.mubr.f32.gmra.mrb[0].mxu0 %v374
      %v570 = vpop.f32.mrb[0].mxu0
      %v571 = vadd.f32 0.0, %v570
      %v572 = vpop.f32.mrb[0].mxu0
      %573 = vmatprep.mubr.f32.mxu0 0.0
      %574 = vmatmul.mubr.f32.gmra.mrb[0].mxu0 %v377
      %v575 = vpop.f32.mrb[0].mxu0
      %v576 = vadd.f32 0.0, %v575
      %v577 = vpop.f32.mrb[0].mxu0
      %578 = vmatprep.mubr.f32.mxu0 0.0
      %579 = vmatmul.mubr.f32.gmra.mrb[0].mxu0 %v380
      %v580 = vpop.f32.mrb[0].mxu0
      %v581 = vadd.f32 0.0, %v580
      %v582 = vpop.f32.mrb[0].mxu0
      %583 = vmatprep.mubr.f32.mxu0 0.0
      %584 = vmatmul.mubr.f32.gmra.mrb[0].mxu0 %v383
      %v585 = vpop.f32.mrb[0].mxu0
      %v586 = vadd.f32 0.0, %v585
      %v587 = vpop.f32.mrb[0].mxu0
      %588 = vmatprep.mubr.f32.mxu0 0.0
      %589 = vmatmul.mubr.f32.gmra.mrb[0].mxu0 %v386
      %v590 = vpop.f32.mrb[0].mxu0
      %v591 = vadd.f32 0.0, %v590
      %v592 = vpop.f32.mrb[0].mxu0
      %593 = vmatprep.mubr.f32.mxu0 0.0
      %594 = vmatmul.mubr.f32.gmra.mrb[0].mxu0 %v389
      %v595 = vpop.f32.mrb[0].mxu0
      %v596 = vadd.f32 0.0, %v595
      %v597 = vpop.f32.mrb[0].mxu0
      %598 = vmatprep.mubr.f32.mxu0 0.0
      %599 = vmatmul.mubr.f32.gmra.mrb[0].mxu0 %v392
      %v600 = vpop.f32.mrb[0].mxu0
      %v601 = vadd.f32 0.0, %v600
      %v602 = vpop.f32.mrb[0].mxu0
      %603 = vmatprep.mubr.f32.mxu0 0.0
      %604 = vmatmul.mubr.f32.gmra.mrb[0].mxu0 %v395
      %v605 = vpop.f32.mrb[0].mxu0
      %v606 = vadd.f32 0.0, %v605
      %v607 = vpop.f32.mrb[0].mxu0
      %608 = vmatprep.mubr.f32.mxu0 0.0
      %609 = vmatmul.mubr.f32.gmra.mrb[0].mxu0 %v398
      %v610 = vpop.f32.mrb[0].mxu0
      %v611 = vadd.f32 0.0, %v610
      %v612 = vpop.f32.mrb[0].mxu0
      %613 = vdwg.mxu0
      %v615 = vsel %vm312, %v252, 0
      %v618 = vsel %vm312, %v253, 0
      %v621 = vsel %vm312, %v254, 0
      %v624 = vsel %vm312, %v255, 0
      %v627 = vsel %vm312, %v256, 0
      %v630 = vsel %vm312, %v257, 0
      %v633 = vsel %vm312, %v258, 0
      %v636 = vsel %vm312, %v259, 0
      %v639 = vsel %vm312, %v260, 0
      %v642 = vsel %vm312, %v261, 0
      %v645 = vsel %vm312, %v262, 0
      %v648 = vsel %vm312, %v263, 0
      %v651 = vsel %vm312, %v264, 0
      %v654 = vsel %vm312, %v265, 0
      %v657 = vsel %vm312, %v266, 0
      %v660 = vsel %vm312, %v267, 0
      %v663 = vsel %vm312, %v268, 0
      %v666 = vsel %vm312, %v269, 0
      %v669 = vsel %vm312, %v270, 0
      %v672 = vsel %vm312, %v271, 0
      %v675 = vsel %vm312, %v272, 0
      %v678 = vsel %vm312, %v273, 0
      %v681 = vsel %vm312, %v274, 0
      %v684 = vsel %vm312, %v275, 0
      %v687 = vsel %vm312, %v276, 0
      %v690 = vsel %vm312, %v277, 0
      %v693 = vsel %vm312, %v278, 0
      %v696 = vsel %vm312, %v279, 0
      %v699 = vsel %vm312, %v280, 0
      %v702 = vsel %vm400, %v281, 0
      %704 = vmatprep.subr.mxu0 0.0
      %705 = vmatpush1.msra.mxu0 %v702
      %706 = vmatprep.subr.mxu0 0.0
      %707 = vmatpush1.msra.mxu0 0.0
      %708 = vmatprep.subr.mxu0 0.0
      %709 = vmatpush1.msra.mxu0 0.0
      %710 = vmatprep.subr.mxu0 0.0
      %711 = vmatpush1.msra.mxu0 0.0
      %712 = vmatprep.subr.mxu0 0.0
      %713 = vmatpush1.msra.mxu0 0.0
      %714 = vmatprep.subr.mxu0 0.0
      %715 = vmatpush1.msra.mxu0 0.0
      %716 = vmatprep.subr.mxu0 0.0
      %717 = vmatpush1.msra.mxu0 0.0
      %718 = vmatprep.subr.mxu0 0.0
      %719 = vmatpush1.msra.mxu0 0.0
      %720 = vmatprep.subr.mxu0 0.0
      %721 = vmatpush1.msra.mxu0 0.0
      %722 = vmatprep.subr.mxu0 0.0
      %723 = vmatpush1.msra.mxu0 0.0
      %724 = vmatprep.subr.mxu0 0.0
      %725 = vmatpush1.msra.mxu0 0.0
      %726 = vmatprep.subr.mxu0 0.0
      %727 = vmatpush1.msra.mxu0 0.0
      %728 = vmatprep.subr.mxu0 0.0
      %729 = vmatpush1.msra.mxu0 0.0
      %730 = vmatprep.subr.mxu0 0.0
      %731 = vmatpush1.msra.mxu0 0.0
      %732 = vmatprep.subr.mxu0 0.0
      %733 = vmatpush1.msra.mxu0 0.0
      %734 = vmatprep.subr.mxu0 0.0
      %735 = vmatpush1.msra.mxu0 0.0
      %736 = vmatprep.subr.mxu0 0.0
      %737 = vmatpush1.msra.mxu0 0.0
      %738 = vmatprep.subr.mxu0 0.0
      %739 = vmatpush1.msra.mxu0 0.0
      %740 = vmatprep.subr.mxu0 0.0
      %741 = vmatpush1.msra.mxu0 0.0
      %742 = vmatprep.subr.mxu0 0.0
      %743 = vmatpush1.msra.mxu0 0.0
      %744 = vmatprep.subr.mxu0 0.0
      %745 = vmatpush1.msra.mxu0 0.0
      %746 = vmatprep.subr.mxu0 0.0
      %747 = vmatpush1.msra.mxu0 0.0
      %748 = vmatprep.subr.mxu0 0.0
      %749 = vmatpush1.msra.mxu0 0.0
      %750 = vmatprep.subr.mxu0 0.0
      %751 = vmatpush1.msra.mxu0 0.0
      %752 = vmatprep.subr.mxu0 0.0
      %753 = vmatpush1.msra.mxu0 0.0
      %754 = vmatprep.subr.mxu0 0.0
      %755 = vmatpush1.msra.mxu0 0.0
      %756 = vmatprep.subr.mxu0 0.0
      %757 = vmatpush1.msra.mxu0 0.0
      %758 = vmatprep.subr.mxu0 0.0
      %759 = vmatpush1.msra.mxu0 0.0
      %760 = vmatprep.subr.mxu0 0.0
      %761 = vmatpush1.msra.mxu0 0.0
      %762 = vmatprep.subr.mxu0 0.0
      %763 = vmatpush1.msra.mxu0 0.0
      %764 = vmatprep.subr.mxu0 0.0
      %765 = vmatpush1.msra.mxu0 0.0
      %766 = vmatprep.subr.mxu0 0.0
      %767 = vmatpush1.msra.mxu0 0.0
      %768 = vmatprep.mubr.f32.mxu0 0.0
      %769 = vmatmul.mubr.f32.gmra.mrb[0].mxu0 %v615
      %v770 = vpop.f32.mrb[0].mxu0
      %v771 = vadd.f32 %v471, %v770
      %v772 = vpop.f32.mrb[0].mxu0
      %773 = vmatprep.mubr.f32.mxu0 0.0
      %774 = vmatmul.mubr.f32.gmra.mrb[0].mxu0 %v618
      %v775 = vpop.f32.mrb[0].mxu0
      %v776 = vadd.f32 %v476, %v775
      %v777 = vpop.f32.mrb[0].mxu0
      %778 = vmatprep.mubr.f32.mxu0 0.0
      %779 = vmatmul.mubr.f32.gmra.mrb[0].mxu0 %v621
      %v780 = vpop.f32.mrb[0].mxu0
      %v781 = vadd.f32 %v481, %v780
      %v782 = vpop.f32.mrb[0].mxu0
      %783 = vmatprep.mubr.f32.mxu0 0.0
      %784 = vmatmul.mubr.f32.gmra.mrb[0].mxu0 %v624
      %v785 = vpop.f32.mrb[0].mxu0
      %v786 = vadd.f32 %v486, %v785
      %v787 = vpop.f32.mrb[0].mxu0
      %788 = vmatprep.mubr.f32.mxu0 0.0
      %789 = vmatmul.mubr.f32.gmra.mrb[0].mxu0 %v627
      %v790 = vpop.f32.mrb[0].mxu0
      %v791 = vadd.f32 %v491, %v790
      %v792 = vpop.f32.mrb[0].mxu0
      %793 = vmatprep.mubr.f32.mxu0 0.0
      %794 = vmatmul.mubr.f32.gmra.mrb[0].mxu0 %v630
      %v795 = vpop.f32.mrb[0].mxu0
      %v796 = vadd.f32 %v496, %v795
      %v797 = vpop.f32.mrb[0].mxu0
      %798 = vmatprep.mubr.f32.mxu0 0.0
      %799 = vmatmul.mubr.f32.gmra.mrb[0].mxu0 %v633
      %v800 = vpop.f32.mrb[0].mxu0
      %v801 = vadd.f32 %v501, %v800
      %v802 = vpop.f32.mrb[0].mxu0
      %803 = vmatprep.mubr.f32.mxu0 0.0
      %804 = vmatmul.mubr.f32.gmra.mrb[0].mxu0 %v636
      %v805 = vpop.f32.mrb[0].mxu0
      %v806 = vadd.f32 %v506, %v805
      %v807 = vpop.f32.mrb[0].mxu0
      %808 = vmatprep.mubr.f32.mxu0 0.0
      %809 = vmatmul.mubr.f32.gmra.mrb[0].mxu0 %v639
      %v810 = vpop.f32.mrb[0].mxu0
      %v811 = vadd.f32 %v511, %v810
      %v812 = vpop.f32.mrb[0].mxu0
      %813 = vmatprep.mubr.f32.mxu0 0.0
      %814 = vmatmul.mubr.f32.gmra.mrb[0].mxu0 %v642
      %v815 = vpop.f32.mrb[0].mxu0
      %v816 = vadd.f32 %v516, %v815
      %v817 = vpop.f32.mrb[0].mxu0
      %818 = vmatprep.mubr.f32.mxu0 0.0
      %819 = vmatmul.mubr.f32.gmra.mrb[0].mxu0 %v645
      %v820 = vpop.f32.mrb[0].mxu0
      %v821 = vadd.f32 %v521, %v820
      %v822 = vpop.f32.mrb[0].mxu0
      %823 = vmatprep.mubr.f32.mxu0 0.0
      %824 = vmatmul.mubr.f32.gmra.mrb[0].mxu0 %v648
      %v825 = vpop.f32.mrb[0].mxu0
      %v826 = vadd.f32 %v526, %v825
      %v827 = vpop.f32.mrb[0].mxu0
      %828 = vmatprep.mubr.f32.mxu0 0.0
      %829 = vmatmul.mubr.f32.gmra.mrb[0].mxu0 %v651
      %v830 = vpop.f32.mrb[0].mxu0
      %v831 = vadd.f32 %v531, %v830
      %v832 = vpop.f32.mrb[0].mxu0
      %833 = vmatprep.mubr.f32.mxu0 0.0
      %834 = vmatmul.mubr.f32.gmra.mrb[0].mxu0 %v654
      %v835 = vpop.f32.mrb[0].mxu0
      %v836 = vadd.f32 %v536, %v835
      %v837 = vpop.f32.mrb[0].mxu0
      %838 = vmatprep.mubr.f32.mxu0 0.0
      %839 = vmatmul.mubr.f32.gmra.mrb[0].mxu0 %v657
      %v840 = vpop.f32.mrb[0].mxu0
      %v841 = vadd.f32 %v541, %v840
      %v842 = vpop.f32.mrb[0].mxu0
      %843 = vmatprep.mubr.f32.mxu0 0.0
      %844 = vmatmul.mubr.f32.gmra.mrb[0].mxu0 %v660
      %v845 = vpop.f32.mrb[0].mxu0
      %v846 = vadd.f32 %v546, %v845
      %v847 = vpop.f32.mrb[0].mxu0
      %848 = vmatprep.mubr.f32.mxu0 0.0
      %849 = vmatmul.mubr.f32.gmra.mrb[0].mxu0 %v663
      %v850 = vpop.f32.mrb[0].mxu0
      %v851 = vadd.f32 %v551, %v850
      %v852 = vpop.f32.mrb[0].mxu0
      %853 = vmatprep.mubr.f32.mxu0 0.0
      %854 = vmatmul.mubr.f32.gmra.mrb[0].mxu0 %v666
      %v855 = vpop.f32.mrb[0].mxu0
      %v856 = vadd.f32 %v556, %v855
      %v857 = vpop.f32.mrb[0].mxu0
      %858 = vmatprep.mubr.f32.mxu0 0.0
      %859 = vmatmul.mubr.f32.gmra.mrb[0].mxu0 %v669
      %v860 = vpop.f32.mrb[0].mxu0
      %v861 = vadd.f32 %v561, %v860
      %v862 = vpop.f32.mrb[0].mxu0
      %863 = vmatprep.mubr.f32.mxu0 0.0
      %864 = vmatmul.mubr.f32.gmra.mrb[0].mxu0 %v672
      %v865 = vpop.f32.mrb[0].mxu0
      %v866 = vadd.f32 %v566, %v865
      %v867 = vpop.f32.mrb[0].mxu0
      %868 = vmatprep.mubr.f32.mxu0 0.0
      %869 = vmatmul.mubr.f32.gmra.mrb[0].mxu0 %v675
      %v870 = vpop.f32.mrb[0].mxu0
      %v871 = vadd.f32 %v571, %v870
      %v872 = vpop.f32.mrb[0].mxu0
      %873 = vmatprep.mubr.f32.mxu0 0.0
      %874 = vmatmul.mubr.f32.gmra.mrb[0].mxu0 %v678
      %v875 = vpop.f32.mrb[0].mxu0
      %v876 = vadd.f32 %v576, %v875
      %v877 = vpop.f32.mrb[0].mxu0
      %878 = vmatprep.mubr.f32.mxu0 0.0
      %879 = vmatmul.mubr.f32.gmra.mrb[0].mxu0 %v681
      %v880 = vpop.f32.mrb[0].mxu0
      %v881 = vadd.f32 %v581, %v880
      %v882 = vpop.f32.mrb[0].mxu0
      %883 = vmatprep.mubr.f32.mxu0 0.0
      %884 = vmatmul.mubr.f32.gmra.mrb[0].mxu0 %v684
      %v885 = vpop.f32.mrb[0].mxu0
      %v886 = vadd.f32 %v586, %v885
      %v887 = vpop.f32.mrb[0].mxu0
      %888 = vmatprep.mubr.f32.mxu0 0.0
      %889 = vmatmul.mubr.f32.gmra.mrb[0].mxu0 %v687
      %v890 = vpop.f32.mrb[0].mxu0
      %v891 = vadd.f32 %v591, %v890
      %v892 = vpop.f32.mrb[0].mxu0
      %893 = vmatprep.mubr.f32.mxu0 0.0
      %894 = vmatmul.mubr.f32.gmra.mrb[0].mxu0 %v690
      %v895 = vpop.f32.mrb[0].mxu0
      %v896 = vadd.f32 %v596, %v895
      %v897 = vpop.f32.mrb[0].mxu0
      %898 = vmatprep.mubr.f32.mxu0 0.0
      %899 = vmatmul.mubr.f32.gmra.mrb[0].mxu0 %v693
      %v900 = vpop.f32.mrb[0].mxu0
      %v901 = vadd.f32 %v601, %v900
      %v902 = vpop.f32.mrb[0].mxu0
      %903 = vmatprep.mubr.f32.mxu0 0.0
      %904 = vmatmul.mubr.f32.gmra.mrb[0].mxu0 %v696
      %v905 = vpop.f32.mrb[0].mxu0
      %v906 = vadd.f32 %v606, %v905
      %v907 = vpop.f32.mrb[0].mxu0
      %908 = vmatprep.mubr.f32.mxu0 0.0
      %909 = vmatmul.mubr.f32.gmra.mrb[0].mxu0 %v699
      %v910 = vpop.f32.mrb[0].mxu0
      %v911 = vadd.f32 %v611, %v910
      %v912 = vpop.f32.mrb[0].mxu0
      %913 = vdwg.mxu0
      %v914 = vld [vmem:[%s246 + $0x2] sm:$0xff]
      %v915 = vld [vmem:[%s246 + $0xa] sm:$0xff]
      %v916 = vld [vmem:[%s246 + $0x12] sm:$0xff]
      %v917 = vld [vmem:[%s246 + $0x1a] sm:$0xff]
      %v918 = vld [vmem:[%s246 + $0x22] sm:$0xff]
      %v919 = vld [vmem:[%s246 + $0x2a] sm:$0xff]
      %v920 = vld [vmem:[%s246 + $0x32] sm:$0xff]
      %v921 = vld [vmem:[%s246 + $0x3a] sm:$0xff]
      %v922 = vld [vmem:[%s246 + $0x42] sm:$0xff]
      %v923 = vld [vmem:[%s246 + $0x4a] sm:$0xff]
      %v924 = vld [vmem:[%s246 + $0x52] sm:$0xff]
      %v925 = vld [vmem:[%s246 + $0x5a] sm:$0xff]
      %v926 = vld [vmem:[%s246 + $0x62] sm:$0xff]
      %v927 = vld [vmem:[%s246 + $0x6a] sm:$0xff]
      %v928 = vld [vmem:[%s246 + $0x72] sm:$0xff]
      %v929 = vld [vmem:[%s246 + $0x7a] sm:$0xff]
      %v930 = vld [vmem:[%s246 + $0x82] sm:$0xff]
      %v931 = vld [vmem:[%s246 + $0x8a] sm:$0xff]
      %v932 = vld [vmem:[%s246 + $0x92] sm:$0xff]
      %v933 = vld [vmem:[%s246 + $0x9a] sm:$0xff]
      %v934 = vld [vmem:[%s246 + $0xa2] sm:$0xff]
      %v935 = vld [vmem:[%s246 + $0xaa] sm:$0xff]
      %v936 = vld [vmem:[%s246 + $0xb2] sm:$0xff]
      %v937 = vld [vmem:[%s246 + $0xba] sm:$0xff]
      %v938 = vld [vmem:[%s246 + $0xc2] sm:$0xff]
      %v939 = vld [vmem:[%s246 + $0xca] sm:$0xff]
      %v940 = vld [vmem:[%s246 + $0xd2] sm:$0xff]
      %v941 = vld [vmem:[%s246 + $0xda] sm:$0xff]
      %v942 = vld [vmem:[%s246 + $0xe2] sm:$0xff]
      %v943 = vld [vmem:[%s1 + $0x8] sm:$0xf]
      %v945 = vsel %vm312, %v914, 0
      %v948 = vsel %vm312, %v915, 0
      %v951 = vsel %vm312, %v916, 0
      %v954 = vsel %vm312, %v917, 0
      %v957 = vsel %vm312, %v918, 0
      %v960 = vsel %vm312, %v919, 0
      %v963 = vsel %vm312, %v920, 0
      %v966 = vsel %vm312, %v921, 0
      %v969 = vsel %vm312, %v922, 0
      %v972 = vsel %vm312, %v923, 0
      %v975 = vsel %vm312, %v924, 0
      %v978 = vsel %vm312, %v925, 0
      %v981 = vsel %vm312, %v926, 0
      %v984 = vsel %vm312, %v927, 0
      %v987 = vsel %vm312, %v928, 0
      %v990 = vsel %vm312, %v929, 0
      %v993 = vsel %vm312, %v930, 0
      %v996 = vsel %vm312, %v931, 0
      %v999 = vsel %vm312, %v932, 0
      %v1002 = vsel %vm312, %v933, 0
      %v1005 = vsel %vm312, %v934, 0
      %v1008 = vsel %vm312, %v935, 0
      %v1011 = vsel %vm312, %v936, 0
      %v1014 = vsel %vm312, %v937, 0
      %v1017 = vsel %vm312, %v938, 0
      %v1020 = vsel %vm312, %v939, 0
      %v1023 = vsel %vm312, %v940, 0
      %v1026 = vsel %vm312, %v941, 0
      %v1029 = vsel %vm312, %v942, 0
      %v1032 = vsel %vm400, %v943, 0
      %1034 = vmatprep.subr.mxu0 0.0
      %1035 = vmatpush1.msra.mxu0 %v1032
      %1036 = vmatprep.subr.mxu0 0.0
      %1037 = vmatpush1.msra.mxu0 0.0
      %1038 = vmatprep.subr.mxu0 0.0
      %1039 = vmatpush1.msra.mxu0 0.0
      %1040 = vmatprep.subr.mxu0 0.0
      %1041 = vmatpush1.msra.mxu0 0.0
      %1042 = vmatprep.subr.mxu0 0.0
      %1043 = vmatpush1.msra.mxu0 0.0
      %1044 = vmatprep.subr.mxu0 0.0
      %1045 = vmatpush1.msra.mxu0 0.0
      %1046 = vmatprep.subr.mxu0 0.0
      %1047 = vmatpush1.msra.mxu0 0.0
      %1048 = vmatprep.subr.mxu0 0.0
      %1049 = vmatpush1.msra.mxu0 0.0
      %1050 = vmatprep.subr.mxu0 0.0
      %1051 = vmatpush1.msra.mxu0 0.0
      %1052 = vmatprep.subr.mxu0 0.0
      %1053 = vmatpush1.msra.mxu0 0.0
      %1054 = vmatprep.subr.mxu0 0.0
      %1055 = vmatpush1.msra.mxu0 0.0
      %1056 = vmatprep.subr.mxu0 0.0
      %1057 = vmatpush1.msra.mxu0 0.0
      %1058 = vmatprep.subr.mxu0 0.0
      %1059 = vmatpush1.msra.mxu0 0.0
      %1060 = vmatprep.subr.mxu0 0.0
      %1061 = vmatpush1.msra.mxu0 0.0
      %1062 = vmatprep.subr.mxu0 0.0
      %1063 = vmatpush1.msra.mxu0 0.0
      %1064 = vmatprep.subr.mxu0 0.0
      %1065 = vmatpush1.msra.mxu0 0.0
      %1066 = vmatprep.subr.mxu0 0.0
      %1067 = vmatpush1.msra.mxu0 0.0
      %1068 = vmatprep.subr.mxu0 0.0
      %1069 = vmatpush1.msra.mxu0 0.0
      %1070 = vmatprep.subr.mxu0 0.0
      %1071 = vmatpush1.msra.mxu0 0.0
      %1072 = vmatprep.subr.mxu0 0.0
      %1073 = vmatpush1.msra.mxu0 0.0
      %1074 = vmatprep.subr.mxu0 0.0
      %1075 = vmatpush1.msra.mxu0 0.0
      %1076 = vmatprep.subr.mxu0 0.0
      %1077 = vmatpush1.msra.mxu0 0.0
      %1078 = vmatprep.subr.mxu0 0.0
      %1079 = vmatpush1.msra.mxu0 0.0
      %1080 = vmatprep.subr.mxu0 0.0
      %1081 = vmatpush1.msra.mxu0 0.0
      %1082 = vmatprep.subr.mxu0 0.0
      %1083 = vmatpush1.msra.mxu0 0.0
      %1084 = vmatprep.subr.mxu0 0.0
      %1085 = vmatpush1.msra.mxu0 0.0
      %1086 = vmatprep.subr.mxu0 0.0
      %1087 = vmatpush1.msra.mxu0 0.0
      %1088 = vmatprep.subr.mxu0 0.0
      %1089 = vmatpush1.msra.mxu0 0.0
      %1090 = vmatprep.subr.mxu0 0.0
      %1091 = vmatpush1.msra.mxu0 0.0
      %1092 = vmatprep.subr.mxu0 0.0
      %1093 = vmatpush1.msra.mxu0 0.0
      %1094 = vmatprep.subr.mxu0 0.0
      %1095 = vmatpush1.msra.mxu0 0.0
      %1096 = vmatprep.subr.mxu0 0.0
      %1097 = vmatpush1.msra.mxu0 0.0
      %1098 = vmatprep.mubr.f32.mxu0 0.0
      %1099 = vmatmul.mubr.f32.gmra.mrb[0].mxu0 %v945
      %v1100 = vpop.f32.mrb[0].mxu0
      %v1101 = vadd.f32 0.0, %v1100
      %v1102 = vpop.f32.mrb[0].mxu0
      %1103 = vmatprep.mubr.f32.mxu0 0.0
      %1104 = vmatmul.mubr.f32.gmra.mrb[0].mxu0 %v948
      %v1105 = vpop.f32.mrb[0].mxu0
      %v1106 = vadd.f32 0.0, %v1105
      %v1107 = vpop.f32.mrb[0].mxu0
      %1108 = vmatprep.mubr.f32.mxu0 0.0
      %1109 = vmatmul.mubr.f32.gmra.mrb[0].mxu0 %v951
      %v1110 = vpop.f32.mrb[0].mxu0
      %v1111 = vadd.f32 0.0, %v1110
      %v1112 = vpop.f32.mrb[0].mxu0
      %1113 = vmatprep.mubr.f32.mxu0 0.0
      %1114 = vmatmul.mubr.f32.gmra.mrb[0].mxu0 %v954
      %v1115 = vpop.f32.mrb[0].mxu0
      %v1116 = vadd.f32 0.0, %v1115
      %v1117 = vpop.f32.mrb[0].mxu0
      %1118 = vmatprep.mubr.f32.mxu0 0.0
      %1119 = vmatmul.mubr.f32.gmra.mrb[0].mxu0 %v957
      %v1120 = vpop.f32.mrb[0].mxu0
      %v1121 = vadd.f32 0.0, %v1120
      %v1122 = vpop.f32.mrb[0].mxu0
      %1123 = vmatprep.mubr.f32.mxu0 0.0
      %1124 = vmatmul.mubr.f32.gmra.mrb[0].mxu0 %v960
      %v1125 = vpop.f32.mrb[0].mxu0
      %v1126 = vadd.f32 0.0, %v1125
      %v1127 = vpop.f32.mrb[0].mxu0
      %1128 = vmatprep.mubr.f32.mxu0 0.0
      %1129 = vmatmul.mubr.f32.gmra.mrb[0].mxu0 %v963
      %v1130 = vpop.f32.mrb[0].mxu0
      %v1131 = vadd.f32 0.0, %v1130
      %v1132 = vpop.f32.mrb[0].mxu0
      %1133 = vmatprep.mubr.f32.mxu0 0.0
      %1134 = vmatmul.mubr.f32.gmra.mrb[0].mxu0 %v966
      %v1135 = vpop.f32.mrb[0].mxu0
      %v1136 = vadd.f32 0.0, %v1135
      %v1137 = vpop.f32.mrb[0].mxu0
      %1138 = vmatprep.mubr.f32.mxu0 0.0
      %1139 = vmatmul.mubr.f32.gmra.mrb[0].mxu0 %v969
      %v1140 = vpop.f32.mrb[0].mxu0
      %v1141 = vadd.f32 0.0, %v1140
      %v1142 = vpop.f32.mrb[0].mxu0
      %1143 = vmatprep.mubr.f32.mxu0 0.0
      %1144 = vmatmul.mubr.f32.gmra.mrb[0].mxu0 %v972
      %v1145 = vpop.f32.mrb[0].mxu0
      %v1146 = vadd.f32 0.0, %v1145
      %v1147 = vpop.f32.mrb[0].mxu0
      %1148 = vmatprep.mubr.f32.mxu0 0.0
      %1149 = vmatmul.mubr.f32.gmra.mrb[0].mxu0 %v975
      %v1150 = vpop.f32.mrb[0].mxu0
      %v1151 = vadd.f32 0.0, %v1150
      %v1152 = vpop.f32.mrb[0].mxu0
      %1153 = vmatprep.mubr.f32.mxu0 0.0
      %1154 = vmatmul.mubr.f32.gmra.mrb[0].mxu0 %v978
      %v1155 = vpop.f32.mrb[0].mxu0
      %v1156 = vadd.f32 0.0, %v1155
      %v1157 = vpop.f32.mrb[0].mxu0
      %1158 = vmatprep.mubr.f32.mxu0 0.0
      %1159 = vmatmul.mubr.f32.gmra.mrb[0].mxu0 %v981
      %v1160 = vpop.f32.mrb[0].mxu0
      %v1161 = vadd.f32 0.0, %v1160
      %v1162 = vpop.f32.mrb[0].mxu0
      %1163 = vmatprep.mubr.f32.mxu0 0.0
      %1164 = vmatmul.mubr.f32.gmra.mrb[0].mxu0 %v984
      %v1165 = vpop.f32.mrb[0].mxu0
      %v1166 = vadd.f32 0.0, %v1165
      %v1167 = vpop.f32.mrb[0].mxu0
      %1168 = vmatprep.mubr.f32.mxu0 0.0
      %1169 = vmatmul.mubr.f32.gmra.mrb[0].mxu0 %v987
      %v1170 = vpop.f32.mrb[0].mxu0
      %v1171 = vadd.f32 0.0, %v1170
      %v1172 = vpop.f32.mrb[0].mxu0
      %1173 = vmatprep.mubr.f32.mxu0 0.0
      %1174 = vmatmul.mubr.f32.gmra.mrb[0].mxu0 %v990
      %v1175 = vpop.f32.mrb[0].mxu0
      %v1176 = vadd.f32 0.0, %v1175
      %v1177 = vpop.f32.mrb[0].mxu0
      %1178 = vmatprep.mubr.f32.mxu0 0.0
      %1179 = vmatmul.mubr.f32.gmra.mrb[0].mxu0 %v993
      %v1180 = vpop.f32.mrb[0].mxu0
      %v1181 = vadd.f32 0.0, %v1180
      %v1182 = vpop.f32.mrb[0].mxu0
      %1183 = vmatprep.mubr.f32.mxu0 0.0
      %1184 = vmatmul.mubr.f32.gmra.mrb[0].mxu0 %v996
      %v1185 = vpop.f32.mrb[0].mxu0
      %v1186 = vadd.f32 0.0, %v1185
      %v1187 = vpop.f32.mrb[0].mxu0
      %1188 = vmatprep.mubr.f32.mxu0 0.0
      %1189 = vmatmul.mubr.f32.gmra.mrb[0].mxu0 %v999
      %v1190 = vpop.f32.mrb[0].mxu0
      %v1191 = vadd.f32 0.0, %v1190
      %v1192 = vpop.f32.mrb[0].mxu0
      %1193 = vmatprep.mubr.f32.mxu0 0.0
      %1194 = vmatmul.mubr.f32.gmra.mrb[0].mxu0 %v1002
      %v1195 = vpop.f32.mrb[0].mxu0
      %v1196 = vadd.f32 0.0, %v1195
      %v1197 = vpop.f32.mrb[0].mxu0
      %1198 = vmatprep.mubr.f32.mxu0 0.0
      %1199 = vmatmul.mubr.f32.gmra.mrb[0].mxu0 %v1005
      %v1200 = vpop.f32.mrb[0].mxu0
      %v1201 = vadd.f32 0.0, %v1200
      %v1202 = vpop.f32.mrb[0].mxu0
      %1203 = vmatprep.mubr.f32.mxu0 0.0
      %1204 = vmatmul.mubr.f32.gmra.mrb[0].mxu0 %v1008
      %v1205 = vpop.f32.mrb[0].mxu0
      %v1206 = vadd.f32 0.0, %v1205
      %v1207 = vpop.f32.mrb[0].mxu0
      %1208 = vmatprep.mubr.f32.mxu0 0.0
      %1209 = vmatmul.mubr.f32.gmra.mrb[0].mxu0 %v1011
      %v1210 = vpop.f32.mrb[0].mxu0
      %v1211 = vadd.f32 0.0, %v1210
      %v1212 = vpop.f32.mrb[0].mxu0
      %1213 = vmatprep.mubr.f32.mxu0 0.0
      %1214 = vmatmul.mubr.f32.gmra.mrb[0].mxu0 %v1014
      %v1215 = vpop.f32.mrb[0].mxu0
      %v1216 = vadd.f32 0.0, %v1215
      %v1217 = vpop.f32.mrb[0].mxu0
      %1218 = vmatprep.mubr.f32.mxu0 0.0
      %1219 = vmatmul.mubr.f32.gmra.mrb[0].mxu0 %v1017
      %v1220 = vpop.f32.mrb[0].mxu0
      %v1221 = vadd.f32 0.0, %v1220
      %v1222 = vpop.f32.mrb[0].mxu0
      %1223 = vmatprep.mubr.f32.mxu0 0.0
      %1224 = vmatmul.mubr.f32.gmra.mrb[0].mxu0 %v1020
      %v1225 = vpop.f32.mrb[0].mxu0
      %v1226 = vadd.f32 0.0, %v1225
      %v1227 = vpop.f32.mrb[0].mxu0
      %1228 = vmatprep.mubr.f32.mxu0 0.0
      %1229 = vmatmul.mubr.f32.gmra.mrb[0].mxu0 %v1023
      %v1230 = vpop.f32.mrb[0].mxu0
      %v1231 = vadd.f32 0.0, %v1230
      %v1232 = vpop.f32.mrb[0].mxu0
      %1233 = vmatprep.mubr.f32.mxu0 0.0
      %1234 = vmatmul.mubr.f32.gmra.mrb[0].mxu0 %v1026
      %v1235 = vpop.f32.mrb[0].mxu0
      %v1236 = vadd.f32 0.0, %v1235
      %v1237 = vpop.f32.mrb[0].mxu0
      %1238 = vmatprep.mubr.f32.mxu0 0.0
      %1239 = vmatmul.mubr.f32.gmra.mrb[0].mxu0 %v1029
      %v1240 = vpop.f32.mrb[0].mxu0
      %v1241 = vadd.f32 0.0, %v1240
      %v1242 = vpop.f32.mrb[0].mxu0
      %1243 = vdwg.mxu0
      %v1244 = vadd.f32 %v771, %v1101
      %v1245 = vadd.f32 %v776, %v1106
      %v1246 = vadd.f32 %v781, %v1111
      %v1247 = vadd.f32 %v786, %v1116
      %v1248 = vadd.f32 %v791, %v1121
      %v1249 = vadd.f32 %v796, %v1126
      %v1250 = vadd.f32 %v801, %v1131
      %v1251 = vadd.f32 %v806, %v1136
      %v1252 = vadd.f32 %v811, %v1141
      %v1253 = vadd.f32 %v816, %v1146
      %v1254 = vadd.f32 %v821, %v1151
      %v1255 = vadd.f32 %v826, %v1156
      %v1256 = vadd.f32 %v831, %v1161
      %v1257 = vadd.f32 %v836, %v1166
      %v1258 = vadd.f32 %v841, %v1171
      %v1259 = vadd.f32 %v846, %v1176
      %v1260 = vadd.f32 %v851, %v1181
      %v1261 = vadd.f32 %v856, %v1186
      %v1262 = vadd.f32 %v861, %v1191
      %v1263 = vadd.f32 %v866, %v1196
      %v1264 = vadd.f32 %v871, %v1201
      %v1265 = vadd.f32 %v876, %v1206
      %v1266 = vadd.f32 %v881, %v1211
      %v1267 = vadd.f32 %v886, %v1216
      %v1268 = vadd.f32 %v891, %v1221
      %v1269 = vadd.f32 %v896, %v1226
      %v1270 = vadd.f32 %v901, %v1231
      %v1271 = vadd.f32 %v906, %v1236
      %v1272 = vadd.f32 %v911, %v1241
      %v1273 = vld [vmem:[%s246 + $0x10] sm:$0xff]
      %v1274 = vld [vmem:[%s246 + $0x18] sm:$0xff]
      %v1275 = vld [vmem:[%s246 + $0x20] sm:$0xff]
      %v1276 = vld [vmem:[%s246 + $0x28] sm:$0xff]
      %v1277 = vld [vmem:[%s246 + $0x30] sm:$0xff]
      %v1278 = vld [vmem:[%s246 + $0x38] sm:$0xff]
      %v1279 = vld [vmem:[%s246 + $0x40] sm:$0xff]
      %v1280 = vld [vmem:[%s246 + $0x48] sm:$0xff]
      %v1281 = vld [vmem:[%s246 + $0x50] sm:$0xff]
      %v1282 = vld [vmem:[%s246 + $0x58] sm:$0xff]
      %v1283 = vld [vmem:[%s246 + $0x60] sm:$0xff]
      %v1284 = vld [vmem:[%s246 + $0x68] sm:$0xff]
      %v1285 = vld [vmem:[%s246 + $0x70] sm:$0xff]
      %v1286 = vld [vmem:[%s246 + $0x78] sm:$0xff]
      %v1287 = vld [vmem:[%s246 + $0x80] sm:$0xff]
      %v1288 = vld [vmem:[%s246 + $0x88] sm:$0xff]
      %v1289 = vld [vmem:[%s246 + $0x90] sm:$0xff]
      %v1290 = vld [vmem:[%s246 + $0x98] sm:$0xff]
      %v1291 = vld [vmem:[%s246 + $0xa0] sm:$0xff]
      %v1292 = vld [vmem:[%s246 + $0xa8] sm:$0xff]
      %v1293 = vld [vmem:[%s246 + $0xb0] sm:$0xff]
      %v1294 = vld [vmem:[%s246 + $0xb8] sm:$0xff]
      %v1295 = vld [vmem:[%s246 + $0xc0] sm:$0xff]
      %v1296 = vld [vmem:[%s246 + $0xc8] sm:$0xff]
      %v1297 = vld [vmem:[%s246 + $0xd0] sm:$0xff]
      %v1298 = vld [vmem:[%s246 + $0xd8] sm:$0xff]
      %v1299 = vld [vmem:[%s246 + $0xe0] sm:$0xff]
      %v1300 = vld [vmem:[%s246 + $0xe8] sm:$0xff]
      %v1301 = vld [vmem:[%s246 + $0xf0] sm:$0xff]
      %v1302 = vld [vmem:[%s1 + $0xc] sm:$0xf]
      %v1304 = vsel %vm312, %v1273, 0
      %v1307 = vsel %vm312, %v1274, 0
      %v1310 = vsel %vm312, %v1275, 0
      %v1313 = vsel %vm312, %v1276, 0
      %v1316 = vsel %vm312, %v1277, 0
      %v1319 = vsel %vm312, %v1278, 0
      %v1322 = vsel %vm312, %v1279, 0
      %v1325 = vsel %vm312, %v1280, 0
      %v1328 = vsel %vm312, %v1281, 0
      %v1331 = vsel %vm312, %v1282, 0
      %v1334 = vsel %vm312, %v1283, 0
      %v1337 = vsel %vm312, %v1284, 0
      %v1340 = vsel %vm312, %v1285, 0
      %v1343 = vsel %vm312, %v1286, 0
      %v1346 = vsel %vm312, %v1287, 0
      %v1349 = vsel %vm312, %v1288, 0
      %v1352 = vsel %vm312, %v1289, 0
      %v1355 = vsel %vm312, %v1290, 0
      %v1358 = vsel %vm312, %v1291, 0
      %v1361 = vsel %vm312, %v1292, 0
      %v1364 = vsel %vm312, %v1293, 0
      %v1367 = vsel %vm312, %v1294, 0
      %v1370 = vsel %vm312, %v1295, 0
      %v1373 = vsel %vm312, %v1296, 0
      %v1376 = vsel %vm312, %v1297, 0
      %v1379 = vsel %vm312, %v1298, 0
      %v1382 = vsel %vm312, %v1299, 0
      %v1385 = vsel %vm312, %v1300, 0
      %v1388 = vsel %vm312, %v1301, 0
      %v1391 = vsel %vm400, %v1302, 0
      %1393 = vmatprep.subr.mxu0 0.0
      %1394 = vmatpush1.msra.mxu0 %v1391
      %1395 = vmatprep.subr.mxu0 0.0
      %1396 = vmatpush1.msra.mxu0 0.0
      %1397 = vmatprep.subr.mxu0 0.0
      %1398 = vmatpush1.msra.mxu0 0.0
      %1399 = vmatprep.subr.mxu0 0.0
      %1400 = vmatpush1.msra.mxu0 0.0
      %1401 = vmatprep.subr.mxu0 0.0
      %1402 = vmatpush1.msra.mxu0 0.0
      %1403 = vmatprep.subr.mxu0 0.0
      %1404 = vmatpush1.msra.mxu0 0.0
      %1405 = vmatprep.subr.mxu0 0.0
      %1406 = vmatpush1.msra.mxu0 0.0
      %1407 = vmatprep.subr.mxu0 0.0
      %1408 = vmatpush1.msra.mxu0 0.0
      %1409 = vmatprep.subr.mxu0 0.0
      %1410 = vmatpush1.msra.mxu0 0.0
      %1411 = vmatprep.subr.mxu0 0.0
      %1412 = vmatpush1.msra.mxu0 0.0
      %1413 = vmatprep.subr.mxu0 0.0
      %1414 = vmatpush1.msra.mxu0 0.0
      %1415 = vmatprep.subr.mxu0 0.0
      %1416 = vmatpush1.msra.mxu0 0.0
      %1417 = vmatprep.subr.mxu0 0.0
      %1418 = vmatpush1.msra.mxu0 0.0
      %1419 = vmatprep.subr.mxu0 0.0
      %1420 = vmatpush1.msra.mxu0 0.0
      %1421 = vmatprep.subr.mxu0 0.0
      %1422 = vmatpush1.msra.mxu0 0.0
      %1423 = vmatprep.subr.mxu0 0.0
      %1424 = vmatpush1.msra.mxu0 0.0
      %1425 = vmatprep.subr.mxu0 0.0
      %1426 = vmatpush1.msra.mxu0 0.0
      %1427 = vmatprep.subr.mxu0 0.0
      %1428 = vmatpush1.msra.mxu0 0.0
      %1429 = vmatprep.subr.mxu0 0.0
      %1430 = vmatpush1.msra.mxu0 0.0
      %1431 = vmatprep.subr.mxu0 0.0
      %1432 = vmatpush1.msra.mxu0 0.0
      %1433 = vmatprep.subr.mxu0 0.0
      %1434 = vmatpush1.msra.mxu0 0.0
      %1435 = vmatprep.subr.mxu0 0.0
      %1436 = vmatpush1.msra.mxu0 0.0
      %1437 = vmatprep.subr.mxu0 0.0
      %1438 = vmatpush1.msra.mxu0 0.0
      %1439 = vmatprep.subr.mxu0 0.0
      %1440 = vmatpush1.msra.mxu0 0.0
      %1441 = vmatprep.subr.mxu0 0.0
      %1442 = vmatpush1.msra.mxu0 0.0
      %1443 = vmatprep.subr.mxu0 0.0
      %1444 = vmatpush1.msra.mxu0 0.0
      %1445 = vmatprep.subr.mxu0 0.0
      %1446 = vmatpush1.msra.mxu0 0.0
      %1447 = vmatprep.subr.mxu0 0.0
      %1448 = vmatpush1.msra.mxu0 0.0
      %1449 = vmatprep.subr.mxu0 0.0
      %1450 = vmatpush1.msra.mxu0 0.0
      %1451 = vmatprep.subr.mxu0 0.0
      %1452 = vmatpush1.msra.mxu0 0.0
      %1453 = vmatprep.subr.mxu0 0.0
      %1454 = vmatpush1.msra.mxu0 0.0
      %1455 = vmatprep.subr.mxu0 0.0
      %1456 = vmatpush1.msra.mxu0 0.0
      %1457 = vmatprep.mubr.f32.mxu0 0.0
      %1458 = vmatmul.mubr.f32.gmra.mrb[0].mxu0 %v1304
      %v1459 = vpop.f32.mrb[0].mxu0
      %v1460 = vadd.f32 0.0, %v1459
      %v1461 = vpop.f32.mrb[0].mxu0
      %1462 = vmatprep.mubr.f32.mxu0 0.0
      %1463 = vmatmul.mubr.f32.gmra.mrb[0].mxu0 %v1307
      %v1464 = vpop.f32.mrb[0].mxu0
      %v1465 = vadd.f32 0.0, %v1464
      %v1466 = vpop.f32.mrb[0].mxu0
      %1467 = vmatprep.mubr.f32.mxu0 0.0
      %1468 = vmatmul.mubr.f32.gmra.mrb[0].mxu0 %v1310
      %v1469 = vpop.f32.mrb[0].mxu0
      %v1470 = vadd.f32 0.0, %v1469
      %v1471 = vpop.f32.mrb[0].mxu0
      %1472 = vmatprep.mubr.f32.mxu0 0.0
      %1473 = vmatmul.mubr.f32.gmra.mrb[0].mxu0 %v1313
      %v1474 = vpop.f32.mrb[0].mxu0
      %v1475 = vadd.f32 0.0, %v1474
      %v1476 = vpop.f32.mrb[0].mxu0
      %1477 = vmatprep.mubr.f32.mxu0 0.0
      %1478 = vmatmul.mubr.f32.gmra.mrb[0].mxu0 %v1316
      %v1479 = vpop.f32.mrb[0].mxu0
      %v1480 = vadd.f32 0.0, %v1479
      %v1481 = vpop.f32.mrb[0].mxu0
      %1482 = vmatprep.mubr.f32.mxu0 0.0
      %1483 = vmatmul.mubr.f32.gmra.mrb[0].mxu0 %v1319
      %v1484 = vpop.f32.mrb[0].mxu0
      %v1485 = vadd.f32 0.0, %v1484
      %v1486 = vpop.f32.mrb[0].mxu0
      %1487 = vmatprep.mubr.f32.mxu0 0.0
      %1488 = vmatmul.mubr.f32.gmra.mrb[0].mxu0 %v1322
      %v1489 = vpop.f32.mrb[0].mxu0
      %v1490 = vadd.f32 0.0, %v1489
      %v1491 = vpop.f32.mrb[0].mxu0
      %1492 = vmatprep.mubr.f32.mxu0 0.0
      %1493 = vmatmul.mubr.f32.gmra.mrb[0].mxu0 %v1325
      %v1494 = vpop.f32.mrb[0].mxu0
      %v1495 = vadd.f32 0.0, %v1494
      %v1496 = vpop.f32.mrb[0].mxu0
      %1497 = vmatprep.mubr.f32.mxu0 0.0
      %1498 = vmatmul.mubr.f32.gmra.mrb[0].mxu0 %v1328
      %v1499 = vpop.f32.mrb[0].mxu0
      %v1500 = vadd.f32 0.0, %v1499
      %v1501 = vpop.f32.mrb[0].mxu0
      %1502 = vmatprep.mubr.f32.mxu0 0.0
      %1503 = vmatmul.mubr.f32.gmra.mrb[0].mxu0 %v1331
      %v1504 = vpop.f32.mrb[0].mxu0
      %v1505 = vadd.f32 0.0, %v1504
      %v1506 = vpop.f32.mrb[0].mxu0
      %1507 = vmatprep.mubr.f32.mxu0 0.0
      %1508 = vmatmul.mubr.f32.gmra.mrb[0].mxu0 %v1334
      %v1509 = vpop.f32.mrb[0].mxu0
      %v1510 = vadd.f32 0.0, %v1509
      %v1511 = vpop.f32.mrb[0].mxu0
      %1512 = vmatprep.mubr.f32.mxu0 0.0
      %1513 = vmatmul.mubr.f32.gmra.mrb[0].mxu0 %v1337
      %v1514 = vpop.f32.mrb[0].mxu0
      %v1515 = vadd.f32 0.0, %v1514
      %v1516 = vpop.f32.mrb[0].mxu0
      %1517 = vmatprep.mubr.f32.mxu0 0.0
      %1518 = vmatmul.mubr.f32.gmra.mrb[0].mxu0 %v1340
      %v1519 = vpop.f32.mrb[0].mxu0
      %v1520 = vadd.f32 0.0, %v1519
      %v1521 = vpop.f32.mrb[0].mxu0
      %1522 = vmatprep.mubr.f32.mxu0 0.0
      %1523 = vmatmul.mubr.f32.gmra.mrb[0].mxu0 %v1343
      %v1524 = vpop.f32.mrb[0].mxu0
      %v1525 = vadd.f32 0.0, %v1524
      %v1526 = vpop.f32.mrb[0].mxu0
      %1527 = vmatprep.mubr.f32.mxu0 0.0
      %1528 = vmatmul.mubr.f32.gmra.mrb[0].mxu0 %v1346
      %v1529 = vpop.f32.mrb[0].mxu0
      %v1530 = vadd.f32 0.0, %v1529
      %v1531 = vpop.f32.mrb[0].mxu0
      %1532 = vmatprep.mubr.f32.mxu0 0.0
      %1533 = vmatmul.mubr.f32.gmra.mrb[0].mxu0 %v1349
      %v1534 = vpop.f32.mrb[0].mxu0
      %v1535 = vadd.f32 0.0, %v1534
      %v1536 = vpop.f32.mrb[0].mxu0
      %1537 = vmatprep.mubr.f32.mxu0 0.0
      %1538 = vmatmul.mubr.f32.gmra.mrb[0].mxu0 %v1352
      %v1539 = vpop.f32.mrb[0].mxu0
      %v1540 = vadd.f32 0.0, %v1539
      %v1541 = vpop.f32.mrb[0].mxu0
      %1542 = vmatprep.mubr.f32.mxu0 0.0
      %1543 = vmatmul.mubr.f32.gmra.mrb[0].mxu0 %v1355
      %v1544 = vpop.f32.mrb[0].mxu0
      %v1545 = vadd.f32 0.0, %v1544
      %v1546 = vpop.f32.mrb[0].mxu0
      %1547 = vmatprep.mubr.f32.mxu0 0.0
      %1548 = vmatmul.mubr.f32.gmra.mrb[0].mxu0 %v1358
      %v1549 = vpop.f32.mrb[0].mxu0
      %v1550 = vadd.f32 0.0, %v1549
      %v1551 = vpop.f32.mrb[0].mxu0
      %1552 = vmatprep.mubr.f32.mxu0 0.0
      %1553 = vmatmul.mubr.f32.gmra.mrb[0].mxu0 %v1361
      %v1554 = vpop.f32.mrb[0].mxu0
      %v1555 = vadd.f32 0.0, %v1554
      %v1556 = vpop.f32.mrb[0].mxu0
      %1557 = vmatprep.mubr.f32.mxu0 0.0
      %1558 = vmatmul.mubr.f32.gmra.mrb[0].mxu0 %v1364
      %v1559 = vpop.f32.mrb[0].mxu0
      %v1560 = vadd.f32 0.0, %v1559
      %v1561 = vpop.f32.mrb[0].mxu0
      %1562 = vmatprep.mubr.f32.mxu0 0.0
      %1563 = vmatmul.mubr.f32.gmra.mrb[0].mxu0 %v1367
      %v1564 = vpop.f32.mrb[0].mxu0
      %v1565 = vadd.f32 0.0, %v1564
      %v1566 = vpop.f32.mrb[0].mxu0
      %1567 = vmatprep.mubr.f32.mxu0 0.0
      %1568 = vmatmul.mubr.f32.gmra.mrb[0].mxu0 %v1370
      %v1569 = vpop.f32.mrb[0].mxu0
      %v1570 = vadd.f32 0.0, %v1569
      %v1571 = vpop.f32.mrb[0].mxu0
      %1572 = vmatprep.mubr.f32.mxu0 0.0
      %1573 = vmatmul.mubr.f32.gmra.mrb[0].mxu0 %v1373
      %v1574 = vpop.f32.mrb[0].mxu0
      %v1575 = vadd.f32 0.0, %v1574
      %v1576 = vpop.f32.mrb[0].mxu0
      %1577 = vmatprep.mubr.f32.mxu0 0.0
      %1578 = vmatmul.mubr.f32.gmra.mrb[0].mxu0 %v1376
      %v1579 = vpop.f32.mrb[0].mxu0
      %v1580 = vadd.f32 0.0, %v1579
      %v1581 = vpop.f32.mrb[0].mxu0
      %1582 = vmatprep.mubr.f32.mxu0 0.0
      %1583 = vmatmul.mubr.f32.gmra.mrb[0].mxu0 %v1379
      %v1584 = vpop.f32.mrb[0].mxu0
      %v1585 = vadd.f32 0.0, %v1584
      %v1586 = vpop.f32.mrb[0].mxu0
      %1587 = vmatprep.mubr.f32.mxu0 0.0
      %1588 = vmatmul.mubr.f32.gmra.mrb[0].mxu0 %v1382
      %v1589 = vpop.f32.mrb[0].mxu0
      %v1590 = vadd.f32 0.0, %v1589
      %v1591 = vpop.f32.mrb[0].mxu0
      %1592 = vmatprep.mubr.f32.mxu0 0.0
      %1593 = vmatmul.mubr.f32.gmra.mrb[0].mxu0 %v1385
      %v1594 = vpop.f32.mrb[0].mxu0
      %v1595 = vadd.f32 0.0, %v1594
      %v1596 = vpop.f32.mrb[0].mxu0
      %1597 = vmatprep.mubr.f32.mxu0 0.0
      %1598 = vmatmul.mubr.f32.gmra.mrb[0].mxu0 %v1388
      %v1599 = vpop.f32.mrb[0].mxu0
      %v1600 = vadd.f32 0.0, %v1599
      %v1601 = vpop.f32.mrb[0].mxu0
      %1602 = vdwg.mxu0
      %v1603 = vadd.f32 %v1244, %v1460
      %v1604 = vadd.f32 %v1245, %v1465
      %v1605 = vadd.f32 %v1246, %v1470
      %v1606 = vadd.f32 %v1247, %v1475
      %v1607 = vadd.f32 %v1248, %v1480
      %v1608 = vadd.f32 %v1249, %v1485
      %v1609 = vadd.f32 %v1250, %v1490
      %v1610 = vadd.f32 %v1251, %v1495
      %v1611 = vadd.f32 %v1252, %v1500
      %v1612 = vadd.f32 %v1253, %v1505
      %v1613 = vadd.f32 %v1254, %v1510
      %v1614 = vadd.f32 %v1255, %v1515
      %v1615 = vadd.f32 %v1256, %v1520
      %v1616 = vadd.f32 %v1257, %v1525
      %v1617 = vadd.f32 %v1258, %v1530
      %v1618 = vadd.f32 %v1259, %v1535
      %v1619 = vadd.f32 %v1260, %v1540
      %v1620 = vadd.f32 %v1261, %v1545
      %v1621 = vadd.f32 %v1262, %v1550
      %v1622 = vadd.f32 %v1263, %v1555
      %v1623 = vadd.f32 %v1264, %v1560
      %v1624 = vadd.f32 %v1265, %v1565
      %v1625 = vadd.f32 %v1266, %v1570
      %v1626 = vadd.f32 %v1267, %v1575
      %v1627 = vadd.f32 %v1268, %v1580
      %v1628 = vadd.f32 %v1269, %v1585
      %v1629 = vadd.f32 %v1270, %v1590
      %v1630 = vadd.f32 %v1271, %v1595
      %v1631 = vadd.f32 %v1272, %v1600
      %v1632 = vld [vmem:[%s246 + $0x11] sm:$0xff]
      %v1633 = vld [vmem:[%s246 + $0x19] sm:$0xff]
      %v1634 = vld [vmem:[%s246 + $0x21] sm:$0xff]
      %v1635 = vld [vmem:[%s246 + $0x29] sm:$0xff]
      %v1636 = vld [vmem:[%s246 + $0x31] sm:$0xff]
      %v1637 = vld [vmem:[%s246 + $0x39] sm:$0xff]
      %v1638 = vld [vmem:[%s246 + $0x41] sm:$0xff]
      %v1639 = vld [vmem:[%s246 + $0x49] sm:$0xff]
      %v1640 = vld [vmem:[%s246 + $0x51] sm:$0xff]
      %v1641 = vld [vmem:[%s246 + $0x59] sm:$0xff]
      %v1642 = vld [vmem:[%s246 + $0x61] sm:$0xff]
      %v1643 = vld [vmem:[%s246 + $0x69] sm:$0xff]
      %v1644 = vld [vmem:[%s246 + $0x71] sm:$0xff]
      %v1645 = vld [vmem:[%s246 + $0x79] sm:$0xff]
      %v1646 = vld [vmem:[%s246 + $0x81] sm:$0xff]
      %v1647 = vld [vmem:[%s246 + $0x89] sm:$0xff]
      %v1648 = vld [vmem:[%s246 + $0x91] sm:$0xff]
      %v1649 = vld [vmem:[%s246 + $0x99] sm:$0xff]
      %v1650 = vld [vmem:[%s246 + $0xa1] sm:$0xff]
      %v1651 = vld [vmem:[%s246 + $0xa9] sm:$0xff]
      %v1652 = vld [vmem:[%s246 + $0xb1] sm:$0xff]
      %v1653 = vld [vmem:[%s246 + $0xb9] sm:$0xff]
      %v1654 = vld [vmem:[%s246 + $0xc1] sm:$0xff]
      %v1655 = vld [vmem:[%s246 + $0xc9] sm:$0xff]
      %v1656 = vld [vmem:[%s246 + $0xd1] sm:$0xff]
      %v1657 = vld [vmem:[%s246 + $0xd9] sm:$0xff]
      %v1658 = vld [vmem:[%s246 + $0xe1] sm:$0xff]
      %v1659 = vld [vmem:[%s246 + $0xe9] sm:$0xff]
      %v1660 = vld [vmem:[%s246 + $0xf1] sm:$0xff]
      %v1661 = vld [vmem:[%s1 + $0x10] sm:$0xf]
      %v1663 = vsel %vm312, %v1632, 0
      %v1666 = vsel %vm312, %v1633, 0
      %v1669 = vsel %vm312, %v1634, 0
      %v1672 = vsel %vm312, %v1635, 0
      %v1675 = vsel %vm312, %v1636, 0
      %v1678 = vsel %vm312, %v1637, 0
      %v1681 = vsel %vm312, %v1638, 0
      %v1684 = vsel %vm312, %v1639, 0
      %v1687 = vsel %vm312, %v1640, 0
      %v1690 = vsel %vm312, %v1641, 0
      %v1693 = vsel %vm312, %v1642, 0
      %v1696 = vsel %vm312, %v1643, 0
      %v1699 = vsel %vm312, %v1644, 0
      %v1702 = vsel %vm312, %v1645, 0
      %v1705 = vsel %vm312, %v1646, 0
      %v1708 = vsel %vm312, %v1647, 0
      %v1711 = vsel %vm312, %v1648, 0
      %v1714 = vsel %vm312, %v1649, 0
      %v1717 = vsel %vm312, %v1650, 0
      %v1720 = vsel %vm312, %v1651, 0
      %v1723 = vsel %vm312, %v1652, 0
      %v1726 = vsel %vm312, %v1653, 0
      %v1729 = vsel %vm312, %v1654, 0
      %v1732 = vsel %vm312, %v1655, 0
      %v1735 = vsel %vm312, %v1656, 0
      %v1738 = vsel %vm312, %v1657, 0
      %v1741 = vsel %vm312, %v1658, 0
      %v1744 = vsel %vm312, %v1659, 0
      %v1747 = vsel %vm312, %v1660, 0
      %v1750 = vsel %vm400, %v1661, 0
      %1752 = vmatprep.subr.mxu0 0.0
      %1753 = vmatpush1.msra.mxu0 %v1750
      %1754 = vmatprep.subr.mxu0 0.0
      %1755 = vmatpush1.msra.mxu0 0.0
      %1756 = vmatprep.subr.mxu0 0.0
      %1757 = vmatpush1.msra.mxu0 0.0
      %1758 = vmatprep.subr.mxu0 0.0
      %1759 = vmatpush1.msra.mxu0 0.0
      %1760 = vmatprep.subr.mxu0 0.0
      %1761 = vmatpush1.msra.mxu0 0.0
      %1762 = vmatprep.subr.mxu0 0.0
      %1763 = vmatpush1.msra.mxu0 0.0
      %1764 = vmatprep.subr.mxu0 0.0
      %1765 = vmatpush1.msra.mxu0 0.0
      %1766 = vmatprep.subr.mxu0 0.0
      %1767 = vmatpush1.msra.mxu0 0.0
      %1768 = vmatprep.subr.mxu0 0.0
      %1769 = vmatpush1.msra.mxu0 0.0
      %1770 = vmatprep.subr.mxu0 0.0
      %1771 = vmatpush1.msra.mxu0 0.0
      %1772 = vmatprep.subr.mxu0 0.0
      %1773 = vmatpush1.msra.mxu0 0.0
      %1774 = vmatprep.subr.mxu0 0.0
      %1775 = vmatpush1.msra.mxu0 0.0
      %1776 = vmatprep.subr.mxu0 0.0
      %1777 = vmatpush1.msra.mxu0 0.0
      %1778 = vmatprep.subr.mxu0 0.0
      %1779 = vmatpush1.msra.mxu0 0.0
      %1780 = vmatprep.subr.mxu0 0.0
      %1781 = vmatpush1.msra.mxu0 0.0
      %1782 = vmatprep.subr.mxu0 0.0
      %1783 = vmatpush1.msra.mxu0 0.0
      %1784 = vmatprep.subr.mxu0 0.0
      %1785 = vmatpush1.msra.mxu0 0.0
      %1786 = vmatprep.subr.mxu0 0.0
      %1787 = vmatpush1.msra.mxu0 0.0
      %1788 = vmatprep.subr.mxu0 0.0
      %1789 = vmatpush1.msra.mxu0 0.0
      %1790 = vmatprep.subr.mxu0 0.0
      %1791 = vmatpush1.msra.mxu0 0.0
      %1792 = vmatprep.subr.mxu0 0.0
      %1793 = vmatpush1.msra.mxu0 0.0
      %1794 = vmatprep.subr.mxu0 0.0
      %1795 = vmatpush1.msra.mxu0 0.0
      %1796 = vmatprep.subr.mxu0 0.0
      %1797 = vmatpush1.msra.mxu0 0.0
      %1798 = vmatprep.subr.mxu0 0.0
      %1799 = vmatpush1.msra.mxu0 0.0
      %1800 = vmatprep.subr.mxu0 0.0
      %1801 = vmatpush1.msra.mxu0 0.0
      %1802 = vmatprep.subr.mxu0 0.0
      %1803 = vmatpush1.msra.mxu0 0.0
      %1804 = vmatprep.subr.mxu0 0.0
      %1805 = vmatpush1.msra.mxu0 0.0
      %1806 = vmatprep.subr.mxu0 0.0
      %1807 = vmatpush1.msra.mxu0 0.0
      %1808 = vmatprep.subr.mxu0 0.0
      %1809 = vmatpush1.msra.mxu0 0.0
      %1810 = vmatprep.subr.mxu0 0.0
      %1811 = vmatpush1.msra.mxu0 0.0
      %1812 = vmatprep.subr.mxu0 0.0
      %1813 = vmatpush1.msra.mxu0 0.0
      %1814 = vmatprep.subr.mxu0 0.0
      %1815 = vmatpush1.msra.mxu0 0.0
      %1816 = vmatprep.mubr.f32.mxu0 0.0
      %1817 = vmatmul.mubr.f32.gmra.mrb[0].mxu0 %v1663
      %v1818 = vpop.f32.mrb[0].mxu0
      %v1819 = vadd.f32 0.0, %v1818
      %v1820 = vpop.f32.mrb[0].mxu0
      %1821 = vmatprep.mubr.f32.mxu0 0.0
      %1822 = vmatmul.mubr.f32.gmra.mrb[0].mxu0 %v1666
      %v1823 = vpop.f32.mrb[0].mxu0
      %v1824 = vadd.f32 0.0, %v1823
      %v1825 = vpop.f32.mrb[0].mxu0
      %1826 = vmatprep.mubr.f32.mxu0 0.0
      %1827 = vmatmul.mubr.f32.gmra.mrb[0].mxu0 %v1669
      %v1828 = vpop.f32.mrb[0].mxu0
      %v1829 = vadd.f32 0.0, %v1828
      %v1830 = vpop.f32.mrb[0].mxu0
      %1831 = vmatprep.mubr.f32.mxu0 0.0
      %1832 = vmatmul.mubr.f32.gmra.mrb[0].mxu0 %v1672
      %v1833 = vpop.f32.mrb[0].mxu0
      %v1834 = vadd.f32 0.0, %v1833
      %v1835 = vpop.f32.mrb[0].mxu0
      %1836 = vmatprep.mubr.f32.mxu0 0.0
      %1837 = vmatmul.mubr.f32.gmra.mrb[0].mxu0 %v1675
      %v1838 = vpop.f32.mrb[0].mxu0
      %v1839 = vadd.f32 0.0, %v1838
      %v1840 = vpop.f32.mrb[0].mxu0
      %1841 = vmatprep.mubr.f32.mxu0 0.0
      %1842 = vmatmul.mubr.f32.gmra.mrb[0].mxu0 %v1678
      %v1843 = vpop.f32.mrb[0].mxu0
      %v1844 = vadd.f32 0.0, %v1843
      %v1845 = vpop.f32.mrb[0].mxu0
      %1846 = vmatprep.mubr.f32.mxu0 0.0
      %1847 = vmatmul.mubr.f32.gmra.mrb[0].mxu0 %v1681
      %v1848 = vpop.f32.mrb[0].mxu0
      %v1849 = vadd.f32 0.0, %v1848
      %v1850 = vpop.f32.mrb[0].mxu0
      %1851 = vmatprep.mubr.f32.mxu0 0.0
      %1852 = vmatmul.mubr.f32.gmra.mrb[0].mxu0 %v1684
      %v1853 = vpop.f32.mrb[0].mxu0
      %v1854 = vadd.f32 0.0, %v1853
      %v1855 = vpop.f32.mrb[0].mxu0
      %1856 = vmatprep.mubr.f32.mxu0 0.0
      %1857 = vmatmul.mubr.f32.gmra.mrb[0].mxu0 %v1687
      %v1858 = vpop.f32.mrb[0].mxu0
      %v1859 = vadd.f32 0.0, %v1858
      %v1860 = vpop.f32.mrb[0].mxu0
      %1861 = vmatprep.mubr.f32.mxu0 0.0
      %1862 = vmatmul.mubr.f32.gmra.mrb[0].mxu0 %v1690
      %v1863 = vpop.f32.mrb[0].mxu0
      %v1864 = vadd.f32 0.0, %v1863
      %v1865 = vpop.f32.mrb[0].mxu0
      %1866 = vmatprep.mubr.f32.mxu0 0.0
      %1867 = vmatmul.mubr.f32.gmra.mrb[0].mxu0 %v1693
      %v1868 = vpop.f32.mrb[0].mxu0
      %v1869 = vadd.f32 0.0, %v1868
      %v1870 = vpop.f32.mrb[0].mxu0
      %1871 = vmatprep.mubr.f32.mxu0 0.0
      %1872 = vmatmul.mubr.f32.gmra.mrb[0].mxu0 %v1696
      %v1873 = vpop.f32.mrb[0].mxu0
      %v1874 = vadd.f32 0.0, %v1873
      %v1875 = vpop.f32.mrb[0].mxu0
      %1876 = vmatprep.mubr.f32.mxu0 0.0
      %1877 = vmatmul.mubr.f32.gmra.mrb[0].mxu0 %v1699
      %v1878 = vpop.f32.mrb[0].mxu0
      %v1879 = vadd.f32 0.0, %v1878
      %v1880 = vpop.f32.mrb[0].mxu0
      %1881 = vmatprep.mubr.f32.mxu0 0.0
      %1882 = vmatmul.mubr.f32.gmra.mrb[0].mxu0 %v1702
      %v1883 = vpop.f32.mrb[0].mxu0
      %v1884 = vadd.f32 0.0, %v1883
      %v1885 = vpop.f32.mrb[0].mxu0
      %1886 = vmatprep.mubr.f32.mxu0 0.0
      %1887 = vmatmul.mubr.f32.gmra.mrb[0].mxu0 %v1705
      %v1888 = vpop.f32.mrb[0].mxu0
      %v1889 = vadd.f32 0.0, %v1888
      %v1890 = vpop.f32.mrb[0].mxu0
      %1891 = vmatprep.mubr.f32.mxu0 0.0
      %1892 = vmatmul.mubr.f32.gmra.mrb[0].mxu0 %v1708
      %v1893 = vpop.f32.mrb[0].mxu0
      %v1894 = vadd.f32 0.0, %v1893
      %v1895 = vpop.f32.mrb[0].mxu0
      %1896 = vmatprep.mubr.f32.mxu0 0.0
      %1897 = vmatmul.mubr.f32.gmra.mrb[0].mxu0 %v1711
      %v1898 = vpop.f32.mrb[0].mxu0
      %v1899 = vadd.f32 0.0, %v1898
      %v1900 = vpop.f32.mrb[0].mxu0
      %1901 = vmatprep.mubr.f32.mxu0 0.0
      %1902 = vmatmul.mubr.f32.gmra.mrb[0].mxu0 %v1714
      %v1903 = vpop.f32.mrb[0].mxu0
      %v1904 = vadd.f32 0.0, %v1903
      %v1905 = vpop.f32.mrb[0].mxu0
      %1906 = vmatprep.mubr.f32.mxu0 0.0
      %1907 = vmatmul.mubr.f32.gmra.mrb[0].mxu0 %v1717
      %v1908 = vpop.f32.mrb[0].mxu0
      %v1909 = vadd.f32 0.0, %v1908
      %v1910 = vpop.f32.mrb[0].mxu0
      %1911 = vmatprep.mubr.f32.mxu0 0.0
      %1912 = vmatmul.mubr.f32.gmra.mrb[0].mxu0 %v1720
      %v1913 = vpop.f32.mrb[0].mxu0
      %v1914 = vadd.f32 0.0, %v1913
      %v1915 = vpop.f32.mrb[0].mxu0
      %1916 = vmatprep.mubr.f32.mxu0 0.0
      %1917 = vmatmul.mubr.f32.gmra.mrb[0].mxu0 %v1723
      %v1918 = vpop.f32.mrb[0].mxu0
      %v1919 = vadd.f32 0.0, %v1918
      %v1920 = vpop.f32.mrb[0].mxu0
      %1921 = vmatprep.mubr.f32.mxu0 0.0
      %1922 = vmatmul.mubr.f32.gmra.mrb[0].mxu0 %v1726
      %v1923 = vpop.f32.mrb[0].mxu0
      %v1924 = vadd.f32 0.0, %v1923
      %v1925 = vpop.f32.mrb[0].mxu0
      %1926 = vmatprep.mubr.f32.mxu0 0.0
      %1927 = vmatmul.mubr.f32.gmra.mrb[0].mxu0 %v1729
      %v1928 = vpop.f32.mrb[0].mxu0
      %v1929 = vadd.f32 0.0, %v1928
      %v1930 = vpop.f32.mrb[0].mxu0
      %1931 = vmatprep.mubr.f32.mxu0 0.0
      %1932 = vmatmul.mubr.f32.gmra.mrb[0].mxu0 %v1732
      %v1933 = vpop.f32.mrb[0].mxu0
      %v1934 = vadd.f32 0.0, %v1933
      %v1935 = vpop.f32.mrb[0].mxu0
      %1936 = vmatprep.mubr.f32.mxu0 0.0
      %1937 = vmatmul.mubr.f32.gmra.mrb[0].mxu0 %v1735
      %v1938 = vpop.f32.mrb[0].mxu0
      %v1939 = vadd.f32 0.0, %v1938
      %v1940 = vpop.f32.mrb[0].mxu0
      %1941 = vmatprep.mubr.f32.mxu0 0.0
      %1942 = vmatmul.mubr.f32.gmra.mrb[0].mxu0 %v1738
      %v1943 = vpop.f32.mrb[0].mxu0
      %v1944 = vadd.f32 0.0, %v1943
      %v1945 = vpop.f32.mrb[0].mxu0
      %1946 = vmatprep.mubr.f32.mxu0 0.0
      %1947 = vmatmul.mubr.f32.gmra.mrb[0].mxu0 %v1741
      %v1948 = vpop.f32.mrb[0].mxu0
      %v1949 = vadd.f32 0.0, %v1948
      %v1950 = vpop.f32.mrb[0].mxu0
      %1951 = vmatprep.mubr.f32.mxu0 0.0
      %1952 = vmatmul.mubr.f32.gmra.mrb[0].mxu0 %v1744
      %v1953 = vpop.f32.mrb[0].mxu0
      %v1954 = vadd.f32 0.0, %v1953
      %v1955 = vpop.f32.mrb[0].mxu0
      %1956 = vmatprep.mubr.f32.mxu0 0.0
      %1957 = vmatmul.mubr.f32.gmra.mrb[0].mxu0 %v1747
      %v1958 = vpop.f32.mrb[0].mxu0
      %v1959 = vadd.f32 0.0, %v1958
      %v1960 = vpop.f32.mrb[0].mxu0
      %1961 = vdwg.mxu0
      %v1962 = vadd.f32 %v1603, %v1819
      %v1963 = vadd.f32 %v1604, %v1824
      %v1964 = vadd.f32 %v1605, %v1829
      %v1965 = vadd.f32 %v1606, %v1834
      %v1966 = vadd.f32 %v1607, %v1839
      %v1967 = vadd.f32 %v1608, %v1844
      %v1968 = vadd.f32 %v1609, %v1849
      %v1969 = vadd.f32 %v1610, %v1854
      %v1970 = vadd.f32 %v1611, %v1859
      %v1971 = vadd.f32 %v1612, %v1864
      %v1972 = vadd.f32 %v1613, %v1869
      %v1973 = vadd.f32 %v1614, %v1874
      %v1974 = vadd.f32 %v1615, %v1879
      %v1975 = vadd.f32 %v1616, %v1884
      %v1976 = vadd.f32 %v1617, %v1889
      %v1977 = vadd.f32 %v1618, %v1894
      %v1978 = vadd.f32 %v1619, %v1899
      %v1979 = vadd.f32 %v1620, %v1904
      %v1980 = vadd.f32 %v1621, %v1909
      %v1981 = vadd.f32 %v1622, %v1914
      %v1982 = vadd.f32 %v1623, %v1919
      %v1983 = vadd.f32 %v1624, %v1924
      %v1984 = vadd.f32 %v1625, %v1929
      %v1985 = vadd.f32 %v1626, %v1934
      %v1986 = vadd.f32 %v1627, %v1939
      %v1987 = vadd.f32 %v1628, %v1944
      %v1988 = vadd.f32 %v1629, %v1949
      %v1989 = vadd.f32 %v1630, %v1954
      %v1990 = vadd.f32 %v1631, %v1959
      %v1991 = vld [vmem:[%s246 + $0x12] sm:$0xff]
      %v1992 = vld [vmem:[%s246 + $0x1a] sm:$0xff]
      %v1993 = vld [vmem:[%s246 + $0x22] sm:$0xff]
      %v1994 = vld [vmem:[%s246 + $0x2a] sm:$0xff]
      %v1995 = vld [vmem:[%s246 + $0x32] sm:$0xff]
      %v1996 = vld [vmem:[%s246 + $0x3a] sm:$0xff]
      %v1997 = vld [vmem:[%s246 + $0x42] sm:$0xff]
      %v1998 = vld [vmem:[%s246 + $0x4a] sm:$0xff]
      %v1999 = vld [vmem:[%s246 + $0x52] sm:$0xff]
      %v2000 = vld [vmem:[%s246 + $0x5a] sm:$0xff]
      %v2001 = vld [vmem:[%s246 + $0x62] sm:$0xff]
      %v2002 = vld [vmem:[%s246 + $0x6a] sm:$0xff]
      %v2003 = vld [vmem:[%s246 + $0x72] sm:$0xff]
      %v2004 = vld [vmem:[%s246 + $0x7a] sm:$0xff]
      %v2005 = vld [vmem:[%s246 + $0x82] sm:$0xff]
      %v2006 = vld [vmem:[%s246 + $0x8a] sm:$0xff]
      %v2007 = vld [vmem:[%s246 + $0x92] sm:$0xff]
      %v2008 = vld [vmem:[%s246 + $0x9a] sm:$0xff]
      %v2009 = vld [vmem:[%s246 + $0xa2] sm:$0xff]
      %v2010 = vld [vmem:[%s246 + $0xaa] sm:$0xff]
      %v2011 = vld [vmem:[%s246 + $0xb2] sm:$0xff]
      %v2012 = vld [vmem:[%s246 + $0xba] sm:$0xff]
      %v2013 = vld [vmem:[%s246 + $0xc2] sm:$0xff]
      %v2014 = vld [vmem:[%s246 + $0xca] sm:$0xff]
      %v2015 = vld [vmem:[%s246 + $0xd2] sm:$0xff]
      %v2016 = vld [vmem:[%s246 + $0xda] sm:$0xff]
      %v2017 = vld [vmem:[%s246 + $0xe2] sm:$0xff]
      %v2018 = vld [vmem:[%s246 + $0xea] sm:$0xff]
      %v2019 = vld [vmem:[%s246 + $0xf2] sm:$0xff]
      %v2020 = vld [vmem:[%s1 + $0x14] sm:$0xf]
      %v2022 = vsel %vm312, %v1991, 0
      %v2025 = vsel %vm312, %v1992, 0
      %v2028 = vsel %vm312, %v1993, 0
      %v2031 = vsel %vm312, %v1994, 0
      %v2034 = vsel %vm312, %v1995, 0
      %v2037 = vsel %vm312, %v1996, 0
      %v2040 = vsel %vm312, %v1997, 0
      %v2043 = vsel %vm312, %v1998, 0
      %v2046 = vsel %vm312, %v1999, 0
      %v2049 = vsel %vm312, %v2000, 0
      %v2052 = vsel %vm312, %v2001, 0
      %v2055 = vsel %vm312, %v2002, 0
      %v2058 = vsel %vm312, %v2003, 0
      %v2061 = vsel %vm312, %v2004, 0
      %v2064 = vsel %vm312, %v2005, 0
      %v2067 = vsel %vm312, %v2006, 0
      %v2070 = vsel %vm312, %v2007, 0
      %v2073 = vsel %vm312, %v2008, 0
      %v2076 = vsel %vm312, %v2009, 0
      %v2079 = vsel %vm312, %v2010, 0
      %v2082 = vsel %vm312, %v2011, 0
      %v2085 = vsel %vm312, %v2012, 0
      %v2088 = vsel %vm312, %v2013, 0
      %v2091 = vsel %vm312, %v2014, 0
      %v2094 = vsel %vm312, %v2015, 0
      %v2097 = vsel %vm312, %v2016, 0
      %v2100 = vsel %vm312, %v2017, 0
      %v2103 = vsel %vm312, %v2018, 0
      %v2106 = vsel %vm312, %v2019, 0
      %v2109 = vsel %vm400, %v2020, 0
      %2111 = vmatprep.subr.mxu0 0.0
      %2112 = vmatpush1.msra.mxu0 %v2109
      %2113 = vmatprep.subr.mxu0 0.0
      %2114 = vmatpush1.msra.mxu0 0.0
      %2115 = vmatprep.subr.mxu0 0.0
      %2116 = vmatpush1.msra.mxu0 0.0
      %2117 = vmatprep.subr.mxu0 0.0
      %2118 = vmatpush1.msra.mxu0 0.0
      %2119 = vmatprep.subr.mxu0 0.0
      %2120 = vmatpush1.msra.mxu0 0.0
      %2121 = vmatprep.subr.mxu0 0.0
      %2122 = vmatpush1.msra.mxu0 0.0
      %2123 = vmatprep.subr.mxu0 0.0
      %2124 = vmatpush1.msra.mxu0 0.0
      %2125 = vmatprep.subr.mxu0 0.0
      %2126 = vmatpush1.msra.mxu0 0.0
      %2127 = vmatprep.subr.mxu0 0.0
      %2128 = vmatpush1.msra.mxu0 0.0
      %2129 = vmatprep.subr.mxu0 0.0
      %2130 = vmatpush1.msra.mxu0 0.0
      %2131 = vmatprep.subr.mxu0 0.0
      %2132 = vmatpush1.msra.mxu0 0.0
      %2133 = vmatprep.subr.mxu0 0.0
      %2134 = vmatpush1.msra.mxu0 0.0
      %2135 = vmatprep.subr.mxu0 0.0
      %2136 = vmatpush1.msra.mxu0 0.0
      %2137 = vmatprep.subr.mxu0 0.0
      %2138 = vmatpush1.msra.mxu0 0.0
      %2139 = vmatprep.subr.mxu0 0.0
      %2140 = vmatpush1.msra.mxu0 0.0
      %2141 = vmatprep.subr.mxu0 0.0
      %2142 = vmatpush1.msra.mxu0 0.0
      %2143 = vmatprep.subr.mxu0 0.0
      %2144 = vmatpush1.msra.mxu0 0.0
      %2145 = vmatprep.subr.mxu0 0.0
      %2146 = vmatpush1.msra.mxu0 0.0
      %2147 = vmatprep.subr.mxu0 0.0
      %2148 = vmatpush1.msra.mxu0 0.0
      %2149 = vmatprep.subr.mxu0 0.0
      %2150 = vmatpush1.msra.mxu0 0.0
      %2151 = vmatprep.subr.mxu0 0.0
      %2152 = vmatpush1.msra.mxu0 0.0
      %2153 = vmatprep.subr.mxu0 0.0
      %2154 = vmatpush1.msra.mxu0 0.0
      %2155 = vmatprep.subr.mxu0 0.0
      %2156 = vmatpush1.msra.mxu0 0.0
      %2157 = vmatprep.subr.mxu0 0.0
      %2158 = vmatpush1.msra.mxu0 0.0
      %2159 = vmatprep.subr.mxu0 0.0
      %2160 = vmatpush1.msra.mxu0 0.0
      %2161 = vmatprep.subr.mxu0 0.0
      %2162 = vmatpush1.msra.mxu0 0.0
      %2163 = vmatprep.subr.mxu0 0.0
      %2164 = vmatpush1.msra.mxu0 0.0
      %2165 = vmatprep.subr.mxu0 0.0
      %2166 = vmatpush1.msra.mxu0 0.0
      %2167 = vmatprep.subr.mxu0 0.0
      %2168 = vmatpush1.msra.mxu0 0.0
      %2169 = vmatprep.subr.mxu0 0.0
      %2170 = vmatpush1.msra.mxu0 0.0
      %2171 = vmatprep.subr.mxu0 0.0
      %2172 = vmatpush1.msra.mxu0 0.0
      %2173 = vmatprep.subr.mxu0 0.0
      %2174 = vmatpush1.msra.mxu0 0.0
      %2175 = vmatprep.mubr.f32.mxu0 0.0
      %2176 = vmatmul.mubr.f32.gmra.mrb[0].mxu0 %v2022
      %v2177 = vpop.f32.mrb[0].mxu0
      %v2178 = vadd.f32 0.0, %v2177
      %v2179 = vpop.f32.mrb[0].mxu0
      %2180 = vmatprep.mubr.f32.mxu0 0.0
      %2181 = vmatmul.mubr.f32.gmra.mrb[0].mxu0 %v2025
      %v2182 = vpop.f32.mrb[0].mxu0
      %v2183 = vadd.f32 0.0, %v2182
      %v2184 = vpop.f32.mrb[0].mxu0
      %2185 = vmatprep.mubr.f32.mxu0 0.0
      %2186 = vmatmul.mubr.f32.gmra.mrb[0].mxu0 %v2028
      %v2187 = vpop.f32.mrb[0].mxu0
      %v2188 = vadd.f32 0.0, %v2187
      %v2189 = vpop.f32.mrb[0].mxu0
      %2190 = vmatprep.mubr.f32.mxu0 0.0
      %2191 = vmatmul.mubr.f32.gmra.mrb[0].mxu0 %v2031
      %v2192 = vpop.f32.mrb[0].mxu0
      %v2193 = vadd.f32 0.0, %v2192
      %v2194 = vpop.f32.mrb[0].mxu0
      %2195 = vmatprep.mubr.f32.mxu0 0.0
      %2196 = vmatmul.mubr.f32.gmra.mrb[0].mxu0 %v2034
      %v2197 = vpop.f32.mrb[0].mxu0
      %v2198 = vadd.f32 0.0, %v2197
      %v2199 = vpop.f32.mrb[0].mxu0
      %2200 = vmatprep.mubr.f32.mxu0 0.0
      %2201 = vmatmul.mubr.f32.gmra.mrb[0].mxu0 %v2037
      %v2202 = vpop.f32.mrb[0].mxu0
      %v2203 = vadd.f32 0.0, %v2202
      %v2204 = vpop.f32.mrb[0].mxu0
      %2205 = vmatprep.mubr.f32.mxu0 0.0
      %2206 = vmatmul.mubr.f32.gmra.mrb[0].mxu0 %v2040
      %v2207 = vpop.f32.mrb[0].mxu0
      %v2208 = vadd.f32 0.0, %v2207
      %v2209 = vpop.f32.mrb[0].mxu0
      %2210 = vmatprep.mubr.f32.mxu0 0.0
      %2211 = vmatmul.mubr.f32.gmra.mrb[0].mxu0 %v2043
      %v2212 = vpop.f32.mrb[0].mxu0
      %v2213 = vadd.f32 0.0, %v2212
      %v2214 = vpop.f32.mrb[0].mxu0
      %2215 = vmatprep.mubr.f32.mxu0 0.0
      %2216 = vmatmul.mubr.f32.gmra.mrb[0].mxu0 %v2046
      %v2217 = vpop.f32.mrb[0].mxu0
      %v2218 = vadd.f32 0.0, %v2217
      %v2219 = vpop.f32.mrb[0].mxu0
      %2220 = vmatprep.mubr.f32.mxu0 0.0
      %2221 = vmatmul.mubr.f32.gmra.mrb[0].mxu0 %v2049
      %v2222 = vpop.f32.mrb[0].mxu0
      %v2223 = vadd.f32 0.0, %v2222
      %v2224 = vpop.f32.mrb[0].mxu0
      %2225 = vmatprep.mubr.f32.mxu0 0.0
      %2226 = vmatmul.mubr.f32.gmra.mrb[0].mxu0 %v2052
      %v2227 = vpop.f32.mrb[0].mxu0
      %v2228 = vadd.f32 0.0, %v2227
      %v2229 = vpop.f32.mrb[0].mxu0
      %2230 = vmatprep.mubr.f32.mxu0 0.0
      %2231 = vmatmul.mubr.f32.gmra.mrb[0].mxu0 %v2055
      %v2232 = vpop.f32.mrb[0].mxu0
      %v2233 = vadd.f32 0.0, %v2232
      %v2234 = vpop.f32.mrb[0].mxu0
      %2235 = vmatprep.mubr.f32.mxu0 0.0
      %2236 = vmatmul.mubr.f32.gmra.mrb[0].mxu0 %v2058
      %v2237 = vpop.f32.mrb[0].mxu0
      %v2238 = vadd.f32 0.0, %v2237
      %v2239 = vpop.f32.mrb[0].mxu0
      %2240 = vmatprep.mubr.f32.mxu0 0.0
      %2241 = vmatmul.mubr.f32.gmra.mrb[0].mxu0 %v2061
      %v2242 = vpop.f32.mrb[0].mxu0
      %v2243 = vadd.f32 0.0, %v2242
      %v2244 = vpop.f32.mrb[0].mxu0
      %2245 = vmatprep.mubr.f32.mxu0 0.0
      %2246 = vmatmul.mubr.f32.gmra.mrb[0].mxu0 %v2064
      %v2247 = vpop.f32.mrb[0].mxu0
      %v2248 = vadd.f32 0.0, %v2247
      %v2249 = vpop.f32.mrb[0].mxu0
      %2250 = vmatprep.mubr.f32.mxu0 0.0
      %2251 = vmatmul.mubr.f32.gmra.mrb[0].mxu0 %v2067
      %v2252 = vpop.f32.mrb[0].mxu0
      %v2253 = vadd.f32 0.0, %v2252
      %v2254 = vpop.f32.mrb[0].mxu0
      %2255 = vmatprep.mubr.f32.mxu0 0.0
      %2256 = vmatmul.mubr.f32.gmra.mrb[0].mxu0 %v2070
      %v2257 = vpop.f32.mrb[0].mxu0
      %v2258 = vadd.f32 0.0, %v2257
      %v2259 = vpop.f32.mrb[0].mxu0
      %2260 = vmatprep.mubr.f32.mxu0 0.0
      %2261 = vmatmul.mubr.f32.gmra.mrb[0].mxu0 %v2073
      %v2262 = vpop.f32.mrb[0].mxu0
      %v2263 = vadd.f32 0.0, %v2262
      %v2264 = vpop.f32.mrb[0].mxu0
      %2265 = vmatprep.mubr.f32.mxu0 0.0
      %2266 = vmatmul.mubr.f32.gmra.mrb[0].mxu0 %v2076
      %v2267 = vpop.f32.mrb[0].mxu0
      %v2268 = vadd.f32 0.0, %v2267
      %v2269 = vpop.f32.mrb[0].mxu0
      %2270 = vmatprep.mubr.f32.mxu0 0.0
      %2271 = vmatmul.mubr.f32.gmra.mrb[0].mxu0 %v2079
      %v2272 = vpop.f32.mrb[0].mxu0
      %v2273 = vadd.f32 0.0, %v2272
      %v2274 = vpop.f32.mrb[0].mxu0
      %2275 = vmatprep.mubr.f32.mxu0 0.0
      %2276 = vmatmul.mubr.f32.gmra.mrb[0].mxu0 %v2082
      %v2277 = vpop.f32.mrb[0].mxu0
      %v2278 = vadd.f32 0.0, %v2277
      %v2279 = vpop.f32.mrb[0].mxu0
      %2280 = vmatprep.mubr.f32.mxu0 0.0
      %2281 = vmatmul.mubr.f32.gmra.mrb[0].mxu0 %v2085
      %v2282 = vpop.f32.mrb[0].mxu0
      %v2283 = vadd.f32 0.0, %v2282
      %v2284 = vpop.f32.mrb[0].mxu0
      %2285 = vmatprep.mubr.f32.mxu0 0.0
      %2286 = vmatmul.mubr.f32.gmra.mrb[0].mxu0 %v2088
      %v2287 = vpop.f32.mrb[0].mxu0
      %v2288 = vadd.f32 0.0, %v2287
      %v2289 = vpop.f32.mrb[0].mxu0
      %2290 = vmatprep.mubr.f32.mxu0 0.0
      %2291 = vmatmul.mubr.f32.gmra.mrb[0].mxu0 %v2091
      %v2292 = vpop.f32.mrb[0].mxu0
      %v2293 = vadd.f32 0.0, %v2292
      %v2294 = vpop.f32.mrb[0].mxu0
      %2295 = vmatprep.mubr.f32.mxu0 0.0
      %2296 = vmatmul.mubr.f32.gmra.mrb[0].mxu0 %v2094
      %v2297 = vpop.f32.mrb[0].mxu0
      %v2298 = vadd.f32 0.0, %v2297
      %v2299 = vpop.f32.mrb[0].mxu0
      %2300 = vmatprep.mubr.f32.mxu0 0.0
      %2301 = vmatmul.mubr.f32.gmra.mrb[0].mxu0 %v2097
      %v2302 = vpop.f32.mrb[0].mxu0
      %v2303 = vadd.f32 0.0, %v2302
      %v2304 = vpop.f32.mrb[0].mxu0
      %2305 = vmatprep.mubr.f32.mxu0 0.0
      %2306 = vmatmul.mubr.f32.gmra.mrb[0].mxu0 %v2100
      %v2307 = vpop.f32.mrb[0].mxu0
      %v2308 = vadd.f32 0.0, %v2307
      %v2309 = vpop.f32.mrb[0].mxu0
      %2310 = vmatprep.mubr.f32.mxu0 0.0
      %2311 = vmatmul.mubr.f32.gmra.mrb[0].mxu0 %v2103
      %v2312 = vpop.f32.mrb[0].mxu0
      %v2313 = vadd.f32 0.0, %v2312
      %v2314 = vpop.f32.mrb[0].mxu0
      %2315 = vmatprep.mubr.f32.mxu0 0.0
      %2316 = vmatmul.mubr.f32.gmra.mrb[0].mxu0 %v2106
      %v2317 = vpop.f32.mrb[0].mxu0
      %v2318 = vadd.f32 0.0, %v2317
      %v2319 = vpop.f32.mrb[0].mxu0
      %2320 = vdwg.mxu0
      %v2321 = vadd.f32 %v1962, %v2178
      %v2322 = vadd.f32 %v1963, %v2183
      %v2323 = vadd.f32 %v1964, %v2188
      %v2324 = vadd.f32 %v1965, %v2193
      %v2325 = vadd.f32 %v1966, %v2198
      %v2326 = vadd.f32 %v1967, %v2203
      %v2327 = vadd.f32 %v1968, %v2208
      %v2328 = vadd.f32 %v1969, %v2213
      %v2329 = vadd.f32 %v1970, %v2218
      %v2330 = vadd.f32 %v1971, %v2223
      %v2331 = vadd.f32 %v1972, %v2228
      %v2332 = vadd.f32 %v1973, %v2233
      %v2333 = vadd.f32 %v1974, %v2238
      %v2334 = vadd.f32 %v1975, %v2243
      %v2335 = vadd.f32 %v1976, %v2248
      %v2336 = vadd.f32 %v1977, %v2253
      %v2337 = vadd.f32 %v1978, %v2258
      %v2338 = vadd.f32 %v1979, %v2263
      %v2339 = vadd.f32 %v1980, %v2268
      %v2340 = vadd.f32 %v1981, %v2273
      %v2341 = vadd.f32 %v1982, %v2278
      %v2342 = vadd.f32 %v1983, %v2283
      %v2343 = vadd.f32 %v1984, %v2288
      %v2344 = vadd.f32 %v1985, %v2293
      %v2345 = vadd.f32 %v1986, %v2298
      %v2346 = vadd.f32 %v1987, %v2303
      %v2347 = vadd.f32 %v1988, %v2308
      %v2348 = vadd.f32 %v1989, %v2313
      %v2349 = vadd.f32 %v1990, %v2318
      %v2350 = vld [vmem:[%s246 + $0x20] sm:$0xff]
      %v2351 = vld [vmem:[%s246 + $0x28] sm:$0xff]
      %v2352 = vld [vmem:[%s246 + $0x30] sm:$0xff]
      %v2353 = vld [vmem:[%s246 + $0x38] sm:$0xff]
      %v2354 = vld [vmem:[%s246 + $0x40] sm:$0xff]
      %v2355 = vld [vmem:[%s246 + $0x48] sm:$0xff]
      %v2356 = vld [vmem:[%s246 + $0x50] sm:$0xff]
      %v2357 = vld [vmem:[%s246 + $0x58] sm:$0xff]
      %v2358 = vld [vmem:[%s246 + $0x60] sm:$0xff]
      %v2359 = vld [vmem:[%s246 + $0x68] sm:$0xff]
      %v2360 = vld [vmem:[%s246 + $0x70] sm:$0xff]
      %v2361 = vld [vmem:[%s246 + $0x78] sm:$0xff]
      %v2362 = vld [vmem:[%s246 + $0x80] sm:$0xff]
      %v2363 = vld [vmem:[%s246 + $0x88] sm:$0xff]
      %v2364 = vld [vmem:[%s246 + $0x90] sm:$0xff]
      %v2365 = vld [vmem:[%s246 + $0x98] sm:$0xff]
      %v2366 = vld [vmem:[%s246 + $0xa0] sm:$0xff]
      %v2367 = vld [vmem:[%s246 + $0xa8] sm:$0xff]
      %v2368 = vld [vmem:[%s246 + $0xb0] sm:$0xff]
      %v2369 = vld [vmem:[%s246 + $0xb8] sm:$0xff]
      %v2370 = vld [vmem:[%s246 + $0xc0] sm:$0xff]
      %v2371 = vld [vmem:[%s246 + $0xc8] sm:$0xff]
      %v2372 = vld [vmem:[%s246 + $0xd0] sm:$0xff]
      %v2373 = vld [vmem:[%s246 + $0xd8] sm:$0xff]
      %v2374 = vld [vmem:[%s246 + $0xe0] sm:$0xff]
      %v2375 = vld [vmem:[%s246 + $0xe8] sm:$0xff]
      %v2376 = vld [vmem:[%s246 + $0xf0] sm:$0xff]
      %v2377 = vld [vmem:[%s246 + $0xf8] sm:$0xff]
      %v2378 = vld [vmem:[%s246 + $0x100] sm:$0xff]
      %v2379 = vld [vmem:[%s1 + $0x18] sm:$0xf]
      %v2381 = vsel %vm312, %v2350, 0
      %v2384 = vsel %vm312, %v2351, 0
      %v2387 = vsel %vm312, %v2352, 0
      %v2390 = vsel %vm312, %v2353, 0
      %v2393 = vsel %vm312, %v2354, 0
      %v2396 = vsel %vm312, %v2355, 0
      %v2399 = vsel %vm312, %v2356, 0
      %v2402 = vsel %vm312, %v2357, 0
      %v2405 = vsel %vm312, %v2358, 0
      %v2408 = vsel %vm312, %v2359, 0
      %v2411 = vsel %vm312, %v2360, 0
      %v2414 = vsel %vm312, %v2361, 0
      %v2417 = vsel %vm312, %v2362, 0
      %v2420 = vsel %vm312, %v2363, 0
      %v2423 = vsel %vm312, %v2364, 0
      %v2426 = vsel %vm312, %v2365, 0
      %v2429 = vsel %vm312, %v2366, 0
      %v2432 = vsel %vm312, %v2367, 0
      %v2435 = vsel %vm312, %v2368, 0
      %v2438 = vsel %vm312, %v2369, 0
      %v2441 = vsel %vm312, %v2370, 0
      %v2444 = vsel %vm312, %v2371, 0
      %v2447 = vsel %vm312, %v2372, 0
      %v2450 = vsel %vm312, %v2373, 0
      %v2453 = vsel %vm312, %v2374, 0
      %v2456 = vsel %vm312, %v2375, 0
      %v2459 = vsel %vm312, %v2376, 0
      %v2462 = vsel %vm312, %v2377, 0
      %v2465 = vsel %vm312, %v2378, 0
      %v2468 = vsel %vm400, %v2379, 0
      %2470 = vmatprep.subr.mxu0 0.0
      %2471 = vmatpush1.msra.mxu0 %v2468
      %2472 = vmatprep.subr.mxu0 0.0
      %2473 = vmatpush1.msra.mxu0 0.0
      %2474 = vmatprep.subr.mxu0 0.0
      %2475 = vmatpush1.msra.mxu0 0.0
      %2476 = vmatprep.subr.mxu0 0.0
      %2477 = vmatpush1.msra.mxu0 0.0
      %2478 = vmatprep.subr.mxu0 0.0
      %2479 = vmatpush1.msra.mxu0 0.0
      %2480 = vmatprep.subr.mxu0 0.0
      %2481 = vmatpush1.msra.mxu0 0.0
      %2482 = vmatprep.subr.mxu0 0.0
      %2483 = vmatpush1.msra.mxu0 0.0
      %2484 = vmatprep.subr.mxu0 0.0
      %2485 = vmatpush1.msra.mxu0 0.0
      %2486 = vmatprep.subr.mxu0 0.0
      %2487 = vmatpush1.msra.mxu0 0.0
      %2488 = vmatprep.subr.mxu0 0.0
      %2489 = vmatpush1.msra.mxu0 0.0
      %2490 = vmatprep.subr.mxu0 0.0
      %2491 = vmatpush1.msra.mxu0 0.0
      %2492 = vmatprep.subr.mxu0 0.0
      %2493 = vmatpush1.msra.mxu0 0.0
      %2494 = vmatprep.subr.mxu0 0.0
      %2495 = vmatpush1.msra.mxu0 0.0
      %2496 = vmatprep.subr.mxu0 0.0
      %2497 = vmatpush1.msra.mxu0 0.0
      %2498 = vmatprep.subr.mxu0 0.0
      %2499 = vmatpush1.msra.mxu0 0.0
      %2500 = vmatprep.subr.mxu0 0.0
      %2501 = vmatpush1.msra.mxu0 0.0
      %2502 = vmatprep.subr.mxu0 0.0
      %2503 = vmatpush1.msra.mxu0 0.0
      %2504 = vmatprep.subr.mxu0 0.0
      %2505 = vmatpush1.msra.mxu0 0.0
      %2506 = vmatprep.subr.mxu0 0.0
      %2507 = vmatpush1.msra.mxu0 0.0
      %2508 = vmatprep.subr.mxu0 0.0
      %2509 = vmatpush1.msra.mxu0 0.0
      %2510 = vmatprep.subr.mxu0 0.0
      %2511 = vmatpush1.msra.mxu0 0.0
      %2512 = vmatprep.subr.mxu0 0.0
      %2513 = vmatpush1.msra.mxu0 0.0
      %2514 = vmatprep.subr.mxu0 0.0
      %2515 = vmatpush1.msra.mxu0 0.0
      %2516 = vmatprep.subr.mxu0 0.0
      %2517 = vmatpush1.msra.mxu0 0.0
      %2518 = vmatprep.subr.mxu0 0.0
      %2519 = vmatpush1.msra.mxu0 0.0
      %2520 = vmatprep.subr.mxu0 0.0
      %2521 = vmatpush1.msra.mxu0 0.0
      %2522 = vmatprep.subr.mxu0 0.0
      %2523 = vmatpush1.msra.mxu0 0.0
      %2524 = vmatprep.subr.mxu0 0.0
      %2525 = vmatpush1.msra.mxu0 0.0
      %2526 = vmatprep.subr.mxu0 0.0
      %2527 = vmatpush1.msra.mxu0 0.0
      %2528 = vmatprep.subr.mxu0 0.0
      %2529 = vmatpush1.msra.mxu0 0.0
      %2530 = vmatprep.subr.mxu0 0.0
      %2531 = vmatpush1.msra.mxu0 0.0
      %2532 = vmatprep.subr.mxu0 0.0
      %2533 = vmatpush1.msra.mxu0 0.0
      %2534 = vmatprep.mubr.f32.mxu0 0.0
      %2535 = vmatmul.mubr.f32.gmra.mrb[0].mxu0 %v2381
      %v2536 = vpop.f32.mrb[0].mxu0
      %v2537 = vadd.f32 0.0, %v2536
      %v2538 = vpop.f32.mrb[0].mxu0
      %2539 = vmatprep.mubr.f32.mxu0 0.0
      %2540 = vmatmul.mubr.f32.gmra.mrb[0].mxu0 %v2384
      %v2541 = vpop.f32.mrb[0].mxu0
      %v2542 = vadd.f32 0.0, %v2541
      %v2543 = vpop.f32.mrb[0].mxu0
      %2544 = vmatprep.mubr.f32.mxu0 0.0
      %2545 = vmatmul.mubr.f32.gmra.mrb[0].mxu0 %v2387
      %v2546 = vpop.f32.mrb[0].mxu0
      %v2547 = vadd.f32 0.0, %v2546
      %v2548 = vpop.f32.mrb[0].mxu0
      %2549 = vmatprep.mubr.f32.mxu0 0.0
      %2550 = vmatmul.mubr.f32.gmra.mrb[0].mxu0 %v2390
      %v2551 = vpop.f32.mrb[0].mxu0
      %v2552 = vadd.f32 0.0, %v2551
      %v2553 = vpop.f32.mrb[0].mxu0
      %2554 = vmatprep.mubr.f32.mxu0 0.0
      %2555 = vmatmul.mubr.f32.gmra.mrb[0].mxu0 %v2393
      %v2556 = vpop.f32.mrb[0].mxu0
      %v2557 = vadd.f32 0.0, %v2556
      %v2558 = vpop.f32.mrb[0].mxu0
      %2559 = vmatprep.mubr.f32.mxu0 0.0
      %2560 = vmatmul.mubr.f32.gmra.mrb[0].mxu0 %v2396
      %v2561 = vpop.f32.mrb[0].mxu0
      %v2562 = vadd.f32 0.0, %v2561
      %v2563 = vpop.f32.mrb[0].mxu0
      %2564 = vmatprep.mubr.f32.mxu0 0.0
      %2565 = vmatmul.mubr.f32.gmra.mrb[0].mxu0 %v2399
      %v2566 = vpop.f32.mrb[0].mxu0
      %v2567 = vadd.f32 0.0, %v2566
      %v2568 = vpop.f32.mrb[0].mxu0
      %2569 = vmatprep.mubr.f32.mxu0 0.0
      %2570 = vmatmul.mubr.f32.gmra.mrb[0].mxu0 %v2402
      %v2571 = vpop.f32.mrb[0].mxu0
      %v2572 = vadd.f32 0.0, %v2571
      %v2573 = vpop.f32.mrb[0].mxu0
      %2574 = vmatprep.mubr.f32.mxu0 0.0
      %2575 = vmatmul.mubr.f32.gmra.mrb[0].mxu0 %v2405
      %v2576 = vpop.f32.mrb[0].mxu0
      %v2577 = vadd.f32 0.0, %v2576
      %v2578 = vpop.f32.mrb[0].mxu0
      %2579 = vmatprep.mubr.f32.mxu0 0.0
      %2580 = vmatmul.mubr.f32.gmra.mrb[0].mxu0 %v2408
      %v2581 = vpop.f32.mrb[0].mxu0
      %v2582 = vadd.f32 0.0, %v2581
      %v2583 = vpop.f32.mrb[0].mxu0
      %2584 = vmatprep.mubr.f32.mxu0 0.0
      %2585 = vmatmul.mubr.f32.gmra.mrb[0].mxu0 %v2411
      %v2586 = vpop.f32.mrb[0].mxu0
      %v2587 = vadd.f32 0.0, %v2586
      %v2588 = vpop.f32.mrb[0].mxu0
      %2589 = vmatprep.mubr.f32.mxu0 0.0
      %2590 = vmatmul.mubr.f32.gmra.mrb[0].mxu0 %v2414
      %v2591 = vpop.f32.mrb[0].mxu0
      %v2592 = vadd.f32 0.0, %v2591
      %v2593 = vpop.f32.mrb[0].mxu0
      %2594 = vmatprep.mubr.f32.mxu0 0.0
      %2595 = vmatmul.mubr.f32.gmra.mrb[0].mxu0 %v2417
      %v2596 = vpop.f32.mrb[0].mxu0
      %v2597 = vadd.f32 0.0, %v2596
      %v2598 = vpop.f32.mrb[0].mxu0
      %2599 = vmatprep.mubr.f32.mxu0 0.0
      %2600 = vmatmul.mubr.f32.gmra.mrb[0].mxu0 %v2420
      %v2601 = vpop.f32.mrb[0].mxu0
      %v2602 = vadd.f32 0.0, %v2601
      %v2603 = vpop.f32.mrb[0].mxu0
      %2604 = vmatprep.mubr.f32.mxu0 0.0
      %2605 = vmatmul.mubr.f32.gmra.mrb[0].mxu0 %v2423
      %v2606 = vpop.f32.mrb[0].mxu0
      %v2607 = vadd.f32 0.0, %v2606
      %v2608 = vpop.f32.mrb[0].mxu0
      %2609 = vmatprep.mubr.f32.mxu0 0.0
      %2610 = vmatmul.mubr.f32.gmra.mrb[0].mxu0 %v2426
      %v2611 = vpop.f32.mrb[0].mxu0
      %v2612 = vadd.f32 0.0, %v2611
      %v2613 = vpop.f32.mrb[0].mxu0
      %2614 = vmatprep.mubr.f32.mxu0 0.0
      %2615 = vmatmul.mubr.f32.gmra.mrb[0].mxu0 %v2429
      %v2616 = vpop.f32.mrb[0].mxu0
      %v2617 = vadd.f32 0.0, %v2616
      %v2618 = vpop.f32.mrb[0].mxu0
      %2619 = vmatprep.mubr.f32.mxu0 0.0
      %2620 = vmatmul.mubr.f32.gmra.mrb[0].mxu0 %v2432
      %v2621 = vpop.f32.mrb[0].mxu0
      %v2622 = vadd.f32 0.0, %v2621
      %v2623 = vpop.f32.mrb[0].mxu0
      %2624 = vmatprep.mubr.f32.mxu0 0.0
      %2625 = vmatmul.mubr.f32.gmra.mrb[0].mxu0 %v2435
      %v2626 = vpop.f32.mrb[0].mxu0
      %v2627 = vadd.f32 0.0, %v2626
      %v2628 = vpop.f32.mrb[0].mxu0
      %2629 = vmatprep.mubr.f32.mxu0 0.0
      %2630 = vmatmul.mubr.f32.gmra.mrb[0].mxu0 %v2438
      %v2631 = vpop.f32.mrb[0].mxu0
      %v2632 = vadd.f32 0.0, %v2631
      %v2633 = vpop.f32.mrb[0].mxu0
      %2634 = vmatprep.mubr.f32.mxu0 0.0
      %2635 = vmatmul.mubr.f32.gmra.mrb[0].mxu0 %v2441
      %v2636 = vpop.f32.mrb[0].mxu0
      %v2637 = vadd.f32 0.0, %v2636
      %v2638 = vpop.f32.mrb[0].mxu0
      %2639 = vmatprep.mubr.f32.mxu0 0.0
      %2640 = vmatmul.mubr.f32.gmra.mrb[0].mxu0 %v2444
      %v2641 = vpop.f32.mrb[0].mxu0
      %v2642 = vadd.f32 0.0, %v2641
      %v2643 = vpop.f32.mrb[0].mxu0
      %2644 = vmatprep.mubr.f32.mxu0 0.0
      %2645 = vmatmul.mubr.f32.gmra.mrb[0].mxu0 %v2447
      %v2646 = vpop.f32.mrb[0].mxu0
      %v2647 = vadd.f32 0.0, %v2646
      %v2648 = vpop.f32.mrb[0].mxu0
      %2649 = vmatprep.mubr.f32.mxu0 0.0
      %2650 = vmatmul.mubr.f32.gmra.mrb[0].mxu0 %v2450
      %v2651 = vpop.f32.mrb[0].mxu0
      %v2652 = vadd.f32 0.0, %v2651
      %v2653 = vpop.f32.mrb[0].mxu0
      %2654 = vmatprep.mubr.f32.mxu0 0.0
      %2655 = vmatmul.mubr.f32.gmra.mrb[0].mxu0 %v2453
      %v2656 = vpop.f32.mrb[0].mxu0
      %v2657 = vadd.f32 0.0, %v2656
      %v2658 = vpop.f32.mrb[0].mxu0
      %2659 = vmatprep.mubr.f32.mxu0 0.0
      %2660 = vmatmul.mubr.f32.gmra.mrb[0].mxu0 %v2456
      %v2661 = vpop.f32.mrb[0].mxu0
      %v2662 = vadd.f32 0.0, %v2661
      %v2663 = vpop.f32.mrb[0].mxu0
      %2664 = vmatprep.mubr.f32.mxu0 0.0
      %2665 = vmatmul.mubr.f32.gmra.mrb[0].mxu0 %v2459
      %v2666 = vpop.f32.mrb[0].mxu0
      %v2667 = vadd.f32 0.0, %v2666
      %v2668 = vpop.f32.mrb[0].mxu0
      %2669 = vmatprep.mubr.f32.mxu0 0.0
      %2670 = vmatmul.mubr.f32.gmra.mrb[0].mxu0 %v2462
      %v2671 = vpop.f32.mrb[0].mxu0
      %v2672 = vadd.f32 0.0, %v2671
      %v2673 = vpop.f32.mrb[0].mxu0
      %2674 = vmatprep.mubr.f32.mxu0 0.0
      %2675 = vmatmul.mubr.f32.gmra.mrb[0].mxu0 %v2465
      %v2676 = vpop.f32.mrb[0].mxu0
      %v2677 = vadd.f32 0.0, %v2676
      %v2678 = vpop.f32.mrb[0].mxu0
      %2679 = vdwg.mxu0
      %v2680 = vadd.f32 %v2321, %v2537
      %v2681 = vadd.f32 %v2322, %v2542
      %v2682 = vadd.f32 %v2323, %v2547
      %v2683 = vadd.f32 %v2324, %v2552
      %v2684 = vadd.f32 %v2325, %v2557
      %v2685 = vadd.f32 %v2326, %v2562
      %v2686 = vadd.f32 %v2327, %v2567
      %v2687 = vadd.f32 %v2328, %v2572
      %v2688 = vadd.f32 %v2329, %v2577
      %v2689 = vadd.f32 %v2330, %v2582
      %v2690 = vadd.f32 %v2331, %v2587
      %v2691 = vadd.f32 %v2332, %v2592
      %v2692 = vadd.f32 %v2333, %v2597
      %v2693 = vadd.f32 %v2334, %v2602
      %v2694 = vadd.f32 %v2335, %v2607
      %v2695 = vadd.f32 %v2336, %v2612
      %v2696 = vadd.f32 %v2337, %v2617
      %v2697 = vadd.f32 %v2338, %v2622
      %v2698 = vadd.f32 %v2339, %v2627
      %v2699 = vadd.f32 %v2340, %v2632
      %v2700 = vadd.f32 %v2341, %v2637
      %v2701 = vadd.f32 %v2342, %v2642
      %v2702 = vadd.f32 %v2343, %v2647
      %v2703 = vadd.f32 %v2344, %v2652
      %v2704 = vadd.f32 %v2345, %v2657
      %v2705 = vadd.f32 %v2346, %v2662
      %v2706 = vadd.f32 %v2347, %v2667
      %v2707 = vadd.f32 %v2348, %v2672
      %v2708 = vadd.f32 %v2349, %v2677
      %v2709 = vld [vmem:[%s246 + $0x21] sm:$0xff]
      %v2710 = vld [vmem:[%s246 + $0x29] sm:$0xff]
      %v2711 = vld [vmem:[%s246 + $0x31] sm:$0xff]
      %v2712 = vld [vmem:[%s246 + $0x39] sm:$0xff]
      %v2713 = vld [vmem:[%s246 + $0x41] sm:$0xff]
      %v2714 = vld [vmem:[%s246 + $0x49] sm:$0xff]
      %v2715 = vld [vmem:[%s246 + $0x51] sm:$0xff]
      %v2716 = vld [vmem:[%s246 + $0x59] sm:$0xff]
      %v2717 = vld [vmem:[%s246 + $0x61] sm:$0xff]
      %v2718 = vld [vmem:[%s246 + $0x69] sm:$0xff]
      %v2719 = vld [vmem:[%s246 + $0x71] sm:$0xff]
      %v2720 = vld [vmem:[%s246 + $0x79] sm:$0xff]
      %v2721 = vld [vmem:[%s246 + $0x81] sm:$0xff]
      %v2722 = vld [vmem:[%s246 + $0x89] sm:$0xff]
      %v2723 = vld [vmem:[%s246 + $0x91] sm:$0xff]
      %v2724 = vld [vmem:[%s246 + $0x99] sm:$0xff]
      %v2725 = vld [vmem:[%s246 + $0xa1] sm:$0xff]
      %v2726 = vld [vmem:[%s246 + $0xa9] sm:$0xff]
      %v2727 = vld [vmem:[%s246 + $0xb1] sm:$0xff]
      %v2728 = vld [vmem:[%s246 + $0xb9] sm:$0xff]
      %v2729 = vld [vmem:[%s246 + $0xc1] sm:$0xff]
      %v2730 = vld [vmem:[%s246 + $0xc9] sm:$0xff]
      %v2731 = vld [vmem:[%s246 + $0xd1] sm:$0xff]
      %v2732 = vld [vmem:[%s246 + $0xd9] sm:$0xff]
      %v2733 = vld [vmem:[%s246 + $0xe1] sm:$0xff]
      %v2734 = vld [vmem:[%s246 + $0xe9] sm:$0xff]
      %v2735 = vld [vmem:[%s246 + $0xf1] sm:$0xff]
      %v2736 = vld [vmem:[%s246 + $0xf9] sm:$0xff]
      %v2737 = vld [vmem:[%s246 + $0x101] sm:$0xff]
      %v2738 = vld [vmem:[%s1 + $0x1c] sm:$0xf]
      %v2740 = vsel %vm312, %v2709, 0
      %v2743 = vsel %vm312, %v2710, 0
      %v2746 = vsel %vm312, %v2711, 0
      %v2749 = vsel %vm312, %v2712, 0
      %v2752 = vsel %vm312, %v2713, 0
      %v2755 = vsel %vm312, %v2714, 0
      %v2758 = vsel %vm312, %v2715, 0
      %v2761 = vsel %vm312, %v2716, 0
      %v2764 = vsel %vm312, %v2717, 0
      %v2767 = vsel %vm312, %v2718, 0
      %v2770 = vsel %vm312, %v2719, 0
      %v2773 = vsel %vm312, %v2720, 0
      %v2776 = vsel %vm312, %v2721, 0
      %v2779 = vsel %vm312, %v2722, 0
      %v2782 = vsel %vm312, %v2723, 0
      %v2785 = vsel %vm312, %v2724, 0
      %v2788 = vsel %vm312, %v2725, 0
      %v2791 = vsel %vm312, %v2726, 0
      %v2794 = vsel %vm312, %v2727, 0
      %v2797 = vsel %vm312, %v2728, 0
      %v2800 = vsel %vm312, %v2729, 0
      %v2803 = vsel %vm312, %v2730, 0
      %v2806 = vsel %vm312, %v2731, 0
      %v2809 = vsel %vm312, %v2732, 0
      %v2812 = vsel %vm312, %v2733, 0
      %v2815 = vsel %vm312, %v2734, 0
      %v2818 = vsel %vm312, %v2735, 0
      %v2821 = vsel %vm312, %v2736, 0
      %v2824 = vsel %vm312, %v2737, 0
      %v2827 = vsel %vm400, %v2738, 0
      %2829 = vmatprep.subr.mxu0 0.0
      %2830 = vmatpush1.msra.mxu0 %v2827
      %2831 = vmatprep.subr.mxu0 0.0
      %2832 = vmatpush1.msra.mxu0 0.0
      %2833 = vmatprep.subr.mxu0 0.0
      %2834 = vmatpush1.msra.mxu0 0.0
      %2835 = vmatprep.subr.mxu0 0.0
      %2836 = vmatpush1.msra.mxu0 0.0
      %2837 = vmatprep.subr.mxu0 0.0
      %2838 = vmatpush1.msra.mxu0 0.0
      %2839 = vmatprep.subr.mxu0 0.0
      %2840 = vmatpush1.msra.mxu0 0.0
      %2841 = vmatprep.subr.mxu0 0.0
      %2842 = vmatpush1.msra.mxu0 0.0
      %2843 = vmatprep.subr.mxu0 0.0
      %2844 = vmatpush1.msra.mxu0 0.0
      %2845 = vmatprep.subr.mxu0 0.0
      %2846 = vmatpush1.msra.mxu0 0.0
      %2847 = vmatprep.subr.mxu0 0.0
      %2848 = vmatpush1.msra.mxu0 0.0
      %2849 = vmatprep.subr.mxu0 0.0
      %2850 = vmatpush1.msra.mxu0 0.0
      %2851 = vmatprep.subr.mxu0 0.0
      %2852 = vmatpush1.msra.mxu0 0.0
      %2853 = vmatprep.subr.mxu0 0.0
      %2854 = vmatpush1.msra.mxu0 0.0
      %2855 = vmatprep.subr.mxu0 0.0
      %2856 = vmatpush1.msra.mxu0 0.0
      %2857 = vmatprep.subr.mxu0 0.0
      %2858 = vmatpush1.msra.mxu0 0.0
      %2859 = vmatprep.subr.mxu0 0.0
      %2860 = vmatpush1.msra.mxu0 0.0
      %2861 = vmatprep.subr.mxu0 0.0
      %2862 = vmatpush1.msra.mxu0 0.0
      %2863 = vmatprep.subr.mxu0 0.0
      %2864 = vmatpush1.msra.mxu0 0.0
      %2865 = vmatprep.subr.mxu0 0.0
      %2866 = vmatpush1.msra.mxu0 0.0
      %2867 = vmatprep.subr.mxu0 0.0
      %2868 = vmatpush1.msra.mxu0 0.0
      %2869 = vmatprep.subr.mxu0 0.0
      %2870 = vmatpush1.msra.mxu0 0.0
      %2871 = vmatprep.subr.mxu0 0.0
      %2872 = vmatpush1.msra.mxu0 0.0
      %2873 = vmatprep.subr.mxu0 0.0
      %2874 = vmatpush1.msra.mxu0 0.0
      %2875 = vmatprep.subr.mxu0 0.0
      %2876 = vmatpush1.msra.mxu0 0.0
      %2877 = vmatprep.subr.mxu0 0.0
      %2878 = vmatpush1.msra.mxu0 0.0
      %2879 = vmatprep.subr.mxu0 0.0
      %2880 = vmatpush1.msra.mxu0 0.0
      %2881 = vmatprep.subr.mxu0 0.0
      %2882 = vmatpush1.msra.mxu0 0.0
      %2883 = vmatprep.subr.mxu0 0.0
      %2884 = vmatpush1.msra.mxu0 0.0
      %2885 = vmatprep.subr.mxu0 0.0
      %2886 = vmatpush1.msra.mxu0 0.0
      %2887 = vmatprep.subr.mxu0 0.0
      %2888 = vmatpush1.msra.mxu0 0.0
      %2889 = vmatprep.subr.mxu0 0.0
      %2890 = vmatpush1.msra.mxu0 0.0
      %2891 = vmatprep.subr.mxu0 0.0
      %2892 = vmatpush1.msra.mxu0 0.0
      %2893 = vmatprep.mubr.f32.mxu0 0.0
      %2894 = vmatmul.mubr.f32.gmra.mrb[0].mxu0 %v2740
      %v2895 = vpop.f32.mrb[0].mxu0
      %v2896 = vadd.f32 0.0, %v2895
      %v2897 = vpop.f32.mrb[0].mxu0
      %2898 = vmatprep.mubr.f32.mxu0 0.0
      %2899 = vmatmul.mubr.f32.gmra.mrb[0].mxu0 %v2743
      %v2900 = vpop.f32.mrb[0].mxu0
      %v2901 = vadd.f32 0.0, %v2900
      %v2902 = vpop.f32.mrb[0].mxu0
      %2903 = vmatprep.mubr.f32.mxu0 0.0
      %2904 = vmatmul.mubr.f32.gmra.mrb[0].mxu0 %v2746
      %v2905 = vpop.f32.mrb[0].mxu0
      %v2906 = vadd.f32 0.0, %v2905
      %v2907 = vpop.f32.mrb[0].mxu0
      %2908 = vmatprep.mubr.f32.mxu0 0.0
      %2909 = vmatmul.mubr.f32.gmra.mrb[0].mxu0 %v2749
      %v2910 = vpop.f32.mrb[0].mxu0
      %v2911 = vadd.f32 0.0, %v2910
      %v2912 = vpop.f32.mrb[0].mxu0
      %2913 = vmatprep.mubr.f32.mxu0 0.0
      %2914 = vmatmul.mubr.f32.gmra.mrb[0].mxu0 %v2752
      %v2915 = vpop.f32.mrb[0].mxu0
      %v2916 = vadd.f32 0.0, %v2915
      %v2917 = vpop.f32.mrb[0].mxu0
      %2918 = vmatprep.mubr.f32.mxu0 0.0
      %2919 = vmatmul.mubr.f32.gmra.mrb[0].mxu0 %v2755
      %v2920 = vpop.f32.mrb[0].mxu0
      %v2921 = vadd.f32 0.0, %v2920
      %v2922 = vpop.f32.mrb[0].mxu0
      %2923 = vmatprep.mubr.f32.mxu0 0.0
      %2924 = vmatmul.mubr.f32.gmra.mrb[0].mxu0 %v2758
      %v2925 = vpop.f32.mrb[0].mxu0
      %v2926 = vadd.f32 0.0, %v2925
      %v2927 = vpop.f32.mrb[0].mxu0
      %2928 = vmatprep.mubr.f32.mxu0 0.0
      %2929 = vmatmul.mubr.f32.gmra.mrb[0].mxu0 %v2761
      %v2930 = vpop.f32.mrb[0].mxu0
      %v2931 = vadd.f32 0.0, %v2930
      %v2932 = vpop.f32.mrb[0].mxu0
      %2933 = vmatprep.mubr.f32.mxu0 0.0
      %2934 = vmatmul.mubr.f32.gmra.mrb[0].mxu0 %v2764
      %v2935 = vpop.f32.mrb[0].mxu0
      %v2936 = vadd.f32 0.0, %v2935
      %v2937 = vpop.f32.mrb[0].mxu0
      %2938 = vmatprep.mubr.f32.mxu0 0.0
      %2939 = vmatmul.mubr.f32.gmra.mrb[0].mxu0 %v2767
      %v2940 = vpop.f32.mrb[0].mxu0
      %v2941 = vadd.f32 0.0, %v2940
      %v2942 = vpop.f32.mrb[0].mxu0
      %2943 = vmatprep.mubr.f32.mxu0 0.0
      %2944 = vmatmul.mubr.f32.gmra.mrb[0].mxu0 %v2770
      %v2945 = vpop.f32.mrb[0].mxu0
      %v2946 = vadd.f32 0.0, %v2945
      %v2947 = vpop.f32.mrb[0].mxu0
      %2948 = vmatprep.mubr.f32.mxu0 0.0
      %2949 = vmatmul.mubr.f32.gmra.mrb[0].mxu0 %v2773
      %v2950 = vpop.f32.mrb[0].mxu0
      %v2951 = vadd.f32 0.0, %v2950
      %v2952 = vpop.f32.mrb[0].mxu0
      %2953 = vmatprep.mubr.f32.mxu0 0.0
      %2954 = vmatmul.mubr.f32.gmra.mrb[0].mxu0 %v2776
      %v2955 = vpop.f32.mrb[0].mxu0
      %v2956 = vadd.f32 0.0, %v2955
      %v2957 = vpop.f32.mrb[0].mxu0
      %2958 = vmatprep.mubr.f32.mxu0 0.0
      %2959 = vmatmul.mubr.f32.gmra.mrb[0].mxu0 %v2779
      %v2960 = vpop.f32.mrb[0].mxu0
      %v2961 = vadd.f32 0.0, %v2960
      %v2962 = vpop.f32.mrb[0].mxu0
      %2963 = vmatprep.mubr.f32.mxu0 0.0
      %2964 = vmatmul.mubr.f32.gmra.mrb[0].mxu0 %v2782
      %v2965 = vpop.f32.mrb[0].mxu0
      %v2966 = vadd.f32 0.0, %v2965
      %v2967 = vpop.f32.mrb[0].mxu0
      %2968 = vmatprep.mubr.f32.mxu0 0.0
      %2969 = vmatmul.mubr.f32.gmra.mrb[0].mxu0 %v2785
      %v2970 = vpop.f32.mrb[0].mxu0
      %v2971 = vadd.f32 0.0, %v2970
      %v2972 = vpop.f32.mrb[0].mxu0
      %2973 = vmatprep.mubr.f32.mxu0 0.0
      %2974 = vmatmul.mubr.f32.gmra.mrb[0].mxu0 %v2788
      %v2975 = vpop.f32.mrb[0].mxu0
      %v2976 = vadd.f32 0.0, %v2975
      %v2977 = vpop.f32.mrb[0].mxu0
      %2978 = vmatprep.mubr.f32.mxu0 0.0
      %2979 = vmatmul.mubr.f32.gmra.mrb[0].mxu0 %v2791
      %v2980 = vpop.f32.mrb[0].mxu0
      %v2981 = vadd.f32 0.0, %v2980
      %v2982 = vpop.f32.mrb[0].mxu0
      %2983 = vmatprep.mubr.f32.mxu0 0.0
      %2984 = vmatmul.mubr.f32.gmra.mrb[0].mxu0 %v2794
      %v2985 = vpop.f32.mrb[0].mxu0
      %v2986 = vadd.f32 0.0, %v2985
      %v2987 = vpop.f32.mrb[0].mxu0
      %2988 = vmatprep.mubr.f32.mxu0 0.0
      %2989 = vmatmul.mubr.f32.gmra.mrb[0].mxu0 %v2797
      %v2990 = vpop.f32.mrb[0].mxu0
      %v2991 = vadd.f32 0.0, %v2990
      %v2992 = vpop.f32.mrb[0].mxu0
      %2993 = vmatprep.mubr.f32.mxu0 0.0
      %2994 = vmatmul.mubr.f32.gmra.mrb[0].mxu0 %v2800
      %v2995 = vpop.f32.mrb[0].mxu0
      %v2996 = vadd.f32 0.0, %v2995
      %v2997 = vpop.f32.mrb[0].mxu0
      %2998 = vmatprep.mubr.f32.mxu0 0.0
      %2999 = vmatmul.mubr.f32.gmra.mrb[0].mxu0 %v2803
      %v3000 = vpop.f32.mrb[0].mxu0
      %v3001 = vadd.f32 0.0, %v3000
      %v3002 = vpop.f32.mrb[0].mxu0
      %3003 = vmatprep.mubr.f32.mxu0 0.0
      %3004 = vmatmul.mubr.f32.gmra.mrb[0].mxu0 %v2806
      %v3005 = vpop.f32.mrb[0].mxu0
      %v3006 = vadd.f32 0.0, %v3005
      %v3007 = vpop.f32.mrb[0].mxu0
      %3008 = vmatprep.mubr.f32.mxu0 0.0
      %3009 = vmatmul.mubr.f32.gmra.mrb[0].mxu0 %v2809
      %v3010 = vpop.f32.mrb[0].mxu0
      %v3011 = vadd.f32 0.0, %v3010
      %v3012 = vpop.f32.mrb[0].mxu0
      %3013 = vmatprep.mubr.f32.mxu0 0.0
      %3014 = vmatmul.mubr.f32.gmra.mrb[0].mxu0 %v2812
      %v3015 = vpop.f32.mrb[0].mxu0
      %v3016 = vadd.f32 0.0, %v3015
      %v3017 = vpop.f32.mrb[0].mxu0
      %3018 = vmatprep.mubr.f32.mxu0 0.0
      %3019 = vmatmul.mubr.f32.gmra.mrb[0].mxu0 %v2815
      %v3020 = vpop.f32.mrb[0].mxu0
      %v3021 = vadd.f32 0.0, %v3020
      %v3022 = vpop.f32.mrb[0].mxu0
      %3023 = vmatprep.mubr.f32.mxu0 0.0
      %3024 = vmatmul.mubr.f32.gmra.mrb[0].mxu0 %v2818
      %v3025 = vpop.f32.mrb[0].mxu0
      %v3026 = vadd.f32 0.0, %v3025
      %v3027 = vpop.f32.mrb[0].mxu0
      %3028 = vmatprep.mubr.f32.mxu0 0.0
      %3029 = vmatmul.mubr.f32.gmra.mrb[0].mxu0 %v2821
      %v3030 = vpop.f32.mrb[0].mxu0
      %v3031 = vadd.f32 0.0, %v3030
      %v3032 = vpop.f32.mrb[0].mxu0
      %3033 = vmatprep.mubr.f32.mxu0 0.0
      %3034 = vmatmul.mubr.f32.gmra.mrb[0].mxu0 %v2824
      %v3035 = vpop.f32.mrb[0].mxu0
      %v3036 = vadd.f32 0.0, %v3035
      %v3037 = vpop.f32.mrb[0].mxu0
      %3038 = vdwg.mxu0
      %v3039 = vadd.f32 %v2680, %v2896
      %v3040 = vadd.f32 %v2681, %v2901
      %v3041 = vadd.f32 %v2682, %v2906
      %v3042 = vadd.f32 %v2683, %v2911
      %v3043 = vadd.f32 %v2684, %v2916
      %v3044 = vadd.f32 %v2685, %v2921
      %v3045 = vadd.f32 %v2686, %v2926
      %v3046 = vadd.f32 %v2687, %v2931
      %v3047 = vadd.f32 %v2688, %v2936
      %v3048 = vadd.f32 %v2689, %v2941
      %v3049 = vadd.f32 %v2690, %v2946
      %v3050 = vadd.f32 %v2691, %v2951
      %v3051 = vadd.f32 %v2692, %v2956
      %v3052 = vadd.f32 %v2693, %v2961
      %v3053 = vadd.f32 %v2694, %v2966
      %v3054 = vadd.f32 %v2695, %v2971
      %v3055 = vadd.f32 %v2696, %v2976
      %v3056 = vadd.f32 %v2697, %v2981
      %v3057 = vadd.f32 %v2698, %v2986
      %v3058 = vadd.f32 %v2699, %v2991
      %v3059 = vadd.f32 %v2700, %v2996
      %v3060 = vadd.f32 %v2701, %v3001
      %v3061 = vadd.f32 %v2702, %v3006
      %v3062 = vadd.f32 %v2703, %v3011
      %v3063 = vadd.f32 %v2704, %v3016
      %v3064 = vadd.f32 %v2705, %v3021
      %v3065 = vadd.f32 %v2706, %v3026
      %v3066 = vadd.f32 %v2707, %v3031
      %v3067 = vadd.f32 %v2708, %v3036
      %v3068 = vld [vmem:[%s246 + $0x22] sm:$0xff]
      %v3069 = vld [vmem:[%s246 + $0x2a] sm:$0xff]
      %v3070 = vld [vmem:[%s246 + $0x32] sm:$0xff]
      %v3071 = vld [vmem:[%s246 + $0x3a] sm:$0xff]
      %v3072 = vld [vmem:[%s246 + $0x42] sm:$0xff]
      %v3073 = vld [vmem:[%s246 + $0x4a] sm:$0xff]
      %v3074 = vld [vmem:[%s246 + $0x52] sm:$0xff]
      %v3075 = vld [vmem:[%s246 + $0x5a] sm:$0xff]
      %v3076 = vld [vmem:[%s246 + $0x62] sm:$0xff]
      %v3077 = vld [vmem:[%s246 + $0x6a] sm:$0xff]
      %v3078 = vld [vmem:[%s246 + $0x72] sm:$0xff]
      %v3079 = vld [vmem:[%s246 + $0x7a] sm:$0xff]
      %v3080 = vld [vmem:[%s246 + $0x82] sm:$0xff]
      %v3081 = vld [vmem:[%s246 + $0x8a] sm:$0xff]
      %v3082 = vld [vmem:[%s246 + $0x92] sm:$0xff]
      %v3083 = vld [vmem:[%s246 + $0x9a] sm:$0xff]
      %v3084 = vld [vmem:[%s246 + $0xa2] sm:$0xff]
      %v3085 = vld [vmem:[%s246 + $0xaa] sm:$0xff]
      %v3086 = vld [vmem:[%s246 + $0xb2] sm:$0xff]
      %v3087 = vld [vmem:[%s246 + $0xba] sm:$0xff]
      %v3088 = vld [vmem:[%s246 + $0xc2] sm:$0xff]
      %v3089 = vld [vmem:[%s246 + $0xca] sm:$0xff]
      %v3090 = vld [vmem:[%s246 + $0xd2] sm:$0xff]
      %v3091 = vld [vmem:[%s246 + $0xda] sm:$0xff]
      %v3092 = vld [vmem:[%s246 + $0xe2] sm:$0xff]
      %v3093 = vld [vmem:[%s246 + $0xea] sm:$0xff]
      %v3094 = vld [vmem:[%s246 + $0xf2] sm:$0xff]
      %v3095 = vld [vmem:[%s246 + $0xfa] sm:$0xff]
      %v3096 = vld [vmem:[%s246 + $0x102] sm:$0xff]
      %v3097 = vld [vmem:[%s1 + $0x20] sm:$0xf]
      %v3099 = vsel %vm312, %v3068, 0
      %v3102 = vsel %vm312, %v3069, 0
      %v3105 = vsel %vm312, %v3070, 0
      %v3108 = vsel %vm312, %v3071, 0
      %v3111 = vsel %vm312, %v3072, 0
      %v3114 = vsel %vm312, %v3073, 0
      %v3117 = vsel %vm312, %v3074, 0
      %v3120 = vsel %vm312, %v3075, 0
      %v3123 = vsel %vm312, %v3076, 0
      %v3126 = vsel %vm312, %v3077, 0
      %v3129 = vsel %vm312, %v3078, 0
      %v3132 = vsel %vm312, %v3079, 0
      %v3135 = vsel %vm312, %v3080, 0
      %v3138 = vsel %vm312, %v3081, 0
      %v3141 = vsel %vm312, %v3082, 0
      %v3144 = vsel %vm312, %v3083, 0
      %v3147 = vsel %vm312, %v3084, 0
      %v3150 = vsel %vm312, %v3085, 0
      %v3153 = vsel %vm312, %v3086, 0
      %v3156 = vsel %vm312, %v3087, 0
      %v3159 = vsel %vm312, %v3088, 0
      %v3162 = vsel %vm312, %v3089, 0
      %v3165 = vsel %vm312, %v3090, 0
      %v3168 = vsel %vm312, %v3091, 0
      %v3171 = vsel %vm312, %v3092, 0
      %v3174 = vsel %vm312, %v3093, 0
      %v3177 = vsel %vm312, %v3094, 0
      %v3180 = vsel %vm312, %v3095, 0
      %v3183 = vsel %vm312, %v3096, 0
      %v3186 = vsel %vm400, %v3097, 0
      %3188 = vmatprep.subr.mxu0 0.0
      %3189 = vmatpush1.msra.mxu0 %v3186
      %3190 = vmatprep.subr.mxu0 0.0
      %3191 = vmatpush1.msra.mxu0 0.0
      %3192 = vmatprep.subr.mxu0 0.0
      %3193 = vmatpush1.msra.mxu0 0.0
      %3194 = vmatprep.subr.mxu0 0.0
      %3195 = vmatpush1.msra.mxu0 0.0
      %3196 = vmatprep.subr.mxu0 0.0
      %3197 = vmatpush1.msra.mxu0 0.0
      %3198 = vmatprep.subr.mxu0 0.0
      %3199 = vmatpush1.msra.mxu0 0.0
      %3200 = vmatprep.subr.mxu0 0.0
      %3201 = vmatpush1.msra.mxu0 0.0
      %3202 = vmatprep.subr.mxu0 0.0
      %3203 = vmatpush1.msra.mxu0 0.0
      %3204 = vmatprep.subr.mxu0 0.0
      %3205 = vmatpush1.msra.mxu0 0.0
      %3206 = vmatprep.subr.mxu0 0.0
      %3207 = vmatpush1.msra.mxu0 0.0
      %3208 = vmatprep.subr.mxu0 0.0
      %3209 = vmatpush1.msra.mxu0 0.0
      %3210 = vmatprep.subr.mxu0 0.0
      %3211 = vmatpush1.msra.mxu0 0.0
      %3212 = vmatprep.subr.mxu0 0.0
      %3213 = vmatpush1.msra.mxu0 0.0
      %3214 = vmatprep.subr.mxu0 0.0
      %3215 = vmatpush1.msra.mxu0 0.0
      %3216 = vmatprep.subr.mxu0 0.0
      %3217 = vmatpush1.msra.mxu0 0.0
      %3218 = vmatprep.subr.mxu0 0.0
      %3219 = vmatpush1.msra.mxu0 0.0
      %3220 = vmatprep.subr.mxu0 0.0
      %3221 = vmatpush1.msra.mxu0 0.0
      %3222 = vmatprep.subr.mxu0 0.0
      %3223 = vmatpush1.msra.mxu0 0.0
      %3224 = vmatprep.subr.mxu0 0.0
      %3225 = vmatpush1.msra.mxu0 0.0
      %3226 = vmatprep.subr.mxu0 0.0
      %3227 = vmatpush1.msra.mxu0 0.0
      %3228 = vmatprep.subr.mxu0 0.0
      %3229 = vmatpush1.msra.mxu0 0.0
      %3230 = vmatprep.subr.mxu0 0.0
      %3231 = vmatpush1.msra.mxu0 0.0
      %3232 = vmatprep.subr.mxu0 0.0
      %3233 = vmatpush1.msra.mxu0 0.0
      %3234 = vmatprep.subr.mxu0 0.0
      %3235 = vmatpush1.msra.mxu0 0.0
      %3236 = vmatprep.subr.mxu0 0.0
      %3237 = vmatpush1.msra.mxu0 0.0
      %3238 = vmatprep.subr.mxu0 0.0
      %3239 = vmatpush1.msra.mxu0 0.0
      %3240 = vmatprep.subr.mxu0 0.0
      %3241 = vmatpush1.msra.mxu0 0.0
      %3242 = vmatprep.subr.mxu0 0.0
      %3243 = vmatpush1.msra.mxu0 0.0
      %3244 = vmatprep.subr.mxu0 0.0
      %3245 = vmatpush1.msra.mxu0 0.0
      %3246 = vmatprep.subr.mxu0 0.0
      %3247 = vmatpush1.msra.mxu0 0.0
      %3248 = vmatprep.subr.mxu0 0.0
      %3249 = vmatpush1.msra.mxu0 0.0
      %3250 = vmatprep.subr.mxu0 0.0
      %3251 = vmatpush1.msra.mxu0 0.0
      %3252 = vmatprep.mubr.f32.mxu0 0.0
      %3253 = vmatmul.mubr.f32.gmra.mrb[0].mxu0 %v3099
      %v3254 = vpop.f32.mrb[0].mxu0
      %v3255 = vadd.f32 0.0, %v3254
      %v3256 = vpop.f32.mrb[0].mxu0
      %3257 = vmatprep.mubr.f32.mxu0 0.0
      %3258 = vmatmul.mubr.f32.gmra.mrb[0].mxu0 %v3102
      %v3259 = vpop.f32.mrb[0].mxu0
      %v3260 = vadd.f32 0.0, %v3259
      %v3261 = vpop.f32.mrb[0].mxu0
      %3262 = vmatprep.mubr.f32.mxu0 0.0
      %3263 = vmatmul.mubr.f32.gmra.mrb[0].mxu0 %v3105
      %v3264 = vpop.f32.mrb[0].mxu0
      %v3265 = vadd.f32 0.0, %v3264
      %v3266 = vpop.f32.mrb[0].mxu0
      %3267 = vmatprep.mubr.f32.mxu0 0.0
      %3268 = vmatmul.mubr.f32.gmra.mrb[0].mxu0 %v3108
      %v3269 = vpop.f32.mrb[0].mxu0
      %v3270 = vadd.f32 0.0, %v3269
      %v3271 = vpop.f32.mrb[0].mxu0
      %3272 = vmatprep.mubr.f32.mxu0 0.0
      %3273 = vmatmul.mubr.f32.gmra.mrb[0].mxu0 %v3111
      %v3274 = vpop.f32.mrb[0].mxu0
      %v3275 = vadd.f32 0.0, %v3274
      %v3276 = vpop.f32.mrb[0].mxu0
      %3277 = vmatprep.mubr.f32.mxu0 0.0
      %3278 = vmatmul.mubr.f32.gmra.mrb[0].mxu0 %v3114
      %v3279 = vpop.f32.mrb[0].mxu0
      %v3280 = vadd.f32 0.0, %v3279
      %v3281 = vpop.f32.mrb[0].mxu0
      %3282 = vmatprep.mubr.f32.mxu0 0.0
      %3283 = vmatmul.mubr.f32.gmra.mrb[0].mxu0 %v3117
      %v3284 = vpop.f32.mrb[0].mxu0
      %v3285 = vadd.f32 0.0, %v3284
      %v3286 = vpop.f32.mrb[0].mxu0
      %3287 = vmatprep.mubr.f32.mxu0 0.0
      %3288 = vmatmul.mubr.f32.gmra.mrb[0].mxu0 %v3120
      %v3289 = vpop.f32.mrb[0].mxu0
      %v3290 = vadd.f32 0.0, %v3289
      %v3291 = vpop.f32.mrb[0].mxu0
      %3292 = vmatprep.mubr.f32.mxu0 0.0
      %3293 = vmatmul.mubr.f32.gmra.mrb[0].mxu0 %v3123
      %v3294 = vpop.f32.mrb[0].mxu0
      %v3295 = vadd.f32 0.0, %v3294
      %v3296 = vpop.f32.mrb[0].mxu0
      %3297 = vmatprep.mubr.f32.mxu0 0.0
      %3298 = vmatmul.mubr.f32.gmra.mrb[0].mxu0 %v3126
      %v3299 = vpop.f32.mrb[0].mxu0
      %v3300 = vadd.f32 0.0, %v3299
      %v3301 = vpop.f32.mrb[0].mxu0
      %3302 = vmatprep.mubr.f32.mxu0 0.0
      %3303 = vmatmul.mubr.f32.gmra.mrb[0].mxu0 %v3129
      %v3304 = vpop.f32.mrb[0].mxu0
      %v3305 = vadd.f32 0.0, %v3304
      %v3306 = vpop.f32.mrb[0].mxu0
      %3307 = vmatprep.mubr.f32.mxu0 0.0
      %3308 = vmatmul.mubr.f32.gmra.mrb[0].mxu0 %v3132
      %v3309 = vpop.f32.mrb[0].mxu0
      %v3310 = vadd.f32 0.0, %v3309
      %v3311 = vpop.f32.mrb[0].mxu0
      %3312 = vmatprep.mubr.f32.mxu0 0.0
      %3313 = vmatmul.mubr.f32.gmra.mrb[0].mxu0 %v3135
      %v3314 = vpop.f32.mrb[0].mxu0
      %v3315 = vadd.f32 0.0, %v3314
      %v3316 = vpop.f32.mrb[0].mxu0
      %3317 = vmatprep.mubr.f32.mxu0 0.0
      %3318 = vmatmul.mubr.f32.gmra.mrb[0].mxu0 %v3138
      %v3319 = vpop.f32.mrb[0].mxu0
      %v3320 = vadd.f32 0.0, %v3319
      %v3321 = vpop.f32.mrb[0].mxu0
      %3322 = vmatprep.mubr.f32.mxu0 0.0
      %3323 = vmatmul.mubr.f32.gmra.mrb[0].mxu0 %v3141
      %v3324 = vpop.f32.mrb[0].mxu0
      %v3325 = vadd.f32 0.0, %v3324
      %v3326 = vpop.f32.mrb[0].mxu0
      %3327 = vmatprep.mubr.f32.mxu0 0.0
      %3328 = vmatmul.mubr.f32.gmra.mrb[0].mxu0 %v3144
      %v3329 = vpop.f32.mrb[0].mxu0
      %v3330 = vadd.f32 0.0, %v3329
      %v3331 = vpop.f32.mrb[0].mxu0
      %3332 = vmatprep.mubr.f32.mxu0 0.0
      %3333 = vmatmul.mubr.f32.gmra.mrb[0].mxu0 %v3147
      %v3334 = vpop.f32.mrb[0].mxu0
      %v3335 = vadd.f32 0.0, %v3334
      %v3336 = vpop.f32.mrb[0].mxu0
      %3337 = vmatprep.mubr.f32.mxu0 0.0
      %3338 = vmatmul.mubr.f32.gmra.mrb[0].mxu0 %v3150
      %v3339 = vpop.f32.mrb[0].mxu0
      %v3340 = vadd.f32 0.0, %v3339
      %v3341 = vpop.f32.mrb[0].mxu0
      %3342 = vmatprep.mubr.f32.mxu0 0.0
      %3343 = vmatmul.mubr.f32.gmra.mrb[0].mxu0 %v3153
      %v3344 = vpop.f32.mrb[0].mxu0
      %v3345 = vadd.f32 0.0, %v3344
      %v3346 = vpop.f32.mrb[0].mxu0
      %3347 = vmatprep.mubr.f32.mxu0 0.0
      %3348 = vmatmul.mubr.f32.gmra.mrb[0].mxu0 %v3156
      %v3349 = vpop.f32.mrb[0].mxu0
      %v3350 = vadd.f32 0.0, %v3349
      %v3351 = vpop.f32.mrb[0].mxu0
      %3352 = vmatprep.mubr.f32.mxu0 0.0
      %3353 = vmatmul.mubr.f32.gmra.mrb[0].mxu0 %v3159
      %v3354 = vpop.f32.mrb[0].mxu0
      %v3355 = vadd.f32 0.0, %v3354
      %v3356 = vpop.f32.mrb[0].mxu0
      %3357 = vmatprep.mubr.f32.mxu0 0.0
      %3358 = vmatmul.mubr.f32.gmra.mrb[0].mxu0 %v3162
      %v3359 = vpop.f32.mrb[0].mxu0
      %v3360 = vadd.f32 0.0, %v3359
      %v3361 = vpop.f32.mrb[0].mxu0
      %3362 = vmatprep.mubr.f32.mxu0 0.0
      %3363 = vmatmul.mubr.f32.gmra.mrb[0].mxu0 %v3165
      %v3364 = vpop.f32.mrb[0].mxu0
      %v3365 = vadd.f32 0.0, %v3364
      %v3366 = vpop.f32.mrb[0].mxu0
      %3367 = vmatprep.mubr.f32.mxu0 0.0
      %3368 = vmatmul.mubr.f32.gmra.mrb[0].mxu0 %v3168
      %v3369 = vpop.f32.mrb[0].mxu0
      %v3370 = vadd.f32 0.0, %v3369
      %v3371 = vpop.f32.mrb[0].mxu0
      %3372 = vmatprep.mubr.f32.mxu0 0.0
      %3373 = vmatmul.mubr.f32.gmra.mrb[0].mxu0 %v3171
      %v3374 = vpop.f32.mrb[0].mxu0
      %v3375 = vadd.f32 0.0, %v3374
      %v3376 = vpop.f32.mrb[0].mxu0
      %3377 = vmatprep.mubr.f32.mxu0 0.0
      %3378 = vmatmul.mubr.f32.gmra.mrb[0].mxu0 %v3174
      %v3379 = vpop.f32.mrb[0].mxu0
      %v3380 = vadd.f32 0.0, %v3379
      %v3381 = vpop.f32.mrb[0].mxu0
      %3382 = vmatprep.mubr.f32.mxu0 0.0
      %3383 = vmatmul.mubr.f32.gmra.mrb[0].mxu0 %v3177
      %v3384 = vpop.f32.mrb[0].mxu0
      %v3385 = vadd.f32 0.0, %v3384
      %v3386 = vpop.f32.mrb[0].mxu0
      %3387 = vmatprep.mubr.f32.mxu0 0.0
      %3388 = vmatmul.mubr.f32.gmra.mrb[0].mxu0 %v3180
      %v3389 = vpop.f32.mrb[0].mxu0
      %v3390 = vadd.f32 0.0, %v3389
      %v3391 = vpop.f32.mrb[0].mxu0
      %3392 = vmatprep.mubr.f32.mxu0 0.0
      %3393 = vmatmul.mubr.f32.gmra.mrb[0].mxu0 %v3183
      %v3394 = vpop.f32.mrb[0].mxu0
      %v3395 = vadd.f32 0.0, %v3394
      %v3396 = vpop.f32.mrb[0].mxu0
      %3397 = vdwg.mxu0
      %v3398 = vadd.f32 %v3039, %v3255
      %v3399 = vadd.f32 %v3040, %v3260
      %v3400 = vadd.f32 %v3041, %v3265
      %v3401 = vadd.f32 %v3042, %v3270
      %v3402 = vadd.f32 %v3043, %v3275
      %v3403 = vadd.f32 %v3044, %v3280
      %v3404 = vadd.f32 %v3045, %v3285
      %v3405 = vadd.f32 %v3046, %v3290
      %v3406 = vadd.f32 %v3047, %v3295
      %v3407 = vadd.f32 %v3048, %v3300
      %v3408 = vadd.f32 %v3049, %v3305
      %v3409 = vadd.f32 %v3050, %v3310
      %v3410 = vadd.f32 %v3051, %v3315
      %v3411 = vadd.f32 %v3052, %v3320
      %v3412 = vadd.f32 %v3053, %v3325
      %v3413 = vadd.f32 %v3054, %v3330
      %v3414 = vadd.f32 %v3055, %v3335
      %v3415 = vadd.f32 %v3056, %v3340
      %v3416 = vadd.f32 %v3057, %v3345
      %v3417 = vadd.f32 %v3058, %v3350
      %v3418 = vadd.f32 %v3059, %v3355
      %v3419 = vadd.f32 %v3060, %v3360
      %v3420 = vadd.f32 %v3061, %v3365
      %v3421 = vadd.f32 %v3062, %v3370
      %v3422 = vadd.f32 %v3063, %v3375
      %v3423 = vadd.f32 %v3064, %v3380
      %v3424 = vadd.f32 %v3065, %v3385
      %v3425 = vadd.f32 %v3066, %v3390
      %v3426 = vadd.f32 %v3067, %v3395
      %v3427 = vld [vmem:[%s2] sm:$0x1]
      %v3429 = vlaneseq
      %v3430 = vshrl.u32 %v3429, 7
      %v3431 = vsub.s32 0, %v3430
      %v3432 = vrot.slane %v3427, %v3431
      %v3434 = vadd.f32 %v3398, %v3432
      %v3435 = vadd.f32 %v3399, %v3432
      %v3436 = vadd.f32 %v3400, %v3432
      %v3437 = vadd.f32 %v3401, %v3432
      %v3438 = vadd.f32 %v3402, %v3432
      %v3439 = vadd.f32 %v3403, %v3432
      %v3440 = vadd.f32 %v3404, %v3432
      %v3441 = vadd.f32 %v3405, %v3432
      %v3442 = vadd.f32 %v3406, %v3432
      %v3443 = vadd.f32 %v3407, %v3432
      %v3444 = vadd.f32 %v3408, %v3432
      %v3445 = vadd.f32 %v3409, %v3432
      %v3446 = vadd.f32 %v3410, %v3432
      %v3447 = vadd.f32 %v3411, %v3432
      %v3448 = vadd.f32 %v3412, %v3432
      %v3449 = vadd.f32 %v3413, %v3432
      %v3450 = vadd.f32 %v3414, %v3432
      %v3451 = vadd.f32 %v3415, %v3432
      %v3452 = vadd.f32 %v3416, %v3432
      %v3453 = vadd.f32 %v3417, %v3432
      %v3454 = vadd.f32 %v3418, %v3432
      %v3455 = vadd.f32 %v3419, %v3432
      %v3456 = vadd.f32 %v3420, %v3432
      %v3457 = vadd.f32 %v3421, %v3432
      %v3458 = vadd.f32 %v3422, %v3432
      %v3459 = vadd.f32 %v3423, %v3432
      %v3460 = vadd.f32 %v3424, %v3432
      %v3461 = vadd.f32 %v3425, %v3432
      %v3462 = vadd.f32 %v3426, %v3432
      %v3463 = vmax.f32 %v3434, 0.0
      %v3464 = vmax.f32 %v3435, 0.0
      %v3465 = vmax.f32 %v3436, 0.0
      %v3466 = vmax.f32 %v3437, 0.0
      %v3467 = vmax.f32 %v3438, 0.0
      %v3468 = vmax.f32 %v3439, 0.0
      %v3469 = vmax.f32 %v3440, 0.0
      %v3470 = vmax.f32 %v3441, 0.0
      %v3471 = vmax.f32 %v3442, 0.0
      %v3472 = vmax.f32 %v3443, 0.0
      %v3473 = vmax.f32 %v3444, 0.0
      %v3474 = vmax.f32 %v3445, 0.0
      %v3475 = vmax.f32 %v3446, 0.0
      %v3476 = vmax.f32 %v3447, 0.0
      %v3477 = vmax.f32 %v3448, 0.0
      %v3478 = vmax.f32 %v3449, 0.0
      %v3479 = vmax.f32 %v3450, 0.0
      %v3480 = vmax.f32 %v3451, 0.0
      %v3481 = vmax.f32 %v3452, 0.0
      %v3482 = vmax.f32 %v3453, 0.0
      %v3483 = vmax.f32 %v3454, 0.0
      %v3484 = vmax.f32 %v3455, 0.0
      %v3485 = vmax.f32 %v3456, 0.0
      %v3486 = vmax.f32 %v3457, 0.0
      %v3487 = vmax.f32 %v3458, 0.0
      %v3488 = vmax.f32 %v3459, 0.0
      %v3489 = vmax.f32 %v3460, 0.0
      %v3490 = vmax.f32 %v3461, 0.0
      %v3491 = vmax.f32 %v3462, 0.0
      %vm3492 = vcmask 64512
      %3493 = vst.msk [vmem:[#allocation2] sm:$0xff] %vm3492, %v3463
      %3494 = vst.msk [vmem:[#allocation2 + $0x8] sm:$0xff] %vm3492, %v3464
      %3495 = vst.msk [vmem:[#allocation2 + $0x10] sm:$0xff] %vm3492, %v3465
      %3496 = vst.msk [vmem:[#allocation2 + $0x18] sm:$0xff] %vm3492, %v3466
      %3497 = vst.msk [vmem:[#allocation2 + $0x20] sm:$0xff] %vm3492, %v3467
      %3498 = vst.msk [vmem:[#allocation2 + $0x28] sm:$0xff] %vm3492, %v3468
      %3499 = vst.msk [vmem:[#allocation2 + $0x30] sm:$0xff] %vm3492, %v3469
      %3500 = vst.msk [vmem:[#allocation2 + $0x38] sm:$0xff] %vm3492, %v3470
      %3501 = vst.msk [vmem:[#allocation2 + $0x40] sm:$0xff] %vm3492, %v3471
      %3502 = vst.msk [vmem:[#allocation2 + $0x48] sm:$0xff] %vm3492, %v3472
      %3503 = vst.msk [vmem:[#allocation2 + $0x50] sm:$0xff] %vm3492, %v3473
      %3504 = vst.msk [vmem:[#allocation2 + $0x58] sm:$0xff] %vm3492, %v3474
      %3505 = vst.msk [vmem:[#allocation2 + $0x60] sm:$0xff] %vm3492, %v3475
      %3506 = vst.msk [vmem:[#allocation2 + $0x68] sm:$0xff] %vm3492, %v3476
      %3507 = vst.msk [vmem:[#allocation2 + $0x70] sm:$0xff] %vm3492, %v3477
      %3508 = vst.msk [vmem:[#allocation2 + $0x78] sm:$0xff] %vm3492, %v3478
      %3509 = vst.msk [vmem:[#allocation2 + $0x80] sm:$0xff] %vm3492, %v3479
      %3510 = vst.msk [vmem:[#allocation2 + $0x88] sm:$0xff] %vm3492, %v3480
      %3511 = vst.msk [vmem:[#allocation2 + $0x90] sm:$0xff] %vm3492, %v3481
      %3512 = vst.msk [vmem:[#allocation2 + $0x98] sm:$0xff] %vm3492, %v3482
      %3513 = vst.msk [vmem:[#allocation2 + $0xa0] sm:$0xff] %vm3492, %v3483
      %3514 = vst.msk [vmem:[#allocation2 + $0xa8] sm:$0xff] %vm3492, %v3484
      %3515 = vst.msk [vmem:[#allocation2 + $0xb0] sm:$0xff] %vm3492, %v3485
      %3516 = vst.msk [vmem:[#allocation2 + $0xb8] sm:$0xff] %vm3492, %v3486
      %3517 = vst.msk [vmem:[#allocation2 + $0xc0] sm:$0xff] %vm3492, %v3487
      %3518 = vst.msk [vmem:[#allocation2 + $0xc8] sm:$0xff] %vm3492, %v3488
      %3519 = vst.msk [vmem:[#allocation2 + $0xd0] sm:$0xff] %vm3492, %v3489
      %3520 = vst.msk [vmem:[#allocation2 + $0xd8] sm:$0xff] %vm3492, %v3490
      %3521 = vst.msk [vmem:[#allocation2 + $0xe0] sm:$0xff] %vm3492, %v3491
      %v3522 = vld [vmem:[#allocation2] sm:$0xff]
      %v3523 = vld [vmem:[#allocation2 + $0x8] sm:$0xff]
      %v3524 = vld [vmem:[#allocation2 + $0x10] sm:$0xff]
      %v3525 = vld [vmem:[#allocation2 + $0x18] sm:$0xff]
      %v3526 = vld [vmem:[#allocation2 + $0x20] sm:$0xff]
      %v3527 = vld [vmem:[#allocation2 + $0x28] sm:$0xff]
      %v3528 = vld [vmem:[#allocation2 + $0x30] sm:$0xff]
      %v3529 = vld [vmem:[#allocation2 + $0x38] sm:$0xff]
      %v3530 = vld [vmem:[#allocation2 + $0x40] sm:$0xff]
      %v3531 = vld [vmem:[#allocation2 + $0x48] sm:$0xff]
      %v3532 = vld [vmem:[#allocation2 + $0x50] sm:$0xff]
      %v3533 = vld [vmem:[#allocation2 + $0x58] sm:$0xff]
      %v3534 = vld [vmem:[#allocation2 + $0x60] sm:$0xff]
      %v3535 = vld [vmem:[#allocation2 + $0x68] sm:$0xff]
      %v3536 = vld [vmem:[#allocation2 + $0x70] sm:$0xff]
      %v3537 = vld [vmem:[#allocation2 + $0x78] sm:$0xff]
      %v3538 = vld [vmem:[#allocation2 + $0x80] sm:$0xff]
      %v3539 = vld [vmem:[#allocation2 + $0x88] sm:$0xff]
      %v3540 = vld [vmem:[#allocation2 + $0x90] sm:$0xff]
      %v3541 = vld [vmem:[#allocation2 + $0x98] sm:$0xff]
      %v3542 = vld [vmem:[#allocation2 + $0xa0] sm:$0xff]
      %v3543 = vld [vmem:[#allocation2 + $0xa8] sm:$0xff]
      %v3544 = vld [vmem:[#allocation2 + $0xb0] sm:$0xff]
      %v3545 = vld [vmem:[#allocation2 + $0xb8] sm:$0xff]
      %v3546 = vld [vmem:[%s3] sm:$0xff]
      %v3547 = vld [vmem:[#allocation2 + $0x1] sm:$0xff]
      %v3548 = vld [vmem:[#allocation2 + $0x9] sm:$0xff]
      %v3549 = vld [vmem:[#allocation2 + $0x11] sm:$0xff]
      %v3550 = vld [vmem:[#allocation2 + $0x19] sm:$0xff]
      %v3551 = vld [vmem:[#allocation2 + $0x21] sm:$0xff]
      %v3552 = vld [vmem:[#allocation2 + $0x29] sm:$0xff]
      %v3553 = vld [vmem:[#allocation2 + $0x31] sm:$0xff]
      %v3554 = vld [vmem:[#allocation2 + $0x39] sm:$0xff]
      %v3555 = vld [vmem:[#allocation2 + $0x41] sm:$0xff]
      %v3556 = vld [vmem:[#allocation2 + $0x49] sm:$0xff]
      %v3557 = vld [vmem:[#allocation2 + $0x51] sm:$0xff]
      %v3558 = vld [vmem:[#allocation2 + $0x59] sm:$0xff]
      %v3559 = vld [vmem:[#allocation2 + $0x61] sm:$0xff]
      %v3560 = vld [vmem:[#allocation2 + $0x69] sm:$0xff]
      %v3561 = vld [vmem:[#allocation2 + $0x71] sm:$0xff]
      %v3562 = vld [vmem:[#allocation2 + $0x79] sm:$0xff]
      %v3563 = vld [vmem:[#allocation2 + $0x81] sm:$0xff]
      %v3564 = vld [vmem:[#allocation2 + $0x89] sm:$0xff]
      %v3565 = vld [vmem:[#allocation2 + $0x91] sm:$0xff]
      %v3566 = vld [vmem:[#allocation2 + $0x99] sm:$0xff]
      %v3567 = vld [vmem:[#allocation2 + $0xa1] sm:$0xff]
      %v3568 = vld [vmem:[#allocation2 + $0xa9] sm:$0xff]
      %v3569 = vld [vmem:[#allocation2 + $0xb1] sm:$0xff]
      %v3570 = vld [vmem:[#allocation2 + $0xb9] sm:$0xff]
      %v3571 = vld [vmem:[%s3 + $0x8] sm:$0xff]
      %v3573 = vsel %vm3492, %v3547, 0
      %v3576 = vsel %vm3492, %v3548, 0
      %v3579 = vsel %vm3492, %v3549, 0
      %v3582 = vsel %vm3492, %v3550, 0
      %v3585 = vsel %vm3492, %v3551, 0
      %v3588 = vsel %vm3492, %v3552, 0
      %v3591 = vsel %vm3492, %v3553, 0
      %v3594 = vsel %vm3492, %v3554, 0
      %v3597 = vsel %vm3492, %v3555, 0
      %v3600 = vsel %vm3492, %v3556, 0
      %v3603 = vsel %vm3492, %v3557, 0
      %v3606 = vsel %vm3492, %v3558, 0
      %v3609 = vsel %vm3492, %v3559, 0
      %v3612 = vsel %vm3492, %v3560, 0
      %v3615 = vsel %vm3492, %v3561, 0
      %v3618 = vsel %vm3492, %v3562, 0
      %v3621 = vsel %vm3492, %v3563, 0
      %v3624 = vsel %vm3492, %v3564, 0
      %v3627 = vsel %vm3492, %v3565, 0
      %v3630 = vsel %vm3492, %v3566, 0
      %v3633 = vsel %vm3492, %v3567, 0
      %v3636 = vsel %vm3492, %v3568, 0
      %v3639 = vsel %vm3492, %v3569, 0
      %v3642 = vsel %vm3492, %v3570, 0
      %3644 = vmatprep.subr.mxu0 0.0
      %3645 = vmatpush1.msra.mxu0 %v3571
      %3646 = vmatprep.subr.mxu0 0.0
      %3647 = vmatpush1.msra.mxu0 0.0
      %3648 = vmatprep.subr.mxu0 0.0
      %3649 = vmatpush1.msra.mxu0 0.0
      %3650 = vmatprep.subr.mxu0 0.0
      %3651 = vmatpush1.msra.mxu0 0.0
      %3652 = vmatprep.subr.mxu0 0.0
      %3653 = vmatpush1.msra.mxu0 0.0
      %3654 = vmatprep.subr.mxu0 0.0
      %3655 = vmatpush1.msra.mxu0 0.0
      %3656 = vmatprep.subr.mxu0 0.0
      %3657 = vmatpush1.msra.mxu0 0.0
      %3658 = vmatprep.subr.mxu0 0.0
      %3659 = vmatpush1.msra.mxu0 0.0
      %3660 = vmatprep.subr.mxu0 0.0
      %3661 = vmatpush1.msra.mxu0 0.0
      %3662 = vmatprep.subr.mxu0 0.0
      %3663 = vmatpush1.msra.mxu0 0.0
      %3664 = vmatprep.subr.mxu0 0.0
      %3665 = vmatpush1.msra.mxu0 0.0
      %3666 = vmatprep.subr.mxu0 0.0
      %3667 = vmatpush1.msra.mxu0 0.0
      %3668 = vmatprep.subr.mxu0 0.0
      %3669 = vmatpush1.msra.mxu0 0.0
      %3670 = vmatprep.subr.mxu0 0.0
      %3671 = vmatpush1.msra.mxu0 0.0
      %3672 = vmatprep.subr.mxu0 0.0
      %3673 = vmatpush1.msra.mxu0 0.0
      %3674 = vmatprep.subr.mxu0 0.0
      %3675 = vmatpush1.msra.mxu0 0.0
      %3676 = vmatprep.subr.mxu0 0.0
      %3677 = vmatpush1.msra.mxu0 0.0
      %3678 = vmatprep.subr.mxu0 0.0
      %3679 = vmatpush1.msra.mxu0 0.0
      %3680 = vmatprep.subr.mxu0 0.0
      %3681 = vmatpush1.msra.mxu0 0.0
      %3682 = vmatprep.subr.mxu0 0.0
      %3683 = vmatpush1.msra.mxu0 0.0
      %3684 = vmatprep.subr.mxu0 0.0
      %3685 = vmatpush1.msra.mxu0 0.0
      %3686 = vmatprep.subr.mxu0 0.0
      %3687 = vmatpush1.msra.mxu0 0.0
      %3688 = vmatprep.subr.mxu0 0.0
      %3689 = vmatpush1.msra.mxu0 0.0
      %3690 = vmatprep.subr.mxu0 0.0
      %3691 = vmatpush1.msra.mxu0 0.0
      %3692 = vmatprep.subr.mxu0 0.0
      %3693 = vmatpush1.msra.mxu0 0.0
      %3694 = vmatprep.subr.mxu0 0.0
      %3695 = vmatpush1.msra.mxu0 0.0
      %3696 = vmatprep.subr.mxu0 0.0
      %3697 = vmatpush1.msra.mxu0 0.0
      %3698 = vmatprep.subr.mxu0 0.0
      %3699 = vmatpush1.msra.mxu0 0.0
      %3700 = vmatprep.subr.mxu0 0.0
      %3701 = vmatpush1.msra.mxu0 0.0
      %3702 = vmatprep.subr.mxu0 0.0
      %3703 = vmatpush1.msra.mxu0 0.0
      %3704 = vmatprep.subr.mxu0 0.0
      %3705 = vmatpush1.msra.mxu0 0.0
      %3706 = vmatprep.subr.mxu0 0.0
      %3707 = vmatpush1.msra.mxu0 0.0
      %3708 = vmatprep.mubr.f32.mxu0 0.0
      %3709 = vmatmul.mubr.f32.gmra.mrb[0].mxu0 %v3573
      %v3710 = vpop.f32.mrb[0].mxu0
      %v3711 = vadd.f32 0.0, %v3710
      %v3712 = vpop.f32.mrb[0].mxu0
      %3713 = vmatprep.mubr.f32.mxu0 0.0
      %3714 = vmatmul.mubr.f32.gmra.mrb[0].mxu0 %v3576
      %v3715 = vpop.f32.mrb[0].mxu0
      %v3716 = vadd.f32 0.0, %v3715
      %v3717 = vpop.f32.mrb[0].mxu0
      %3718 = vmatprep.mubr.f32.mxu0 0.0
      %3719 = vmatmul.mubr.f32.gmra.mrb[0].mxu0 %v3579
      %v3720 = vpop.f32.mrb[0].mxu0
      %v3721 = vadd.f32 0.0, %v3720
      %v3722 = vpop.f32.mrb[0].mxu0
      %3723 = vmatprep.mubr.f32.mxu0 0.0
      %3724 = vmatmul.mubr.f32.gmra.mrb[0].mxu0 %v3582
      %v3725 = vpop.f32.mrb[0].mxu0
      %v3726 = vadd.f32 0.0, %v3725
      %v3727 = vpop.f32.mrb[0].mxu0
      %3728 = vmatprep.mubr.f32.mxu0 0.0
      %3729 = vmatmul.mubr.f32.gmra.mrb[0].mxu0 %v3585
      %v3730 = vpop.f32.mrb[0].mxu0
      %v3731 = vadd.f32 0.0, %v3730
      %v3732 = vpop.f32.mrb[0].mxu0
      %3733 = vmatprep.mubr.f32.mxu0 0.0
      %3734 = vmatmul.mubr.f32.gmra.mrb[0].mxu0 %v3588
      %v3735 = vpop.f32.mrb[0].mxu0
      %v3736 = vadd.f32 0.0, %v3735
      %v3737 = vpop.f32.mrb[0].mxu0
      %3738 = vmatprep.mubr.f32.mxu0 0.0
      %3739 = vmatmul.mubr.f32.gmra.mrb[0].mxu0 %v3591
      %v3740 = vpop.f32.mrb[0].mxu0
      %v3741 = vadd.f32 0.0, %v3740
      %v3742 = vpop.f32.mrb[0].mxu0
      %3743 = vmatprep.mubr.f32.mxu0 0.0
      %3744 = vmatmul.mubr.f32.gmra.mrb[0].mxu0 %v3594
      %v3745 = vpop.f32.mrb[0].mxu0
      %v3746 = vadd.f32 0.0, %v3745
      %v3747 = vpop.f32.mrb[0].mxu0
      %3748 = vmatprep.mubr.f32.mxu0 0.0
      %3749 = vmatmul.mubr.f32.gmra.mrb[0].mxu0 %v3597
      %v3750 = vpop.f32.mrb[0].mxu0
      %v3751 = vadd.f32 0.0, %v3750
      %v3752 = vpop.f32.mrb[0].mxu0
      %3753 = vmatprep.mubr.f32.mxu0 0.0
      %3754 = vmatmul.mubr.f32.gmra.mrb[0].mxu0 %v3600
      %v3755 = vpop.f32.mrb[0].mxu0
      %v3756 = vadd.f32 0.0, %v3755
      %v3757 = vpop.f32.mrb[0].mxu0
      %3758 = vmatprep.mubr.f32.mxu0 0.0
      %3759 = vmatmul.mubr.f32.gmra.mrb[0].mxu0 %v3603
      %v3760 = vpop.f32.mrb[0].mxu0
      %v3761 = vadd.f32 0.0, %v3760
      %v3762 = vpop.f32.mrb[0].mxu0
      %3763 = vmatprep.mubr.f32.mxu0 0.0
      %3764 = vmatmul.mubr.f32.gmra.mrb[0].mxu0 %v3606
      %v3765 = vpop.f32.mrb[0].mxu0
      %v3766 = vadd.f32 0.0, %v3765
      %v3767 = vpop.f32.mrb[0].mxu0
      %3768 = vmatprep.mubr.f32.mxu0 0.0
      %3769 = vmatmul.mubr.f32.gmra.mrb[0].mxu0 %v3609
      %v3770 = vpop.f32.mrb[0].mxu0
      %v3771 = vadd.f32 0.0, %v3770
      %v3772 = vpop.f32.mrb[0].mxu0
      %3773 = vmatprep.mubr.f32.mxu0 0.0
      %3774 = vmatmul.mubr.f32.gmra.mrb[0].mxu0 %v3612
      %v3775 = vpop.f32.mrb[0].mxu0
      %v3776 = vadd.f32 0.0, %v3775
      %v3777 = vpop.f32.mrb[0].mxu0
      %3778 = vmatprep.mubr.f32.mxu0 0.0
      %3779 = vmatmul.mubr.f32.gmra.mrb[0].mxu0 %v3615
      %v3780 = vpop.f32.mrb[0].mxu0
      %v3781 = vadd.f32 0.0, %v3780
      %v3782 = vpop.f32.mrb[0].mxu0
      %3783 = vmatprep.mubr.f32.mxu0 0.0
      %3784 = vmatmul.mubr.f32.gmra.mrb[0].mxu0 %v3618
      %v3785 = vpop.f32.mrb[0].mxu0
      %v3786 = vadd.f32 0.0, %v3785
      %v3787 = vpop.f32.mrb[0].mxu0
      %3788 = vmatprep.mubr.f32.mxu0 0.0
      %3789 = vmatmul.mubr.f32.gmra.mrb[0].mxu0 %v3621
      %v3790 = vpop.f32.mrb[0].mxu0
      %v3791 = vadd.f32 0.0, %v3790
      %v3792 = vpop.f32.mrb[0].mxu0
      %3793 = vmatprep.mubr.f32.mxu0 0.0
      %3794 = vmatmul.mubr.f32.gmra.mrb[0].mxu0 %v3624
      %v3795 = vpop.f32.mrb[0].mxu0
      %v3796 = vadd.f32 0.0, %v3795
      %v3797 = vpop.f32.mrb[0].mxu0
      %3798 = vmatprep.mubr.f32.mxu0 0.0
      %3799 = vmatmul.mubr.f32.gmra.mrb[0].mxu0 %v3627
      %v3800 = vpop.f32.mrb[0].mxu0
      %v3801 = vadd.f32 0.0, %v3800
      %v3802 = vpop.f32.mrb[0].mxu0
      %3803 = vmatprep.mubr.f32.mxu0 0.0
      %3804 = vmatmul.mubr.f32.gmra.mrb[0].mxu0 %v3630
      %v3805 = vpop.f32.mrb[0].mxu0
      %v3806 = vadd.f32 0.0, %v3805
      %v3807 = vpop.f32.mrb[0].mxu0
      %3808 = vmatprep.mubr.f32.mxu0 0.0
      %3809 = vmatmul.mubr.f32.gmra.mrb[0].mxu0 %v3633
      %v3810 = vpop.f32.mrb[0].mxu0
      %v3811 = vadd.f32 0.0, %v3810
      %v3812 = vpop.f32.mrb[0].mxu0
      %3813 = vmatprep.mubr.f32.mxu0 0.0
      %3814 = vmatmul.mubr.f32.gmra.mrb[0].mxu0 %v3636
      %v3815 = vpop.f32.mrb[0].mxu0
      %v3816 = vadd.f32 0.0, %v3815
      %v3817 = vpop.f32.mrb[0].mxu0
      %3818 = vmatprep.mubr.f32.mxu0 0.0
      %3819 = vmatmul.mubr.f32.gmra.mrb[0].mxu0 %v3639
      %v3820 = vpop.f32.mrb[0].mxu0
      %v3821 = vadd.f32 0.0, %v3820
      %v3822 = vpop.f32.mrb[0].mxu0
      %3823 = vmatprep.mubr.f32.mxu0 0.0
      %3824 = vmatmul.mubr.f32.gmra.mrb[0].mxu0 %v3642
      %v3825 = vpop.f32.mrb[0].mxu0
      %v3826 = vadd.f32 0.0, %v3825
      %v3827 = vpop.f32.mrb[0].mxu0
      %3828 = vdwg.mxu0
      %v3830 = vsel %vm3492, %v3522, 0
      %v3833 = vsel %vm3492, %v3523, 0
      %v3836 = vsel %vm3492, %v3524, 0
      %v3839 = vsel %vm3492, %v3525, 0
      %v3842 = vsel %vm3492, %v3526, 0
      %v3845 = vsel %vm3492, %v3527, 0
      %v3848 = vsel %vm3492, %v3528, 0
      %v3851 = vsel %vm3492, %v3529, 0
      %v3854 = vsel %vm3492, %v3530, 0
      %v3857 = vsel %vm3492, %v3531, 0
      %v3860 = vsel %vm3492, %v3532, 0
      %v3863 = vsel %vm3492, %v3533, 0
      %v3866 = vsel %vm3492, %v3534, 0
      %v3869 = vsel %vm3492, %v3535, 0
      %v3872 = vsel %vm3492, %v3536, 0
      %v3875 = vsel %vm3492, %v3537, 0
      %v3878 = vsel %vm3492, %v3538, 0
      %v3881 = vsel %vm3492, %v3539, 0
      %v3884 = vsel %vm3492, %v3540, 0
      %v3887 = vsel %vm3492, %v3541, 0
      %v3890 = vsel %vm3492, %v3542, 0
      %v3893 = vsel %vm3492, %v3543, 0
      %v3896 = vsel %vm3492, %v3544, 0
      %v3899 = vsel %vm3492, %v3545, 0
      %3901 = vmatprep.subr.mxu0 0.0
      %3902 = vmatpush1.msra.mxu0 %v3546
      %3903 = vmatprep.subr.mxu0 0.0
      %3904 = vmatpush1.msra.mxu0 0.0
      %3905 = vmatprep.subr.mxu0 0.0
      %3906 = vmatpush1.msra.mxu0 0.0
      %3907 = vmatprep.subr.mxu0 0.0
      %3908 = vmatpush1.msra.mxu0 0.0
      %3909 = vmatprep.subr.mxu0 0.0
      %3910 = vmatpush1.msra.mxu0 0.0
      %3911 = vmatprep.subr.mxu0 0.0
      %3912 = vmatpush1.msra.mxu0 0.0
      %3913 = vmatprep.subr.mxu0 0.0
      %3914 = vmatpush1.msra.mxu0 0.0
      %3915 = vmatprep.subr.mxu0 0.0
      %3916 = vmatpush1.msra.mxu0 0.0
      %3917 = vmatprep.subr.mxu0 0.0
      %3918 = vmatpush1.msra.mxu0 0.0
      %3919 = vmatprep.subr.mxu0 0.0
      %3920 = vmatpush1.msra.mxu0 0.0
      %3921 = vmatprep.subr.mxu0 0.0
      %3922 = vmatpush1.msra.mxu0 0.0
      %3923 = vmatprep.subr.mxu0 0.0
      %3924 = vmatpush1.msra.mxu0 0.0
      %3925 = vmatprep.subr.mxu0 0.0
      %3926 = vmatpush1.msra.mxu0 0.0
      %3927 = vmatprep.subr.mxu0 0.0
      %3928 = vmatpush1.msra.mxu0 0.0
      %3929 = vmatprep.subr.mxu0 0.0
      %3930 = vmatpush1.msra.mxu0 0.0
      %3931 = vmatprep.subr.mxu0 0.0
      %3932 = vmatpush1.msra.mxu0 0.0
      %3933 = vmatprep.subr.mxu0 0.0
      %3934 = vmatpush1.msra.mxu0 0.0
      %3935 = vmatprep.subr.mxu0 0.0
      %3936 = vmatpush1.msra.mxu0 0.0
      %3937 = vmatprep.subr.mxu0 0.0
      %3938 = vmatpush1.msra.mxu0 0.0
      %3939 = vmatprep.subr.mxu0 0.0
      %3940 = vmatpush1.msra.mxu0 0.0
      %3941 = vmatprep.subr.mxu0 0.0
      %3942 = vmatpush1.msra.mxu0 0.0
      %3943 = vmatprep.subr.mxu0 0.0
      %3944 = vmatpush1.msra.mxu0 0.0
      %3945 = vmatprep.subr.mxu0 0.0
      %3946 = vmatpush1.msra.mxu0 0.0
      %3947 = vmatprep.subr.mxu0 0.0
      %3948 = vmatpush1.msra.mxu0 0.0
      %3949 = vmatprep.subr.mxu0 0.0
      %3950 = vmatpush1.msra.mxu0 0.0
      %3951 = vmatprep.subr.mxu0 0.0
      %3952 = vmatpush1.msra.mxu0 0.0
      %3953 = vmatprep.subr.mxu0 0.0
      %3954 = vmatpush1.msra.mxu0 0.0
      %3955 = vmatprep.subr.mxu0 0.0
      %3956 = vmatpush1.msra.mxu0 0.0
      %3957 = vmatprep.subr.mxu0 0.0
      %3958 = vmatpush1.msra.mxu0 0.0
      %3959 = vmatprep.subr.mxu0 0.0
      %3960 = vmatpush1.msra.mxu0 0.0
      %3961 = vmatprep.subr.mxu0 0.0
      %3962 = vmatpush1.msra.mxu0 0.0
      %3963 = vmatprep.subr.mxu0 0.0
      %3964 = vmatpush1.msra.mxu0 0.0
      %3965 = vmatprep.mubr.f32.mxu0 0.0
      %3966 = vmatmul.mubr.f32.gmra.mrb[0].mxu0 %v3830
      %v3967 = vpop.f32.mrb[0].mxu0
      %v3968 = vadd.f32 %v3711, %v3967
      %v3969 = vpop.f32.mrb[0].mxu0
      %3970 = vmatprep.mubr.f32.mxu0 0.0
      %3971 = vmatmul.mubr.f32.gmra.mrb[0].mxu0 %v3833
      %v3972 = vpop.f32.mrb[0].mxu0
      %v3973 = vadd.f32 %v3716, %v3972
      %v3974 = vpop.f32.mrb[0].mxu0
      %3975 = vmatprep.mubr.f32.mxu0 0.0
      %3976 = vmatmul.mubr.f32.gmra.mrb[0].mxu0 %v3836
      %v3977 = vpop.f32.mrb[0].mxu0
      %v3978 = vadd.f32 %v3721, %v3977
      %v3979 = vpop.f32.mrb[0].mxu0
      %3980 = vmatprep.mubr.f32.mxu0 0.0
      %3981 = vmatmul.mubr.f32.gmra.mrb[0].mxu0 %v3839
      %v3982 = vpop.f32.mrb[0].mxu0
      %v3983 = vadd.f32 %v3726, %v3982
      %v3984 = vpop.f32.mrb[0].mxu0
      %3985 = vmatprep.mubr.f32.mxu0 0.0
      %3986 = vmatmul.mubr.f32.gmra.mrb[0].mxu0 %v3842
      %v3987 = vpop.f32.mrb[0].mxu0
      %v3988 = vadd.f32 %v3731, %v3987
      %v3989 = vpop.f32.mrb[0].mxu0
      %3990 = vmatprep.mubr.f32.mxu0 0.0
      %3991 = vmatmul.mubr.f32.gmra.mrb[0].mxu0 %v3845
      %v3992 = vpop.f32.mrb[0].mxu0
      %v3993 = vadd.f32 %v3736, %v3992
      %v3994 = vpop.f32.mrb[0].mxu0
      %3995 = vmatprep.mubr.f32.mxu0 0.0
      %3996 = vmatmul.mubr.f32.gmra.mrb[0].mxu0 %v3848
      %v3997 = vpop.f32.mrb[0].mxu0
      %v3998 = vadd.f32 %v3741, %v3997
      %v3999 = vpop.f32.mrb[0].mxu0
      %4000 = vmatprep.mubr.f32.mxu0 0.0
      %4001 = vmatmul.mubr.f32.gmra.mrb[0].mxu0 %v3851
      %v4002 = vpop.f32.mrb[0].mxu0
      %v4003 = vadd.f32 %v3746, %v4002
      %v4004 = vpop.f32.mrb[0].mxu0
      %4005 = vmatprep.mubr.f32.mxu0 0.0
      %4006 = vmatmul.mubr.f32.gmra.mrb[0].mxu0 %v3854
      %v4007 = vpop.f32.mrb[0].mxu0
      %v4008 = vadd.f32 %v3751, %v4007
      %v4009 = vpop.f32.mrb[0].mxu0
      %4010 = vmatprep.mubr.f32.mxu0 0.0
      %4011 = vmatmul.mubr.f32.gmra.mrb[0].mxu0 %v3857
      %v4012 = vpop.f32.mrb[0].mxu0
      %v4013 = vadd.f32 %v3756, %v4012
      %v4014 = vpop.f32.mrb[0].mxu0
      %4015 = vmatprep.mubr.f32.mxu0 0.0
      %4016 = vmatmul.mubr.f32.gmra.mrb[0].mxu0 %v3860
      %v4017 = vpop.f32.mrb[0].mxu0
      %v4018 = vadd.f32 %v3761, %v4017
      %v4019 = vpop.f32.mrb[0].mxu0
      %4020 = vmatprep.mubr.f32.mxu0 0.0
      %4021 = vmatmul.mubr.f32.gmra.mrb[0].mxu0 %v3863
      %v4022 = vpop.f32.mrb[0].mxu0
      %v4023 = vadd.f32 %v3766, %v4022
      %v4024 = vpop.f32.mrb[0].mxu0
      %4025 = vmatprep.mubr.f32.mxu0 0.0
      %4026 = vmatmul.mubr.f32.gmra.mrb[0].mxu0 %v3866
      %v4027 = vpop.f32.mrb[0].mxu0
      %v4028 = vadd.f32 %v3771, %v4027
      %v4029 = vpop.f32.mrb[0].mxu0
      %4030 = vmatprep.mubr.f32.mxu0 0.0
      %4031 = vmatmul.mubr.f32.gmra.mrb[0].mxu0 %v3869
      %v4032 = vpop.f32.mrb[0].mxu0
      %v4033 = vadd.f32 %v3776, %v4032
      %v4034 = vpop.f32.mrb[0].mxu0
      %4035 = vmatprep.mubr.f32.mxu0 0.0
      %4036 = vmatmul.mubr.f32.gmra.mrb[0].mxu0 %v3872
      %v4037 = vpop.f32.mrb[0].mxu0
      %v4038 = vadd.f32 %v3781, %v4037
      %v4039 = vpop.f32.mrb[0].mxu0
      %4040 = vmatprep.mubr.f32.mxu0 0.0
      %4041 = vmatmul.mubr.f32.gmra.mrb[0].mxu0 %v3875
      %v4042 = vpop.f32.mrb[0].mxu0
      %v4043 = vadd.f32 %v3786, %v4042
      %v4044 = vpop.f32.mrb[0].mxu0
      %4045 = vmatprep.mubr.f32.mxu0 0.0
      %4046 = vmatmul.mubr.f32.gmra.mrb[0].mxu0 %v3878
      %v4047 = vpop.f32.mrb[0].mxu0
      %v4048 = vadd.f32 %v3791, %v4047
      %v4049 = vpop.f32.mrb[0].mxu0
      %4050 = vmatprep.mubr.f32.mxu0 0.0
      %4051 = vmatmul.mubr.f32.gmra.mrb[0].mxu0 %v3881
      %v4052 = vpop.f32.mrb[0].mxu0
      %v4053 = vadd.f32 %v3796, %v4052
      %v4054 = vpop.f32.mrb[0].mxu0
      %4055 = vmatprep.mubr.f32.mxu0 0.0
      %4056 = vmatmul.mubr.f32.gmra.mrb[0].mxu0 %v3884
      %v4057 = vpop.f32.mrb[0].mxu0
      %v4058 = vadd.f32 %v3801, %v4057
      %v4059 = vpop.f32.mrb[0].mxu0
      %4060 = vmatprep.mubr.f32.mxu0 0.0
      %4061 = vmatmul.mubr.f32.gmra.mrb[0].mxu0 %v3887
      %v4062 = vpop.f32.mrb[0].mxu0
      %v4063 = vadd.f32 %v3806, %v4062
      %v4064 = vpop.f32.mrb[0].mxu0
      %4065 = vmatprep.mubr.f32.mxu0 0.0
      %4066 = vmatmul.mubr.f32.gmra.mrb[0].mxu0 %v3890
      %v4067 = vpop.f32.mrb[0].mxu0
      %v4068 = vadd.f32 %v3811, %v4067
      %v4069 = vpop.f32.mrb[0].mxu0
      %4070 = vmatprep.mubr.f32.mxu0 0.0
      %4071 = vmatmul.mubr.f32.gmra.mrb[0].mxu0 %v3893
      %v4072 = vpop.f32.mrb[0].mxu0
      %v4073 = vadd.f32 %v3816, %v4072
      %v4074 = vpop.f32.mrb[0].mxu0
      %4075 = vmatprep.mubr.f32.mxu0 0.0
      %4076 = vmatmul.mubr.f32.gmra.mrb[0].mxu0 %v3896
      %v4077 = vpop.f32.mrb[0].mxu0
      %v4078 = vadd.f32 %v3821, %v4077
      %v4079 = vpop.f32.mrb[0].mxu0
      %4080 = vmatprep.mubr.f32.mxu0 0.0
      %4081 = vmatmul.mubr.f32.gmra.mrb[0].mxu0 %v3899
      %v4082 = vpop.f32.mrb[0].mxu0
      %v4083 = vadd.f32 %v3826, %v4082
      %v4084 = vpop.f32.mrb[0].mxu0
      %4085 = vdwg.mxu0
      %v4086 = vld [vmem:[#allocation2 + $0x2] sm:$0xff]
      %v4087 = vld [vmem:[#allocation2 + $0xa] sm:$0xff]
      %v4088 = vld [vmem:[#allocation2 + $0x12] sm:$0xff]
      %v4089 = vld [vmem:[#allocation2 + $0x1a] sm:$0xff]
      %v4090 = vld [vmem:[#allocation2 + $0x22] sm:$0xff]
      %v4091 = vld [vmem:[#allocation2 + $0x2a] sm:$0xff]
      %v4092 = vld [vmem:[#allocation2 + $0x32] sm:$0xff]
      %v4093 = vld [vmem:[#allocation2 + $0x3a] sm:$0xff]
      %v4094 = vld [vmem:[#allocation2 + $0x42] sm:$0xff]
      %v4095 = vld [vmem:[#allocation2 + $0x4a] sm:$0xff]
      %v4096 = vld [vmem:[#allocation2 + $0x52] sm:$0xff]
      %v4097 = vld [vmem:[#allocation2 + $0x5a] sm:$0xff]
      %v4098 = vld [vmem:[#allocation2 + $0x62] sm:$0xff]
      %v4099 = vld [vmem:[#allocation2 + $0x6a] sm:$0xff]
      %v4100 = vld [vmem:[#allocation2 + $0x72] sm:$0xff]
      %v4101 = vld [vmem:[#allocation2 + $0x7a] sm:$0xff]
      %v4102 = vld [vmem:[#allocation2 + $0x82] sm:$0xff]
      %v4103 = vld [vmem:[#allocation2 + $0x8a] sm:$0xff]
      %v4104 = vld [vmem:[#allocation2 + $0x92] sm:$0xff]
      %v4105 = vld [vmem:[#allocation2 + $0x9a] sm:$0xff]
      %v4106 = vld [vmem:[#allocation2 + $0xa2] sm:$0xff]
      %v4107 = vld [vmem:[#allocation2 + $0xaa] sm:$0xff]
      %v4108 = vld [vmem:[#allocation2 + $0xb2] sm:$0xff]
      %v4109 = vld [vmem:[#allocation2 + $0xba] sm:$0xff]
      %v4110 = vld [vmem:[%s3 + $0x10] sm:$0xff]
      %v4112 = vsel %vm3492, %v4086, 0
      %v4115 = vsel %vm3492, %v4087, 0
      %v4118 = vsel %vm3492, %v4088, 0
      %v4121 = vsel %vm3492, %v4089, 0
      %v4124 = vsel %vm3492, %v4090, 0
      %v4127 = vsel %vm3492, %v4091, 0
      %v4130 = vsel %vm3492, %v4092, 0
      %v4133 = vsel %vm3492, %v4093, 0
      %v4136 = vsel %vm3492, %v4094, 0
      %v4139 = vsel %vm3492, %v4095, 0
      %v4142 = vsel %vm3492, %v4096, 0
      %v4145 = vsel %vm3492, %v4097, 0
      %v4148 = vsel %vm3492, %v4098, 0
      %v4151 = vsel %vm3492, %v4099, 0
      %v4154 = vsel %vm3492, %v4100, 0
      %v4157 = vsel %vm3492, %v4101, 0
      %v4160 = vsel %vm3492, %v4102, 0
      %v4163 = vsel %vm3492, %v4103, 0
      %v4166 = vsel %vm3492, %v4104, 0
      %v4169 = vsel %vm3492, %v4105, 0
      %v4172 = vsel %vm3492, %v4106, 0
      %v4175 = vsel %vm3492, %v4107, 0
      %v4178 = vsel %vm3492, %v4108, 0
      %v4181 = vsel %vm3492, %v4109, 0
      %4183 = vmatprep.subr.mxu0 0.0
      %4184 = vmatpush1.msra.mxu0 %v4110
      %4185 = vmatprep.subr.mxu0 0.0
      %4186 = vmatpush1.msra.mxu0 0.0
      %4187 = vmatprep.subr.mxu0 0.0
      %4188 = vmatpush1.msra.mxu0 0.0
      %4189 = vmatprep.subr.mxu0 0.0
      %4190 = vmatpush1.msra.mxu0 0.0
      %4191 = vmatprep.subr.mxu0 0.0
      %4192 = vmatpush1.msra.mxu0 0.0
      %4193 = vmatprep.subr.mxu0 0.0
      %4194 = vmatpush1.msra.mxu0 0.0
      %4195 = vmatprep.subr.mxu0 0.0
      %4196 = vmatpush1.msra.mxu0 0.0
      %4197 = vmatprep.subr.mxu0 0.0
      %4198 = vmatpush1.msra.mxu0 0.0
      %4199 = vmatprep.subr.mxu0 0.0
      %4200 = vmatpush1.msra.mxu0 0.0
      %4201 = vmatprep.subr.mxu0 0.0
      %4202 = vmatpush1.msra.mxu0 0.0
      %4203 = vmatprep.subr.mxu0 0.0
      %4204 = vmatpush1.msra.mxu0 0.0
      %4205 = vmatprep.subr.mxu0 0.0
      %4206 = vmatpush1.msra.mxu0 0.0
      %4207 = vmatprep.subr.mxu0 0.0
      %4208 = vmatpush1.msra.mxu0 0.0
      %4209 = vmatprep.subr.mxu0 0.0
      %4210 = vmatpush1.msra.mxu0 0.0
      %4211 = vmatprep.subr.mxu0 0.0
      %4212 = vmatpush1.msra.mxu0 0.0
      %4213 = vmatprep.subr.mxu0 0.0
      %4214 = vmatpush1.msra.mxu0 0.0
      %4215 = vmatprep.subr.mxu0 0.0
      %4216 = vmatpush1.msra.mxu0 0.0
      %4217 = vmatprep.subr.mxu0 0.0
      %4218 = vmatpush1.msra.mxu0 0.0
      %4219 = vmatprep.subr.mxu0 0.0
      %4220 = vmatpush1.msra.mxu0 0.0
      %4221 = vmatprep.subr.mxu0 0.0
      %4222 = vmatpush1.msra.mxu0 0.0
      %4223 = vmatprep.subr.mxu0 0.0
      %4224 = vmatpush1.msra.mxu0 0.0
      %4225 = vmatprep.subr.mxu0 0.0
      %4226 = vmatpush1.msra.mxu0 0.0
      %4227 = vmatprep.subr.mxu0 0.0
      %4228 = vmatpush1.msra.mxu0 0.0
      %4229 = vmatprep.subr.mxu0 0.0
      %4230 = vmatpush1.msra.mxu0 0.0
      %4231 = vmatprep.subr.mxu0 0.0
      %4232 = vmatpush1.msra.mxu0 0.0
      %4233 = vmatprep.subr.mxu0 0.0
      %4234 = vmatpush1.msra.mxu0 0.0
      %4235 = vmatprep.subr.mxu0 0.0
      %4236 = vmatpush1.msra.mxu0 0.0
      %4237 = vmatprep.subr.mxu0 0.0
      %4238 = vmatpush1.msra.mxu0 0.0
      %4239 = vmatprep.subr.mxu0 0.0
      %4240 = vmatpush1.msra.mxu0 0.0
      %4241 = vmatprep.subr.mxu0 0.0
      %4242 = vmatpush1.msra.mxu0 0.0
      %4243 = vmatprep.subr.mxu0 0.0
      %4244 = vmatpush1.msra.mxu0 0.0
      %4245 = vmatprep.subr.mxu0 0.0
      %4246 = vmatpush1.msra.mxu0 0.0
      %4247 = vmatprep.mubr.f32.mxu0 0.0
      %4248 = vmatmul.mubr.f32.gmra.mrb[0].mxu0 %v4112
      %v4249 = vpop.f32.mrb[0].mxu0
      %v4250 = vadd.f32 0.0, %v4249
      %v4251 = vpop.f32.mrb[0].mxu0
      %4252 = vmatprep.mubr.f32.mxu0 0.0
      %4253 = vmatmul.mubr.f32.gmra.mrb[0].mxu0 %v4115
      %v4254 = vpop.f32.mrb[0].mxu0
      %v4255 = vadd.f32 0.0, %v4254
      %v4256 = vpop.f32.mrb[0].mxu0
      %4257 = vmatprep.mubr.f32.mxu0 0.0
      %4258 = vmatmul.mubr.f32.gmra.mrb[0].mxu0 %v4118
      %v4259 = vpop.f32.mrb[0].mxu0
      %v4260 = vadd.f32 0.0, %v4259
      %v4261 = vpop.f32.mrb[0].mxu0
      %4262 = vmatprep.mubr.f32.mxu0 0.0
      %4263 = vmatmul.mubr.f32.gmra.mrb[0].mxu0 %v4121
      %v4264 = vpop.f32.mrb[0].mxu0
      %v4265 = vadd.f32 0.0, %v4264
      %v4266 = vpop.f32.mrb[0].mxu0
      %4267 = vmatprep.mubr.f32.mxu0 0.0
      %4268 = vmatmul.mubr.f32.gmra.mrb[0].mxu0 %v4124
      %v4269 = vpop.f32.mrb[0].mxu0
      %v4270 = vadd.f32 0.0, %v4269
      %v4271 = vpop.f32.mrb[0].mxu0
      %4272 = vmatprep.mubr.f32.mxu0 0.0
      %4273 = vmatmul.mubr.f32.gmra.mrb[0].mxu0 %v4127
      %v4274 = vpop.f32.mrb[0].mxu0
      %v4275 = vadd.f32 0.0, %v4274
      %v4276 = vpop.f32.mrb[0].mxu0
      %4277 = vmatprep.mubr.f32.mxu0 0.0
      %4278 = vmatmul.mubr.f32.gmra.mrb[0].mxu0 %v4130
      %v4279 = vpop.f32.mrb[0].mxu0
      %v4280 = vadd.f32 0.0, %v4279
      %v4281 = vpop.f32.mrb[0].mxu0
      %4282 = vmatprep.mubr.f32.mxu0 0.0
      %4283 = vmatmul.mubr.f32.gmra.mrb[0].mxu0 %v4133
      %v4284 = vpop.f32.mrb[0].mxu0
      %v4285 = vadd.f32 0.0, %v4284
      %v4286 = vpop.f32.mrb[0].mxu0
      %4287 = vmatprep.mubr.f32.mxu0 0.0
      %4288 = vmatmul.mubr.f32.gmra.mrb[0].mxu0 %v4136
      %v4289 = vpop.f32.mrb[0].mxu0
      %v4290 = vadd.f32 0.0, %v4289
      %v4291 = vpop.f32.mrb[0].mxu0
      %4292 = vmatprep.mubr.f32.mxu0 0.0
      %4293 = vmatmul.mubr.f32.gmra.mrb[0].mxu0 %v4139
      %v4294 = vpop.f32.mrb[0].mxu0
      %v4295 = vadd.f32 0.0, %v4294
      %v4296 = vpop.f32.mrb[0].mxu0
      %4297 = vmatprep.mubr.f32.mxu0 0.0
      %4298 = vmatmul.mubr.f32.gmra.mrb[0].mxu0 %v4142
      %v4299 = vpop.f32.mrb[0].mxu0
      %v4300 = vadd.f32 0.0, %v4299
      %v4301 = vpop.f32.mrb[0].mxu0
      %4302 = vmatprep.mubr.f32.mxu0 0.0
      %4303 = vmatmul.mubr.f32.gmra.mrb[0].mxu0 %v4145
      %v4304 = vpop.f32.mrb[0].mxu0
      %v4305 = vadd.f32 0.0, %v4304
      %v4306 = vpop.f32.mrb[0].mxu0
      %4307 = vmatprep.mubr.f32.mxu0 0.0
      %4308 = vmatmul.mubr.f32.gmra.mrb[0].mxu0 %v4148
      %v4309 = vpop.f32.mrb[0].mxu0
      %v4310 = vadd.f32 0.0, %v4309
      %v4311 = vpop.f32.mrb[0].mxu0
      %4312 = vmatprep.mubr.f32.mxu0 0.0
      %4313 = vmatmul.mubr.f32.gmra.mrb[0].mxu0 %v4151
      %v4314 = vpop.f32.mrb[0].mxu0
      %v4315 = vadd.f32 0.0, %v4314
      %v4316 = vpop.f32.mrb[0].mxu0
      %4317 = vmatprep.mubr.f32.mxu0 0.0
      %4318 = vmatmul.mubr.f32.gmra.mrb[0].mxu0 %v4154
      %v4319 = vpop.f32.mrb[0].mxu0
      %v4320 = vadd.f32 0.0, %v4319
      %v4321 = vpop.f32.mrb[0].mxu0
      %4322 = vmatprep.mubr.f32.mxu0 0.0
      %4323 = vmatmul.mubr.f32.gmra.mrb[0].mxu0 %v4157
      %v4324 = vpop.f32.mrb[0].mxu0
      %v4325 = vadd.f32 0.0, %v4324
      %v4326 = vpop.f32.mrb[0].mxu0
      %4327 = vmatprep.mubr.f32.mxu0 0.0
      %4328 = vmatmul.mubr.f32.gmra.mrb[0].mxu0 %v4160
      %v4329 = vpop.f32.mrb[0].mxu0
      %v4330 = vadd.f32 0.0, %v4329
      %v4331 = vpop.f32.mrb[0].mxu0
      %4332 = vmatprep.mubr.f32.mxu0 0.0
      %4333 = vmatmul.mubr.f32.gmra.mrb[0].mxu0 %v4163
      %v4334 = vpop.f32.mrb[0].mxu0
      %v4335 = vadd.f32 0.0, %v4334
      %v4336 = vpop.f32.mrb[0].mxu0
      %4337 = vmatprep.mubr.f32.mxu0 0.0
      %4338 = vmatmul.mubr.f32.gmra.mrb[0].mxu0 %v4166
      %v4339 = vpop.f32.mrb[0].mxu0
      %v4340 = vadd.f32 0.0, %v4339
      %v4341 = vpop.f32.mrb[0].mxu0
      %4342 = vmatprep.mubr.f32.mxu0 0.0
      %4343 = vmatmul.mubr.f32.gmra.mrb[0].mxu0 %v4169
      %v4344 = vpop.f32.mrb[0].mxu0
      %v4345 = vadd.f32 0.0, %v4344
      %v4346 = vpop.f32.mrb[0].mxu0
      %4347 = vmatprep.mubr.f32.mxu0 0.0
      %4348 = vmatmul.mubr.f32.gmra.mrb[0].mxu0 %v4172
      %v4349 = vpop.f32.mrb[0].mxu0
      %v4350 = vadd.f32 0.0, %v4349
      %v4351 = vpop.f32.mrb[0].mxu0
      %4352 = vmatprep.mubr.f32.mxu0 0.0
      %4353 = vmatmul.mubr.f32.gmra.mrb[0].mxu0 %v4175
      %v4354 = vpop.f32.mrb[0].mxu0
      %v4355 = vadd.f32 0.0, %v4354
      %v4356 = vpop.f32.mrb[0].mxu0
      %4357 = vmatprep.mubr.f32.mxu0 0.0
      %4358 = vmatmul.mubr.f32.gmra.mrb[0].mxu0 %v4178
      %v4359 = vpop.f32.mrb[0].mxu0
      %v4360 = vadd.f32 0.0, %v4359
      %v4361 = vpop.f32.mrb[0].mxu0
      %4362 = vmatprep.mubr.f32.mxu0 0.0
      %4363 = vmatmul.mubr.f32.gmra.mrb[0].mxu0 %v4181
      %v4364 = vpop.f32.mrb[0].mxu0
      %v4365 = vadd.f32 0.0, %v4364
      %v4366 = vpop.f32.mrb[0].mxu0
      %4367 = vdwg.mxu0
      %v4368 = vadd.f32 %v3968, %v4250
      %v4369 = vadd.f32 %v3973, %v4255
      %v4370 = vadd.f32 %v3978, %v4260
      %v4371 = vadd.f32 %v3983, %v4265
      %v4372 = vadd.f32 %v3988, %v4270
      %v4373 = vadd.f32 %v3993, %v4275
      %v4374 = vadd.f32 %v3998, %v4280
      %v4375 = vadd.f32 %v4003, %v4285
      %v4376 = vadd.f32 %v4008, %v4290
      %v4377 = vadd.f32 %v4013, %v4295
      %v4378 = vadd.f32 %v4018, %v4300
      %v4379 = vadd.f32 %v4023, %v4305
      %v4380 = vadd.f32 %v4028, %v4310
      %v4381 = vadd.f32 %v4033, %v4315
      %v4382 = vadd.f32 %v4038, %v4320
      %v4383 = vadd.f32 %v4043, %v4325
      %v4384 = vadd.f32 %v4048, %v4330
      %v4385 = vadd.f32 %v4053, %v4335
      %v4386 = vadd.f32 %v4058, %v4340
      %v4387 = vadd.f32 %v4063, %v4345
      %v4388 = vadd.f32 %v4068, %v4350
      %v4389 = vadd.f32 %v4073, %v4355
      %v4390 = vadd.f32 %v4078, %v4360
      %v4391 = vadd.f32 %v4083, %v4365
      %v4392 = vld [vmem:[#allocation2 + $0x10] sm:$0xff]
      %v4393 = vld [vmem:[#allocation2 + $0x18] sm:$0xff]
      %v4394 = vld [vmem:[#allocation2 + $0x20] sm:$0xff]
      %v4395 = vld [vmem:[#allocation2 + $0x28] sm:$0xff]
      %v4396 = vld [vmem:[#allocation2 + $0x30] sm:$0xff]
      %v4397 = vld [vmem:[#allocation2 + $0x38] sm:$0xff]
      %v4398 = vld [vmem:[#allocation2 + $0x40] sm:$0xff]
      %v4399 = vld [vmem:[#allocation2 + $0x48] sm:$0xff]
      %v4400 = vld [vmem:[#allocation2 + $0x50] sm:$0xff]
      %v4401 = vld [vmem:[#allocation2 + $0x58] sm:$0xff]
      %v4402 = vld [vmem:[#allocation2 + $0x60] sm:$0xff]
      %v4403 = vld [vmem:[#allocation2 + $0x68] sm:$0xff]
      %v4404 = vld [vmem:[#allocation2 + $0x70] sm:$0xff]
      %v4405 = vld [vmem:[#allocation2 + $0x78] sm:$0xff]
      %v4406 = vld [vmem:[#allocation2 + $0x80] sm:$0xff]
      %v4407 = vld [vmem:[#allocation2 + $0x88] sm:$0xff]
      %v4408 = vld [vmem:[#allocation2 + $0x90] sm:$0xff]
      %v4409 = vld [vmem:[#allocation2 + $0x98] sm:$0xff]
      %v4410 = vld [vmem:[#allocation2 + $0xa0] sm:$0xff]
      %v4411 = vld [vmem:[#allocation2 + $0xa8] sm:$0xff]
      %v4412 = vld [vmem:[#allocation2 + $0xb0] sm:$0xff]
      %v4413 = vld [vmem:[#allocation2 + $0xb8] sm:$0xff]
      %v4414 = vld [vmem:[#allocation2 + $0xc0] sm:$0xff]
      %v4415 = vld [vmem:[#allocation2 + $0xc8] sm:$0xff]
      %v4416 = vld [vmem:[%s3 + $0x18] sm:$0xff]
      %v4418 = vsel %vm3492, %v4392, 0
      %v4421 = vsel %vm3492, %v4393, 0
      %v4424 = vsel %vm3492, %v4394, 0
      %v4427 = vsel %vm3492, %v4395, 0
      %v4430 = vsel %vm3492, %v4396, 0
      %v4433 = vsel %vm3492, %v4397, 0
      %v4436 = vsel %vm3492, %v4398, 0
      %v4439 = vsel %vm3492, %v4399, 0
      %v4442 = vsel %vm3492, %v4400, 0
      %v4445 = vsel %vm3492, %v4401, 0
      %v4448 = vsel %vm3492, %v4402, 0
      %v4451 = vsel %vm3492, %v4403, 0
      %v4454 = vsel %vm3492, %v4404, 0
      %v4457 = vsel %vm3492, %v4405, 0
      %v4460 = vsel %vm3492, %v4406, 0
      %v4463 = vsel %vm3492, %v4407, 0
      %v4466 = vsel %vm3492, %v4408, 0
      %v4469 = vsel %vm3492, %v4409, 0
      %v4472 = vsel %vm3492, %v4410, 0
      %v4475 = vsel %vm3492, %v4411, 0
      %v4478 = vsel %vm3492, %v4412, 0
      %v4481 = vsel %vm3492, %v4413, 0
      %v4484 = vsel %vm3492, %v4414, 0
      %v4487 = vsel %vm3492, %v4415, 0
      %4489 = vmatprep.subr.mxu0 0.0
      %4490 = vmatpush1.msra.mxu0 %v4416
      %4491 = vmatprep.subr.mxu0 0.0
      %4492 = vmatpush1.msra.mxu0 0.0
      %4493 = vmatprep.subr.mxu0 0.0
      %4494 = vmatpush1.msra.mxu0 0.0
      %4495 = vmatprep.subr.mxu0 0.0
      %4496 = vmatpush1.msra.mxu0 0.0
      %4497 = vmatprep.subr.mxu0 0.0
      %4498 = vmatpush1.msra.mxu0 0.0
      %4499 = vmatprep.subr.mxu0 0.0
      %4500 = vmatpush1.msra.mxu0 0.0
      %4501 = vmatprep.subr.mxu0 0.0
      %4502 = vmatpush1.msra.mxu0 0.0
      %4503 = vmatprep.subr.mxu0 0.0
      %4504 = vmatpush1.msra.mxu0 0.0
      %4505 = vmatprep.subr.mxu0 0.0
      %4506 = vmatpush1.msra.mxu0 0.0
      %4507 = vmatprep.subr.mxu0 0.0
      %4508 = vmatpush1.msra.mxu0 0.0
      %4509 = vmatprep.subr.mxu0 0.0
      %4510 = vmatpush1.msra.mxu0 0.0
      %4511 = vmatprep.subr.mxu0 0.0
      %4512 = vmatpush1.msra.mxu0 0.0
      %4513 = vmatprep.subr.mxu0 0.0
      %4514 = vmatpush1.msra.mxu0 0.0
      %4515 = vmatprep.subr.mxu0 0.0
      %4516 = vmatpush1.msra.mxu0 0.0
      %4517 = vmatprep.subr.mxu0 0.0
      %4518 = vmatpush1.msra.mxu0 0.0
      %4519 = vmatprep.subr.mxu0 0.0
      %4520 = vmatpush1.msra.mxu0 0.0
      %4521 = vmatprep.subr.mxu0 0.0
      %4522 = vmatpush1.msra.mxu0 0.0
      %4523 = vmatprep.subr.mxu0 0.0
      %4524 = vmatpush1.msra.mxu0 0.0
      %4525 = vmatprep.subr.mxu0 0.0
      %4526 = vmatpush1.msra.mxu0 0.0
      %4527 = vmatprep.subr.mxu0 0.0
      %4528 = vmatpush1.msra.mxu0 0.0
      %4529 = vmatprep.subr.mxu0 0.0
      %4530 = vmatpush1.msra.mxu0 0.0
      %4531 = vmatprep.subr.mxu0 0.0
      %4532 = vmatpush1.msra.mxu0 0.0
      %4533 = vmatprep.subr.mxu0 0.0
      %4534 = vmatpush1.msra.mxu0 0.0
      %4535 = vmatprep.subr.mxu0 0.0
      %4536 = vmatpush1.msra.mxu0 0.0
      %4537 = vmatprep.subr.mxu0 0.0
      %4538 = vmatpush1.msra.mxu0 0.0
      %4539 = vmatprep.subr.mxu0 0.0
      %4540 = vmatpush1.msra.mxu0 0.0
      %4541 = vmatprep.subr.mxu0 0.0
      %4542 = vmatpush1.msra.mxu0 0.0
      %4543 = vmatprep.subr.mxu0 0.0
      %4544 = vmatpush1.msra.mxu0 0.0
      %4545 = vmatprep.subr.mxu0 0.0
      %4546 = vmatpush1.msra.mxu0 0.0
      %4547 = vmatprep.subr.mxu0 0.0
      %4548 = vmatpush1.msra.mxu0 0.0
      %4549 = vmatprep.subr.mxu0 0.0
      %4550 = vmatpush1.msra.mxu0 0.0
      %4551 = vmatprep.subr.mxu0 0.0
      %4552 = vmatpush1.msra.mxu0 0.0
      %4553 = vmatprep.mubr.f32.mxu0 0.0
      %4554 = vmatmul.mubr.f32.gmra.mrb[0].mxu0 %v4418
      %v4555 = vpop.f32.mrb[0].mxu0
      %v4556 = vadd.f32 0.0, %v4555
      %v4557 = vpop.f32.mrb[0].mxu0
      %4558 = vmatprep.mubr.f32.mxu0 0.0
      %4559 = vmatmul.mubr.f32.gmra.mrb[0].mxu0 %v4421
      %v4560 = vpop.f32.mrb[0].mxu0
      %v4561 = vadd.f32 0.0, %v4560
      %v4562 = vpop.f32.mrb[0].mxu0
      %4563 = vmatprep.mubr.f32.mxu0 0.0
      %4564 = vmatmul.mubr.f32.gmra.mrb[0].mxu0 %v4424
      %v4565 = vpop.f32.mrb[0].mxu0
      %v4566 = vadd.f32 0.0, %v4565
      %v4567 = vpop.f32.mrb[0].mxu0
      %4568 = vmatprep.mubr.f32.mxu0 0.0
      %4569 = vmatmul.mubr.f32.gmra.mrb[0].mxu0 %v4427
      %v4570 = vpop.f32.mrb[0].mxu0
      %v4571 = vadd.f32 0.0, %v4570
      %v4572 = vpop.f32.mrb[0].mxu0
      %4573 = vmatprep.mubr.f32.mxu0 0.0
      %4574 = vmatmul.mubr.f32.gmra.mrb[0].mxu0 %v4430
      %v4575 = vpop.f32.mrb[0].mxu0
      %v4576 = vadd.f32 0.0, %v4575
      %v4577 = vpop.f32.mrb[0].mxu0
      %4578 = vmatprep.mubr.f32.mxu0 0.0
      %4579 = vmatmul.mubr.f32.gmra.mrb[0].mxu0 %v4433
      %v4580 = vpop.f32.mrb[0].mxu0
      %v4581 = vadd.f32 0.0, %v4580
      %v4582 = vpop.f32.mrb[0].mxu0
      %4583 = vmatprep.mubr.f32.mxu0 0.0
      %4584 = vmatmul.mubr.f32.gmra.mrb[0].mxu0 %v4436
      %v4585 = vpop.f32.mrb[0].mxu0
      %v4586 = vadd.f32 0.0, %v4585
      %v4587 = vpop.f32.mrb[0].mxu0
      %4588 = vmatprep.mubr.f32.mxu0 0.0
      %4589 = vmatmul.mubr.f32.gmra.mrb[0].mxu0 %v4439
      %v4590 = vpop.f32.mrb[0].mxu0
      %v4591 = vadd.f32 0.0, %v4590
      %v4592 = vpop.f32.mrb[0].mxu0
      %4593 = vmatprep.mubr.f32.mxu0 0.0
      %4594 = vmatmul.mubr.f32.gmra.mrb[0].mxu0 %v4442
      %v4595 = vpop.f32.mrb[0].mxu0
      %v4596 = vadd.f32 0.0, %v4595
      %v4597 = vpop.f32.mrb[0].mxu0
      %4598 = vmatprep.mubr.f32.mxu0 0.0
      %4599 = vmatmul.mubr.f32.gmra.mrb[0].mxu0 %v4445
      %v4600 = vpop.f32.mrb[0].mxu0
      %v4601 = vadd.f32 0.0, %v4600
      %v4602 = vpop.f32.mrb[0].mxu0
      %4603 = vmatprep.mubr.f32.mxu0 0.0
      %4604 = vmatmul.mubr.f32.gmra.mrb[0].mxu0 %v4448
      %v4605 = vpop.f32.mrb[0].mxu0
      %v4606 = vadd.f32 0.0, %v4605
      %v4607 = vpop.f32.mrb[0].mxu0
      %4608 = vmatprep.mubr.f32.mxu0 0.0
      %4609 = vmatmul.mubr.f32.gmra.mrb[0].mxu0 %v4451
      %v4610 = vpop.f32.mrb[0].mxu0
      %v4611 = vadd.f32 0.0, %v4610
      %v4612 = vpop.f32.mrb[0].mxu0
      %4613 = vmatprep.mubr.f32.mxu0 0.0
      %4614 = vmatmul.mubr.f32.gmra.mrb[0].mxu0 %v4454
      %v4615 = vpop.f32.mrb[0].mxu0
      %v4616 = vadd.f32 0.0, %v4615
      %v4617 = vpop.f32.mrb[0].mxu0
      %4618 = vmatprep.mubr.f32.mxu0 0.0
      %4619 = vmatmul.mubr.f32.gmra.mrb[0].mxu0 %v4457
      %v4620 = vpop.f32.mrb[0].mxu0
      %v4621 = vadd.f32 0.0, %v4620
      %v4622 = vpop.f32.mrb[0].mxu0
      %4623 = vmatprep.mubr.f32.mxu0 0.0
      %4624 = vmatmul.mubr.f32.gmra.mrb[0].mxu0 %v4460
      %v4625 = vpop.f32.mrb[0].mxu0
      %v4626 = vadd.f32 0.0, %v4625
      %v4627 = vpop.f32.mrb[0].mxu0
      %4628 = vmatprep.mubr.f32.mxu0 0.0
      %4629 = vmatmul.mubr.f32.gmra.mrb[0].mxu0 %v4463
      %v4630 = vpop.f32.mrb[0].mxu0
      %v4631 = vadd.f32 0.0, %v4630
      %v4632 = vpop.f32.mrb[0].mxu0
      %4633 = vmatprep.mubr.f32.mxu0 0.0
      %4634 = vmatmul.mubr.f32.gmra.mrb[0].mxu0 %v4466
      %v4635 = vpop.f32.mrb[0].mxu0
      %v4636 = vadd.f32 0.0, %v4635
      %v4637 = vpop.f32.mrb[0].mxu0
      %4638 = vmatprep.mubr.f32.mxu0 0.0
      %4639 = vmatmul.mubr.f32.gmra.mrb[0].mxu0 %v4469
      %v4640 = vpop.f32.mrb[0].mxu0
      %v4641 = vadd.f32 0.0, %v4640
      %v4642 = vpop.f32.mrb[0].mxu0
      %4643 = vmatprep.mubr.f32.mxu0 0.0
      %4644 = vmatmul.mubr.f32.gmra.mrb[0].mxu0 %v4472
      %v4645 = vpop.f32.mrb[0].mxu0
      %v4646 = vadd.f32 0.0, %v4645
      %v4647 = vpop.f32.mrb[0].mxu0
      %4648 = vmatprep.mubr.f32.mxu0 0.0
      %4649 = vmatmul.mubr.f32.gmra.mrb[0].mxu0 %v4475
      %v4650 = vpop.f32.mrb[0].mxu0
      %v4651 = vadd.f32 0.0, %v4650
      %v4652 = vpop.f32.mrb[0].mxu0
      %4653 = vmatprep.mubr.f32.mxu0 0.0
      %4654 = vmatmul.mubr.f32.gmra.mrb[0].mxu0 %v4478
      %v4655 = vpop.f32.mrb[0].mxu0
      %v4656 = vadd.f32 0.0, %v4655
      %v4657 = vpop.f32.mrb[0].mxu0
      %4658 = vmatprep.mubr.f32.mxu0 0.0
      %4659 = vmatmul.mubr.f32.gmra.mrb[0].mxu0 %v4481
      %v4660 = vpop.f32.mrb[0].mxu0
      %v4661 = vadd.f32 0.0, %v4660
      %v4662 = vpop.f32.mrb[0].mxu0
      %4663 = vmatprep.mubr.f32.mxu0 0.0
      %4664 = vmatmul.mubr.f32.gmra.mrb[0].mxu0 %v4484
      %v4665 = vpop.f32.mrb[0].mxu0
      %v4666 = vadd.f32 0.0, %v4665
      %v4667 = vpop.f32.mrb[0].mxu0
      %4668 = vmatprep.mubr.f32.mxu0 0.0
      %4669 = vmatmul.mubr.f32.gmra.mrb[0].mxu0 %v4487
      %v4670 = vpop.f32.mrb[0].mxu0
      %v4671 = vadd.f32 0.0, %v4670
      %v4672 = vpop.f32.mrb[0].mxu0
      %4673 = vdwg.mxu0
      %v4674 = vadd.f32 %v4368, %v4556
      %v4675 = vadd.f32 %v4369, %v4561
      %v4676 = vadd.f32 %v4370, %v4566
      %v4677 = vadd.f32 %v4371, %v4571
      %v4678 = vadd.f32 %v4372, %v4576
      %v4679 = vadd.f32 %v4373, %v4581
      %v4680 = vadd.f32 %v4374, %v4586
      %v4681 = vadd.f32 %v4375, %v4591
      %v4682 = vadd.f32 %v4376, %v4596
      %v4683 = vadd.f32 %v4377, %v4601
      %v4684 = vadd.f32 %v4378, %v4606
      %v4685 = vadd.f32 %v4379, %v4611
      %v4686 = vadd.f32 %v4380, %v4616
      %v4687 = vadd.f32 %v4381, %v4621
      %v4688 = vadd.f32 %v4382, %v4626
      %v4689 = vadd.f32 %v4383, %v4631
      %v4690 = vadd.f32 %v4384, %v4636
      %v4691 = vadd.f32 %v4385, %v4641
      %v4692 = vadd.f32 %v4386, %v4646
      %v4693 = vadd.f32 %v4387, %v4651
      %v4694 = vadd.f32 %v4388, %v4656
      %v4695 = vadd.f32 %v4389, %v4661
      %v4696 = vadd.f32 %v4390, %v4666
      %v4697 = vadd.f32 %v4391, %v4671
      %v4698 = vld [vmem:[#allocation2 + $0x11] sm:$0xff]
      %v4699 = vld [vmem:[#allocation2 + $0x19] sm:$0xff]
      %v4700 = vld [vmem:[#allocation2 + $0x21] sm:$0xff]
      %v4701 = vld [vmem:[#allocation2 + $0x29] sm:$0xff]
      %v4702 = vld [vmem:[#allocation2 + $0x31] sm:$0xff]
      %v4703 = vld [vmem:[#allocation2 + $0x39] sm:$0xff]
      %v4704 = vld [vmem:[#allocation2 + $0x41] sm:$0xff]
      %v4705 = vld [vmem:[#allocation2 + $0x49] sm:$0xff]
      %v4706 = vld [vmem:[#allocation2 + $0x51] sm:$0xff]
      %v4707 = vld [vmem:[#allocation2 + $0x59] sm:$0xff]
      %v4708 = vld [vmem:[#allocation2 + $0x61] sm:$0xff]
      %v4709 = vld [vmem:[#allocation2 + $0x69] sm:$0xff]
      %v4710 = vld [vmem:[#allocation2 + $0x71] sm:$0xff]
      %v4711 = vld [vmem:[#allocation2 + $0x79] sm:$0xff]
      %v4712 = vld [vmem:[#allocation2 + $0x81] sm:$0xff]
      %v4713 = vld [vmem:[#allocation2 + $0x89] sm:$0xff]
      %v4714 = vld [vmem:[#allocation2 + $0x91] sm:$0xff]
      %v4715 = vld [vmem:[#allocation2 + $0x99] sm:$0xff]
      %v4716 = vld [vmem:[#allocation2 + $0xa1] sm:$0xff]
      %v4717 = vld [vmem:[#allocation2 + $0xa9] sm:$0xff]
      %v4718 = vld [vmem:[#allocation2 + $0xb1] sm:$0xff]
      %v4719 = vld [vmem:[#allocation2 + $0xb9] sm:$0xff]
      %v4720 = vld [vmem:[#allocation2 + $0xc1] sm:$0xff]
      %v4721 = vld [vmem:[#allocation2 + $0xc9] sm:$0xff]
      %v4722 = vld [vmem:[%s3 + $0x20] sm:$0xff]
      %v4724 = vsel %vm3492, %v4698, 0
      %v4727 = vsel %vm3492, %v4699, 0
      %v4730 = vsel %vm3492, %v4700, 0
      %v4733 = vsel %vm3492, %v4701, 0
      %v4736 = vsel %vm3492, %v4702, 0
      %v4739 = vsel %vm3492, %v4703, 0
      %v4742 = vsel %vm3492, %v4704, 0
      %v4745 = vsel %vm3492, %v4705, 0
      %v4748 = vsel %vm3492, %v4706, 0
      %v4751 = vsel %vm3492, %v4707, 0
      %v4754 = vsel %vm3492, %v4708, 0
      %v4757 = vsel %vm3492, %v4709, 0
      %v4760 = vsel %vm3492, %v4710, 0
      %v4763 = vsel %vm3492, %v4711, 0
      %v4766 = vsel %vm3492, %v4712, 0
      %v4769 = vsel %vm3492, %v4713, 0
      %v4772 = vsel %vm3492, %v4714, 0
      %v4775 = vsel %vm3492, %v4715, 0
      %v4778 = vsel %vm3492, %v4716, 0
      %v4781 = vsel %vm3492, %v4717, 0
      %v4784 = vsel %vm3492, %v4718, 0
      %v4787 = vsel %vm3492, %v4719, 0
      %v4790 = vsel %vm3492, %v4720, 0
      %v4793 = vsel %vm3492, %v4721, 0
      %4795 = vmatprep.subr.mxu0 0.0
      %4796 = vmatpush1.msra.mxu0 %v4722
      %4797 = vmatprep.subr.mxu0 0.0
      %4798 = vmatpush1.msra.mxu0 0.0
      %4799 = vmatprep.subr.mxu0 0.0
      %4800 = vmatpush1.msra.mxu0 0.0
      %4801 = vmatprep.subr.mxu0 0.0
      %4802 = vmatpush1.msra.mxu0 0.0
      %4803 = vmatprep.subr.mxu0 0.0
      %4804 = vmatpush1.msra.mxu0 0.0
      %4805 = vmatprep.subr.mxu0 0.0
      %4806 = vmatpush1.msra.mxu0 0.0
      %4807 = vmatprep.subr.mxu0 0.0
      %4808 = vmatpush1.msra.mxu0 0.0
      %4809 = vmatprep.subr.mxu0 0.0
      %4810 = vmatpush1.msra.mxu0 0.0
      %4811 = vmatprep.subr.mxu0 0.0
      %4812 = vmatpush1.msra.mxu0 0.0
      %4813 = vmatprep.subr.mxu0 0.0
      %4814 = vmatpush1.msra.mxu0 0.0
      %4815 = vmatprep.subr.mxu0 0.0
      %4816 = vmatpush1.msra.mxu0 0.0
      %4817 = vmatprep.subr.mxu0 0.0
      %4818 = vmatpush1.msra.mxu0 0.0
      %4819 = vmatprep.subr.mxu0 0.0
      %4820 = vmatpush1.msra.mxu0 0.0
      %4821 = vmatprep.subr.mxu0 0.0
      %4822 = vmatpush1.msra.mxu0 0.0
      %4823 = vmatprep.subr.mxu0 0.0
      %4824 = vmatpush1.msra.mxu0 0.0
      %4825 = vmatprep.subr.mxu0 0.0
      %4826 = vmatpush1.msra.mxu0 0.0
      %4827 = vmatprep.subr.mxu0 0.0
      %4828 = vmatpush1.msra.mxu0 0.0
      %4829 = vmatprep.subr.mxu0 0.0
      %4830 = vmatpush1.msra.mxu0 0.0
      %4831 = vmatprep.subr.mxu0 0.0
      %4832 = vmatpush1.msra.mxu0 0.0
      %4833 = vmatprep.subr.mxu0 0.0
      %4834 = vmatpush1.msra.mxu0 0.0
      %4835 = vmatprep.subr.mxu0 0.0
      %4836 = vmatpush1.msra.mxu0 0.0
      %4837 = vmatprep.subr.mxu0 0.0
      %4838 = vmatpush1.msra.mxu0 0.0
      %4839 = vmatprep.subr.mxu0 0.0
      %4840 = vmatpush1.msra.mxu0 0.0
      %4841 = vmatprep.subr.mxu0 0.0
      %4842 = vmatpush1.msra.mxu0 0.0
      %4843 = vmatprep.subr.mxu0 0.0
      %4844 = vmatpush1.msra.mxu0 0.0
      %4845 = vmatprep.subr.mxu0 0.0
      %4846 = vmatpush1.msra.mxu0 0.0
      %4847 = vmatprep.subr.mxu0 0.0
      %4848 = vmatpush1.msra.mxu0 0.0
      %4849 = vmatprep.subr.mxu0 0.0
      %4850 = vmatpush1.msra.mxu0 0.0
      %4851 = vmatprep.subr.mxu0 0.0
      %4852 = vmatpush1.msra.mxu0 0.0
      %4853 = vmatprep.subr.mxu0 0.0
      %4854 = vmatpush1.msra.mxu0 0.0
      %4855 = vmatprep.subr.mxu0 0.0
      %4856 = vmatpush1.msra.mxu0 0.0
      %4857 = vmatprep.subr.mxu0 0.0
      %4858 = vmatpush1.msra.mxu0 0.0
      %4859 = vmatprep.mubr.f32.mxu0 0.0
      %4860 = vmatmul.mubr.f32.gmra.mrb[0].mxu0 %v4724
      %v4861 = vpop.f32.mrb[0].mxu0
      %v4862 = vadd.f32 0.0, %v4861
      %v4863 = vpop.f32.mrb[0].mxu0
      %4864 = vmatprep.mubr.f32.mxu0 0.0
      %4865 = vmatmul.mubr.f32.gmra.mrb[0].mxu0 %v4727
      %v4866 = vpop.f32.mrb[0].mxu0
      %v4867 = vadd.f32 0.0, %v4866
      %v4868 = vpop.f32.mrb[0].mxu0
      %4869 = vmatprep.mubr.f32.mxu0 0.0
      %4870 = vmatmul.mubr.f32.gmra.mrb[0].mxu0 %v4730
      %v4871 = vpop.f32.mrb[0].mxu0
      %v4872 = vadd.f32 0.0, %v4871
      %v4873 = vpop.f32.mrb[0].mxu0
      %4874 = vmatprep.mubr.f32.mxu0 0.0
      %4875 = vmatmul.mubr.f32.gmra.mrb[0].mxu0 %v4733
      %v4876 = vpop.f32.mrb[0].mxu0
      %v4877 = vadd.f32 0.0, %v4876
      %v4878 = vpop.f32.mrb[0].mxu0
      %4879 = vmatprep.mubr.f32.mxu0 0.0
      %4880 = vmatmul.mubr.f32.gmra.mrb[0].mxu0 %v4736
      %v4881 = vpop.f32.mrb[0].mxu0
      %v4882 = vadd.f32 0.0, %v4881
      %v4883 = vpop.f32.mrb[0].mxu0
      %4884 = vmatprep.mubr.f32.mxu0 0.0
      %4885 = vmatmul.mubr.f32.gmra.mrb[0].mxu0 %v4739
      %v4886 = vpop.f32.mrb[0].mxu0
      %v4887 = vadd.f32 0.0, %v4886
      %v4888 = vpop.f32.mrb[0].mxu0
      %4889 = vmatprep.mubr.f32.mxu0 0.0
      %4890 = vmatmul.mubr.f32.gmra.mrb[0].mxu0 %v4742
      %v4891 = vpop.f32.mrb[0].mxu0
      %v4892 = vadd.f32 0.0, %v4891
      %v4893 = vpop.f32.mrb[0].mxu0
      %4894 = vmatprep.mubr.f32.mxu0 0.0
      %4895 = vmatmul.mubr.f32.gmra.mrb[0].mxu0 %v4745
      %v4896 = vpop.f32.mrb[0].mxu0
      %v4897 = vadd.f32 0.0, %v4896
      %v4898 = vpop.f32.mrb[0].mxu0
      %4899 = vmatprep.mubr.f32.mxu0 0.0
      %4900 = vmatmul.mubr.f32.gmra.mrb[0].mxu0 %v4748
      %v4901 = vpop.f32.mrb[0].mxu0
      %v4902 = vadd.f32 0.0, %v4901
      %v4903 = vpop.f32.mrb[0].mxu0
      %4904 = vmatprep.mubr.f32.mxu0 0.0
      %4905 = vmatmul.mubr.f32.gmra.mrb[0].mxu0 %v4751
      %v4906 = vpop.f32.mrb[0].mxu0
      %v4907 = vadd.f32 0.0, %v4906
      %v4908 = vpop.f32.mrb[0].mxu0
      %4909 = vmatprep.mubr.f32.mxu0 0.0
      %4910 = vmatmul.mubr.f32.gmra.mrb[0].mxu0 %v4754
      %v4911 = vpop.f32.mrb[0].mxu0
      %v4912 = vadd.f32 0.0, %v4911
      %v4913 = vpop.f32.mrb[0].mxu0
      %4914 = vmatprep.mubr.f32.mxu0 0.0
      %4915 = vmatmul.mubr.f32.gmra.mrb[0].mxu0 %v4757
      %v4916 = vpop.f32.mrb[0].mxu0
      %v4917 = vadd.f32 0.0, %v4916
      %v4918 = vpop.f32.mrb[0].mxu0
      %4919 = vmatprep.mubr.f32.mxu0 0.0
      %4920 = vmatmul.mubr.f32.gmra.mrb[0].mxu0 %v4760
      %v4921 = vpop.f32.mrb[0].mxu0
      %v4922 = vadd.f32 0.0, %v4921
      %v4923 = vpop.f32.mrb[0].mxu0
      %4924 = vmatprep.mubr.f32.mxu0 0.0
      %4925 = vmatmul.mubr.f32.gmra.mrb[0].mxu0 %v4763
      %v4926 = vpop.f32.mrb[0].mxu0
      %v4927 = vadd.f32 0.0, %v4926
      %v4928 = vpop.f32.mrb[0].mxu0
      %4929 = vmatprep.mubr.f32.mxu0 0.0
      %4930 = vmatmul.mubr.f32.gmra.mrb[0].mxu0 %v4766
      %v4931 = vpop.f32.mrb[0].mxu0
      %v4932 = vadd.f32 0.0, %v4931
      %v4933 = vpop.f32.mrb[0].mxu0
      %4934 = vmatprep.mubr.f32.mxu0 0.0
      %4935 = vmatmul.mubr.f32.gmra.mrb[0].mxu0 %v4769
      %v4936 = vpop.f32.mrb[0].mxu0
      %v4937 = vadd.f32 0.0, %v4936
      %v4938 = vpop.f32.mrb[0].mxu0
      %4939 = vmatprep.mubr.f32.mxu0 0.0
      %4940 = vmatmul.mubr.f32.gmra.mrb[0].mxu0 %v4772
      %v4941 = vpop.f32.mrb[0].mxu0
      %v4942 = vadd.f32 0.0, %v4941
      %v4943 = vpop.f32.mrb[0].mxu0
      %4944 = vmatprep.mubr.f32.mxu0 0.0
      %4945 = vmatmul.mubr.f32.gmra.mrb[0].mxu0 %v4775
      %v4946 = vpop.f32.mrb[0].mxu0
      %v4947 = vadd.f32 0.0, %v4946
      %v4948 = vpop.f32.mrb[0].mxu0
      %4949 = vmatprep.mubr.f32.mxu0 0.0
      %4950 = vmatmul.mubr.f32.gmra.mrb[0].mxu0 %v4778
      %v4951 = vpop.f32.mrb[0].mxu0
      %v4952 = vadd.f32 0.0, %v4951
      %v4953 = vpop.f32.mrb[0].mxu0
      %4954 = vmatprep.mubr.f32.mxu0 0.0
      %4955 = vmatmul.mubr.f32.gmra.mrb[0].mxu0 %v4781
      %v4956 = vpop.f32.mrb[0].mxu0
      %v4957 = vadd.f32 0.0, %v4956
      %v4958 = vpop.f32.mrb[0].mxu0
      %4959 = vmatprep.mubr.f32.mxu0 0.0
      %4960 = vmatmul.mubr.f32.gmra.mrb[0].mxu0 %v4784
      %v4961 = vpop.f32.mrb[0].mxu0
      %v4962 = vadd.f32 0.0, %v4961
      %v4963 = vpop.f32.mrb[0].mxu0
      %4964 = vmatprep.mubr.f32.mxu0 0.0
      %4965 = vmatmul.mubr.f32.gmra.mrb[0].mxu0 %v4787
      %v4966 = vpop.f32.mrb[0].mxu0
      %v4967 = vadd.f32 0.0, %v4966
      %v4968 = vpop.f32.mrb[0].mxu0
      %4969 = vmatprep.mubr.f32.mxu0 0.0
      %4970 = vmatmul.mubr.f32.gmra.mrb[0].mxu0 %v4790
      %v4971 = vpop.f32.mrb[0].mxu0
      %v4972 = vadd.f32 0.0, %v4971
      %v4973 = vpop.f32.mrb[0].mxu0
      %4974 = vmatprep.mubr.f32.mxu0 0.0
      %4975 = vmatmul.mubr.f32.gmra.mrb[0].mxu0 %v4793
      %v4976 = vpop.f32.mrb[0].mxu0
      %v4977 = vadd.f32 0.0, %v4976
      %v4978 = vpop.f32.mrb[0].mxu0
      %4979 = vdwg.mxu0
      %v4980 = vadd.f32 %v4674, %v4862
      %v4981 = vadd.f32 %v4675, %v4867
      %v4982 = vadd.f32 %v4676, %v4872
      %v4983 = vadd.f32 %v4677, %v4877
      %v4984 = vadd.f32 %v4678, %v4882
      %v4985 = vadd.f32 %v4679, %v4887
      %v4986 = vadd.f32 %v4680, %v4892
      %v4987 = vadd.f32 %v4681, %v4897
      %v4988 = vadd.f32 %v4682, %v4902
      %v4989 = vadd.f32 %v4683, %v4907
      %v4990 = vadd.f32 %v4684, %v4912
      %v4991 = vadd.f32 %v4685, %v4917
      %v4992 = vadd.f32 %v4686, %v4922
      %v4993 = vadd.f32 %v4687, %v4927
      %v4994 = vadd.f32 %v4688, %v4932
      %v4995 = vadd.f32 %v4689, %v4937
      %v4996 = vadd.f32 %v4690, %v4942
      %v4997 = vadd.f32 %v4691, %v4947
      %v4998 = vadd.f32 %v4692, %v4952
      %v4999 = vadd.f32 %v4693, %v4957
      %v5000 = vadd.f32 %v4694, %v4962
      %v5001 = vadd.f32 %v4695, %v4967
      %v5002 = vadd.f32 %v4696, %v4972
      %v5003 = vadd.f32 %v4697, %v4977
      %v5004 = vld [vmem:[#allocation2 + $0x12] sm:$0xff]
      %v5005 = vld [vmem:[#allocation2 + $0x1a] sm:$0xff]
      %v5006 = vld [vmem:[#allocation2 + $0x22] sm:$0xff]
      %v5007 = vld [vmem:[#allocation2 + $0x2a] sm:$0xff]
      %v5008 = vld [vmem:[#allocation2 + $0x32] sm:$0xff]
      %v5009 = vld [vmem:[#allocation2 + $0x3a] sm:$0xff]
      %v5010 = vld [vmem:[#allocation2 + $0x42] sm:$0xff]
      %v5011 = vld [vmem:[#allocation2 + $0x4a] sm:$0xff]
      %v5012 = vld [vmem:[#allocation2 + $0x52] sm:$0xff]
      %v5013 = vld [vmem:[#allocation2 + $0x5a] sm:$0xff]
      %v5014 = vld [vmem:[#allocation2 + $0x62] sm:$0xff]
      %v5015 = vld [vmem:[#allocation2 + $0x6a] sm:$0xff]
      %v5016 = vld [vmem:[#allocation2 + $0x72] sm:$0xff]
      %v5017 = vld [vmem:[#allocation2 + $0x7a] sm:$0xff]
      %v5018 = vld [vmem:[#allocation2 + $0x82] sm:$0xff]
      %v5019 = vld [vmem:[#allocation2 + $0x8a] sm:$0xff]
      %v5020 = vld [vmem:[#allocation2 + $0x92] sm:$0xff]
      %v5021 = vld [vmem:[#allocation2 + $0x9a] sm:$0xff]
      %v5022 = vld [vmem:[#allocation2 + $0xa2] sm:$0xff]
      %v5023 = vld [vmem:[#allocation2 + $0xaa] sm:$0xff]
      %v5024 = vld [vmem:[#allocation2 + $0xb2] sm:$0xff]
      %v5025 = vld [vmem:[#allocation2 + $0xba] sm:$0xff]
      %v5026 = vld [vmem:[#allocation2 + $0xc2] sm:$0xff]
      %v5027 = vld [vmem:[#allocation2 + $0xca] sm:$0xff]
      %v5028 = vld [vmem:[%s3 + $0x28] sm:$0xff]
      %v5030 = vsel %vm3492, %v5004, 0
      %v5033 = vsel %vm3492, %v5005, 0
      %v5036 = vsel %vm3492, %v5006, 0
      %v5039 = vsel %vm3492, %v5007, 0
      %v5042 = vsel %vm3492, %v5008, 0
      %v5045 = vsel %vm3492, %v5009, 0
      %v5048 = vsel %vm3492, %v5010, 0
      %v5051 = vsel %vm3492, %v5011, 0
      %v5054 = vsel %vm3492, %v5012, 0
      %v5057 = vsel %vm3492, %v5013, 0
      %v5060 = vsel %vm3492, %v5014, 0
      %v5063 = vsel %vm3492, %v5015, 0
      %v5066 = vsel %vm3492, %v5016, 0
      %v5069 = vsel %vm3492, %v5017, 0
      %v5072 = vsel %vm3492, %v5018, 0
      %v5075 = vsel %vm3492, %v5019, 0
      %v5078 = vsel %vm3492, %v5020, 0
      %v5081 = vsel %vm3492, %v5021, 0
      %v5084 = vsel %vm3492, %v5022, 0
      %v5087 = vsel %vm3492, %v5023, 0
      %v5090 = vsel %vm3492, %v5024, 0
      %v5093 = vsel %vm3492, %v5025, 0
      %v5096 = vsel %vm3492, %v5026, 0
      %v5099 = vsel %vm3492, %v5027, 0
      %5101 = vmatprep.subr.mxu0 0.0
      %5102 = vmatpush1.msra.mxu0 %v5028
      %5103 = vmatprep.subr.mxu0 0.0
      %5104 = vmatpush1.msra.mxu0 0.0
      %5105 = vmatprep.subr.mxu0 0.0
      %5106 = vmatpush1.msra.mxu0 0.0
      %5107 = vmatprep.subr.mxu0 0.0
      %5108 = vmatpush1.msra.mxu0 0.0
      %5109 = vmatprep.subr.mxu0 0.0
      %5110 = vmatpush1.msra.mxu0 0.0
      %5111 = vmatprep.subr.mxu0 0.0
      %5112 = vmatpush1.msra.mxu0 0.0
      %5113 = vmatprep.subr.mxu0 0.0
      %5114 = vmatpush1.msra.mxu0 0.0
      %5115 = vmatprep.subr.mxu0 0.0
      %5116 = vmatpush1.msra.mxu0 0.0
      %5117 = vmatprep.subr.mxu0 0.0
      %5118 = vmatpush1.msra.mxu0 0.0
      %5119 = vmatprep.subr.mxu0 0.0
      %5120 = vmatpush1.msra.mxu0 0.0
      %5121 = vmatprep.subr.mxu0 0.0
      %5122 = vmatpush1.msra.mxu0 0.0
      %5123 = vmatprep.subr.mxu0 0.0
      %5124 = vmatpush1.msra.mxu0 0.0
      %5125 = vmatprep.subr.mxu0 0.0
      %5126 = vmatpush1.msra.mxu0 0.0
      %5127 = vmatprep.subr.mxu0 0.0
      %5128 = vmatpush1.msra.mxu0 0.0
      %5129 = vmatprep.subr.mxu0 0.0
      %5130 = vmatpush1.msra.mxu0 0.0
      %5131 = vmatprep.subr.mxu0 0.0
      %5132 = vmatpush1.msra.mxu0 0.0
      %5133 = vmatprep.subr.mxu0 0.0
      %5134 = vmatpush1.msra.mxu0 0.0
      %5135 = vmatprep.subr.mxu0 0.0
      %5136 = vmatpush1.msra.mxu0 0.0
      %5137 = vmatprep.subr.mxu0 0.0
      %5138 = vmatpush1.msra.mxu0 0.0
      %5139 = vmatprep.subr.mxu0 0.0
      %5140 = vmatpush1.msra.mxu0 0.0
      %5141 = vmatprep.subr.mxu0 0.0
      %5142 = vmatpush1.msra.mxu0 0.0
      %5143 = vmatprep.subr.mxu0 0.0
      %5144 = vmatpush1.msra.mxu0 0.0
      %5145 = vmatprep.subr.mxu0 0.0
      %5146 = vmatpush1.msra.mxu0 0.0
      %5147 = vmatprep.subr.mxu0 0.0
      %5148 = vmatpush1.msra.mxu0 0.0
      %5149 = vmatprep.subr.mxu0 0.0
      %5150 = vmatpush1.msra.mxu0 0.0
      %5151 = vmatprep.subr.mxu0 0.0
      %5152 = vmatpush1.msra.mxu0 0.0
      %5153 = vmatprep.subr.mxu0 0.0
      %5154 = vmatpush1.msra.mxu0 0.0
      %5155 = vmatprep.subr.mxu0 0.0
      %5156 = vmatpush1.msra.mxu0 0.0
      %5157 = vmatprep.subr.mxu0 0.0
      %5158 = vmatpush1.msra.mxu0 0.0
      %5159 = vmatprep.subr.mxu0 0.0
      %5160 = vmatpush1.msra.mxu0 0.0
      %5161 = vmatprep.subr.mxu0 0.0
      %5162 = vmatpush1.msra.mxu0 0.0
      %5163 = vmatprep.subr.mxu0 0.0
      %5164 = vmatpush1.msra.mxu0 0.0
      %5165 = vmatprep.mubr.f32.mxu0 0.0
      %5166 = vmatmul.mubr.f32.gmra.mrb[0].mxu0 %v5030
      %v5167 = vpop.f32.mrb[0].mxu0
      %v5168 = vadd.f32 0.0, %v5167
      %v5169 = vpop.f32.mrb[0].mxu0
      %5170 = vmatprep.mubr.f32.mxu0 0.0
      %5171 = vmatmul.mubr.f32.gmra.mrb[0].mxu0 %v5033
      %v5172 = vpop.f32.mrb[0].mxu0
      %v5173 = vadd.f32 0.0, %v5172
      %v5174 = vpop.f32.mrb[0].mxu0
      %5175 = vmatprep.mubr.f32.mxu0 0.0
      %5176 = vmatmul.mubr.f32.gmra.mrb[0].mxu0 %v5036
      %v5177 = vpop.f32.mrb[0].mxu0
      %v5178 = vadd.f32 0.0, %v5177
      %v5179 = vpop.f32.mrb[0].mxu0
      %5180 = vmatprep.mubr.f32.mxu0 0.0
      %5181 = vmatmul.mubr.f32.gmra.mrb[0].mxu0 %v5039
      %v5182 = vpop.f32.mrb[0].mxu0
      %v5183 = vadd.f32 0.0, %v5182
      %v5184 = vpop.f32.mrb[0].mxu0
      %5185 = vmatprep.mubr.f32.mxu0 0.0
      %5186 = vmatmul.mubr.f32.gmra.mrb[0].mxu0 %v5042
      %v5187 = vpop.f32.mrb[0].mxu0
      %v5188 = vadd.f32 0.0, %v5187
      %v5189 = vpop.f32.mrb[0].mxu0
      %5190 = vmatprep.mubr.f32.mxu0 0.0
      %5191 = vmatmul.mubr.f32.gmra.mrb[0].mxu0 %v5045
      %v5192 = vpop.f32.mrb[0].mxu0
      %v5193 = vadd.f32 0.0, %v5192
      %v5194 = vpop.f32.mrb[0].mxu0
      %5195 = vmatprep.mubr.f32.mxu0 0.0
      %5196 = vmatmul.mubr.f32.gmra.mrb[0].mxu0 %v5048
      %v5197 = vpop.f32.mrb[0].mxu0
      %v5198 = vadd.f32 0.0, %v5197
      %v5199 = vpop.f32.mrb[0].mxu0
      %5200 = vmatprep.mubr.f32.mxu0 0.0
      %5201 = vmatmul.mubr.f32.gmra.mrb[0].mxu0 %v5051
      %v5202 = vpop.f32.mrb[0].mxu0
      %v5203 = vadd.f32 0.0, %v5202
      %v5204 = vpop.f32.mrb[0].mxu0
      %5205 = vmatprep.mubr.f32.mxu0 0.0
      %5206 = vmatmul.mubr.f32.gmra.mrb[0].mxu0 %v5054
      %v5207 = vpop.f32.mrb[0].mxu0
      %v5208 = vadd.f32 0.0, %v5207
      %v5209 = vpop.f32.mrb[0].mxu0
      %5210 = vmatprep.mubr.f32.mxu0 0.0
      %5211 = vmatmul.mubr.f32.gmra.mrb[0].mxu0 %v5057
      %v5212 = vpop.f32.mrb[0].mxu0
      %v5213 = vadd.f32 0.0, %v5212
      %v5214 = vpop.f32.mrb[0].mxu0
      %5215 = vmatprep.mubr.f32.mxu0 0.0
      %5216 = vmatmul.mubr.f32.gmra.mrb[0].mxu0 %v5060
      %v5217 = vpop.f32.mrb[0].mxu0
      %v5218 = vadd.f32 0.0, %v5217
      %v5219 = vpop.f32.mrb[0].mxu0
      %5220 = vmatprep.mubr.f32.mxu0 0.0
      %5221 = vmatmul.mubr.f32.gmra.mrb[0].mxu0 %v5063
      %v5222 = vpop.f32.mrb[0].mxu0
      %v5223 = vadd.f32 0.0, %v5222
      %v5224 = vpop.f32.mrb[0].mxu0
      %5225 = vmatprep.mubr.f32.mxu0 0.0
      %5226 = vmatmul.mubr.f32.gmra.mrb[0].mxu0 %v5066
      %v5227 = vpop.f32.mrb[0].mxu0
      %v5228 = vadd.f32 0.0, %v5227
      %v5229 = vpop.f32.mrb[0].mxu0
      %5230 = vmatprep.mubr.f32.mxu0 0.0
      %5231 = vmatmul.mubr.f32.gmra.mrb[0].mxu0 %v5069
      %v5232 = vpop.f32.mrb[0].mxu0
      %v5233 = vadd.f32 0.0, %v5232
      %v5234 = vpop.f32.mrb[0].mxu0
      %5235 = vmatprep.mubr.f32.mxu0 0.0
      %5236 = vmatmul.mubr.f32.gmra.mrb[0].mxu0 %v5072
      %v5237 = vpop.f32.mrb[0].mxu0
      %v5238 = vadd.f32 0.0, %v5237
      %v5239 = vpop.f32.mrb[0].mxu0
      %5240 = vmatprep.mubr.f32.mxu0 0.0
      %5241 = vmatmul.mubr.f32.gmra.mrb[0].mxu0 %v5075
      %v5242 = vpop.f32.mrb[0].mxu0
      %v5243 = vadd.f32 0.0, %v5242
      %v5244 = vpop.f32.mrb[0].mxu0
      %5245 = vmatprep.mubr.f32.mxu0 0.0
      %5246 = vmatmul.mubr.f32.gmra.mrb[0].mxu0 %v5078
      %v5247 = vpop.f32.mrb[0].mxu0
      %v5248 = vadd.f32 0.0, %v5247
      %v5249 = vpop.f32.mrb[0].mxu0
      %5250 = vmatprep.mubr.f32.mxu0 0.0
      %5251 = vmatmul.mubr.f32.gmra.mrb[0].mxu0 %v5081
      %v5252 = vpop.f32.mrb[0].mxu0
      %v5253 = vadd.f32 0.0, %v5252
      %v5254 = vpop.f32.mrb[0].mxu0
      %5255 = vmatprep.mubr.f32.mxu0 0.0
      %5256 = vmatmul.mubr.f32.gmra.mrb[0].mxu0 %v5084
      %v5257 = vpop.f32.mrb[0].mxu0
      %v5258 = vadd.f32 0.0, %v5257
      %v5259 = vpop.f32.mrb[0].mxu0
      %5260 = vmatprep.mubr.f32.mxu0 0.0
      %5261 = vmatmul.mubr.f32.gmra.mrb[0].mxu0 %v5087
      %v5262 = vpop.f32.mrb[0].mxu0
      %v5263 = vadd.f32 0.0, %v5262
      %v5264 = vpop.f32.mrb[0].mxu0
      %5265 = vmatprep.mubr.f32.mxu0 0.0
      %5266 = vmatmul.mubr.f32.gmra.mrb[0].mxu0 %v5090
      %v5267 = vpop.f32.mrb[0].mxu0
      %v5268 = vadd.f32 0.0, %v5267
      %v5269 = vpop.f32.mrb[0].mxu0
      %5270 = vmatprep.mubr.f32.mxu0 0.0
      %5271 = vmatmul.mubr.f32.gmra.mrb[0].mxu0 %v5093
      %v5272 = vpop.f32.mrb[0].mxu0
      %v5273 = vadd.f32 0.0, %v5272
      %v5274 = vpop.f32.mrb[0].mxu0
      %5275 = vmatprep.mubr.f32.mxu0 0.0
      %5276 = vmatmul.mubr.f32.gmra.mrb[0].mxu0 %v5096
      %v5277 = vpop.f32.mrb[0].mxu0
      %v5278 = vadd.f32 0.0, %v5277
      %v5279 = vpop.f32.mrb[0].mxu0
      %5280 = vmatprep.mubr.f32.mxu0 0.0
      %5281 = vmatmul.mubr.f32.gmra.mrb[0].mxu0 %v5099
      %v5282 = vpop.f32.mrb[0].mxu0
      %v5283 = vadd.f32 0.0, %v5282
      %v5284 = vpop.f32.mrb[0].mxu0
      %5285 = vdwg.mxu0
      %v5286 = vadd.f32 %v4980, %v5168
      %v5287 = vadd.f32 %v4981, %v5173
      %v5288 = vadd.f32 %v4982, %v5178
      %v5289 = vadd.f32 %v4983, %v5183
      %v5290 = vadd.f32 %v4984, %v5188
      %v5291 = vadd.f32 %v4985, %v5193
      %v5292 = vadd.f32 %v4986, %v5198
      %v5293 = vadd.f32 %v4987, %v5203
      %v5294 = vadd.f32 %v4988, %v5208
      %v5295 = vadd.f32 %v4989, %v5213
      %v5296 = vadd.f32 %v4990, %v5218
      %v5297 = vadd.f32 %v4991, %v5223
      %v5298 = vadd.f32 %v4992, %v5228
      %v5299 = vadd.f32 %v4993, %v5233
      %v5300 = vadd.f32 %v4994, %v5238
      %v5301 = vadd.f32 %v4995, %v5243
      %v5302 = vadd.f32 %v4996, %v5248
      %v5303 = vadd.f32 %v4997, %v5253
      %v5304 = vadd.f32 %v4998, %v5258
      %v5305 = vadd.f32 %v4999, %v5263
      %v5306 = vadd.f32 %v5000, %v5268
      %v5307 = vadd.f32 %v5001, %v5273
      %v5308 = vadd.f32 %v5002, %v5278
      %v5309 = vadd.f32 %v5003, %v5283
      %v5310 = vld [vmem:[#allocation2 + $0x20] sm:$0xff]
      %v5311 = vld [vmem:[#allocation2 + $0x28] sm:$0xff]
      %v5312 = vld [vmem:[#allocation2 + $0x30] sm:$0xff]
      %v5313 = vld [vmem:[#allocation2 + $0x38] sm:$0xff]
      %v5314 = vld [vmem:[#allocation2 + $0x40] sm:$0xff]
      %v5315 = vld [vmem:[#allocation2 + $0x48] sm:$0xff]
      %v5316 = vld [vmem:[#allocation2 + $0x50] sm:$0xff]
      %v5317 = vld [vmem:[#allocation2 + $0x58] sm:$0xff]
      %v5318 = vld [vmem:[#allocation2 + $0x60] sm:$0xff]
      %v5319 = vld [vmem:[#allocation2 + $0x68] sm:$0xff]
      %v5320 = vld [vmem:[#allocation2 + $0x70] sm:$0xff]
      %v5321 = vld [vmem:[#allocation2 + $0x78] sm:$0xff]
      %v5322 = vld [vmem:[#allocation2 + $0x80] sm:$0xff]
      %v5323 = vld [vmem:[#allocation2 + $0x88] sm:$0xff]
      %v5324 = vld [vmem:[#allocation2 + $0x90] sm:$0xff]
      %v5325 = vld [vmem:[#allocation2 + $0x98] sm:$0xff]
      %v5326 = vld [vmem:[#allocation2 + $0xa0] sm:$0xff]
      %v5327 = vld [vmem:[#allocation2 + $0xa8] sm:$0xff]
      %v5328 = vld [vmem:[#allocation2 + $0xb0] sm:$0xff]
      %v5329 = vld [vmem:[#allocation2 + $0xb8] sm:$0xff]
      %v5330 = vld [vmem:[#allocation2 + $0xc0] sm:$0xff]
      %v5331 = vld [vmem:[#allocation2 + $0xc8] sm:$0xff]
      %v5332 = vld [vmem:[#allocation2 + $0xd0] sm:$0xff]
      %v5333 = vld [vmem:[#allocation2 + $0xd8] sm:$0xff]
      %v5334 = vld [vmem:[%s3 + $0x30] sm:$0xff]
      %v5336 = vsel %vm3492, %v5310, 0
      %v5339 = vsel %vm3492, %v5311, 0
      %v5342 = vsel %vm3492, %v5312, 0
      %v5345 = vsel %vm3492, %v5313, 0
      %v5348 = vsel %vm3492, %v5314, 0
      %v5351 = vsel %vm3492, %v5315, 0
      %v5354 = vsel %vm3492, %v5316, 0
      %v5357 = vsel %vm3492, %v5317, 0
      %v5360 = vsel %vm3492, %v5318, 0
      %v5363 = vsel %vm3492, %v5319, 0
      %v5366 = vsel %vm3492, %v5320, 0
      %v5369 = vsel %vm3492, %v5321, 0
      %v5372 = vsel %vm3492, %v5322, 0
      %v5375 = vsel %vm3492, %v5323, 0
      %v5378 = vsel %vm3492, %v5324, 0
      %v5381 = vsel %vm3492, %v5325, 0
      %v5384 = vsel %vm3492, %v5326, 0
      %v5387 = vsel %vm3492, %v5327, 0
      %v5390 = vsel %vm3492, %v5328, 0
      %v5393 = vsel %vm3492, %v5329, 0
      %v5396 = vsel %vm3492, %v5330, 0
      %v5399 = vsel %vm3492, %v5331, 0
      %v5402 = vsel %vm3492, %v5332, 0
      %v5405 = vsel %vm3492, %v5333, 0
      %5407 = vmatprep.subr.mxu0 0.0
      %5408 = vmatpush1.msra.mxu0 %v5334
      %5409 = vmatprep.subr.mxu0 0.0
      %5410 = vmatpush1.msra.mxu0 0.0
      %5411 = vmatprep.subr.mxu0 0.0
      %5412 = vmatpush1.msra.mxu0 0.0
      %5413 = vmatprep.subr.mxu0 0.0
      %5414 = vmatpush1.msra.mxu0 0.0
      %5415 = vmatprep.subr.mxu0 0.0
      %5416 = vmatpush1.msra.mxu0 0.0
      %5417 = vmatprep.subr.mxu0 0.0
      %5418 = vmatpush1.msra.mxu0 0.0
      %5419 = vmatprep.subr.mxu0 0.0
      %5420 = vmatpush1.msra.mxu0 0.0
      %5421 = vmatprep.subr.mxu0 0.0
      %5422 = vmatpush1.msra.mxu0 0.0
      %5423 = vmatprep.subr.mxu0 0.0
      %5424 = vmatpush1.msra.mxu0 0.0
      %5425 = vmatprep.subr.mxu0 0.0
      %5426 = vmatpush1.msra.mxu0 0.0
      %5427 = vmatprep.subr.mxu0 0.0
      %5428 = vmatpush1.msra.mxu0 0.0
      %5429 = vmatprep.subr.mxu0 0.0
      %5430 = vmatpush1.msra.mxu0 0.0
      %5431 = vmatprep.subr.mxu0 0.0
      %5432 = vmatpush1.msra.mxu0 0.0
      %5433 = vmatprep.subr.mxu0 0.0
      %5434 = vmatpush1.msra.mxu0 0.0
      %5435 = vmatprep.subr.mxu0 0.0
      %5436 = vmatpush1.msra.mxu0 0.0
      %5437 = vmatprep.subr.mxu0 0.0
      %5438 = vmatpush1.msra.mxu0 0.0
      %5439 = vmatprep.subr.mxu0 0.0
      %5440 = vmatpush1.msra.mxu0 0.0
      %5441 = vmatprep.subr.mxu0 0.0
      %5442 = vmatpush1.msra.mxu0 0.0
      %5443 = vmatprep.subr.mxu0 0.0
      %5444 = vmatpush1.msra.mxu0 0.0
      %5445 = vmatprep.subr.mxu0 0.0
      %5446 = vmatpush1.msra.mxu0 0.0
      %5447 = vmatprep.subr.mxu0 0.0
      %5448 = vmatpush1.msra.mxu0 0.0
      %5449 = vmatprep.subr.mxu0 0.0
      %5450 = vmatpush1.msra.mxu0 0.0
      %5451 = vmatprep.subr.mxu0 0.0
      %5452 = vmatpush1.msra.mxu0 0.0
      %5453 = vmatprep.subr.mxu0 0.0
      %5454 = vmatpush1.msra.mxu0 0.0
      %5455 = vmatprep.subr.mxu0 0.0
      %5456 = vmatpush1.msra.mxu0 0.0
      %5457 = vmatprep.subr.mxu0 0.0
      %5458 = vmatpush1.msra.mxu0 0.0
      %5459 = vmatprep.subr.mxu0 0.0
      %5460 = vmatpush1.msra.mxu0 0.0
      %5461 = vmatprep.subr.mxu0 0.0
      %5462 = vmatpush1.msra.mxu0 0.0
      %5463 = vmatprep.subr.mxu0 0.0
      %5464 = vmatpush1.msra.mxu0 0.0
      %5465 = vmatprep.subr.mxu0 0.0
      %5466 = vmatpush1.msra.mxu0 0.0
      %5467 = vmatprep.subr.mxu0 0.0
      %5468 = vmatpush1.msra.mxu0 0.0
      %5469 = vmatprep.subr.mxu0 0.0
      %5470 = vmatpush1.msra.mxu0 0.0
      %5471 = vmatprep.mubr.f32.mxu0 0.0
      %5472 = vmatmul.mubr.f32.gmra.mrb[0].mxu0 %v5336
      %v5473 = vpop.f32.mrb[0].mxu0
      %v5474 = vadd.f32 0.0, %v5473
      %v5475 = vpop.f32.mrb[0].mxu0
      %5476 = vmatprep.mubr.f32.mxu0 0.0
      %5477 = vmatmul.mubr.f32.gmra.mrb[0].mxu0 %v5339
      %v5478 = vpop.f32.mrb[0].mxu0
      %v5479 = vadd.f32 0.0, %v5478
      %v5480 = vpop.f32.mrb[0].mxu0
      %5481 = vmatprep.mubr.f32.mxu0 0.0
      %5482 = vmatmul.mubr.f32.gmra.mrb[0].mxu0 %v5342
      %v5483 = vpop.f32.mrb[0].mxu0
      %v5484 = vadd.f32 0.0, %v5483
      %v5485 = vpop.f32.mrb[0].mxu0
      %5486 = vmatprep.mubr.f32.mxu0 0.0
      %5487 = vmatmul.mubr.f32.gmra.mrb[0].mxu0 %v5345
      %v5488 = vpop.f32.mrb[0].mxu0
      %v5489 = vadd.f32 0.0, %v5488
      %v5490 = vpop.f32.mrb[0].mxu0
      %5491 = vmatprep.mubr.f32.mxu0 0.0
      %5492 = vmatmul.mubr.f32.gmra.mrb[0].mxu0 %v5348
      %v5493 = vpop.f32.mrb[0].mxu0
      %v5494 = vadd.f32 0.0, %v5493
      %v5495 = vpop.f32.mrb[0].mxu0
      %5496 = vmatprep.mubr.f32.mxu0 0.0
      %5497 = vmatmul.mubr.f32.gmra.mrb[0].mxu0 %v5351
      %v5498 = vpop.f32.mrb[0].mxu0
      %v5499 = vadd.f32 0.0, %v5498
      %v5500 = vpop.f32.mrb[0].mxu0
      %5501 = vmatprep.mubr.f32.mxu0 0.0
      %5502 = vmatmul.mubr.f32.gmra.mrb[0].mxu0 %v5354
      %v5503 = vpop.f32.mrb[0].mxu0
      %v5504 = vadd.f32 0.0, %v5503
      %v5505 = vpop.f32.mrb[0].mxu0
      %5506 = vmatprep.mubr.f32.mxu0 0.0
      %5507 = vmatmul.mubr.f32.gmra.mrb[0].mxu0 %v5357
      %v5508 = vpop.f32.mrb[0].mxu0
      %v5509 = vadd.f32 0.0, %v5508
      %v5510 = vpop.f32.mrb[0].mxu0
      %5511 = vmatprep.mubr.f32.mxu0 0.0
      %5512 = vmatmul.mubr.f32.gmra.mrb[0].mxu0 %v5360
      %v5513 = vpop.f32.mrb[0].mxu0
      %v5514 = vadd.f32 0.0, %v5513
      %v5515 = vpop.f32.mrb[0].mxu0
      %5516 = vmatprep.mubr.f32.mxu0 0.0
      %5517 = vmatmul.mubr.f32.gmra.mrb[0].mxu0 %v5363
      %v5518 = vpop.f32.mrb[0].mxu0
      %v5519 = vadd.f32 0.0, %v5518
      %v5520 = vpop.f32.mrb[0].mxu0
      %5521 = vmatprep.mubr.f32.mxu0 0.0
      %5522 = vmatmul.mubr.f32.gmra.mrb[0].mxu0 %v5366
      %v5523 = vpop.f32.mrb[0].mxu0
      %v5524 = vadd.f32 0.0, %v5523
      %v5525 = vpop.f32.mrb[0].mxu0
      %5526 = vmatprep.mubr.f32.mxu0 0.0
      %5527 = vmatmul.mubr.f32.gmra.mrb[0].mxu0 %v5369
      %v5528 = vpop.f32.mrb[0].mxu0
      %v5529 = vadd.f32 0.0, %v5528
      %v5530 = vpop.f32.mrb[0].mxu0
      %5531 = vmatprep.mubr.f32.mxu0 0.0
      %5532 = vmatmul.mubr.f32.gmra.mrb[0].mxu0 %v5372
      %v5533 = vpop.f32.mrb[0].mxu0
      %v5534 = vadd.f32 0.0, %v5533
      %v5535 = vpop.f32.mrb[0].mxu0
      %5536 = vmatprep.mubr.f32.mxu0 0.0
      %5537 = vmatmul.mubr.f32.gmra.mrb[0].mxu0 %v5375
      %v5538 = vpop.f32.mrb[0].mxu0
      %v5539 = vadd.f32 0.0, %v5538
      %v5540 = vpop.f32.mrb[0].mxu0
      %5541 = vmatprep.mubr.f32.mxu0 0.0
      %5542 = vmatmul.mubr.f32.gmra.mrb[0].mxu0 %v5378
      %v5543 = vpop.f32.mrb[0].mxu0
      %v5544 = vadd.f32 0.0, %v5543
      %v5545 = vpop.f32.mrb[0].mxu0
      %5546 = vmatprep.mubr.f32.mxu0 0.0
      %5547 = vmatmul.mubr.f32.gmra.mrb[0].mxu0 %v5381
      %v5548 = vpop.f32.mrb[0].mxu0
      %v5549 = vadd.f32 0.0, %v5548
      %v5550 = vpop.f32.mrb[0].mxu0
      %5551 = vmatprep.mubr.f32.mxu0 0.0
      %5552 = vmatmul.mubr.f32.gmra.mrb[0].mxu0 %v5384
      %v5553 = vpop.f32.mrb[0].mxu0
      %v5554 = vadd.f32 0.0, %v5553
      %v5555 = vpop.f32.mrb[0].mxu0
      %5556 = vmatprep.mubr.f32.mxu0 0.0
      %5557 = vmatmul.mubr.f32.gmra.mrb[0].mxu0 %v5387
      %v5558 = vpop.f32.mrb[0].mxu0
      %v5559 = vadd.f32 0.0, %v5558
      %v5560 = vpop.f32.mrb[0].mxu0
      %5561 = vmatprep.mubr.f32.mxu0 0.0
      %5562 = vmatmul.mubr.f32.gmra.mrb[0].mxu0 %v5390
      %v5563 = vpop.f32.mrb[0].mxu0
      %v5564 = vadd.f32 0.0, %v5563
      %v5565 = vpop.f32.mrb[0].mxu0
      %5566 = vmatprep.mubr.f32.mxu0 0.0
      %5567 = vmatmul.mubr.f32.gmra.mrb[0].mxu0 %v5393
      %v5568 = vpop.f32.mrb[0].mxu0
      %v5569 = vadd.f32 0.0, %v5568
      %v5570 = vpop.f32.mrb[0].mxu0
      %5571 = vmatprep.mubr.f32.mxu0 0.0
      %5572 = vmatmul.mubr.f32.gmra.mrb[0].mxu0 %v5396
      %v5573 = vpop.f32.mrb[0].mxu0
      %v5574 = vadd.f32 0.0, %v5573
      %v5575 = vpop.f32.mrb[0].mxu0
      %5576 = vmatprep.mubr.f32.mxu0 0.0
      %5577 = vmatmul.mubr.f32.gmra.mrb[0].mxu0 %v5399
      %v5578 = vpop.f32.mrb[0].mxu0
      %v5579 = vadd.f32 0.0, %v5578
      %v5580 = vpop.f32.mrb[0].mxu0
      %5581 = vmatprep.mubr.f32.mxu0 0.0
      %5582 = vmatmul.mubr.f32.gmra.mrb[0].mxu0 %v5402
      %v5583 = vpop.f32.mrb[0].mxu0
      %v5584 = vadd.f32 0.0, %v5583
      %v5585 = vpop.f32.mrb[0].mxu0
      %5586 = vmatprep.mubr.f32.mxu0 0.0
      %5587 = vmatmul.mubr.f32.gmra.mrb[0].mxu0 %v5405
      %v5588 = vpop.f32.mrb[0].mxu0
      %v5589 = vadd.f32 0.0, %v5588
      %v5590 = vpop.f32.mrb[0].mxu0
      %5591 = vdwg.mxu0
      %v5592 = vadd.f32 %v5286, %v5474
      %v5593 = vadd.f32 %v5287, %v5479
      %v5594 = vadd.f32 %v5288, %v5484
      %v5595 = vadd.f32 %v5289, %v5489
      %v5596 = vadd.f32 %v5290, %v5494
      %v5597 = vadd.f32 %v5291, %v5499
      %v5598 = vadd.f32 %v5292, %v5504
      %v5599 = vadd.f32 %v5293, %v5509
      %v5600 = vadd.f32 %v5294, %v5514
      %v5601 = vadd.f32 %v5295, %v5519
      %v5602 = vadd.f32 %v5296, %v5524
      %v5603 = vadd.f32 %v5297, %v5529
      %v5604 = vadd.f32 %v5298, %v5534
      %v5605 = vadd.f32 %v5299, %v5539
      %v5606 = vadd.f32 %v5300, %v5544
      %v5607 = vadd.f32 %v5301, %v5549
      %v5608 = vadd.f32 %v5302, %v5554
      %v5609 = vadd.f32 %v5303, %v5559
      %v5610 = vadd.f32 %v5304, %v5564
      %v5611 = vadd.f32 %v5305, %v5569
      %v5612 = vadd.f32 %v5306, %v5574
      %v5613 = vadd.f32 %v5307, %v5579
      %v5614 = vadd.f32 %v5308, %v5584
      %v5615 = vadd.f32 %v5309, %v5589
      %v5616 = vld [vmem:[#allocation2 + $0x21] sm:$0xff]
      %v5617 = vld [vmem:[#allocation2 + $0x29] sm:$0xff]
      %v5618 = vld [vmem:[#allocation2 + $0x31] sm:$0xff]
      %v5619 = vld [vmem:[#allocation2 + $0x39] sm:$0xff]
      %v5620 = vld [vmem:[#allocation2 + $0x41] sm:$0xff]
      %v5621 = vld [vmem:[#allocation2 + $0x49] sm:$0xff]
      %v5622 = vld [vmem:[#allocation2 + $0x51] sm:$0xff]
      %v5623 = vld [vmem:[#allocation2 + $0x59] sm:$0xff]
      %v5624 = vld [vmem:[#allocation2 + $0x61] sm:$0xff]
      %v5625 = vld [vmem:[#allocation2 + $0x69] sm:$0xff]
      %v5626 = vld [vmem:[#allocation2 + $0x71] sm:$0xff]
      %v5627 = vld [vmem:[#allocation2 + $0x79] sm:$0xff]
      %v5628 = vld [vmem:[#allocation2 + $0x81] sm:$0xff]
      %v5629 = vld [vmem:[#allocation2 + $0x89] sm:$0xff]
      %v5630 = vld [vmem:[#allocation2 + $0x91] sm:$0xff]
      %v5631 = vld [vmem:[#allocation2 + $0x99] sm:$0xff]
      %v5632 = vld [vmem:[#allocation2 + $0xa1] sm:$0xff]
      %v5633 = vld [vmem:[#allocation2 + $0xa9] sm:$0xff]
      %v5634 = vld [vmem:[#allocation2 + $0xb1] sm:$0xff]
      %v5635 = vld [vmem:[#allocation2 + $0xb9] sm:$0xff]
      %v5636 = vld [vmem:[#allocation2 + $0xc1] sm:$0xff]
      %v5637 = vld [vmem:[#allocation2 + $0xc9] sm:$0xff]
      %v5638 = vld [vmem:[#allocation2 + $0xd1] sm:$0xff]
      %v5639 = vld [vmem:[#allocation2 + $0xd9] sm:$0xff]
      %v5640 = vld [vmem:[%s3 + $0x38] sm:$0xff]
      %v5642 = vsel %vm3492, %v5616, 0
      %v5645 = vsel %vm3492, %v5617, 0
      %v5648 = vsel %vm3492, %v5618, 0
      %v5651 = vsel %vm3492, %v5619, 0
      %v5654 = vsel %vm3492, %v5620, 0
      %v5657 = vsel %vm3492, %v5621, 0
      %v5660 = vsel %vm3492, %v5622, 0
      %v5663 = vsel %vm3492, %v5623, 0
      %v5666 = vsel %vm3492, %v5624, 0
      %v5669 = vsel %vm3492, %v5625, 0
      %v5672 = vsel %vm3492, %v5626, 0
      %v5675 = vsel %vm3492, %v5627, 0
      %v5678 = vsel %vm3492, %v5628, 0
      %v5681 = vsel %vm3492, %v5629, 0
      %v5684 = vsel %vm3492, %v5630, 0
      %v5687 = vsel %vm3492, %v5631, 0
      %v5690 = vsel %vm3492, %v5632, 0
      %v5693 = vsel %vm3492, %v5633, 0
      %v5696 = vsel %vm3492, %v5634, 0
      %v5699 = vsel %vm3492, %v5635, 0
      %v5702 = vsel %vm3492, %v5636, 0
      %v5705 = vsel %vm3492, %v5637, 0
      %v5708 = vsel %vm3492, %v5638, 0
      %v5711 = vsel %vm3492, %v5639, 0
      %5713 = vmatprep.subr.mxu0 0.0
      %5714 = vmatpush1.msra.mxu0 %v5640
      %5715 = vmatprep.subr.mxu0 0.0
      %5716 = vmatpush1.msra.mxu0 0.0
      %5717 = vmatprep.subr.mxu0 0.0
      %5718 = vmatpush1.msra.mxu0 0.0
      %5719 = vmatprep.subr.mxu0 0.0
      %5720 = vmatpush1.msra.mxu0 0.0
      %5721 = vmatprep.subr.mxu0 0.0
      %5722 = vmatpush1.msra.mxu0 0.0
      %5723 = vmatprep.subr.mxu0 0.0
      %5724 = vmatpush1.msra.mxu0 0.0
      %5725 = vmatprep.subr.mxu0 0.0
      %5726 = vmatpush1.msra.mxu0 0.0
      %5727 = vmatprep.subr.mxu0 0.0
      %5728 = vmatpush1.msra.mxu0 0.0
      %5729 = vmatprep.subr.mxu0 0.0
      %5730 = vmatpush1.msra.mxu0 0.0
      %5731 = vmatprep.subr.mxu0 0.0
      %5732 = vmatpush1.msra.mxu0 0.0
      %5733 = vmatprep.subr.mxu0 0.0
      %5734 = vmatpush1.msra.mxu0 0.0
      %5735 = vmatprep.subr.mxu0 0.0
      %5736 = vmatpush1.msra.mxu0 0.0
      %5737 = vmatprep.subr.mxu0 0.0
      %5738 = vmatpush1.msra.mxu0 0.0
      %5739 = vmatprep.subr.mxu0 0.0
      %5740 = vmatpush1.msra.mxu0 0.0
      %5741 = vmatprep.subr.mxu0 0.0
      %5742 = vmatpush1.msra.mxu0 0.0
      %5743 = vmatprep.subr.mxu0 0.0
      %5744 = vmatpush1.msra.mxu0 0.0
      %5745 = vmatprep.subr.mxu0 0.0
      %5746 = vmatpush1.msra.mxu0 0.0
      %5747 = vmatprep.subr.mxu0 0.0
      %5748 = vmatpush1.msra.mxu0 0.0
      %5749 = vmatprep.subr.mxu0 0.0
      %5750 = vmatpush1.msra.mxu0 0.0
      %5751 = vmatprep.subr.mxu0 0.0
      %5752 = vmatpush1.msra.mxu0 0.0
      %5753 = vmatprep.subr.mxu0 0.0
      %5754 = vmatpush1.msra.mxu0 0.0
      %5755 = vmatprep.subr.mxu0 0.0
      %5756 = vmatpush1.msra.mxu0 0.0
      %5757 = vmatprep.subr.mxu0 0.0
      %5758 = vmatpush1.msra.mxu0 0.0
      %5759 = vmatprep.subr.mxu0 0.0
      %5760 = vmatpush1.msra.mxu0 0.0
      %5761 = vmatprep.subr.mxu0 0.0
      %5762 = vmatpush1.msra.mxu0 0.0
      %5763 = vmatprep.subr.mxu0 0.0
      %5764 = vmatpush1.msra.mxu0 0.0
      %5765 = vmatprep.subr.mxu0 0.0
      %5766 = vmatpush1.msra.mxu0 0.0
      %5767 = vmatprep.subr.mxu0 0.0
      %5768 = vmatpush1.msra.mxu0 0.0
      %5769 = vmatprep.subr.mxu0 0.0
      %5770 = vmatpush1.msra.mxu0 0.0
      %5771 = vmatprep.subr.mxu0 0.0
      %5772 = vmatpush1.msra.mxu0 0.0
      %5773 = vmatprep.subr.mxu0 0.0
      %5774 = vmatpush1.msra.mxu0 0.0
      %5775 = vmatprep.subr.mxu0 0.0
      %5776 = vmatpush1.msra.mxu0 0.0
      %5777 = vmatprep.mubr.f32.mxu0 0.0
      %5778 = vmatmul.mubr.f32.gmra.mrb[0].mxu0 %v5642
      %v5779 = vpop.f32.mrb[0].mxu0
      %v5780 = vadd.f32 0.0, %v5779
      %v5781 = vpop.f32.mrb[0].mxu0
      %5782 = vmatprep.mubr.f32.mxu0 0.0
      %5783 = vmatmul.mubr.f32.gmra.mrb[0].mxu0 %v5645
      %v5784 = vpop.f32.mrb[0].mxu0
      %v5785 = vadd.f32 0.0, %v5784
      %v5786 = vpop.f32.mrb[0].mxu0
      %5787 = vmatprep.mubr.f32.mxu0 0.0
      %5788 = vmatmul.mubr.f32.gmra.mrb[0].mxu0 %v5648
      %v5789 = vpop.f32.mrb[0].mxu0
      %v5790 = vadd.f32 0.0, %v5789
      %v5791 = vpop.f32.mrb[0].mxu0
      %5792 = vmatprep.mubr.f32.mxu0 0.0
      %5793 = vmatmul.mubr.f32.gmra.mrb[0].mxu0 %v5651
      %v5794 = vpop.f32.mrb[0].mxu0
      %v5795 = vadd.f32 0.0, %v5794
      %v5796 = vpop.f32.mrb[0].mxu0
      %5797 = vmatprep.mubr.f32.mxu0 0.0
      %5798 = vmatmul.mubr.f32.gmra.mrb[0].mxu0 %v5654
      %v5799 = vpop.f32.mrb[0].mxu0
      %v5800 = vadd.f32 0.0, %v5799
      %v5801 = vpop.f32.mrb[0].mxu0
      %5802 = vmatprep.mubr.f32.mxu0 0.0
      %5803 = vmatmul.mubr.f32.gmra.mrb[0].mxu0 %v5657
      %v5804 = vpop.f32.mrb[0].mxu0
      %v5805 = vadd.f32 0.0, %v5804
      %v5806 = vpop.f32.mrb[0].mxu0
      %5807 = vmatprep.mubr.f32.mxu0 0.0
      %5808 = vmatmul.mubr.f32.gmra.mrb[0].mxu0 %v5660
      %v5809 = vpop.f32.mrb[0].mxu0
      %v5810 = vadd.f32 0.0, %v5809
      %v5811 = vpop.f32.mrb[0].mxu0
      %5812 = vmatprep.mubr.f32.mxu0 0.0
      %5813 = vmatmul.mubr.f32.gmra.mrb[0].mxu0 %v5663
      %v5814 = vpop.f32.mrb[0].mxu0
      %v5815 = vadd.f32 0.0, %v5814
      %v5816 = vpop.f32.mrb[0].mxu0
      %5817 = vmatprep.mubr.f32.mxu0 0.0
      %5818 = vmatmul.mubr.f32.gmra.mrb[0].mxu0 %v5666
      %v5819 = vpop.f32.mrb[0].mxu0
      %v5820 = vadd.f32 0.0, %v5819
      %v5821 = vpop.f32.mrb[0].mxu0
      %5822 = vmatprep.mubr.f32.mxu0 0.0
      %5823 = vmatmul.mubr.f32.gmra.mrb[0].mxu0 %v5669
      %v5824 = vpop.f32.mrb[0].mxu0
      %v5825 = vadd.f32 0.0, %v5824
      %v5826 = vpop.f32.mrb[0].mxu0
      %5827 = vmatprep.mubr.f32.mxu0 0.0
      %5828 = vmatmul.mubr.f32.gmra.mrb[0].mxu0 %v5672
      %v5829 = vpop.f32.mrb[0].mxu0
      %v5830 = vadd.f32 0.0, %v5829
      %v5831 = vpop.f32.mrb[0].mxu0
      %5832 = vmatprep.mubr.f32.mxu0 0.0
      %5833 = vmatmul.mubr.f32.gmra.mrb[0].mxu0 %v5675
      %v5834 = vpop.f32.mrb[0].mxu0
      %v5835 = vadd.f32 0.0, %v5834
      %v5836 = vpop.f32.mrb[0].mxu0
      %5837 = vmatprep.mubr.f32.mxu0 0.0
      %5838 = vmatmul.mubr.f32.gmra.mrb[0].mxu0 %v5678
      %v5839 = vpop.f32.mrb[0].mxu0
      %v5840 = vadd.f32 0.0, %v5839
      %v5841 = vpop.f32.mrb[0].mxu0
      %5842 = vmatprep.mubr.f32.mxu0 0.0
      %5843 = vmatmul.mubr.f32.gmra.mrb[0].mxu0 %v5681
      %v5844 = vpop.f32.mrb[0].mxu0
      %v5845 = vadd.f32 0.0, %v5844
      %v5846 = vpop.f32.mrb[0].mxu0
      %5847 = vmatprep.mubr.f32.mxu0 0.0
      %5848 = vmatmul.mubr.f32.gmra.mrb[0].mxu0 %v5684
      %v5849 = vpop.f32.mrb[0].mxu0
      %v5850 = vadd.f32 0.0, %v5849
      %v5851 = vpop.f32.mrb[0].mxu0
      %5852 = vmatprep.mubr.f32.mxu0 0.0
      %5853 = vmatmul.mubr.f32.gmra.mrb[0].mxu0 %v5687
      %v5854 = vpop.f32.mrb[0].mxu0
      %v5855 = vadd.f32 0.0, %v5854
      %v5856 = vpop.f32.mrb[0].mxu0
      %5857 = vmatprep.mubr.f32.mxu0 0.0
      %5858 = vmatmul.mubr.f32.gmra.mrb[0].mxu0 %v5690
      %v5859 = vpop.f32.mrb[0].mxu0
      %v5860 = vadd.f32 0.0, %v5859
      %v5861 = vpop.f32.mrb[0].mxu0
      %5862 = vmatprep.mubr.f32.mxu0 0.0
      %5863 = vmatmul.mubr.f32.gmra.mrb[0].mxu0 %v5693
      %v5864 = vpop.f32.mrb[0].mxu0
      %v5865 = vadd.f32 0.0, %v5864
      %v5866 = vpop.f32.mrb[0].mxu0
      %5867 = vmatprep.mubr.f32.mxu0 0.0
      %5868 = vmatmul.mubr.f32.gmra.mrb[0].mxu0 %v5696
      %v5869 = vpop.f32.mrb[0].mxu0
      %v5870 = vadd.f32 0.0, %v5869
      %v5871 = vpop.f32.mrb[0].mxu0
      %5872 = vmatprep.mubr.f32.mxu0 0.0
      %5873 = vmatmul.mubr.f32.gmra.mrb[0].mxu0 %v5699
      %v5874 = vpop.f32.mrb[0].mxu0
      %v5875 = vadd.f32 0.0, %v5874
      %v5876 = vpop.f32.mrb[0].mxu0
      %5877 = vmatprep.mubr.f32.mxu0 0.0
      %5878 = vmatmul.mubr.f32.gmra.mrb[0].mxu0 %v5702
      %v5879 = vpop.f32.mrb[0].mxu0
      %v5880 = vadd.f32 0.0, %v5879
      %v5881 = vpop.f32.mrb[0].mxu0
      %5882 = vmatprep.mubr.f32.mxu0 0.0
      %5883 = vmatmul.mubr.f32.gmra.mrb[0].mxu0 %v5705
      %v5884 = vpop.f32.mrb[0].mxu0
      %v5885 = vadd.f32 0.0, %v5884
      %v5886 = vpop.f32.mrb[0].mxu0
      %5887 = vmatprep.mubr.f32.mxu0 0.0
      %5888 = vmatmul.mubr.f32.gmra.mrb[0].mxu0 %v5708
      %v5889 = vpop.f32.mrb[0].mxu0
      %v5890 = vadd.f32 0.0, %v5889
      %v5891 = vpop.f32.mrb[0].mxu0
      %5892 = vmatprep.mubr.f32.mxu0 0.0
      %5893 = vmatmul.mubr.f32.gmra.mrb[0].mxu0 %v5711
      %v5894 = vpop.f32.mrb[0].mxu0
      %v5895 = vadd.f32 0.0, %v5894
      %v5896 = vpop.f32.mrb[0].mxu0
      %5897 = vdwg.mxu0
      %v5898 = vadd.f32 %v5592, %v5780
      %v5899 = vadd.f32 %v5593, %v5785
      %v5900 = vadd.f32 %v5594, %v5790
      %v5901 = vadd.f32 %v5595, %v5795
      %v5902 = vadd.f32 %v5596, %v5800
      %v5903 = vadd.f32 %v5597, %v5805
      %v5904 = vadd.f32 %v5598, %v5810
      %v5905 = vadd.f32 %v5599, %v5815
      %v5906 = vadd.f32 %v5600, %v5820
      %v5907 = vadd.f32 %v5601, %v5825
      %v5908 = vadd.f32 %v5602, %v5830
      %v5909 = vadd.f32 %v5603, %v5835
      %v5910 = vadd.f32 %v5604, %v5840
      %v5911 = vadd.f32 %v5605, %v5845
      %v5912 = vadd.f32 %v5606, %v5850
      %v5913 = vadd.f32 %v5607, %v5855
      %v5914 = vadd.f32 %v5608, %v5860
      %v5915 = vadd.f32 %v5609, %v5865
      %v5916 = vadd.f32 %v5610, %v5870
      %v5917 = vadd.f32 %v5611, %v5875
      %v5918 = vadd.f32 %v5612, %v5880
      %v5919 = vadd.f32 %v5613, %v5885
      %v5920 = vadd.f32 %v5614, %v5890
      %v5921 = vadd.f32 %v5615, %v5895
      %v5922 = vld [vmem:[#allocation2 + $0x22] sm:$0xff]
      %v5923 = vld [vmem:[#allocation2 + $0x2a] sm:$0xff]
      %v5924 = vld [vmem:[#allocation2 + $0x32] sm:$0xff]
      %v5925 = vld [vmem:[#allocation2 + $0x3a] sm:$0xff]
      %v5926 = vld [vmem:[#allocation2 + $0x42] sm:$0xff]
      %v5927 = vld [vmem:[#allocation2 + $0x4a] sm:$0xff]
      %v5928 = vld [vmem:[#allocation2 + $0x52] sm:$0xff]
      %v5929 = vld [vmem:[#allocation2 + $0x5a] sm:$0xff]
      %v5930 = vld [vmem:[#allocation2 + $0x62] sm:$0xff]
      %v5931 = vld [vmem:[#allocation2 + $0x6a] sm:$0xff]
      %v5932 = vld [vmem:[#allocation2 + $0x72] sm:$0xff]
      %v5933 = vld [vmem:[#allocation2 + $0x7a] sm:$0xff]
      %v5934 = vld [vmem:[#allocation2 + $0x82] sm:$0xff]
      %v5935 = vld [vmem:[#allocation2 + $0x8a] sm:$0xff]
      %v5936 = vld [vmem:[#allocation2 + $0x92] sm:$0xff]
      %v5937 = vld [vmem:[#allocation2 + $0x9a] sm:$0xff]
      %v5938 = vld [vmem:[#allocation2 + $0xa2] sm:$0xff]
      %v5939 = vld [vmem:[#allocation2 + $0xaa] sm:$0xff]
      %v5940 = vld [vmem:[#allocation2 + $0xb2] sm:$0xff]
      %v5941 = vld [vmem:[#allocation2 + $0xba] sm:$0xff]
      %v5942 = vld [vmem:[#allocation2 + $0xc2] sm:$0xff]
      %v5943 = vld [vmem:[#allocation2 + $0xca] sm:$0xff]
      %v5944 = vld [vmem:[#allocation2 + $0xd2] sm:$0xff]
      %v5945 = vld [vmem:[#allocation2 + $0xda] sm:$0xff]
      %v5946 = vld [vmem:[%s3 + $0x40] sm:$0xff]
      %v5948 = vsel %vm3492, %v5922, 0
      %v5951 = vsel %vm3492, %v5923, 0
      %v5954 = vsel %vm3492, %v5924, 0
      %v5957 = vsel %vm3492, %v5925, 0
      %v5960 = vsel %vm3492, %v5926, 0
      %v5963 = vsel %vm3492, %v5927, 0
      %v5966 = vsel %vm3492, %v5928, 0
      %v5969 = vsel %vm3492, %v5929, 0
      %v5972 = vsel %vm3492, %v5930, 0
      %v5975 = vsel %vm3492, %v5931, 0
      %v5978 = vsel %vm3492, %v5932, 0
      %v5981 = vsel %vm3492, %v5933, 0
      %v5984 = vsel %vm3492, %v5934, 0
      %v5987 = vsel %vm3492, %v5935, 0
      %v5990 = vsel %vm3492, %v5936, 0
      %v5993 = vsel %vm3492, %v5937, 0
      %v5996 = vsel %vm3492, %v5938, 0
      %v5999 = vsel %vm3492, %v5939, 0
      %v6002 = vsel %vm3492, %v5940, 0
      %v6005 = vsel %vm3492, %v5941, 0
      %v6008 = vsel %vm3492, %v5942, 0
      %v6011 = vsel %vm3492, %v5943, 0
      %v6014 = vsel %vm3492, %v5944, 0
      %v6017 = vsel %vm3492, %v5945, 0
      %6019 = vmatprep.subr.mxu0 0.0
      %6020 = vmatpush1.msra.mxu0 %v5946
      %6021 = vmatprep.subr.mxu0 0.0
      %6022 = vmatpush1.msra.mxu0 0.0
      %6023 = vmatprep.subr.mxu0 0.0
      %6024 = vmatpush1.msra.mxu0 0.0
      %6025 = vmatprep.subr.mxu0 0.0
      %6026 = vmatpush1.msra.mxu0 0.0
      %6027 = vmatprep.subr.mxu0 0.0
      %6028 = vmatpush1.msra.mxu0 0.0
      %6029 = vmatprep.subr.mxu0 0.0
      %6030 = vmatpush1.msra.mxu0 0.0
      %6031 = vmatprep.subr.mxu0 0.0
      %6032 = vmatpush1.msra.mxu0 0.0
      %6033 = vmatprep.subr.mxu0 0.0
      %6034 = vmatpush1.msra.mxu0 0.0
      %6035 = vmatprep.subr.mxu0 0.0
      %6036 = vmatpush1.msra.mxu0 0.0
      %6037 = vmatprep.subr.mxu0 0.0
      %6038 = vmatpush1.msra.mxu0 0.0
      %6039 = vmatprep.subr.mxu0 0.0
      %6040 = vmatpush1.msra.mxu0 0.0
      %6041 = vmatprep.subr.mxu0 0.0
      %6042 = vmatpush1.msra.mxu0 0.0
      %6043 = vmatprep.subr.mxu0 0.0
      %6044 = vmatpush1.msra.mxu0 0.0
      %6045 = vmatprep.subr.mxu0 0.0
      %6046 = vmatpush1.msra.mxu0 0.0
      %6047 = vmatprep.subr.mxu0 0.0
      %6048 = vmatpush1.msra.mxu0 0.0
      %6049 = vmatprep.subr.mxu0 0.0
      %6050 = vmatpush1.msra.mxu0 0.0
      %6051 = vmatprep.subr.mxu0 0.0
      %6052 = vmatpush1.msra.mxu0 0.0
      %6053 = vmatprep.subr.mxu0 0.0
      %6054 = vmatpush1.msra.mxu0 0.0
      %6055 = vmatprep.subr.mxu0 0.0
      %6056 = vmatpush1.msra.mxu0 0.0
      %6057 = vmatprep.subr.mxu0 0.0
      %6058 = vmatpush1.msra.mxu0 0.0
      %6059 = vmatprep.subr.mxu0 0.0
      %6060 = vmatpush1.msra.mxu0 0.0
      %6061 = vmatprep.subr.mxu0 0.0
      %6062 = vmatpush1.msra.mxu0 0.0
      %6063 = vmatprep.subr.mxu0 0.0
      %6064 = vmatpush1.msra.mxu0 0.0
      %6065 = vmatprep.subr.mxu0 0.0
      %6066 = vmatpush1.msra.mxu0 0.0
      %6067 = vmatprep.subr.mxu0 0.0
      %6068 = vmatpush1.msra.mxu0 0.0
      %6069 = vmatprep.subr.mxu0 0.0
      %6070 = vmatpush1.msra.mxu0 0.0
      %6071 = vmatprep.subr.mxu0 0.0
      %6072 = vmatpush1.msra.mxu0 0.0
      %6073 = vmatprep.subr.mxu0 0.0
      %6074 = vmatpush1.msra.mxu0 0.0
      %6075 = vmatprep.subr.mxu0 0.0
      %6076 = vmatpush1.msra.mxu0 0.0
      %6077 = vmatprep.subr.mxu0 0.0
      %6078 = vmatpush1.msra.mxu0 0.0
      %6079 = vmatprep.subr.mxu0 0.0
      %6080 = vmatpush1.msra.mxu0 0.0
      %6081 = vmatprep.subr.mxu0 0.0
      %6082 = vmatpush1.msra.mxu0 0.0
      %6083 = vmatprep.mubr.f32.mxu0 0.0
      %6084 = vmatmul.mubr.f32.gmra.mrb[0].mxu0 %v5948
      %v6085 = vpop.f32.mrb[0].mxu0
      %v6086 = vadd.f32 0.0, %v6085
      %v6087 = vpop.f32.mrb[0].mxu0
      %6088 = vmatprep.mubr.f32.mxu0 0.0
      %6089 = vmatmul.mubr.f32.gmra.mrb[0].mxu0 %v5951
      %v6090 = vpop.f32.mrb[0].mxu0
      %v6091 = vadd.f32 0.0, %v6090
      %v6092 = vpop.f32.mrb[0].mxu0
      %6093 = vmatprep.mubr.f32.mxu0 0.0
      %6094 = vmatmul.mubr.f32.gmra.mrb[0].mxu0 %v5954
      %v6095 = vpop.f32.mrb[0].mxu0
      %v6096 = vadd.f32 0.0, %v6095
      %v6097 = vpop.f32.mrb[0].mxu0
      %6098 = vmatprep.mubr.f32.mxu0 0.0
      %6099 = vmatmul.mubr.f32.gmra.mrb[0].mxu0 %v5957
      %v6100 = vpop.f32.mrb[0].mxu0
      %v6101 = vadd.f32 0.0, %v6100
      %v6102 = vpop.f32.mrb[0].mxu0
      %6103 = vmatprep.mubr.f32.mxu0 0.0
      %6104 = vmatmul.mubr.f32.gmra.mrb[0].mxu0 %v5960
      %v6105 = vpop.f32.mrb[0].mxu0
      %v6106 = vadd.f32 0.0, %v6105
      %v6107 = vpop.f32.mrb[0].mxu0
      %6108 = vmatprep.mubr.f32.mxu0 0.0
      %6109 = vmatmul.mubr.f32.gmra.mrb[0].mxu0 %v5963
      %v6110 = vpop.f32.mrb[0].mxu0
      %v6111 = vadd.f32 0.0, %v6110
      %v6112 = vpop.f32.mrb[0].mxu0
      %6113 = vmatprep.mubr.f32.mxu0 0.0
      %6114 = vmatmul.mubr.f32.gmra.mrb[0].mxu0 %v5966
      %v6115 = vpop.f32.mrb[0].mxu0
      %v6116 = vadd.f32 0.0, %v6115
      %v6117 = vpop.f32.mrb[0].mxu0
      %6118 = vmatprep.mubr.f32.mxu0 0.0
      %6119 = vmatmul.mubr.f32.gmra.mrb[0].mxu0 %v5969
      %v6120 = vpop.f32.mrb[0].mxu0
      %v6121 = vadd.f32 0.0, %v6120
      %v6122 = vpop.f32.mrb[0].mxu0
      %6123 = vmatprep.mubr.f32.mxu0 0.0
      %6124 = vmatmul.mubr.f32.gmra.mrb[0].mxu0 %v5972
      %v6125 = vpop.f32.mrb[0].mxu0
      %v6126 = vadd.f32 0.0, %v6125
      %v6127 = vpop.f32.mrb[0].mxu0
      %6128 = vmatprep.mubr.f32.mxu0 0.0
      %6129 = vmatmul.mubr.f32.gmra.mrb[0].mxu0 %v5975
      %v6130 = vpop.f32.mrb[0].mxu0
      %v6131 = vadd.f32 0.0, %v6130
      %v6132 = vpop.f32.mrb[0].mxu0
      %6133 = vmatprep.mubr.f32.mxu0 0.0
      %6134 = vmatmul.mubr.f32.gmra.mrb[0].mxu0 %v5978
      %v6135 = vpop.f32.mrb[0].mxu0
      %v6136 = vadd.f32 0.0, %v6135
      %v6137 = vpop.f32.mrb[0].mxu0
      %6138 = vmatprep.mubr.f32.mxu0 0.0
      %6139 = vmatmul.mubr.f32.gmra.mrb[0].mxu0 %v5981
      %v6140 = vpop.f32.mrb[0].mxu0
      %v6141 = vadd.f32 0.0, %v6140
      %v6142 = vpop.f32.mrb[0].mxu0
      %6143 = vmatprep.mubr.f32.mxu0 0.0
      %6144 = vmatmul.mubr.f32.gmra.mrb[0].mxu0 %v5984
      %v6145 = vpop.f32.mrb[0].mxu0
      %v6146 = vadd.f32 0.0, %v6145
      %v6147 = vpop.f32.mrb[0].mxu0
      %6148 = vmatprep.mubr.f32.mxu0 0.0
      %6149 = vmatmul.mubr.f32.gmra.mrb[0].mxu0 %v5987
      %v6150 = vpop.f32.mrb[0].mxu0
      %v6151 = vadd.f32 0.0, %v6150
      %v6152 = vpop.f32.mrb[0].mxu0
      %6153 = vmatprep.mubr.f32.mxu0 0.0
      %6154 = vmatmul.mubr.f32.gmra.mrb[0].mxu0 %v5990
      %v6155 = vpop.f32.mrb[0].mxu0
      %v6156 = vadd.f32 0.0, %v6155
      %v6157 = vpop.f32.mrb[0].mxu0
      %6158 = vmatprep.mubr.f32.mxu0 0.0
      %6159 = vmatmul.mubr.f32.gmra.mrb[0].mxu0 %v5993
      %v6160 = vpop.f32.mrb[0].mxu0
      %v6161 = vadd.f32 0.0, %v6160
      %v6162 = vpop.f32.mrb[0].mxu0
      %6163 = vmatprep.mubr.f32.mxu0 0.0
      %6164 = vmatmul.mubr.f32.gmra.mrb[0].mxu0 %v5996
      %v6165 = vpop.f32.mrb[0].mxu0
      %v6166 = vadd.f32 0.0, %v6165
      %v6167 = vpop.f32.mrb[0].mxu0
      %6168 = vmatprep.mubr.f32.mxu0 0.0
      %6169 = vmatmul.mubr.f32.gmra.mrb[0].mxu0 %v5999
      %v6170 = vpop.f32.mrb[0].mxu0
      %v6171 = vadd.f32 0.0, %v6170
      %v6172 = vpop.f32.mrb[0].mxu0
      %6173 = vmatprep.mubr.f32.mxu0 0.0
      %6174 = vmatmul.mubr.f32.gmra.mrb[0].mxu0 %v6002
      %v6175 = vpop.f32.mrb[0].mxu0
      %v6176 = vadd.f32 0.0, %v6175
      %v6177 = vpop.f32.mrb[0].mxu0
      %6178 = vmatprep.mubr.f32.mxu0 0.0
      %6179 = vmatmul.mubr.f32.gmra.mrb[0].mxu0 %v6005
      %v6180 = vpop.f32.mrb[0].mxu0
      %v6181 = vadd.f32 0.0, %v6180
      %v6182 = vpop.f32.mrb[0].mxu0
      %6183 = vmatprep.mubr.f32.mxu0 0.0
      %6184 = vmatmul.mubr.f32.gmra.mrb[0].mxu0 %v6008
      %v6185 = vpop.f32.mrb[0].mxu0
      %v6186 = vadd.f32 0.0, %v6185
      %v6187 = vpop.f32.mrb[0].mxu0
      %6188 = vmatprep.mubr.f32.mxu0 0.0
      %6189 = vmatmul.mubr.f32.gmra.mrb[0].mxu0 %v6011
      %v6190 = vpop.f32.mrb[0].mxu0
      %v6191 = vadd.f32 0.0, %v6190
      %v6192 = vpop.f32.mrb[0].mxu0
      %6193 = vmatprep.mubr.f32.mxu0 0.0
      %6194 = vmatmul.mubr.f32.gmra.mrb[0].mxu0 %v6014
      %v6195 = vpop.f32.mrb[0].mxu0
      %v6196 = vadd.f32 0.0, %v6195
      %v6197 = vpop.f32.mrb[0].mxu0
      %6198 = vmatprep.mubr.f32.mxu0 0.0
      %6199 = vmatmul.mubr.f32.gmra.mrb[0].mxu0 %v6017
      %v6200 = vpop.f32.mrb[0].mxu0
      %v6201 = vadd.f32 0.0, %v6200
      %v6202 = vpop.f32.mrb[0].mxu0
      %6203 = vdwg.mxu0
      %v6204 = vadd.f32 %v5898, %v6086
      %v6205 = vadd.f32 %v5899, %v6091
      %v6206 = vadd.f32 %v5900, %v6096
      %v6207 = vadd.f32 %v5901, %v6101
      %v6208 = vadd.f32 %v5902, %v6106
      %v6209 = vadd.f32 %v5903, %v6111
      %v6210 = vadd.f32 %v5904, %v6116
      %v6211 = vadd.f32 %v5905, %v6121
      %v6212 = vadd.f32 %v5906, %v6126
      %v6213 = vadd.f32 %v5907, %v6131
      %v6214 = vadd.f32 %v5908, %v6136
      %v6215 = vadd.f32 %v5909, %v6141
      %v6216 = vadd.f32 %v5910, %v6146
      %v6217 = vadd.f32 %v5911, %v6151
      %v6218 = vadd.f32 %v5912, %v6156
      %v6219 = vadd.f32 %v5913, %v6161
      %v6220 = vadd.f32 %v5914, %v6166
      %v6221 = vadd.f32 %v5915, %v6171
      %v6222 = vadd.f32 %v5916, %v6176
      %v6223 = vadd.f32 %v5917, %v6181
      %v6224 = vadd.f32 %v5918, %v6186
      %v6225 = vadd.f32 %v5919, %v6191
      %v6226 = vadd.f32 %v5920, %v6196
      %v6227 = vadd.f32 %v5921, %v6201
      %v6228 = vld [vmem:[%s4] sm:$0x1]
      %v6230 = vlaneseq
      %v6231 = vshrl.u32 %v6230, 7
      %v6232 = vsub.s32 0, %v6231
      %v6233 = vrot.slane %v6228, %v6232
      %v6235 = vadd.f32 %v6204, %v6233
      %v6236 = vadd.f32 %v6205, %v6233
      %v6237 = vadd.f32 %v6206, %v6233
      %v6238 = vadd.f32 %v6207, %v6233
      %v6239 = vadd.f32 %v6208, %v6233
      %v6240 = vadd.f32 %v6209, %v6233
      %v6241 = vadd.f32 %v6210, %v6233
      %v6242 = vadd.f32 %v6211, %v6233
      %v6243 = vadd.f32 %v6212, %v6233
      %v6244 = vadd.f32 %v6213, %v6233
      %v6245 = vadd.f32 %v6214, %v6233
      %v6246 = vadd.f32 %v6215, %v6233
      %v6247 = vadd.f32 %v6216, %v6233
      %v6248 = vadd.f32 %v6217, %v6233
      %v6249 = vadd.f32 %v6218, %v6233
      %v6250 = vadd.f32 %v6219, %v6233
      %v6251 = vadd.f32 %v6220, %v6233
      %v6252 = vadd.f32 %v6221, %v6233
      %v6253 = vadd.f32 %v6222, %v6233
      %v6254 = vadd.f32 %v6223, %v6233
      %v6255 = vadd.f32 %v6224, %v6233
      %v6256 = vadd.f32 %v6225, %v6233
      %v6257 = vadd.f32 %v6226, %v6233
      %v6258 = vadd.f32 %v6227, %v6233
      %v6259 = vmax.f32 %v6235, 0.0
      %v6260 = vmax.f32 %v6236, 0.0
      %v6261 = vmax.f32 %v6237, 0.0
      %v6262 = vmax.f32 %v6238, 0.0
      %v6263 = vmax.f32 %v6239, 0.0
      %v6264 = vmax.f32 %v6240, 0.0
      %v6265 = vmax.f32 %v6241, 0.0
      %v6266 = vmax.f32 %v6242, 0.0
      %v6267 = vmax.f32 %v6243, 0.0
      %v6268 = vmax.f32 %v6244, 0.0
      %v6269 = vmax.f32 %v6245, 0.0
      %v6270 = vmax.f32 %v6246, 0.0
      %v6271 = vmax.f32 %v6247, 0.0
      %v6272 = vmax.f32 %v6248, 0.0
      %v6273 = vmax.f32 %v6249, 0.0
      %v6274 = vmax.f32 %v6250, 0.0
      %v6275 = vmax.f32 %v6251, 0.0
      %v6276 = vmax.f32 %v6252, 0.0
      %v6277 = vmax.f32 %v6253, 0.0
      %v6278 = vmax.f32 %v6254, 0.0
      %v6279 = vmax.f32 %v6255, 0.0
      %v6280 = vmax.f32 %v6256, 0.0
      %v6281 = vmax.f32 %v6257, 0.0
      %v6282 = vmax.f32 %v6258, 0.0
      %v6283 = vld [vmem:[%s5] sm:$0xff]
      %v6284 = vld [vmem:[%s5 + $0x8] sm:$0xff]
      %v6285 = vld [vmem:[%s5 + $0x10] sm:$0xff]
      %v6286 = vld [vmem:[%s5 + $0x18] sm:$0xff]
      %v6287 = vld [vmem:[%s5 + $0x20] sm:$0xff]
      %v6288 = vld [vmem:[%s5 + $0x28] sm:$0xff]
      %v6289 = vld [vmem:[%s5 + $0x30] sm:$0xff]
      %v6290 = vld [vmem:[%s5 + $0x38] sm:$0xff]
      %v6291 = vld [vmem:[%s5 + $0x40] sm:$0xf]
      %v6292 = vld [vmem:[%s5 + $0x48] sm:$0xf]
      %vm6293 = vcmask 523264
      %v6295 = vsel %vm6293, %v6284, 0
      %v6298 = vsel %vm6293, %v6286, 0
      %v6301 = vsel %vm6293, %v6288, 0
      %v6304 = vsel %vm6293, %v6290, 0
      %v6307 = vsel %vm6293, %v6292, 0
      %6309 = vmatprep.subr.mxu0 0.0
      %6310 = vmatpush1.msra.mxu0 %v6259
      %6311 = vmatprep.subr.mxu0 0.0
      %6312 = vmatpush1.msra.mxu0 %v6260
      %6313 = vmatprep.subr.mxu0 0.0
      %6314 = vmatpush1.msra.mxu0 %v6261
      %6315 = vmatprep.subr.mxu0 0.0
      %6316 = vmatpush1.msra.mxu0 %v6262
      %6317 = vmatprep.subr.mxu0 0.0
      %6318 = vmatpush1.msra.mxu0 %v6263
      %6319 = vmatprep.subr.mxu0 0.0
      %6320 = vmatpush1.msra.mxu0 %v6264
      %6321 = vmatprep.subr.mxu0 0.0
      %6322 = vmatpush1.msra.mxu0 %v6265
      %6323 = vmatprep.subr.mxu0 0.0
      %6324 = vmatpush1.msra.mxu0 %v6266
      %6325 = vmatprep.subr.mxu0 0.0
      %6326 = vmatpush1.msra.mxu0 %v6267
      %6327 = vmatprep.subr.mxu0 0.0
      %6328 = vmatpush1.msra.mxu0 %v6268
      %6329 = vmatprep.subr.mxu0 0.0
      %6330 = vmatpush1.msra.mxu0 %v6269
      %6331 = vmatprep.subr.mxu0 0.0
      %6332 = vmatpush1.msra.mxu0 %v6270
      %6333 = vmatprep.subr.mxu0 0.0
      %6334 = vmatpush1.msra.mxu0 %v6271
      %6335 = vmatprep.subr.mxu0 0.0
      %6336 = vmatpush1.msra.mxu0 %v6272
      %6337 = vmatprep.subr.mxu0 0.0
      %6338 = vmatpush1.msra.mxu0 %v6273
      %6339 = vmatprep.subr.mxu0 0.0
      %6340 = vmatpush1.msra.mxu0 %v6274
      %6341 = vmatprep.subr.mxu0 0.0
      %6342 = vmatpush1.msra.mxu0 %v6275
      %6343 = vmatprep.subr.mxu0 0.0
      %6344 = vmatpush1.msra.mxu0 %v6276
      %6345 = vmatprep.subr.mxu0 0.0
      %6346 = vmatpush1.msra.mxu0 %v6277
      %6347 = vmatprep.subr.mxu0 0.0
      %6348 = vmatpush1.msra.mxu0 %v6278
      %6349 = vmatprep.subr.mxu0 0.0
      %6350 = vmatpush1.msra.mxu0 %v6279
      %6351 = vmatprep.subr.mxu0 0.0
      %6352 = vmatpush1.msra.mxu0 %v6280
      %6353 = vmatprep.subr.mxu0 0.0
      %6354 = vmatpush1.msra.mxu0 %v6281
      %6355 = vmatprep.subr.mxu0 0.0
      %6356 = vmatpush1.msra.mxu0 %v6282
      %6357 = vmatprep.subr.mxu0 0.0
      %6358 = vmatpush1.msra.mxu0 0.0
      %6359 = vmatprep.subr.mxu0 0.0
      %6360 = vmatpush1.msra.mxu0 0.0
      %6361 = vmatprep.subr.mxu0 0.0
      %6362 = vmatpush1.msra.mxu0 0.0
      %6363 = vmatprep.subr.mxu0 0.0
      %6364 = vmatpush1.msra.mxu0 0.0
      %6365 = vmatprep.subr.mxu0 0.0
      %6366 = vmatpush1.msra.mxu0 0.0
      %6367 = vmatprep.subr.mxu0 0.0
      %6368 = vmatpush1.msra.mxu0 0.0
      %6369 = vmatprep.subr.mxu0 0.0
      %6370 = vmatpush1.msra.mxu0 0.0
      %6371 = vmatprep.subr.mxu0 0.0
      %6372 = vmatpush1.msra.mxu0 0.0
      %6373 = vmatprep.mubr.f32.mxu0 %v6295
      %6374 = vmatmul.mubr.f32.gmra.mrb[0].mxu0 %v6283
      %v6375 = vpop.f32.mrb[0].mxu0
      %v6376 = vadd.f32 0.0, %v6375
      %v6377 = vpop.f32.mrb[0].mxu0
      %6378 = vmatprep.mubr.f32.mxu0 %v6298
      %6379 = vmatmul.mubr.f32.gmra.mrb[0].mxu0 %v6285
      %v6380 = vpop.f32.mrb[0].mxu0
      %v6381 = vadd.f32 0.0, %v6380
      %v6382 = vpop.f32.mrb[0].mxu0
      %6383 = vmatprep.mubr.f32.mxu0 %v6301
      %6384 = vmatmul.mubr.f32.gmra.mrb[0].mxu0 %v6287
      %v6385 = vpop.f32.mrb[0].mxu0
      %v6386 = vadd.f32 0.0, %v6385
      %v6387 = vpop.f32.mrb[0].mxu0
      %6388 = vmatprep.mubr.f32.mxu0 %v6304
      %6389 = vmatmul.mubr.f32.gmra.mrb[0].mxu0 %v6289
      %v6390 = vpop.f32.mrb[0].mxu0
      %v6391 = vadd.f32 0.0, %v6390
      %v6392 = vpop.f32.mrb[0].mxu0
      %6393 = vmatprep.mubr.f32.mxu0 %v6307
      %6394 = vmatmul.mubr.f32.gmra.mrb[0].mxu0 %v6291
      %v6395 = vpop.f32.mrb[0].mxu0
      %v6396 = vadd.f32 0.0, %v6395
      %v6397 = vpop.f32.mrb[0].mxu0
      %6398 = vdwg.mxu0
      %s6399 = scalar_lea.vmem %s5, 80
      %v6400 = vld [vmem:[%s6399] sm:$0xff]
      %v6401 = vld [vmem:[%s6399 + $0x8] sm:$0xff]
      %v6402 = vld [vmem:[%s6399 + $0x10] sm:$0xff]
      %v6403 = vld [vmem:[%s6399 + $0x18] sm:$0xff]
      %v6404 = vld [vmem:[%s6399 + $0x20] sm:$0xff]
      %v6405 = vld [vmem:[%s6399 + $0x28] sm:$0xff]
      %v6406 = vld [vmem:[%s6399 + $0x30] sm:$0xff]
      %v6407 = vld [vmem:[%s6399 + $0x38] sm:$0xff]
      %v6408 = vld [vmem:[%s6399 + $0x40] sm:$0xf]
      %v6409 = vld [vmem:[%s6399 + $0x48] sm:$0xf]
      %v6411 = vsel %vm6293, %v6401, 0
      %v6414 = vsel %vm6293, %v6403, 0
      %v6417 = vsel %vm6293, %v6405, 0
      %v6420 = vsel %vm6293, %v6407, 0
      %v6423 = vsel %vm6293, %v6409, 0
      %6425 = vmatprep.subr.mxu0 0.0
      %6426 = vmatpush1.msra.mxu0 %v6259
      %6427 = vmatprep.subr.mxu0 0.0
      %6428 = vmatpush1.msra.mxu0 %v6260
      %6429 = vmatprep.subr.mxu0 0.0
      %6430 = vmatpush1.msra.mxu0 %v6261
      %6431 = vmatprep.subr.mxu0 0.0
      %6432 = vmatpush1.msra.mxu0 %v6262
      %6433 = vmatprep.subr.mxu0 0.0
      %6434 = vmatpush1.msra.mxu0 %v6263
      %6435 = vmatprep.subr.mxu0 0.0
      %6436 = vmatpush1.msra.mxu0 %v6264
      %6437 = vmatprep.subr.mxu0 0.0
      %6438 = vmatpush1.msra.mxu0 %v6265
      %6439 = vmatprep.subr.mxu0 0.0
      %6440 = vmatpush1.msra.mxu0 %v6266
      %6441 = vmatprep.subr.mxu0 0.0
      %6442 = vmatpush1.msra.mxu0 %v6267
      %6443 = vmatprep.subr.mxu0 0.0
      %6444 = vmatpush1.msra.mxu0 %v6268
      %6445 = vmatprep.subr.mxu0 0.0
      %6446 = vmatpush1.msra.mxu0 %v6269
      %6447 = vmatprep.subr.mxu0 0.0
      %6448 = vmatpush1.msra.mxu0 %v6270
      %6449 = vmatprep.subr.mxu0 0.0
      %6450 = vmatpush1.msra.mxu0 %v6271
      %6451 = vmatprep.subr.mxu0 0.0
      %6452 = vmatpush1.msra.mxu0 %v6272
      %6453 = vmatprep.subr.mxu0 0.0
      %6454 = vmatpush1.msra.mxu0 %v6273
      %6455 = vmatprep.subr.mxu0 0.0
      %6456 = vmatpush1.msra.mxu0 %v6274
      %6457 = vmatprep.subr.mxu0 0.0
      %6458 = vmatpush1.msra.mxu0 %v6275
      %6459 = vmatprep.subr.mxu0 0.0
      %6460 = vmatpush1.msra.mxu0 %v6276
      %6461 = vmatprep.subr.mxu0 0.0
      %6462 = vmatpush1.msra.mxu0 %v6277
      %6463 = vmatprep.subr.mxu0 0.0
      %6464 = vmatpush1.msra.mxu0 %v6278
      %6465 = vmatprep.subr.mxu0 0.0
      %6466 = vmatpush1.msra.mxu0 %v6279
      %6467 = vmatprep.subr.mxu0 0.0
      %6468 = vmatpush1.msra.mxu0 %v6280
      %6469 = vmatprep.subr.mxu0 0.0
      %6470 = vmatpush1.msra.mxu0 %v6281
      %6471 = vmatprep.subr.mxu0 0.0
      %6472 = vmatpush1.msra.mxu0 %v6282
      %6473 = vmatprep.subr.mxu0 0.0
      %6474 = vmatpush1.msra.mxu0 0.0
      %6475 = vmatprep.subr.mxu0 0.0
      %6476 = vmatpush1.msra.mxu0 0.0
      %6477 = vmatprep.subr.mxu0 0.0
      %6478 = vmatpush1.msra.mxu0 0.0
      %6479 = vmatprep.subr.mxu0 0.0
      %6480 = vmatpush1.msra.mxu0 0.0
      %6481 = vmatprep.subr.mxu0 0.0
      %6482 = vmatpush1.msra.mxu0 0.0
      %6483 = vmatprep.subr.mxu0 0.0
      %6484 = vmatpush1.msra.mxu0 0.0
      %6485 = vmatprep.subr.mxu0 0.0
      %6486 = vmatpush1.msra.mxu0 0.0
      %6487 = vmatprep.subr.mxu0 0.0
      %6488 = vmatpush1.msra.mxu0 0.0
      %6489 = vmatprep.mubr.f32.mxu0 %v6411
      %6490 = vmatmul.mubr.f32.gmra.mrb[0].mxu0 %v6400
      %v6491 = vpop.f32.mrb[0].mxu0
      %v6492 = vadd.f32 0.0, %v6491
      %v6493 = vpop.f32.mrb[0].mxu0
      %6494 = vmatprep.mubr.f32.mxu0 %v6414
      %6495 = vmatmul.mubr.f32.gmra.mrb[0].mxu0 %v6402
      %v6496 = vpop.f32.mrb[0].mxu0
      %v6497 = vadd.f32 0.0, %v6496
      %v6498 = vpop.f32.mrb[0].mxu0
      %6499 = vmatprep.mubr.f32.mxu0 %v6417
      %6500 = vmatmul.mubr.f32.gmra.mrb[0].mxu0 %v6404
      %v6501 = vpop.f32.mrb[0].mxu0
      %v6502 = vadd.f32 0.0, %v6501
      %v6503 = vpop.f32.mrb[0].mxu0
      %6504 = vmatprep.mubr.f32.mxu0 %v6420
      %6505 = vmatmul.mubr.f32.gmra.mrb[0].mxu0 %v6406
      %v6506 = vpop.f32.mrb[0].mxu0
      %v6507 = vadd.f32 0.0, %v6506
      %v6508 = vpop.f32.mrb[0].mxu0
      %6509 = vmatprep.mubr.f32.mxu0 %v6423
      %6510 = vmatmul.mubr.f32.gmra.mrb[0].mxu0 %v6408
      %v6511 = vpop.f32.mrb[0].mxu0
      %v6512 = vadd.f32 0.0, %v6511
      %v6513 = vpop.f32.mrb[0].mxu0
      %6514 = vdwg.mxu0
      %v6515 = vmax.f32 %v6376, %v6492
      %v6516 = vmax.f32 %v6381, %v6497
      %v6517 = vmax.f32 %v6386, %v6502
      %v6518 = vmax.f32 %v6391, %v6507
      %v6519 = vmax.f32 %v6396, %v6512
      %s6520 = scalar_lea.vmem %s5, 160
      %v6521 = vld [vmem:[%s6520] sm:$0xff]
      %v6522 = vld [vmem:[%s6520 + $0x8] sm:$0xff]
      %v6523 = vld [vmem:[%s6520 + $0x10] sm:$0xff]
      %v6524 = vld [vmem:[%s6520 + $0x18] sm:$0xff]
      %v6525 = vld [vmem:[%s6520 + $0x20] sm:$0xff]
      %v6526 = vld [vmem:[%s6520 + $0x28] sm:$0xff]
      %v6527 = vld [vmem:[%s6520 + $0x30] sm:$0xff]
      %v6528 = vld [vmem:[%s6520 + $0x38] sm:$0xff]
      %v6529 = vld [vmem:[%s6520 + $0x40] sm:$0xf]
      %v6530 = vld [vmem:[%s6520 + $0x48] sm:$0xf]
      %v6532 = vsel %vm6293, %v6522, 0
      %v6535 = vsel %vm6293, %v6524, 0
      %v6538 = vsel %vm6293, %v6526, 0
      %v6541 = vsel %vm6293, %v6528, 0
      %v6544 = vsel %vm6293, %v6530, 0
      %6546 = vmatprep.subr.mxu0 0.0
      %6547 = vmatpush1.msra.mxu0 %v6259
      %6548 = vmatprep.subr.mxu0 0.0
      %6549 = vmatpush1.msra.mxu0 %v6260
      %6550 = vmatprep.subr.mxu0 0.0
      %6551 = vmatpush1.msra.mxu0 %v6261
      %6552 = vmatprep.subr.mxu0 0.0
      %6553 = vmatpush1.msra.mxu0 %v6262
      %6554 = vmatprep.subr.mxu0 0.0
      %6555 = vmatpush1.msra.mxu0 %v6263
      %6556 = vmatprep.subr.mxu0 0.0
      %6557 = vmatpush1.msra.mxu0 %v6264
      %6558 = vmatprep.subr.mxu0 0.0
      %6559 = vmatpush1.msra.mxu0 %v6265
      %6560 = vmatprep.subr.mxu0 0.0
      %6561 = vmatpush1.msra.mxu0 %v6266
      %6562 = vmatprep.subr.mxu0 0.0
      %6563 = vmatpush1.msra.mxu0 %v6267
      %6564 = vmatprep.subr.mxu0 0.0
      %6565 = vmatpush1.msra.mxu0 %v6268
      %6566 = vmatprep.subr.mxu0 0.0
      %6567 = vmatpush1.msra.mxu0 %v6269
      %6568 = vmatprep.subr.mxu0 0.0
      %6569 = vmatpush1.msra.mxu0 %v6270
      %6570 = vmatprep.subr.mxu0 0.0
      %6571 = vmatpush1.msra.mxu0 %v6271
      %6572 = vmatprep.subr.mxu0 0.0
      %6573 = vmatpush1.msra.mxu0 %v6272
      %6574 = vmatprep.subr.mxu0 0.0
      %6575 = vmatpush1.msra.mxu0 %v6273
      %6576 = vmatprep.subr.mxu0 0.0
      %6577 = vmatpush1.msra.mxu0 %v6274
      %6578 = vmatprep.subr.mxu0 0.0
      %6579 = vmatpush1.msra.mxu0 %v6275
      %6580 = vmatprep.subr.mxu0 0.0
      %6581 = vmatpush1.msra.mxu0 %v6276
      %6582 = vmatprep.subr.mxu0 0.0
      %6583 = vmatpush1.msra.mxu0 %v6277
      %6584 = vmatprep.subr.mxu0 0.0
      %6585 = vmatpush1.msra.mxu0 %v6278
      %6586 = vmatprep.subr.mxu0 0.0
      %6587 = vmatpush1.msra.mxu0 %v6279
      %6588 = vmatprep.subr.mxu0 0.0
      %6589 = vmatpush1.msra.mxu0 %v6280
      %6590 = vmatprep.subr.mxu0 0.0
      %6591 = vmatpush1.msra.mxu0 %v6281
      %6592 = vmatprep.subr.mxu0 0.0
      %6593 = vmatpush1.msra.mxu0 %v6282
      %6594 = vmatprep.subr.mxu0 0.0
      %6595 = vmatpush1.msra.mxu0 0.0
      %6596 = vmatprep.subr.mxu0 0.0
      %6597 = vmatpush1.msra.mxu0 0.0
      %6598 = vmatprep.subr.mxu0 0.0
      %6599 = vmatpush1.msra.mxu0 0.0
      %6600 = vmatprep.subr.mxu0 0.0
      %6601 = vmatpush1.msra.mxu0 0.0
      %6602 = vmatprep.subr.mxu0 0.0
      %6603 = vmatpush1.msra.mxu0 0.0
      %6604 = vmatprep.subr.mxu0 0.0
      %6605 = vmatpush1.msra.mxu0 0.0
      %6606 = vmatprep.subr.mxu0 0.0
      %6607 = vmatpush1.msra.mxu0 0.0
      %6608 = vmatprep.subr.mxu0 0.0
      %6609 = vmatpush1.msra.mxu0 0.0
      %6610 = vmatprep.mubr.f32.mxu0 %v6532
      %6611 = vmatmul.mubr.f32.gmra.mrb[0].mxu0 %v6521
      %v6612 = vpop.f32.mrb[0].mxu0
      %v6613 = vadd.f32 0.0, %v6612
      %v6614 = vpop.f32.mrb[0].mxu0
      %6615 = vmatprep.mubr.f32.mxu0 %v6535
      %6616 = vmatmul.mubr.f32.gmra.mrb[0].mxu0 %v6523
      %v6617 = vpop.f32.mrb[0].mxu0
      %v6618 = vadd.f32 0.0, %v6617
      %v6619 = vpop.f32.mrb[0].mxu0
      %6620 = vmatprep.mubr.f32.mxu0 %v6538
      %6621 = vmatmul.mubr.f32.gmra.mrb[0].mxu0 %v6525
      %v6622 = vpop.f32.mrb[0].mxu0
      %v6623 = vadd.f32 0.0, %v6622
      %v6624 = vpop.f32.mrb[0].mxu0
      %6625 = vmatprep.mubr.f32.mxu0 %v6541
      %6626 = vmatmul.mubr.f32.gmra.mrb[0].mxu0 %v6527
      %v6627 = vpop.f32.mrb[0].mxu0
      %v6628 = vadd.f32 0.0, %v6627
      %v6629 = vpop.f32.mrb[0].mxu0
      %6630 = vmatprep.mubr.f32.mxu0 %v6544
      %6631 = vmatmul.mubr.f32.gmra.mrb[0].mxu0 %v6529
      %v6632 = vpop.f32.mrb[0].mxu0
      %v6633 = vadd.f32 0.0, %v6632
      %v6634 = vpop.f32.mrb[0].mxu0
      %6635 = vdwg.mxu0
      %v6636 = vmax.f32 %v6515, %v6613
      %v6637 = vmax.f32 %v6516, %v6618
      %v6638 = vmax.f32 %v6517, %v6623
      %v6639 = vmax.f32 %v6518, %v6628
      %v6640 = vmax.f32 %v6519, %v6633
      %s6641 = scalar_lea.vmem %s5, 240
      %v6642 = vld [vmem:[%s6641] sm:$0xff]
      %v6643 = vld [vmem:[%s6641 + $0x8] sm:$0xff]
      %v6644 = vld [vmem:[%s6641 + $0x10] sm:$0xff]
      %v6645 = vld [vmem:[%s6641 + $0x18] sm:$0xff]
      %v6646 = vld [vmem:[%s6641 + $0x20] sm:$0xff]
      %v6647 = vld [vmem:[%s6641 + $0x28] sm:$0xff]
      %v6648 = vld [vmem:[%s6641 + $0x30] sm:$0xff]
      %v6649 = vld [vmem:[%s6641 + $0x38] sm:$0xff]
      %v6650 = vld [vmem:[%s6641 + $0x40] sm:$0xf]
      %v6651 = vld [vmem:[%s6641 + $0x48] sm:$0xf]
      %v6653 = vsel %vm6293, %v6643, 0
      %v6656 = vsel %vm6293, %v6645, 0
      %v6659 = vsel %vm6293, %v6647, 0
      %v6662 = vsel %vm6293, %v6649, 0
      %v6665 = vsel %vm6293, %v6651, 0
      %6667 = vmatprep.subr.mxu0 0.0
      %6668 = vmatpush1.msra.mxu0 %v6259
      %6669 = vmatprep.subr.mxu0 0.0
      %6670 = vmatpush1.msra.mxu0 %v6260
      %6671 = vmatprep.subr.mxu0 0.0
      %6672 = vmatpush1.msra.mxu0 %v6261
      %6673 = vmatprep.subr.mxu0 0.0
      %6674 = vmatpush1.msra.mxu0 %v6262
      %6675 = vmatprep.subr.mxu0 0.0
      %6676 = vmatpush1.msra.mxu0 %v6263
      %6677 = vmatprep.subr.mxu0 0.0
      %6678 = vmatpush1.msra.mxu0 %v6264
      %6679 = vmatprep.subr.mxu0 0.0
      %6680 = vmatpush1.msra.mxu0 %v6265
      %6681 = vmatprep.subr.mxu0 0.0
      %6682 = vmatpush1.msra.mxu0 %v6266
      %6683 = vmatprep.subr.mxu0 0.0
      %6684 = vmatpush1.msra.mxu0 %v6267
      %6685 = vmatprep.subr.mxu0 0.0
      %6686 = vmatpush1.msra.mxu0 %v6268
      %6687 = vmatprep.subr.mxu0 0.0
      %6688 = vmatpush1.msra.mxu0 %v6269
      %6689 = vmatprep.subr.mxu0 0.0
      %6690 = vmatpush1.msra.mxu0 %v6270
      %6691 = vmatprep.subr.mxu0 0.0
      %6692 = vmatpush1.msra.mxu0 %v6271
      %6693 = vmatprep.subr.mxu0 0.0
      %6694 = vmatpush1.msra.mxu0 %v6272
      %6695 = vmatprep.subr.mxu0 0.0
      %6696 = vmatpush1.msra.mxu0 %v6273
      %6697 = vmatprep.subr.mxu0 0.0
      %6698 = vmatpush1.msra.mxu0 %v6274
      %6699 = vmatprep.subr.mxu0 0.0
      %6700 = vmatpush1.msra.mxu0 %v6275
      %6701 = vmatprep.subr.mxu0 0.0
      %6702 = vmatpush1.msra.mxu0 %v6276
      %6703 = vmatprep.subr.mxu0 0.0
      %6704 = vmatpush1.msra.mxu0 %v6277
      %6705 = vmatprep.subr.mxu0 0.0
      %6706 = vmatpush1.msra.mxu0 %v6278
      %6707 = vmatprep.subr.mxu0 0.0
      %6708 = vmatpush1.msra.mxu0 %v6279
      %6709 = vmatprep.subr.mxu0 0.0
      %6710 = vmatpush1.msra.mxu0 %v6280
      %6711 = vmatprep.subr.mxu0 0.0
      %6712 = vmatpush1.msra.mxu0 %v6281
      %6713 = vmatprep.subr.mxu0 0.0
      %6714 = vmatpush1.msra.mxu0 %v6282
      %6715 = vmatprep.subr.mxu0 0.0
      %6716 = vmatpush1.msra.mxu0 0.0
      %6717 = vmatprep.subr.mxu0 0.0
      %6718 = vmatpush1.msra.mxu0 0.0
      %6719 = vmatprep.subr.mxu0 0.0
      %6720 = vmatpush1.msra.mxu0 0.0
      %6721 = vmatprep.subr.mxu0 0.0
      %6722 = vmatpush1.msra.mxu0 0.0
      %6723 = vmatprep.subr.mxu0 0.0
      %6724 = vmatpush1.msra.mxu0 0.0
      %6725 = vmatprep.subr.mxu0 0.0
      %6726 = vmatpush1.msra.mxu0 0.0
      %6727 = vmatprep.subr.mxu0 0.0
      %6728 = vmatpush1.msra.mxu0 0.0
      %6729 = vmatprep.subr.mxu0 0.0
      %6730 = vmatpush1.msra.mxu0 0.0
      %6731 = vmatprep.mubr.f32.mxu0 %v6653
      %6732 = vmatmul.mubr.f32.gmra.mrb[0].mxu0 %v6642
      %v6733 = vpop.f32.mrb[0].mxu0
      %v6734 = vadd.f32 0.0, %v6733
      %v6735 = vpop.f32.mrb[0].mxu0
      %6736 = vmatprep.mubr.f32.mxu0 %v6656
      %6737 = vmatmul.mubr.f32.gmra.mrb[0].mxu0 %v6644
      %v6738 = vpop.f32.mrb[0].mxu0
      %v6739 = vadd.f32 0.0, %v6738
      %v6740 = vpop.f32.mrb[0].mxu0
      %6741 = vmatprep.mubr.f32.mxu0 %v6659
      %6742 = vmatmul.mubr.f32.gmra.mrb[0].mxu0 %v6646
      %v6743 = vpop.f32.mrb[0].mxu0
      %v6744 = vadd.f32 0.0, %v6743
      %v6745 = vpop.f32.mrb[0].mxu0
      %6746 = vmatprep.mubr.f32.mxu0 %v6662
      %6747 = vmatmul.mubr.f32.gmra.mrb[0].mxu0 %v6648
      %v6748 = vpop.f32.mrb[0].mxu0
      %v6749 = vadd.f32 0.0, %v6748
      %v6750 = vpop.f32.mrb[0].mxu0
      %6751 = vmatprep.mubr.f32.mxu0 %v6665
      %6752 = vmatmul.mubr.f32.gmra.mrb[0].mxu0 %v6650
      %v6753 = vpop.f32.mrb[0].mxu0
      %v6754 = vadd.f32 0.0, %v6753
      %v6755 = vpop.f32.mrb[0].mxu0
      %6756 = vdwg.mxu0
      %v6757 = vmax.f32 %v6636, %v6734
      %v6758 = vmax.f32 %v6637, %v6739
      %v6759 = vmax.f32 %v6638, %v6744
      %v6760 = vmax.f32 %v6639, %v6749
      %v6761 = vmax.f32 %v6640, %v6754
      %6762 = vst [vmem:[%s251] sm:$0xff] %v6757
      %6763 = vst [vmem:[%s251 + $0x8] sm:$0xff] %v6758
      %6764 = vst [vmem:[%s251 + $0x10] sm:$0xff] %v6759
      %6765 = vst [vmem:[%s251 + $0x18] sm:$0xff] %v6760
      %6766 = vst [vmem:[%s251 + $0x20] sm:$0xf] %v6761
      %p6767 = scmp.lt.s32.totalorder %s17, 1
      %s6768 = scalar_select %p6767, %s17, 1
      %s6769 = smul.addr %s6768, 5
      %s6770 = smul.addr %s6769, 8
      %s6771 = scalar_lea.vmem %s6, %s6770
      // Predicated region
      $region45: #{encapsule_forward.1} parent=43 // pred_check
        %p6772 = pneg %p166
      $region46: #{encapsule_forward.1} parent=43 // pred_check_branch
        %6774 = sbr.rel (%p6772) target = $region48
      $region47: #{encapsule_forward.1} parent=43 // pred_region
        _
      $region48: #{encapsule_forward.1} parent=43 // pred_fallthru
        _
    $region44: #{encapsule_forward.1} parent=5 // pred_fallthru
      _
    %p6775 = scmp.le.s32.totalorder 2, %s12
    // Predicated region
    $region49: #{encapsule_forward.1} parent=5 // pred_check
      %p6776 = pneg %p6775
    $region50: #{encapsule_forward.1} parent=5 // pred_check_branch
      %6778 = sbr.rel (%p6776) target = $region52
    $region51: #{encapsule_forward.1} parent=5 // pred_region
      %s6779 = ssub.s32 %s12, 2
      // Predicated region
      $region53: #{encapsule_forward.1} parent=51 // pred_check
        %p6780 = pneg %p172
      $region54: #{encapsule_forward.1} parent=51 // pred_check_branch
        %6782 = sbr.rel (%p6780) target = $region56
      $region55: #{encapsule_forward.1} parent=51 // pred_region
        %p6783 = scmp.lt.s32.totalorder %s18, 1
        %s6784 = scalar_select %p6783, %s18, 1
        %s6785 = smul.addr %s6784, 5
        %s6786 = smul.addr %s6785, 8
        %s6787 = scalar_lea.vmem %s6, %s6786
      $region56: #{encapsule_forward.1} parent=51 // pred_fallthru
        _
    $region52: #{encapsule_forward.1} parent=5 // pred_fallthru
      _
  $region6: #{encapsule_forward.1} parent=0 // loop_footer
    %s16 = sadd.s32 1, %s12
  $region7: #{encapsule_forward.1} parent=0 // loop_footer_branch
    %11 = sbr.rel target = $region3
  $region8: #{encapsule_forward.1} parent=0 // loop_exit
    _

</llo_original>
